<compile_context>
chip_gen: v7x
topology: tpu7x:2x2x1
jax: 0.10.0
libtpu: 0.0.40
codegen_flags: <defaults>
</compile_context>

<pallas_src>
import functools

import jax
import jax.numpy as jnp
from jax.experimental import pallas as pl
from jax.experimental.pallas import tpu as pltpu


# ---------------------------------------------------------------------------
# Encoder: fused Conv2d(k=3, stride=2, pad=1) + bias + ReLU, one batch image per grid step
# ---------------------------------------------------------------------------
def _conv_s2_kernel(xee_ref, xeo_ref, xoe_ref, xoo_ref, w_ref, b_ref, o_ref, *, apply_relu):
    """Parity-decomposed stride-2 conv: 9 tap-dots accumulated in f32 registers."""
    _, Ho, Wo, Cout = o_ref.shape
    cin = xee_ref.shape[-1]
    m = Ho * Wo
    par = ((xee_ref, xeo_ref), (xoe_ref, xoo_ref))   # [row parity][col parity]
    acc = jnp.zeros((m, Cout), jnp.float32)
    for di in range(3):
        rp, ro = di % 2, di // 2
        for dj in range(3):
            cp, co = dj % 2, dj // 2
            xt = par[rp][cp][0, ro:ro + Ho, co:co + Wo, :].reshape(m, cin)
            acc = acc + jnp.dot(xt, w_ref[di * 3 + dj],
                                preferred_element_type=jnp.float32)
    out = acc + b_ref[...]
    if apply_relu:
        out = jnp.maximum(out, 0.0)
    o_ref[0] = out.reshape(Ho, Wo, Cout).astype(o_ref.dtype)


def conv2d_s2_p1(x, w9, b, *, apply_relu, out_dtype):
    """x: (N,H,W,Cin) bf16; w9: (9,Cin,Cout) bf16; b: (1,Cout) f32."""
    n, h, w_sz, cin = x.shape
    assert h % 2 == 0 and w_sz % 2 == 0, "kernel assumes even spatial dims"
    cout = w9.shape[-1]
    ho, wo = h // 2, w_sz // 2
    xp = jnp.pad(x, ((0, 0), (1, 1), (1, 1), (0, 0)))
    # Exact partition of the padded input into 4 parity slabs, each (n, ho+1, wo+1, cin).
    slabs = [xp[:, r::2, c::2, :] for r in (0, 1) for c in (0, 1)]
    slab_spec = pl.BlockSpec((1, ho + 1, wo + 1, cin), lambda i: (i, 0, 0, 0))
    kernel = functools.partial(_conv_s2_kernel, apply_relu=apply_relu)
    flops = 2 * n * ho * wo * 9 * cin * cout
    bytes_accessed = xp.size * 2 + w9.size * 2 + b.size * 4 + n * ho * wo * cout * 2
    return pl.pallas_call(
        kernel,
        out_shape=jax.ShapeDtypeStruct((n, ho, wo, cout), out_dtype),
        grid_spec=pltpu.PrefetchScalarGridSpec(
            num_scalar_prefetch=0,
            grid=(n,),
            in_specs=[slab_spec, slab_spec, slab_spec, slab_spec,
                      pl.BlockSpec((9, cin, cout), lambda i: (0, 0, 0)),
                      pl.BlockSpec((1, cout), lambda i: (0, 0))],
            out_specs=pl.BlockSpec((1, ho, wo, cout), lambda i: (i, 0, 0, 0)),
        ),
        compiler_params=pltpu.CompilerParams(dimension_semantics=("parallel",)),
        cost_estimate=pl.CostEstimate(flops=flops, transcendentals=0,
                                      bytes_accessed=bytes_accessed),
    )(*slabs, w9, b)


# ---------------------------------------------------------------------------
# Decoder: fused ConvTranspose2d(k=3, stride=2, pad=1, output_padding=1) + bias (+ ReLU)
# Phase decomposition (output parity (r,c) selects fixed kernel taps):
#   y[2a  ,2b  ] = x[a  ,b  ]·W(1,1)
#   y[2a  ,2b+1] = x[a  ,b+1]·W(1,0) + x[a,b]·W(1,2)
#   y[2a+1,2b  ] = x[a+1,b  ]·W(0,1) + x[a,b]·W(2,1)
#   y[2a+1,2b+1] = x[a+1,b+1]·W(0,0) + x[a+1,b]·W(0,2) + x[a,b+1]·W(2,0) + x[a,b]·W(2,2)
# ---------------------------------------------------------------------------
def _convt_s2_kernel(xp_ref, w00_ref, w01_ref, w10_ref, w11_ref, b_ref, o_ref, *, apply_relu):
    """All 4 phases from one resident block; column-blocked weights; interleaved stores."""
    _, H, _, W, twoC = o_ref.shape
    C = twoC // 2
    cin = xp_ref.shape[-1]
    m = H * W
    x00 = xp_ref[0, 0:H, 0:W, :].reshape(m, cin)              # x[a,   b  ]
    x01 = xp_ref[0, 0:H, 1:W + 1, :].reshape(m, cin)          # x[a,   b+1]
    x10 = xp_ref[0, 1:H + 1, 0:W, :].reshape(m, cin)          # x[a+1, b  ]
    x11 = xp_ref[0, 1:H + 1, 1:W + 1, :].reshape(m, cin)      # x[a+1, b+1]

    a00 = jnp.dot(x00, w00_ref[...], preferred_element_type=jnp.float32)   # (m, 4C)
    a01 = jnp.dot(x01, w01_ref[...], preferred_element_type=jnp.float32)   # (m, 2C)
    a10 = jnp.dot(x10, w10_ref[...], preferred_element_type=jnp.float32)   # (m, 2C)
    a11 = jnp.dot(x11, w11_ref[...], preferred_element_type=jnp.float32)   # (m, C)

    bias = b_ref[...]                                                       # (1, C) f32
    y00 = a00[:, 0:C] + bias
    y01 = a00[:, C:2 * C] + a01[:, 0:C] + bias
    y10 = a00[:, 2 * C:3 * C] + a10[:, 0:C] + bias
    y11 = a00[:, 3 * C:4 * C] + a01[:, C:2 * C] + a10[:, C:2 * C] + a11 + bias
    if apply_relu:
        y00 = jnp.maximum(y00, 0.0)
        y01 = jnp.maximum(y01, 0.0)
        y10 = jnp.maximum(y10, 0.0)
        y11 = jnp.maximum(y11, 0.0)

    # Even output rows: [y00 | y01] along lanes; odd rows: [y10 | y11].  Contiguous stores.
    y_even = jnp.concatenate([y00, y01], axis=-1).reshape(H, W, twoC)
    y_odd = jnp.concatenate([y10, y11], axis=-1).reshape(H, W, twoC)
    o_ref[0, :, 0, :, :] = y_even.astype(o_ref.dtype)
    o_ref[0, :, 1, :, :] = y_odd.astype(o_ref.dtype)


def conv_transpose2d_s2_p1_op1(x, wblocks, b, *, apply_relu, out_dtype):
    """x: (N,H,W,Cin) bf16; wblocks: column-blocked bf16 weights; b: (1,C) f32.  -> (N,2H,2W,C)."""
    n, h, w_sz, cin = x.shape
    w00, w01, w10, w11 = wblocks
    c = w11.shape[-1]
    xp = jnp.pad(x, ((0, 0), (0, 1), (0, 1), (0, 0)))          # zero row/col bottom/right
    kernel = functools.partial(_convt_s2_kernel, apply_relu=apply_relu)
    flops = 2 * n * h * w_sz * cin * 9 * c
    bytes_accessed = (xp.size * 2 + sum(wi.size for wi in wblocks) * 2 + b.size * 4
                      + n * h * w_sz * 4 * c * jnp.dtype(out_dtype).itemsize)
    out6 = pl.pallas_call(
        kernel,
        out_shape=jax.ShapeDtypeStruct((n, h, 2, w_sz, 2 * c), out_dtype),
        grid_spec=pltpu.PrefetchScalarGridSpec(
            num_scalar_prefetch=0,
            grid=(n,),
            in_specs=[pl.BlockSpec((1, h + 1, w_sz + 1, cin), lambda i: (i, 0, 0, 0)),
                      pl.BlockSpec(w00.shape, lambda i: (0, 0)),
                      pl.BlockSpec(w01.shape, lambda i: (0, 0)),
                      pl.BlockSpec(w10.shape, lambda i: (0, 0)),
                      pl.BlockSpec(w11.shape, lambda i: (0, 0)),
                      pl.BlockSpec((1, c), lambda i: (0, 0))],
            out_specs=pl.BlockSpec((1, h, 2, w_sz, 2 * c), lambda i: (i, 0, 0, 0, 0)),
        ),
        compiler_params=pltpu.CompilerParams(dimension_semantics=("parallel",)),
        cost_estimate=pl.CostEstimate(flops=flops, transcendentals=0,
                                      bytes_accessed=int(bytes_accessed)),
    )(xp, w00, w01, w10, w11, b)
    # Free, contiguous (row-major) reshape: (n, h, 2, w, 2c) -> (n, 2h, 2w, c).
    return out6.reshape(n, 2 * h, 2 * w_sz, c)


# ---------------------------------------------------------------------------
# Parameters (torch layouts) + one-time repack into kernel-ready blocks
# ---------------------------------------------------------------------------
def init_params(key, in_channels=3):
    enc_dims = [(in_channels, 64), (64, 128), (128, 256)]
    dec_dims = [(256, 128), (128, 64), (64, in_channels)]
    params = {"enc": [], "dec": []}
    keys = jax.random.split(key, 2 * (len(enc_dims) + len(dec_dims)))
    ki = 0
    for cin, cout in enc_dims:
        fan_in = cin * 9
        w = jax.random.normal(keys[ki], (cout, cin, 3, 3), jnp.float32) / jnp.sqrt(fan_in)
        b = jax.random.normal(keys[ki + 1], (cout,), jnp.float32) * 0.01
        params["enc"].append((w, b))
        ki += 2
    for cin, cout in dec_dims:
        fan_in = cin * 9
        # ConvTranspose2d weight layout: (Cin, Cout, kH, kW)
        w = jax.random.normal(keys[ki], (cin, cout, 3, 3), jnp.float32) / jnp.sqrt(fan_in)
        b = jax.random.normal(keys[ki + 1], (cout,), jnp.float32) * 0.01
        params["dec"].append((w, b))
        ki += 2
    return params


def prepare_params(params, final_lane_pad=128):
    """Repack torch-layout weights into bf16 kernel blocks once (outside the per-call path)."""
    enc = []
    for w, b in params["enc"]:
        cout, cin, k, _ = w.shape
        assert k == 3, "encoder kernel is specialized to k=3, stride=2, pad=1"
        w9 = jnp.transpose(w, (2, 3, 1, 0)).reshape(9, cin, cout).astype(jnp.bfloat16)
        enc.append((w9, b.reshape(1, cout).astype(jnp.float32)))

    dec = []
    n_dec = len(params["dec"])
    for li, (w, b) in enumerate(params["dec"]):
        cin, cout, k, _ = w.shape
        assert k == 3, "ConvT phase decomposition is hard-wired to k=3, stride=2, pad=1, out_pad=1"
        c_logical = cout
        cpad = final_lane_pad if (li == n_dec - 1 and cout < final_lane_pad) else cout
        if cpad != cout:      # lane-pad tiny final Cout (3 -> 128) for dense stores
            w = jnp.pad(w, ((0, 0), (0, cpad - cout), (0, 0), (0, 0)))
            b = jnp.pad(b, ((0, cpad - cout),))
        tap = lambda i, j: w[:, :, i, j]                                   # (cin, cpad)
        w00 = jnp.concatenate([tap(1, 1), tap(1, 2), tap(2, 1), tap(2, 2)], axis=1)  # x[a,b]
        w01 = jnp.concatenate([tap(1, 0), tap(2, 0)], axis=1)                        # x[a,b+1]
        w10 = jnp.concatenate([tap(0, 1), tap(0, 2)], axis=1)                        # x[a+1,b]
        w11 = tap(0, 0)                                                              # x[a+1,b+1]
        wb = tuple(wi.astype(jnp.bfloat16) for wi in (w00, w01, w10, w11))
        dec.append((wb, b.reshape(1, cpad).astype(jnp.float32), c_logical))
    return {"enc": enc, "dec": dec}


def autoencoder_forward(p, x_nchw):
    h = jnp.transpose(x_nchw, (0, 2, 3, 1)).astype(jnp.bfloat16)   # NCHW->NHWC once, bf16 acts
    for w9, b in p["enc"]:
        h = conv2d_s2_p1(h, w9, b, apply_relu=True, out_dtype=jnp.bfloat16)
    n_dec = len(p["dec"])
    for li, (wb, b, c_logical) in enumerate(p["dec"]):
        last = li == n_dec - 1
        h = conv_transpose2d_s2_p1_op1(h, wb, b, apply_relu=not last,
                                       out_dtype=jnp.float32 if last else jnp.bfloat16)
        if h.shape[-1] != c_logical:
            h = h[..., :c_logical]                                  # drop lane padding (final layer)
    return jnp.transpose(h, (0, 3, 1, 2))                           # NHWC -> NCHW once


# ---------------------------------------------------------------------------
# Pure-JAX reference (same bf16 rounding points as the kernels) for a self-check
# ---------------------------------------------------------------------------
def _ref_forward(params, x_nchw):
    f32 = jnp.float32
    hp = jax.lax.Precision.HIGHEST

    def q(v):  # bf16 quantize, matching MXU inputs / inter-layer activation storage
        return v.astype(jnp.bfloat16).astype(f32)

    h = q(jnp.transpose(x_nchw, (0, 2, 3, 1)))
    for w, b in params["enc"]:
        n, hh, ww, _ = h.shape
        ho, wo = hh // 2, ww // 2
        xp = jnp.pad(h, ((0, 0), (1, 1), (1, 1), (0, 0)))
        w_q = q(w)
        y = jnp.zeros((n, ho, wo, w.shape[0]), f32)
        for di in range(3):
            for dj in range(3):
                patch = xp[:, di:di + 2 * ho:2, dj:dj + 2 * wo:2, :]
                y = y + jnp.einsum("nhwc,oc->nhwo", patch, w_q[:, :, di, dj], precision=hp)
        h = q(jnp.maximum(y + b, 0.0))
    n_dec = len(params["dec"])
    for li, (w, b) in enumerate(params["dec"]):
        n, hh, ww, _ = h.shape
        cout = w.shape[1]
        w_q = q(w)
        canvas = jnp.zeros((n, 2 * hh + 2, 2 * ww + 2, cout), f32)
        for i in range(3):
            for j in range(3):
                contrib = jnp.einsum("nhwc,co->nhwo", h, w_q[:, :, i, j], precision=hp)
                canvas = canvas.at[:, i:i + 2 * hh:2, j:j + 2 * ww:2, :].add(contrib)
        y = canvas[:, 1:2 * hh + 1, 1:2 * ww + 1, :] + b
        h = q(jnp.maximum(y, 0.0)) if li < n_dec - 1 else y
    return jnp.transpose(h, (0, 3, 1, 2))


if __name__ == "__main__":
    key = jax.random.PRNGKey(0)
    pkey, xkey = jax.random.split(key)
    in_channels = 3
    params = init_params(pkey, in_channels=in_channels)
    gparams = prepare_params(params)

    # small example input, NCHW like PyTorch
    x = jax.random.normal(xkey, (2, in_channels, 16, 16), jnp.float32)

    fwd = jax.jit(functools.partial(autoencoder_forward, gparams))
    out = jax.block_until_ready(fwd(x))

    assert out.shape == x.shape, f"expected {x.shape}, got {out.shape}"
    assert out.dtype == jnp.float32

    ref = jax.block_until_ready(jax.jit(functools.partial(_ref_forward, params))(x))
    max_err = float(jnp.max(jnp.abs(out - ref)))
    assert max_err < 2e-2, f"kernel/reference mismatch: max abs err {max_err}"
    print("KERNEL_OK")
</pallas_src>

<mosaic_0001>
module attributes {stable_mosaic.version = 11 : i64} {
  func.func @_conv_s2_kernel(%arg0: i32, %arg1: memref<1x9x9x3xbf16, #tpu.memory_space<vmem>>, %arg2: memref<1x9x9x3xbf16, #tpu.memory_space<vmem>>, %arg3: memref<1x9x9x3xbf16, #tpu.memory_space<vmem>>, %arg4: memref<1x9x9x3xbf16, #tpu.memory_space<vmem>>, %arg5: memref<9x3x64xbf16, #tpu.memory_space<vmem>>, %arg6: memref<1x64xf32, #tpu.memory_space<vmem>>, %arg7: memref<1x8x8x64xbf16, #tpu.memory_space<vmem>>) attributes {dimension_semantics = [#tpu.dimension_semantics<parallel>], iteration_bounds = array<i64: 2>, scalar_prefetch = 0 : i64, scratch_operands = 0 : i64, tpu.core_type = #tpu.core_type<tc>, window_params = [{transform_indices = @transform_0, window_bounds = array<i64: 1, 9, 9, 3>}, {transform_indices = @transform_1, window_bounds = array<i64: 1, 9, 9, 3>}, {transform_indices = @transform_2, window_bounds = array<i64: 1, 9, 9, 3>}, {transform_indices = @transform_3, window_bounds = array<i64: 1, 9, 9, 3>}, {pipeline_mode = #tpu.pipeline_mode<synchronous>, transform_indices = @transform_4, window_bounds = array<i64: 9, 3, 64>}, {pipeline_mode = #tpu.pipeline_mode<synchronous>, transform_indices = @transform_5, window_bounds = array<i64: 1, 64>}, {transform_indices = @transform_6, window_bounds = array<i64: 1, 8, 8, 64>}]} {
    %cst = arith.constant 0.000000e+00 : f32
    %0 = vector.broadcast %cst : f32 to vector<64x64xf32>
    %c0 = arith.constant 0 : index
    %c0_0 = arith.constant 0 : index
    %c0_1 = arith.constant 0 : index
    %c0_2 = arith.constant 0 : index
    %1 = vector.load %arg1[%c0, %c0_0, %c0_1, %c0_2] : memref<1x9x9x3xbf16, #tpu.memory_space<vmem>>, vector<1x8x8x3xbf16>
    %2 = vector.shape_cast %1 : vector<1x8x8x3xbf16> to vector<8x8x3xbf16>
    %3 = vector.shape_cast %2 : vector<8x8x3xbf16> to vector<64x3xbf16>
    %c0_3 = arith.constant 0 : index
    %c0_4 = arith.constant 0 : index
    %c0_5 = arith.constant 0 : index
    %4 = vector.load %arg5[%c0_3, %c0_4, %c0_5] : memref<9x3x64xbf16, #tpu.memory_space<vmem>>, vector<1x3x64xbf16>
    %5 = vector.shape_cast %4 : vector<1x3x64xbf16> to vector<3x64xbf16>
    %cst_6 = arith.constant dense<0.000000e+00> : vector<64x64xf32>
    %6 = tpu.matmul %3, %5, %cst_6 {dimension_numbers = #tpu.dot_dimension_numbers<[1], [0], [0], [1], [0, 0, 1, 1], [], []>} : vector<64x3xbf16>, vector<3x64xbf16>, vector<64x64xf32> -> vector<64x64xf32>
    %7 = arith.addf %0, %6 : vector<64x64xf32>
    %c0_7 = arith.constant 0 : index
    %c0_8 = arith.constant 0 : index
    %c0_9 = arith.constant 0 : index
    %c0_10 = arith.constant 0 : index
    %8 = vector.load %arg2[%c0_7, %c0_8, %c0_9, %c0_10] : memref<1x9x9x3xbf16, #tpu.memory_space<vmem>>, vector<1x8x8x3xbf16>
    %9 = vector.shape_cast %8 : vector<1x8x8x3xbf16> to vector<8x8x3xbf16>
    %10 = vector.shape_cast %9 : vector<8x8x3xbf16> to vector<64x3xbf16>
    %c1 = arith.constant 1 : index
    %c0_11 = arith.constant 0 : index
    %c0_12 = arith.constant 0 : index
    %11 = vector.load %arg5[%c1, %c0_11, %c0_12] : memref<9x3x64xbf16, #tpu.memory_space<vmem>>, vector<1x3x64xbf16>
    %12 = vector.shape_cast %11 : vector<1x3x64xbf16> to vector<3x64xbf16>
    %cst_13 = arith.constant dense<0.000000e+00> : vector<64x64xf32>
    %13 = tpu.matmul %10, %12, %cst_13 {dimension_numbers = #tpu.dot_dimension_numbers<[1], [0], [0], [1], [0, 0, 1, 1], [], []>} : vector<64x3xbf16>, vector<3x64xbf16>, vector<64x64xf32> -> vector<64x64xf32>
    %14 = arith.addf %7, %13 : vector<64x64xf32>
    %c0_14 = arith.constant 0 : index
    %c0_15 = arith.constant 0 : index
    %c1_16 = arith.constant 1 : index
    %c0_17 = arith.constant 0 : index
    %15 = vector.load %arg1[%c0_14, %c0_15, %c1_16, %c0_17] : memref<1x9x9x3xbf16, #tpu.memory_space<vmem>>, vector<1x8x8x3xbf16>
    %16 = vector.shape_cast %15 : vector<1x8x8x3xbf16> to vector<8x8x3xbf16>
    %17 = vector.shape_cast %16 : vector<8x8x3xbf16> to vector<64x3xbf16>
    %c2 = arith.constant 2 : index
    %c0_18 = arith.constant 0 : index
    %c0_19 = arith.constant 0 : index
    %18 = vector.load %arg5[%c2, %c0_18, %c0_19] : memref<9x3x64xbf16, #tpu.memory_space<vmem>>, vector<1x3x64xbf16>
    %19 = vector.shape_cast %18 : vector<1x3x64xbf16> to vector<3x64xbf16>
    %cst_20 = arith.constant dense<0.000000e+00> : vector<64x64xf32>
    %20 = tpu.matmul %17, %19, %cst_20 {dimension_numbers = #tpu.dot_dimension_numbers<[1], [0], [0], [1], [0, 0, 1, 1], [], []>} : vector<64x3xbf16>, vector<3x64xbf16>, vector<64x64xf32> -> vector<64x64xf32>
    %21 = arith.addf %14, %20 : vector<64x64xf32>
    %c0_21 = arith.constant 0 : index
    %c0_22 = arith.constant 0 : index
    %c0_23 = arith.constant 0 : index
    %c0_24 = arith.constant 0 : index
    %22 = vector.load %arg3[%c0_21, %c0_22, %c0_23, %c0_24] : memref<1x9x9x3xbf16, #tpu.memory_space<vmem>>, vector<1x8x8x3xbf16>
    %23 = vector.shape_cast %22 : vector<1x8x8x3xbf16> to vector<8x8x3xbf16>
    %24 = vector.shape_cast %23 : vector<8x8x3xbf16> to vector<64x3xbf16>
    %c3 = arith.constant 3 : index
    %c0_25 = arith.constant 0 : index
    %c0_26 = arith.constant 0 : index
    %25 = vector.load %arg5[%c3, %c0_25, %c0_26] : memref<9x3x64xbf16, #tpu.memory_space<vmem>>, vector<1x3x64xbf16>
    %26 = vector.shape_cast %25 : vector<1x3x64xbf16> to vector<3x64xbf16>
    %cst_27 = arith.constant dense<0.000000e+00> : vector<64x64xf32>
    %27 = tpu.matmul %24, %26, %cst_27 {dimension_numbers = #tpu.dot_dimension_numbers<[1], [0], [0], [1], [0, 0, 1, 1], [], []>} : vector<64x3xbf16>, vector<3x64xbf16>, vector<64x64xf32> -> vector<64x64xf32>
    %28 = arith.addf %21, %27 : vector<64x64xf32>
    %c0_28 = arith.constant 0 : index
    %c0_29 = arith.constant 0 : index
    %c0_30 = arith.constant 0 : index
    %c0_31 = arith.constant 0 : index
    %29 = vector.load %arg4[%c0_28, %c0_29, %c0_30, %c0_31] : memref<1x9x9x3xbf16, #tpu.memory_space<vmem>>, vector<1x8x8x3xbf16>
    %30 = vector.shape_cast %29 : vector<1x8x8x3xbf16> to vector<8x8x3xbf16>
    %31 = vector.shape_cast %30 : vector<8x8x3xbf16> to vector<64x3xbf16>
    %c4 = arith.constant 4 : index
    %c0_32 = arith.constant 0 : index
    %c0_33 = arith.constant 0 : index
    %32 = vector.load %arg5[%c4, %c0_32, %c0_33] : memref<9x3x64xbf16, #tpu.memory_space<vmem>>, vector<1x3x64xbf16>
    %33 = vector.shape_cast %32 : vector<1x3x64xbf16> to vector<3x64xbf16>
    %cst_34 = arith.constant dense<0.000000e+00> : vector<64x64xf32>
    %34 = tpu.matmul %31, %33, %cst_34 {dimension_numbers = #tpu.dot_dimension_numbers<[1], [0], [0], [1], [0, 0, 1, 1], [], []>} : vector<64x3xbf16>, vector<3x64xbf16>, vector<64x64xf32> -> vector<64x64xf32>
    %35 = arith.addf %28, %34 : vector<64x64xf32>
    %c0_35 = arith.constant 0 : index
    %c0_36 = arith.constant 0 : index
    %c1_37 = arith.constant 1 : index
    %c0_38 = arith.constant 0 : index
    %36 = vector.load %arg3[%c0_35, %c0_36, %c1_37, %c0_38] : memref<1x9x9x3xbf16, #tpu.memory_space<vmem>>, vector<1x8x8x3xbf16>
    %37 = vector.shape_cast %36 : vector<1x8x8x3xbf16> to vector<8x8x3xbf16>
    %38 = vector.shape_cast %37 : vector<8x8x3xbf16> to vector<64x3xbf16>
    %c5 = arith.constant 5 : index
    %c0_39 = arith.constant 0 : index
    %c0_40 = arith.constant 0 : index
    %39 = vector.load %arg5[%c5, %c0_39, %c0_40] : memref<9x3x64xbf16, #tpu.memory_space<vmem>>, vector<1x3x64xbf16>
    %40 = vector.shape_cast %39 : vector<1x3x64xbf16> to vector<3x64xbf16>
    %cst_41 = arith.constant dense<0.000000e+00> : vector<64x64xf32>
    %41 = tpu.matmul %38, %40, %cst_41 {dimension_numbers = #tpu.dot_dimension_numbers<[1], [0], [0], [1], [0, 0, 1, 1], [], []>} : vector<64x3xbf16>, vector<3x64xbf16>, vector<64x64xf32> -> vector<64x64xf32>
    %42 = arith.addf %35, %41 : vector<64x64xf32>
    %c0_42 = arith.constant 0 : index
    %c1_43 = arith.constant 1 : index
    %c0_44 = arith.constant 0 : index
    %c0_45 = arith.constant 0 : index
    %43 = vector.load %arg1[%c0_42, %c1_43, %c0_44, %c0_45] : memref<1x9x9x3xbf16, #tpu.memory_space<vmem>>, vector<1x8x8x3xbf16>
    %44 = vector.shape_cast %43 : vector<1x8x8x3xbf16> to vector<8x8x3xbf16>
    %45 = vector.shape_cast %44 : vector<8x8x3xbf16> to vector<64x3xbf16>
    %c6 = arith.constant 6 : index
    %c0_46 = arith.constant 0 : index
    %c0_47 = arith.constant 0 : index
    %46 = vector.load %arg5[%c6, %c0_46, %c0_47] : memref<9x3x64xbf16, #tpu.memory_space<vmem>>, vector<1x3x64xbf16>
    %47 = vector.shape_cast %46 : vector<1x3x64xbf16> to vector<3x64xbf16>
    %cst_48 = arith.constant dense<0.000000e+00> : vector<64x64xf32>
    %48 = tpu.matmul %45, %47, %cst_48 {dimension_numbers = #tpu.dot_dimension_numbers<[1], [0], [0], [1], [0, 0, 1, 1], [], []>} : vector<64x3xbf16>, vector<3x64xbf16>, vector<64x64xf32> -> vector<64x64xf32>
    %49 = arith.addf %42, %48 : vector<64x64xf32>
    %c0_49 = arith.constant 0 : index
    %c1_50 = arith.constant 1 : index
    %c0_51 = arith.constant 0 : index
    %c0_52 = arith.constant 0 : index
    %50 = vector.load %arg2[%c0_49, %c1_50, %c0_51, %c0_52] : memref<1x9x9x3xbf16, #tpu.memory_space<vmem>>, vector<1x8x8x3xbf16>
    %51 = vector.shape_cast %50 : vector<1x8x8x3xbf16> to vector<8x8x3xbf16>
    %52 = vector.shape_cast %51 : vector<8x8x3xbf16> to vector<64x3xbf16>
    %c7 = arith.constant 7 : index
    %c0_53 = arith.constant 0 : index
    %c0_54 = arith.constant 0 : index
    %53 = vector.load %arg5[%c7, %c0_53, %c0_54] : memref<9x3x64xbf16, #tpu.memory_space<vmem>>, vector<1x3x64xbf16>
    %54 = vector.shape_cast %53 : vector<1x3x64xbf16> to vector<3x64xbf16>
    %cst_55 = arith.constant dense<0.000000e+00> : vector<64x64xf32>
    %55 = tpu.matmul %52, %54, %cst_55 {dimension_numbers = #tpu.dot_dimension_numbers<[1], [0], [0], [1], [0, 0, 1, 1], [], []>} : vector<64x3xbf16>, vector<3x64xbf16>, vector<64x64xf32> -> vector<64x64xf32>
    %56 = arith.addf %49, %55 : vector<64x64xf32>
    %c0_56 = arith.constant 0 : index
    %c1_57 = arith.constant 1 : index
    %c1_58 = arith.constant 1 : index
    %c0_59 = arith.constant 0 : index
    %57 = vector.load %arg1[%c0_56, %c1_57, %c1_58, %c0_59] : memref<1x9x9x3xbf16, #tpu.memory_space<vmem>>, vector<1x8x8x3xbf16>
    %58 = vector.shape_cast %57 : vector<1x8x8x3xbf16> to vector<8x8x3xbf16>
    %59 = vector.shape_cast %58 : vector<8x8x3xbf16> to vector<64x3xbf16>
    %c8 = arith.constant 8 : index
    %c0_60 = arith.constant 0 : index
    %c0_61 = arith.constant 0 : index
    %60 = vector.load %arg5[%c8, %c0_60, %c0_61] : memref<9x3x64xbf16, #tpu.memory_space<vmem>>, vector<1x3x64xbf16>
    %61 = vector.shape_cast %60 : vector<1x3x64xbf16> to vector<3x64xbf16>
    %cst_62 = arith.constant dense<0.000000e+00> : vector<64x64xf32>
    %62 = tpu.matmul %59, %61, %cst_62 {dimension_numbers = #tpu.dot_dimension_numbers<[1], [0], [0], [1], [0, 0, 1, 1], [], []>} : vector<64x3xbf16>, vector<3x64xbf16>, vector<64x64xf32> -> vector<64x64xf32>
    %63 = arith.addf %56, %62 : vector<64x64xf32>
    %c0_63 = arith.constant 0 : index
    %c0_64 = arith.constant 0 : index
    %64 = vector.load %arg6[%c0_63, %c0_64] : memref<1x64xf32, #tpu.memory_space<vmem>>, vector<1x64xf32>
    %65 = vector.broadcast %64 : vector<1x64xf32> to vector<64x64xf32>
    %66 = arith.addf %63, %65 : vector<64x64xf32>
    %cst_65 = arith.constant 0.000000e+00 : f32
    %67 = vector.broadcast %cst_65 : f32 to vector<64x64xf32>
    %68 = arith.maximumf %66, %67 : vector<64x64xf32>
    %69 = vector.shape_cast %68 : vector<64x64xf32> to vector<8x8x64xf32>
    %70 = arith.truncf %69 : vector<8x8x64xf32> to vector<8x8x64xbf16>
    %c0_66 = arith.constant 0 : index
    %c0_67 = arith.constant 0 : index
    %c0_68 = arith.constant 0 : index
    %c0_69 = arith.constant 0 : index
    %71 = vector.load %arg7[%c0_66, %c0_67, %c0_68, %c0_69] : memref<1x8x8x64xbf16, #tpu.memory_space<vmem>>, vector<1x8x8x64xbf16>
    %72 = vector.shape_cast %71 : vector<1x8x8x64xbf16> to vector<8x8x64xbf16>
    %73 = vector.shape_cast %70 : vector<8x8x64xbf16> to vector<1x8x8x64xbf16>
    tpu.vector_store %arg7[%c0_66, %c0_67, %c0_68, %c0_69], %73 {strides = array<i32>} : memref<1x8x8x64xbf16, #tpu.memory_space<vmem>>, vector<1x8x8x64xbf16>,
    return
  }
  func.func @transform_0(%arg0: i32) -> (i32, i32, i32, i32) {
    %c0_i32 = arith.constant 0 : i32
    %c0_i32_0 = arith.constant 0 : i32
    %c0_i32_1 = arith.constant 0 : i32
    %c0_i32_2 = arith.constant 0 : i32
    return %arg0, %c0_i32, %c0_i32_0, %c0_i32_1 : i32, i32, i32, i32
  }
  func.func @transform_1(%arg0: i32) -> (i32, i32, i32, i32) {
    %c0_i32 = arith.constant 0 : i32
    %c0_i32_0 = arith.constant 0 : i32
    %c0_i32_1 = arith.constant 0 : i32
    %c0_i32_2 = arith.constant 0 : i32
    return %arg0, %c0_i32, %c0_i32_0, %c0_i32_1 : i32, i32, i32, i32
  }
  func.func @transform_2(%arg0: i32) -> (i32, i32, i32, i32) {
    %c0_i32 = arith.constant 0 : i32
    %c0_i32_0 = arith.constant 0 : i32
    %c0_i32_1 = arith.constant 0 : i32
    %c0_i32_2 = arith.constant 0 : i32
    return %arg0, %c0_i32, %c0_i32_0, %c0_i32_1 : i32, i32, i32, i32
  }
  func.func @transform_3(%arg0: i32) -> (i32, i32, i32, i32) {
    %c0_i32 = arith.constant 0 : i32
    %c0_i32_0 = arith.constant 0 : i32
    %c0_i32_1 = arith.constant 0 : i32
    %c0_i32_2 = arith.constant 0 : i32
    return %arg0, %c0_i32, %c0_i32_0, %c0_i32_1 : i32, i32, i32, i32
  }
  func.func @transform_4(%arg0: i32) -> (i32, i32, i32) {
    %c0_i32 = arith.constant 0 : i32
    %c0_i32_0 = arith.constant 0 : i32
    %c0_i32_1 = arith.constant 0 : i32
    %c0_i32_2 = arith.constant 0 : i32
    return %c0_i32, %c0_i32_0, %c0_i32_1 : i32, i32, i32
  }
  func.func @transform_5(%arg0: i32) -> (i32, i32) {
    %c0_i32 = arith.constant 0 : i32
    %c0_i32_0 = arith.constant 0 : i32
    %c0_i32_1 = arith.constant 0 : i32
    return %c0_i32, %c0_i32_0 : i32, i32
  }
  func.func @transform_6(%arg0: i32) -> (i32, i32, i32, i32) {
    %c0_i32 = arith.constant 0 : i32
    %c0_i32_0 = arith.constant 0 : i32
    %c0_i32_1 = arith.constant 0 : i32
    %c0_i32_2 = arith.constant 0 : i32
    return %arg0, %c0_i32, %c0_i32_0, %c0_i32_1 : i32, i32, i32, i32
  }
}

module attributes {stable_mosaic.version = 11 : i64} {
  func.func @_conv_s2_kernel(%arg0: i32, %arg1: memref<1x5x5x64xbf16, #tpu.memory_space<vmem>>, %arg2: memref<1x5x5x64xbf16, #tpu.memory_space<vmem>>, %arg3: memref<1x5x5x64xbf16, #tpu.memory_space<vmem>>, %arg4: memref<1x5x5x64xbf16, #tpu.memory_space<vmem>>, %arg5: memref<9x64x128xbf16, #tpu.memory_space<vmem>>, %arg6: memref<1x128xf32, #tpu.memory_space<vmem>>, %arg7: memref<1x4x4x128xbf16, #tpu.memory_space<vmem>>) attributes {dimension_semantics = [#tpu.dimension_semantics<parallel>], iteration_bounds = array<i64: 2>, scalar_prefetch = 0 : i64, scratch_operands = 0 : i64, tpu.core_type = #tpu.core_type<tc>, window_params = [{transform_indices = @transform_0, window_bounds = array<i64: 1, 5, 5, 64>}, {transform_indices = @transform_1, window_bounds = array<i64: 1, 5, 5, 64>}, {transform_indices = @transform_2, window_bounds = array<i64: 1, 5, 5, 64>}, {transform_indices = @transform_3, window_bounds = array<i64: 1, 5, 5, 64>}, {pipeline_mode = #tpu.pipeline_mode<synchronous>, transform_indices = @transform_4, window_bounds = array<i64: 9, 64, 128>}, {pipeline_mode = #tpu.pipeline_mode<synchronous>, transform_indices = @transform_5, window_bounds = array<i64: 1, 128>}, {transform_indices = @transform_6, window_bounds = array<i64: 1, 4, 4, 128>}]} {
    %cst = arith.constant 0.000000e+00 : f32
    %0 = vector.broadcast %cst : f32 to vector<16x128xf32>
    %c0 = arith.constant 0 : index
    %c0_0 = arith.constant 0 : index
    %c0_1 = arith.constant 0 : index
    %c0_2 = arith.constant 0 : index
    %1 = vector.load %arg1[%c0, %c0_0, %c0_1, %c0_2] : memref<1x5x5x64xbf16, #tpu.memory_space<vmem>>, vector<1x4x4x64xbf16>
    %2 = vector.shape_cast %1 : vector<1x4x4x64xbf16> to vector<4x4x64xbf16>
    %3 = vector.shape_cast %2 : vector<4x4x64xbf16> to vector<16x64xbf16>
    %c0_3 = arith.constant 0 : index
    %c0_4 = arith.constant 0 : index
    %c0_5 = arith.constant 0 : index
    %4 = vector.load %arg5[%c0_3, %c0_4, %c0_5] : memref<9x64x128xbf16, #tpu.memory_space<vmem>>, vector<1x64x128xbf16>
    %5 = vector.shape_cast %4 : vector<1x64x128xbf16> to vector<64x128xbf16>
    %cst_6 = arith.constant dense<0.000000e+00> : vector<16x128xf32>
    %6 = tpu.matmul %3, %5, %cst_6 {dimension_numbers = #tpu.dot_dimension_numbers<[1], [0], [0], [1], [0, 0, 1, 1], [], []>} : vector<16x64xbf16>, vector<64x128xbf16>, vector<16x128xf32> -> vector<16x128xf32>
    %7 = arith.addf %0, %6 : vector<16x128xf32>
    %c0_7 = arith.constant 0 : index
    %c0_8 = arith.constant 0 : index
    %c0_9 = arith.constant 0 : index
    %c0_10 = arith.constant 0 : index
    %8 = vector.load %arg2[%c0_7, %c0_8, %c0_9, %c0_10] : memref<1x5x5x64xbf16, #tpu.memory_space<vmem>>, vector<1x4x4x64xbf16>
    %9 = vector.shape_cast %8 : vector<1x4x4x64xbf16> to vector<4x4x64xbf16>
    %10 = vector.shape_cast %9 : vector<4x4x64xbf16> to vector<16x64xbf16>
    %c1 = arith.constant 1 : index
    %c0_11 = arith.constant 0 : index
    %c0_12 = arith.constant 0 : index
    %11 = vector.load %arg5[%c1, %c0_11, %c0_12] : memref<9x64x128xbf16, #tpu.memory_space<vmem>>, vector<1x64x128xbf16>
    %12 = vector.shape_cast %11 : vector<1x64x128xbf16> to vector<64x128xbf16>
    %cst_13 = arith.constant dense<0.000000e+00> : vector<16x128xf32>
    %13 = tpu.matmul %10, %12, %cst_13 {dimension_numbers = #tpu.dot_dimension_numbers<[1], [0], [0], [1], [0, 0, 1, 1], [], []>} : vector<16x64xbf16>, vector<64x128xbf16>, vector<16x128xf32> -> vector<16x128xf32>
    %14 = arith.addf %7, %13 : vector<16x128xf32>
    %c0_14 = arith.constant 0 : index
    %c0_15 = arith.constant 0 : index
    %c1_16 = arith.constant 1 : index
    %c0_17 = arith.constant 0 : index
    %15 = vector.load %arg1[%c0_14, %c0_15, %c1_16, %c0_17] : memref<1x5x5x64xbf16, #tpu.memory_space<vmem>>, vector<1x4x4x64xbf16>
    %16 = vector.shape_cast %15 : vector<1x4x4x64xbf16> to vector<4x4x64xbf16>
    %17 = vector.shape_cast %16 : vector<4x4x64xbf16> to vector<16x64xbf16>
    %c2 = arith.constant 2 : index
    %c0_18 = arith.constant 0 : index
    %c0_19 = arith.constant 0 : index
    %18 = vector.load %arg5[%c2, %c0_18, %c0_19] : memref<9x64x128xbf16, #tpu.memory_space<vmem>>, vector<1x64x128xbf16>
    %19 = vector.shape_cast %18 : vector<1x64x128xbf16> to vector<64x128xbf16>
    %cst_20 = arith.constant dense<0.000000e+00> : vector<16x128xf32>
    %20 = tpu.matmul %17, %19, %cst_20 {dimension_numbers = #tpu.dot_dimension_numbers<[1], [0], [0], [1], [0, 0, 1, 1], [], []>} : vector<16x64xbf16>, vector<64x128xbf16>, vector<16x128xf32> -> vector<16x128xf32>
    %21 = arith.addf %14, %20 : vector<16x128xf32>
    %c0_21 = arith.constant 0 : index
    %c0_22 = arith.constant 0 : index
    %c0_23 = arith.constant 0 : index
    %c0_24 = arith.constant 0 : index
    %22 = vector.load %arg3[%c0_21, %c0_22, %c0_23, %c0_24] : memref<1x5x5x64xbf16, #tpu.memory_space<vmem>>, vector<1x4x4x64xbf16>
    %23 = vector.shape_cast %22 : vector<1x4x4x64xbf16> to vector<4x4x64xbf16>
    %24 = vector.shape_cast %23 : vector<4x4x64xbf16> to vector<16x64xbf16>
    %c3 = arith.constant 3 : index
    %c0_25 = arith.constant 0 : index
    %c0_26 = arith.constant 0 : index
    %25 = vector.load %arg5[%c3, %c0_25, %c0_26] : memref<9x64x128xbf16, #tpu.memory_space<vmem>>, vector<1x64x128xbf16>
    %26 = vector.shape_cast %25 : vector<1x64x128xbf16> to vector<64x128xbf16>
    %cst_27 = arith.constant dense<0.000000e+00> : vector<16x128xf32>
    %27 = tpu.matmul %24, %26, %cst_27 {dimension_numbers = #tpu.dot_dimension_numbers<[1], [0], [0], [1], [0, 0, 1, 1], [], []>} : vector<16x64xbf16>, vector<64x128xbf16>, vector<16x128xf32> -> vector<16x128xf32>
    %28 = arith.addf %21, %27 : vector<16x128xf32>
    %c0_28 = arith.constant 0 : index
    %c0_29 = arith.constant 0 : index
    %c0_30 = arith.constant 0 : index
    %c0_31 = arith.constant 0 : index
    %29 = vector.load %arg4[%c0_28, %c0_29, %c0_30, %c0_31] : memref<1x5x5x64xbf16, #tpu.memory_space<vmem>>, vector<1x4x4x64xbf16>
    %30 = vector.shape_cast %29 : vector<1x4x4x64xbf16> to vector<4x4x64xbf16>
    %31 = vector.shape_cast %30 : vector<4x4x64xbf16> to vector<16x64xbf16>
    %c4 = arith.constant 4 : index
    %c0_32 = arith.constant 0 : index
    %c0_33 = arith.constant 0 : index
    %32 = vector.load %arg5[%c4, %c0_32, %c0_33] : memref<9x64x128xbf16, #tpu.memory_space<vmem>>, vector<1x64x128xbf16>
    %33 = vector.shape_cast %32 : vector<1x64x128xbf16> to vector<64x128xbf16>
    %cst_34 = arith.constant dense<0.000000e+00> : vector<16x128xf32>
    %34 = tpu.matmul %31, %33, %cst_34 {dimension_numbers = #tpu.dot_dimension_numbers<[1], [0], [0], [1], [0, 0, 1, 1], [], []>} : vector<16x64xbf16>, vector<64x128xbf16>, vector<16x128xf32> -> vector<16x128xf32>
    %35 = arith.addf %28, %34 : vector<16x128xf32>
    %c0_35 = arith.constant 0 : index
    %c0_36 = arith.constant 0 : index
    %c1_37 = arith.constant 1 : index
    %c0_38 = arith.constant 0 : index
    %36 = vector.load %arg3[%c0_35, %c0_36, %c1_37, %c0_38] : memref<1x5x5x64xbf16, #tpu.memory_space<vmem>>, vector<1x4x4x64xbf16>
    %37 = vector.shape_cast %36 : vector<1x4x4x64xbf16> to vector<4x4x64xbf16>
    %38 = vector.shape_cast %37 : vector<4x4x64xbf16> to vector<16x64xbf16>
    %c5 = arith.constant 5 : index
    %c0_39 = arith.constant 0 : index
    %c0_40 = arith.constant 0 : index
    %39 = vector.load %arg5[%c5, %c0_39, %c0_40] : memref<9x64x128xbf16, #tpu.memory_space<vmem>>, vector<1x64x128xbf16>
    %40 = vector.shape_cast %39 : vector<1x64x128xbf16> to vector<64x128xbf16>
    %cst_41 = arith.constant dense<0.000000e+00> : vector<16x128xf32>
    %41 = tpu.matmul %38, %40, %cst_41 {dimension_numbers = #tpu.dot_dimension_numbers<[1], [0], [0], [1], [0, 0, 1, 1], [], []>} : vector<16x64xbf16>, vector<64x128xbf16>, vector<16x128xf32> -> vector<16x128xf32>
    %42 = arith.addf %35, %41 : vector<16x128xf32>
    %c0_42 = arith.constant 0 : index
    %c1_43 = arith.constant 1 : index
    %c0_44 = arith.constant 0 : index
    %c0_45 = arith.constant 0 : index
    %43 = vector.load %arg1[%c0_42, %c1_43, %c0_44, %c0_45] : memref<1x5x5x64xbf16, #tpu.memory_space<vmem>>, vector<1x4x4x64xbf16>
    %44 = vector.shape_cast %43 : vector<1x4x4x64xbf16> to vector<4x4x64xbf16>
    %45 = vector.shape_cast %44 : vector<4x4x64xbf16> to vector<16x64xbf16>
    %c6 = arith.constant 6 : index
    %c0_46 = arith.constant 0 : index
    %c0_47 = arith.constant 0 : index
    %46 = vector.load %arg5[%c6, %c0_46, %c0_47] : memref<9x64x128xbf16, #tpu.memory_space<vmem>>, vector<1x64x128xbf16>
    %47 = vector.shape_cast %46 : vector<1x64x128xbf16> to vector<64x128xbf16>
    %cst_48 = arith.constant dense<0.000000e+00> : vector<16x128xf32>
    %48 = tpu.matmul %45, %47, %cst_48 {dimension_numbers = #tpu.dot_dimension_numbers<[1], [0], [0], [1], [0, 0, 1, 1], [], []>} : vector<16x64xbf16>, vector<64x128xbf16>, vector<16x128xf32> -> vector<16x128xf32>
    %49 = arith.addf %42, %48 : vector<16x128xf32>
    %c0_49 = arith.constant 0 : index
    %c1_50 = arith.constant 1 : index
    %c0_51 = arith.constant 0 : index
    %c0_52 = arith.constant 0 : index
    %50 = vector.load %arg2[%c0_49, %c1_50, %c0_51, %c0_52] : memref<1x5x5x64xbf16, #tpu.memory_space<vmem>>, vector<1x4x4x64xbf16>
    %51 = vector.shape_cast %50 : vector<1x4x4x64xbf16> to vector<4x4x64xbf16>
    %52 = vector.shape_cast %51 : vector<4x4x64xbf16> to vector<16x64xbf16>
    %c7 = arith.constant 7 : index
    %c0_53 = arith.constant 0 : index
    %c0_54 = arith.constant 0 : index
    %53 = vector.load %arg5[%c7, %c0_53, %c0_54] : memref<9x64x128xbf16, #tpu.memory_space<vmem>>, vector<1x64x128xbf16>
    %54 = vector.shape_cast %53 : vector<1x64x128xbf16> to vector<64x128xbf16>
    %cst_55 = arith.constant dense<0.000000e+00> : vector<16x128xf32>
    %55 = tpu.matmul %52, %54, %cst_55 {dimension_numbers = #tpu.dot_dimension_numbers<[1], [0], [0], [1], [0, 0, 1, 1], [], []>} : vector<16x64xbf16>, vector<64x128xbf16>, vector<16x128xf32> -> vector<16x128xf32>
    %56 = arith.addf %49, %55 : vector<16x128xf32>
    %c0_56 = arith.constant 0 : index
    %c1_57 = arith.constant 1 : index
    %c1_58 = arith.constant 1 : index
    %c0_59 = arith.constant 0 : index
    %57 = vector.load %arg1[%c0_56, %c1_57, %c1_58, %c0_59] : memref<1x5x5x64xbf16, #tpu.memory_space<vmem>>, vector<1x4x4x64xbf16>
    %58 = vector.shape_cast %57 : vector<1x4x4x64xbf16> to vector<4x4x64xbf16>
    %59 = vector.shape_cast %58 : vector<4x4x64xbf16> to vector<16x64xbf16>
    %c8 = arith.constant 8 : index
    %c0_60 = arith.constant 0 : index
    %c0_61 = arith.constant 0 : index
    %60 = vector.load %arg5[%c8, %c0_60, %c0_61] : memref<9x64x128xbf16, #tpu.memory_space<vmem>>, vector<1x64x128xbf16>
    %61 = vector.shape_cast %60 : vector<1x64x128xbf16> to vector<64x128xbf16>
    %cst_62 = arith.constant dense<0.000000e+00> : vector<16x128xf32>
    %62 = tpu.matmul %59, %61, %cst_62 {dimension_numbers = #tpu.dot_dimension_numbers<[1], [0], [0], [1], [0, 0, 1, 1], [], []>} : vector<16x64xbf16>, vector<64x128xbf16>, vector<16x128xf32> -> vector<16x128xf32>
    %63 = arith.addf %56, %62 : vector<16x128xf32>
    %c0_63 = arith.constant 0 : index
    %c0_64 = arith.constant 0 : index
    %64 = vector.load %arg6[%c0_63, %c0_64] : memref<1x128xf32, #tpu.memory_space<vmem>>, vector<1x128xf32>
    %65 = vector.broadcast %64 : vector<1x128xf32> to vector<16x128xf32>
    %66 = arith.addf %63, %65 : vector<16x128xf32>
    %cst_65 = arith.constant 0.000000e+00 : f32
    %67 = vector.broadcast %cst_65 : f32 to vector<16x128xf32>
    %68 = arith.maximumf %66, %67 : vector<16x128xf32>
    %69 = vector.shape_cast %68 : vector<16x128xf32> to vector<4x4x128xf32>
    %70 = arith.truncf %69 : vector<4x4x128xf32> to vector<4x4x128xbf16>
    %c0_66 = arith.constant 0 : index
    %c0_67 = arith.constant 0 : index
    %c0_68 = arith.constant 0 : index
    %c0_69 = arith.constant 0 : index
    %71 = vector.load %arg7[%c0_66, %c0_67, %c0_68, %c0_69] : memref<1x4x4x128xbf16, #tpu.memory_space<vmem>>, vector<1x4x4x128xbf16>
    %72 = vector.shape_cast %71 : vector<1x4x4x128xbf16> to vector<4x4x128xbf16>
    %73 = vector.shape_cast %70 : vector<4x4x128xbf16> to vector<1x4x4x128xbf16>
    tpu.vector_store %arg7[%c0_66, %c0_67, %c0_68, %c0_69], %73 {strides = array<i32>} : memref<1x4x4x128xbf16, #tpu.memory_space<vmem>>, vector<1x4x4x128xbf16>,
    return
  }
  func.func @transform_0(%arg0: i32) -> (i32, i32, i32, i32) {
    %c0_i32 = arith.constant 0 : i32
    %c0_i32_0 = arith.constant 0 : i32
    %c0_i32_1 = arith.constant 0 : i32
    %c0_i32_2 = arith.constant 0 : i32
    return %arg0, %c0_i32, %c0_i32_0, %c0_i32_1 : i32, i32, i32, i32
  }
  func.func @transform_1(%arg0: i32) -> (i32, i32, i32, i32) {
    %c0_i32 = arith.constant 0 : i32
    %c0_i32_0 = arith.constant 0 : i32
    %c0_i32_1 = arith.constant 0 : i32
    %c0_i32_2 = arith.constant 0 : i32
    return %arg0, %c0_i32, %c0_i32_0, %c0_i32_1 : i32, i32, i32, i32
  }
  func.func @transform_2(%arg0: i32) -> (i32, i32, i32, i32) {
    %c0_i32 = arith.constant 0 : i32
    %c0_i32_0 = arith.constant 0 : i32
    %c0_i32_1 = arith.constant 0 : i32
    %c0_i32_2 = arith.constant 0 : i32
    return %arg0, %c0_i32, %c0_i32_0, %c0_i32_1 : i32, i32, i32, i32
  }
  func.func @transform_3(%arg0: i32) -> (i32, i32, i32, i32) {
    %c0_i32 = arith.constant 0 : i32
    %c0_i32_0 = arith.constant 0 : i32
    %c0_i32_1 = arith.constant 0 : i32
    %c0_i32_2 = arith.constant 0 : i32
    return %arg0, %c0_i32, %c0_i32_0, %c0_i32_1 : i32, i32, i32, i32
  }
  func.func @transform_4(%arg0: i32) -> (i32, i32, i32) {
    %c0_i32 = arith.constant 0 : i32
    %c0_i32_0 = arith.constant 0 : i32
    %c0_i32_1 = arith.constant 0 : i32
    %c0_i32_2 = arith.constant 0 : i32
    return %c0_i32, %c0_i32_0, %c0_i32_1 : i32, i32, i32
  }
  func.func @transform_5(%arg0: i32) -> (i32, i32) {
    %c0_i32 = arith.constant 0 : i32
    %c0_i32_0 = arith.constant 0 : i32
    %c0_i32_1 = arith.constant 0 : i32
    return %c0_i32, %c0_i32_0 : i32, i32
  }
  func.func @transform_6(%arg0: i32) -> (i32, i32, i32, i32) {
    %c0_i32 = arith.constant 0 : i32
    %c0_i32_0 = arith.constant 0 : i32
    %c0_i32_1 = arith.constant 0 : i32
    %c0_i32_2 = arith.constant 0 : i32
    return %arg0, %c0_i32, %c0_i32_0, %c0_i32_1 : i32, i32, i32, i32
  }
}

module attributes {stable_mosaic.version = 11 : i64} {
  func.func @_conv_s2_kernel(%arg0: i32, %arg1: memref<1x3x3x128xbf16, #tpu.memory_space<vmem>>, %arg2: memref<1x3x3x128xbf16, #tpu.memory_space<vmem>>, %arg3: memref<1x3x3x128xbf16, #tpu.memory_space<vmem>>, %arg4: memref<1x3x3x128xbf16, #tpu.memory_space<vmem>>, %arg5: memref<9x128x256xbf16, #tpu.memory_space<vmem>>, %arg6: memref<1x256xf32, #tpu.memory_space<vmem>>, %arg7: memref<1x2x2x256xbf16, #tpu.memory_space<vmem>>) attributes {dimension_semantics = [#tpu.dimension_semantics<parallel>], iteration_bounds = array<i64: 2>, scalar_prefetch = 0 : i64, scratch_operands = 0 : i64, tpu.core_type = #tpu.core_type<tc>, window_params = [{transform_indices = @transform_0, window_bounds = array<i64: 1, 3, 3, 128>}, {transform_indices = @transform_1, window_bounds = array<i64: 1, 3, 3, 128>}, {transform_indices = @transform_2, window_bounds = array<i64: 1, 3, 3, 128>}, {transform_indices = @transform_3, window_bounds = array<i64: 1, 3, 3, 128>}, {pipeline_mode = #tpu.pipeline_mode<synchronous>, transform_indices = @transform_4, window_bounds = array<i64: 9, 128, 256>}, {pipeline_mode = #tpu.pipeline_mode<synchronous>, transform_indices = @transform_5, window_bounds = array<i64: 1, 256>}, {transform_indices = @transform_6, window_bounds = array<i64: 1, 2, 2, 256>}]} {
    %cst = arith.constant 0.000000e+00 : f32
    %0 = vector.broadcast %cst : f32 to vector<4x256xf32>
    %c0 = arith.constant 0 : index
    %c0_0 = arith.constant 0 : index
    %c0_1 = arith.constant 0 : index
    %c0_2 = arith.constant 0 : index
    %1 = vector.load %arg1[%c0, %c0_0, %c0_1, %c0_2] : memref<1x3x3x128xbf16, #tpu.memory_space<vmem>>, vector<1x2x2x128xbf16>
    %2 = vector.shape_cast %1 : vector<1x2x2x128xbf16> to vector<2x2x128xbf16>
    %3 = vector.shape_cast %2 : vector<2x2x128xbf16> to vector<4x128xbf16>
    %c0_3 = arith.constant 0 : index
    %c0_4 = arith.constant 0 : index
    %c0_5 = arith.constant 0 : index
    %4 = vector.load %arg5[%c0_3, %c0_4, %c0_5] : memref<9x128x256xbf16, #tpu.memory_space<vmem>>, vector<1x128x256xbf16>
    %5 = vector.shape_cast %4 : vector<1x128x256xbf16> to vector<128x256xbf16>
    %cst_6 = arith.constant dense<0.000000e+00> : vector<4x256xf32>
    %6 = tpu.matmul %3, %5, %cst_6 {dimension_numbers = #tpu.dot_dimension_numbers<[1], [0], [0], [1], [0, 0, 1, 1], [], []>} : vector<4x128xbf16>, vector<128x256xbf16>, vector<4x256xf32> -> vector<4x256xf32>
    %7 = arith.addf %0, %6 : vector<4x256xf32>
    %c0_7 = arith.constant 0 : index
    %c0_8 = arith.constant 0 : index
    %c0_9 = arith.constant 0 : index
    %c0_10 = arith.constant 0 : index
    %8 = vector.load %arg2[%c0_7, %c0_8, %c0_9, %c0_10] : memref<1x3x3x128xbf16, #tpu.memory_space<vmem>>, vector<1x2x2x128xbf16>
    %9 = vector.shape_cast %8 : vector<1x2x2x128xbf16> to vector<2x2x128xbf16>
    %10 = vector.shape_cast %9 : vector<2x2x128xbf16> to vector<4x128xbf16>
    %c1 = arith.constant 1 : index
    %c0_11 = arith.constant 0 : index
    %c0_12 = arith.constant 0 : index
    %11 = vector.load %arg5[%c1, %c0_11, %c0_12] : memref<9x128x256xbf16, #tpu.memory_space<vmem>>, vector<1x128x256xbf16>
    %12 = vector.shape_cast %11 : vector<1x128x256xbf16> to vector<128x256xbf16>
    %cst_13 = arith.constant dense<0.000000e+00> : vector<4x256xf32>
    %13 = tpu.matmul %10, %12, %cst_13 {dimension_numbers = #tpu.dot_dimension_numbers<[1], [0], [0], [1], [0, 0, 1, 1], [], []>} : vector<4x128xbf16>, vector<128x256xbf16>, vector<4x256xf32> -> vector<4x256xf32>
    %14 = arith.addf %7, %13 : vector<4x256xf32>
    %c0_14 = arith.constant 0 : index
    %c0_15 = arith.constant 0 : index
    %c1_16 = arith.constant 1 : index
    %c0_17 = arith.constant 0 : index
    %15 = vector.load %arg1[%c0_14, %c0_15, %c1_16, %c0_17] : memref<1x3x3x128xbf16, #tpu.memory_space<vmem>>, vector<1x2x2x128xbf16>
    %16 = vector.shape_cast %15 : vector<1x2x2x128xbf16> to vector<2x2x128xbf16>
    %17 = vector.shape_cast %16 : vector<2x2x128xbf16> to vector<4x128xbf16>
    %c2 = arith.constant 2 : index
    %c0_18 = arith.constant 0 : index
    %c0_19 = arith.constant 0 : index
    %18 = vector.load %arg5[%c2, %c0_18, %c0_19] : memref<9x128x256xbf16, #tpu.memory_space<vmem>>, vector<1x128x256xbf16>
    %19 = vector.shape_cast %18 : vector<1x128x256xbf16> to vector<128x256xbf16>
    %cst_20 = arith.constant dense<0.000000e+00> : vector<4x256xf32>
    %20 = tpu.matmul %17, %19, %cst_20 {dimension_numbers = #tpu.dot_dimension_numbers<[1], [0], [0], [1], [0, 0, 1, 1], [], []>} : vector<4x128xbf16>, vector<128x256xbf16>, vector<4x256xf32> -> vector<4x256xf32>
    %21 = arith.addf %14, %20 : vector<4x256xf32>
    %c0_21 = arith.constant 0 : index
    %c0_22 = arith.constant 0 : index
    %c0_23 = arith.constant 0 : index
    %c0_24 = arith.constant 0 : index
    %22 = vector.load %arg3[%c0_21, %c0_22, %c0_23, %c0_24] : memref<1x3x3x128xbf16, #tpu.memory_space<vmem>>, vector<1x2x2x128xbf16>
    %23 = vector.shape_cast %22 : vector<1x2x2x128xbf16> to vector<2x2x128xbf16>
    %24 = vector.shape_cast %23 : vector<2x2x128xbf16> to vector<4x128xbf16>
    %c3 = arith.constant 3 : index
    %c0_25 = arith.constant 0 : index
    %c0_26 = arith.constant 0 : index
    %25 = vector.load %arg5[%c3, %c0_25, %c0_26] : memref<9x128x256xbf16, #tpu.memory_space<vmem>>, vector<1x128x256xbf16>
    %26 = vector.shape_cast %25 : vector<1x128x256xbf16> to vector<128x256xbf16>
    %cst_27 = arith.constant dense<0.000000e+00> : vector<4x256xf32>
    %27 = tpu.matmul %24, %26, %cst_27 {dimension_numbers = #tpu.dot_dimension_numbers<[1], [0], [0], [1], [0, 0, 1, 1], [], []>} : vector<4x128xbf16>, vector<128x256xbf16>, vector<4x256xf32> -> vector<4x256xf32>
    %28 = arith.addf %21, %27 : vector<4x256xf32>
    %c0_28 = arith.constant 0 : index
    %c0_29 = arith.constant 0 : index
    %c0_30 = arith.constant 0 : index
    %c0_31 = arith.constant 0 : index
    %29 = vector.load %arg4[%c0_28, %c0_29, %c0_30, %c0_31] : memref<1x3x3x128xbf16, #tpu.memory_space<vmem>>, vector<1x2x2x128xbf16>
    %30 = vector.shape_cast %29 : vector<1x2x2x128xbf16> to vector<2x2x128xbf16>
    %31 = vector.shape_cast %30 : vector<2x2x128xbf16> to vector<4x128xbf16>
    %c4 = arith.constant 4 : index
    %c0_32 = arith.constant 0 : index
    %c0_33 = arith.constant 0 : index
    %32 = vector.load %arg5[%c4, %c0_32, %c0_33] : memref<9x128x256xbf16, #tpu.memory_space<vmem>>, vector<1x128x256xbf16>
    %33 = vector.shape_cast %32 : vector<1x128x256xbf16> to vector<128x256xbf16>
    %cst_34 = arith.constant dense<0.000000e+00> : vector<4x256xf32>
    %34 = tpu.matmul %31, %33, %cst_34 {dimension_numbers = #tpu.dot_dimension_numbers<[1], [0], [0], [1], [0, 0, 1, 1], [], []>} : vector<4x128xbf16>, vector<128x256xbf16>, vector<4x256xf32> -> vector<4x256xf32>
    %35 = arith.addf %28, %34 : vector<4x256xf32>
    %c0_35 = arith.constant 0 : index
    %c0_36 = arith.constant 0 : index
    %c1_37 = arith.constant 1 : index
    %c0_38 = arith.constant 0 : index
    %36 = vector.load %arg3[%c0_35, %c0_36, %c1_37, %c0_38] : memref<1x3x3x128xbf16, #tpu.memory_space<vmem>>, vector<1x2x2x128xbf16>
    %37 = vector.shape_cast %36 : vector<1x2x2x128xbf16> to vector<2x2x128xbf16>
    %38 = vector.shape_cast %37 : vector<2x2x128xbf16> to vector<4x128xbf16>
    %c5 = arith.constant 5 : index
    %c0_39 = arith.constant 0 : index
    %c0_40 = arith.constant 0 : index
    %39 = vector.load %arg5[%c5, %c0_39, %c0_40] : memref<9x128x256xbf16, #tpu.memory_space<vmem>>, vector<1x128x256xbf16>
    %40 = vector.shape_cast %39 : vector<1x128x256xbf16> to vector<128x256xbf16>
    %cst_41 = arith.constant dense<0.000000e+00> : vector<4x256xf32>
    %41 = tpu.matmul %38, %40, %cst_41 {dimension_numbers = #tpu.dot_dimension_numbers<[1], [0], [0], [1], [0, 0, 1, 1], [], []>} : vector<4x128xbf16>, vector<128x256xbf16>, vector<4x256xf32> -> vector<4x256xf32>
    %42 = arith.addf %35, %41 : vector<4x256xf32>
    %c0_42 = arith.constant 0 : index
    %c1_43 = arith.constant 1 : index
    %c0_44 = arith.constant 0 : index
    %c0_45 = arith.constant 0 : index
    %43 = vector.load %arg1[%c0_42, %c1_43, %c0_44, %c0_45] : memref<1x3x3x128xbf16, #tpu.memory_space<vmem>>, vector<1x2x2x128xbf16>
    %44 = vector.shape_cast %43 : vector<1x2x2x128xbf16> to vector<2x2x128xbf16>
    %45 = vector.shape_cast %44 : vector<2x2x128xbf16> to vector<4x128xbf16>
    %c6 = arith.constant 6 : index
    %c0_46 = arith.constant 0 : index
    %c0_47 = arith.constant 0 : index
    %46 = vector.load %arg5[%c6, %c0_46, %c0_47] : memref<9x128x256xbf16, #tpu.memory_space<vmem>>, vector<1x128x256xbf16>
    %47 = vector.shape_cast %46 : vector<1x128x256xbf16> to vector<128x256xbf16>
    %cst_48 = arith.constant dense<0.000000e+00> : vector<4x256xf32>
    %48 = tpu.matmul %45, %47, %cst_48 {dimension_numbers = #tpu.dot_dimension_numbers<[1], [0], [0], [1], [0, 0, 1, 1], [], []>} : vector<4x128xbf16>, vector<128x256xbf16>, vector<4x256xf32> -> vector<4x256xf32>
    %49 = arith.addf %42, %48 : vector<4x256xf32>
    %c0_49 = arith.constant 0 : index
    %c1_50 = arith.constant 1 : index
    %c0_51 = arith.constant 0 : index
    %c0_52 = arith.constant 0 : index
    %50 = vector.load %arg2[%c0_49, %c1_50, %c0_51, %c0_52] : memref<1x3x3x128xbf16, #tpu.memory_space<vmem>>, vector<1x2x2x128xbf16>
    %51 = vector.shape_cast %50 : vector<1x2x2x128xbf16> to vector<2x2x128xbf16>
    %52 = vector.shape_cast %51 : vector<2x2x128xbf16> to vector<4x128xbf16>
    %c7 = arith.constant 7 : index
    %c0_53 = arith.constant 0 : index
    %c0_54 = arith.constant 0 : index
    %53 = vector.load %arg5[%c7, %c0_53, %c0_54] : memref<9x128x256xbf16, #tpu.memory_space<vmem>>, vector<1x128x256xbf16>
    %54 = vector.shape_cast %53 : vector<1x128x256xbf16> to vector<128x256xbf16>
    %cst_55 = arith.constant dense<0.000000e+00> : vector<4x256xf32>
    %55 = tpu.matmul %52, %54, %cst_55 {dimension_numbers = #tpu.dot_dimension_numbers<[1], [0], [0], [1], [0, 0, 1, 1], [], []>} : vector<4x128xbf16>, vector<128x256xbf16>, vector<4x256xf32> -> vector<4x256xf32>
    %56 = arith.addf %49, %55 : vector<4x256xf32>
    %c0_56 = arith.constant 0 : index
    %c1_57 = arith.constant 1 : index
    %c1_58 = arith.constant 1 : index
    %c0_59 = arith.constant 0 : index
    %57 = vector.load %arg1[%c0_56, %c1_57, %c1_58, %c0_59] : memref<1x3x3x128xbf16, #tpu.memory_space<vmem>>, vector<1x2x2x128xbf16>
    %58 = vector.shape_cast %57 : vector<1x2x2x128xbf16> to vector<2x2x128xbf16>
    %59 = vector.shape_cast %58 : vector<2x2x128xbf16> to vector<4x128xbf16>
    %c8 = arith.constant 8 : index
    %c0_60 = arith.constant 0 : index
    %c0_61 = arith.constant 0 : index
    %60 = vector.load %arg5[%c8, %c0_60, %c0_61] : memref<9x128x256xbf16, #tpu.memory_space<vmem>>, vector<1x128x256xbf16>
    %61 = vector.shape_cast %60 : vector<1x128x256xbf16> to vector<128x256xbf16>
    %cst_62 = arith.constant dense<0.000000e+00> : vector<4x256xf32>
    %62 = tpu.matmul %59, %61, %cst_62 {dimension_numbers = #tpu.dot_dimension_numbers<[1], [0], [0], [1], [0, 0, 1, 1], [], []>} : vector<4x128xbf16>, vector<128x256xbf16>, vector<4x256xf32> -> vector<4x256xf32>
    %63 = arith.addf %56, %62 : vector<4x256xf32>
    %c0_63 = arith.constant 0 : index
    %c0_64 = arith.constant 0 : index
    %64 = vector.load %arg6[%c0_63, %c0_64] : memref<1x256xf32, #tpu.memory_space<vmem>>, vector<1x256xf32>
    %65 = vector.broadcast %64 : vector<1x256xf32> to vector<4x256xf32>
    %66 = arith.addf %63, %65 : vector<4x256xf32>
    %cst_65 = arith.constant 0.000000e+00 : f32
    %67 = vector.broadcast %cst_65 : f32 to vector<4x256xf32>
    %68 = arith.maximumf %66, %67 : vector<4x256xf32>
    %69 = vector.shape_cast %68 : vector<4x256xf32> to vector<2x2x256xf32>
    %70 = arith.truncf %69 : vector<2x2x256xf32> to vector<2x2x256xbf16>
    %c0_66 = arith.constant 0 : index
    %c0_67 = arith.constant 0 : index
    %c0_68 = arith.constant 0 : index
    %c0_69 = arith.constant 0 : index
    %71 = vector.load %arg7[%c0_66, %c0_67, %c0_68, %c0_69] : memref<1x2x2x256xbf16, #tpu.memory_space<vmem>>, vector<1x2x2x256xbf16>
    %72 = vector.shape_cast %71 : vector<1x2x2x256xbf16> to vector<2x2x256xbf16>
    %73 = vector.shape_cast %70 : vector<2x2x256xbf16> to vector<1x2x2x256xbf16>
    tpu.vector_store %arg7[%c0_66, %c0_67, %c0_68, %c0_69], %73 {strides = array<i32>} : memref<1x2x2x256xbf16, #tpu.memory_space<vmem>>, vector<1x2x2x256xbf16>,
    return
  }
  func.func @transform_0(%arg0: i32) -> (i32, i32, i32, i32) {
    %c0_i32 = arith.constant 0 : i32
    %c0_i32_0 = arith.constant 0 : i32
    %c0_i32_1 = arith.constant 0 : i32
    %c0_i32_2 = arith.constant 0 : i32
    return %arg0, %c0_i32, %c0_i32_0, %c0_i32_1 : i32, i32, i32, i32
  }
  func.func @transform_1(%arg0: i32) -> (i32, i32, i32, i32) {
    %c0_i32 = arith.constant 0 : i32
    %c0_i32_0 = arith.constant 0 : i32
    %c0_i32_1 = arith.constant 0 : i32
    %c0_i32_2 = arith.constant 0 : i32
    return %arg0, %c0_i32, %c0_i32_0, %c0_i32_1 : i32, i32, i32, i32
  }
  func.func @transform_2(%arg0: i32) -> (i32, i32, i32, i32) {
    %c0_i32 = arith.constant 0 : i32
    %c0_i32_0 = arith.constant 0 : i32
    %c0_i32_1 = arith.constant 0 : i32
    %c0_i32_2 = arith.constant 0 : i32
    return %arg0, %c0_i32, %c0_i32_0, %c0_i32_1 : i32, i32, i32, i32
  }
  func.func @transform_3(%arg0: i32) -> (i32, i32, i32, i32) {
    %c0_i32 = arith.constant 0 : i32
    %c0_i32_0 = arith.constant 0 : i32
    %c0_i32_1 = arith.constant 0 : i32
    %c0_i32_2 = arith.constant 0 : i32
    return %arg0, %c0_i32, %c0_i32_0, %c0_i32_1 : i32, i32, i32, i32
  }
  func.func @transform_4(%arg0: i32) -> (i32, i32, i32) {
    %c0_i32 = arith.constant 0 : i32
    %c0_i32_0 = arith.constant 0 : i32
    %c0_i32_1 = arith.constant 0 : i32
    %c0_i32_2 = arith.constant 0 : i32
    return %c0_i32, %c0_i32_0, %c0_i32_1 : i32, i32, i32
  }
  func.func @transform_5(%arg0: i32) -> (i32, i32) {
    %c0_i32 = arith.constant 0 : i32
    %c0_i32_0 = arith.constant 0 : i32
    %c0_i32_1 = arith.constant 0 : i32
    return %c0_i32, %c0_i32_0 : i32, i32
  }
  func.func @transform_6(%arg0: i32) -> (i32, i32, i32, i32) {
    %c0_i32 = arith.constant 0 : i32
    %c0_i32_0 = arith.constant 0 : i32
    %c0_i32_1 = arith.constant 0 : i32
    %c0_i32_2 = arith.constant 0 : i32
    return %arg0, %c0_i32, %c0_i32_0, %c0_i32_1 : i32, i32, i32, i32
  }
}

module attributes {stable_mosaic.version = 11 : i64} {
  func.func @_convt_s2_kernel(%arg0: i32, %arg1: memref<1x3x3x256xbf16, #tpu.memory_space<vmem>>, %arg2: memref<256x512xbf16, #tpu.memory_space<vmem>>, %arg3: memref<256x256xbf16, #tpu.memory_space<vmem>>, %arg4: memref<256x256xbf16, #tpu.memory_space<vmem>>, %arg5: memref<256x128xbf16, #tpu.memory_space<vmem>>, %arg6: memref<1x128xf32, #tpu.memory_space<vmem>>, %arg7: memref<1x2x2x2x256xbf16, #tpu.memory_space<vmem>>) attributes {dimension_semantics = [#tpu.dimension_semantics<parallel>], iteration_bounds = array<i64: 2>, scalar_prefetch = 0 : i64, scratch_operands = 0 : i64, tpu.core_type = #tpu.core_type<tc>, window_params = [{transform_indices = @transform_0, window_bounds = array<i64: 1, 3, 3, 256>}, {pipeline_mode = #tpu.pipeline_mode<synchronous>, transform_indices = @transform_1, window_bounds = array<i64: 256, 512>}, {pipeline_mode = #tpu.pipeline_mode<synchronous>, transform_indices = @transform_2, window_bounds = array<i64: 256, 256>}, {pipeline_mode = #tpu.pipeline_mode<synchronous>, transform_indices = @transform_3, window_bounds = array<i64: 256, 256>}, {pipeline_mode = #tpu.pipeline_mode<synchronous>, transform_indices = @transform_4, window_bounds = array<i64: 256, 128>}, {pipeline_mode = #tpu.pipeline_mode<synchronous>, transform_indices = @transform_5, window_bounds = array<i64: 1, 128>}, {transform_indices = @transform_6, window_bounds = array<i64: 1, 2, 2, 2, 256>}]} {
    %c0 = arith.constant 0 : index
    %c0_0 = arith.constant 0 : index
    %c0_1 = arith.constant 0 : index
    %c0_2 = arith.constant 0 : index
    %0 = vector.load %arg1[%c0, %c0_0, %c0_1, %c0_2] : memref<1x3x3x256xbf16, #tpu.memory_space<vmem>>, vector<1x2x2x256xbf16>
    %1 = vector.shape_cast %0 : vector<1x2x2x256xbf16> to vector<2x2x256xbf16>
    %2 = vector.shape_cast %1 : vector<2x2x256xbf16> to vector<4x256xbf16>
    %c0_3 = arith.constant 0 : index
    %c0_4 = arith.constant 0 : index
    %c1 = arith.constant 1 : index
    %c0_5 = arith.constant 0 : index
    %3 = vector.load %arg1[%c0_3, %c0_4, %c1, %c0_5] : memref<1x3x3x256xbf16, #tpu.memory_space<vmem>>, vector<1x2x2x256xbf16>
    %4 = vector.shape_cast %3 : vector<1x2x2x256xbf16> to vector<2x2x256xbf16>
    %5 = vector.shape_cast %4 : vector<2x2x256xbf16> to vector<4x256xbf16>
    %c0_6 = arith.constant 0 : index
    %c1_7 = arith.constant 1 : index
    %c0_8 = arith.constant 0 : index
    %c0_9 = arith.constant 0 : index
    %6 = vector.load %arg1[%c0_6, %c1_7, %c0_8, %c0_9] : memref<1x3x3x256xbf16, #tpu.memory_space<vmem>>, vector<1x2x2x256xbf16>
    %7 = vector.shape_cast %6 : vector<1x2x2x256xbf16> to vector<2x2x256xbf16>
    %8 = vector.shape_cast %7 : vector<2x2x256xbf16> to vector<4x256xbf16>
    %c0_10 = arith.constant 0 : index
    %c1_11 = arith.constant 1 : index
    %c1_12 = arith.constant 1 : index
    %c0_13 = arith.constant 0 : index
    %9 = vector.load %arg1[%c0_10, %c1_11, %c1_12, %c0_13] : memref<1x3x3x256xbf16, #tpu.memory_space<vmem>>, vector<1x2x2x256xbf16>
    %10 = vector.shape_cast %9 : vector<1x2x2x256xbf16> to vector<2x2x256xbf16>
    %11 = vector.shape_cast %10 : vector<2x2x256xbf16> to vector<4x256xbf16>
    %c0_14 = arith.constant 0 : index
    %c0_15 = arith.constant 0 : index
    %12 = vector.load %arg2[%c0_14, %c0_15] : memref<256x512xbf16, #tpu.memory_space<vmem>>, vector<256x512xbf16>
    %cst = arith.constant dense<0.000000e+00> : vector<4x512xf32>
    %13 = tpu.matmul %2, %12, %cst {dimension_numbers = #tpu.dot_dimension_numbers<[1], [0], [0], [1], [0, 0, 1, 1], [], []>} : vector<4x256xbf16>, vector<256x512xbf16>, vector<4x512xf32> -> vector<4x512xf32>
    %c0_16 = arith.constant 0 : index
    %c0_17 = arith.constant 0 : index
    %14 = vector.load %arg3[%c0_16, %c0_17] : memref<256x256xbf16, #tpu.memory_space<vmem>>, vector<256x256xbf16>
    %cst_18 = arith.constant dense<0.000000e+00> : vector<4x256xf32>
    %15 = tpu.matmul %5, %14, %cst_18 {dimension_numbers = #tpu.dot_dimension_numbers<[1], [0], [0], [1], [0, 0, 1, 1], [], []>} : vector<4x256xbf16>, vector<256x256xbf16>, vector<4x256xf32> -> vector<4x256xf32>
    %c0_19 = arith.constant 0 : index
    %c0_20 = arith.constant 0 : index
    %16 = vector.load %arg4[%c0_19, %c0_20] : memref<256x256xbf16, #tpu.memory_space<vmem>>, vector<256x256xbf16>
    %cst_21 = arith.constant dense<0.000000e+00> : vector<4x256xf32>
    %17 = tpu.matmul %8, %16, %cst_21 {dimension_numbers = #tpu.dot_dimension_numbers<[1], [0], [0], [1], [0, 0, 1, 1], [], []>} : vector<4x256xbf16>, vector<256x256xbf16>, vector<4x256xf32> -> vector<4x256xf32>
    %c0_22 = arith.constant 0 : index
    %c0_23 = arith.constant 0 : index
    %18 = vector.load %arg5[%c0_22, %c0_23] : memref<256x128xbf16, #tpu.memory_space<vmem>>, vector<256x128xbf16>
    %cst_24 = arith.constant dense<0.000000e+00> : vector<4x128xf32>
    %19 = tpu.matmul %11, %18, %cst_24 {dimension_numbers = #tpu.dot_dimension_numbers<[1], [0], [0], [1], [0, 0, 1, 1], [], []>} : vector<4x256xbf16>, vector<256x128xbf16>, vector<4x128xf32> -> vector<4x128xf32>
    %c0_25 = arith.constant 0 : index
    %c0_26 = arith.constant 0 : index
    %20 = vector.load %arg6[%c0_25, %c0_26] : memref<1x128xf32, #tpu.memory_space<vmem>>, vector<1x128xf32>
    %21 = vector.extract_strided_slice %13 {offsets = [0, 0], sizes = [4, 128], strides = [1, 1]} : vector<4x512xf32> to vector<4x128xf32>
    %22 = vector.broadcast %20 : vector<1x128xf32> to vector<4x128xf32>
    %23 = arith.addf %21, %22 : vector<4x128xf32>
    %24 = vector.extract_strided_slice %13 {offsets = [0, 128], sizes = [4, 128], strides = [1, 1]} : vector<4x512xf32> to vector<4x128xf32>
    %25 = vector.extract_strided_slice %15 {offsets = [0, 0], sizes = [4, 128], strides = [1, 1]} : vector<4x256xf32> to vector<4x128xf32>
    %26 = arith.addf %24, %25 : vector<4x128xf32>
    %27 = vector.broadcast %20 : vector<1x128xf32> to vector<4x128xf32>
    %28 = arith.addf %26, %27 : vector<4x128xf32>
    %29 = vector.extract_strided_slice %13 {offsets = [0, 256], sizes = [4, 128], strides = [1, 1]} : vector<4x512xf32> to vector<4x128xf32>
    %30 = vector.extract_strided_slice %17 {offsets = [0, 0], sizes = [4, 128], strides = [1, 1]} : vector<4x256xf32> to vector<4x128xf32>
    %31 = arith.addf %29, %30 : vector<4x128xf32>
    %32 = vector.broadcast %20 : vector<1x128xf32> to vector<4x128xf32>
    %33 = arith.addf %31, %32 : vector<4x128xf32>
    %34 = vector.extract_strided_slice %13 {offsets = [0, 384], sizes = [4, 128], strides = [1, 1]} : vector<4x512xf32> to vector<4x128xf32>
    %35 = vector.extract_strided_slice %15 {offsets = [0, 128], sizes = [4, 128], strides = [1, 1]} : vector<4x256xf32> to vector<4x128xf32>
    %36 = arith.addf %34, %35 : vector<4x128xf32>
    %37 = vector.extract_strided_slice %17 {offsets = [0, 128], sizes = [4, 128], strides = [1, 1]} : vector<4x256xf32> to vector<4x128xf32>
    %38 = arith.addf %36, %37 : vector<4x128xf32>
    %39 = arith.addf %38, %19 : vector<4x128xf32>
    %40 = vector.broadcast %20 : vector<1x128xf32> to vector<4x128xf32>
    %41 = arith.addf %39, %40 : vector<4x128xf32>
    %cst_27 = arith.constant 0.000000e+00 : f32
    %42 = vector.broadcast %cst_27 : f32 to vector<4x128xf32>
    %43 = arith.maximumf %23, %42 : vector<4x128xf32>
    %cst_28 = arith.constant 0.000000e+00 : f32
    %44 = vector.broadcast %cst_28 : f32 to vector<4x128xf32>
    %45 = arith.maximumf %28, %44 : vector<4x128xf32>
    %cst_29 = arith.constant 0.000000e+00 : f32
    %46 = vector.broadcast %cst_29 : f32 to vector<4x128xf32>
    %47 = arith.maximumf %33, %46 : vector<4x128xf32>
    %cst_30 = arith.constant 0.000000e+00 : f32
    %48 = vector.broadcast %cst_30 : f32 to vector<4x128xf32>
    %49 = arith.maximumf %41, %48 : vector<4x128xf32>
    %50 = tpu.concatenate %43, %45 in 1 : vector<4x128xf32>, vector<4x128xf32> -> vector<4x256xf32>
    %51 = vector.shape_cast %50 : vector<4x256xf32> to vector<2x2x256xf32>
    %52 = tpu.concatenate %47, %49 in 1 : vector<4x128xf32>, vector<4x128xf32> -> vector<4x256xf32>
    %53 = vector.shape_cast %52 : vector<4x256xf32> to vector<2x2x256xf32>
    %54 = arith.truncf %51 : vector<2x2x256xf32> to vector<2x2x256xbf16>
    %c0_31 = arith.constant 0 : index
    %c0_32 = arith.constant 0 : index
    %c0_33 = arith.constant 0 : index
    %c0_34 = arith.constant 0 : index
    %c0_35 = arith.constant 0 : index
    %55 = vector.load %arg7[%c0_31, %c0_32, %c0_33, %c0_34, %c0_35] : memref<1x2x2x2x256xbf16, #tpu.memory_space<vmem>>, vector<1x2x1x2x256xbf16>
    %56 = vector.shape_cast %55 : vector<1x2x1x2x256xbf16> to vector<2x2x256xbf16>
    %57 = vector.shape_cast %54 : vector<2x2x256xbf16> to vector<1x2x1x2x256xbf16>
    tpu.vector_store %arg7[%c0_31, %c0_32, %c0_33, %c0_34, %c0_35], %57 {strides = array<i32>} : memref<1x2x2x2x256xbf16, #tpu.memory_space<vmem>>, vector<1x2x1x2x256xbf16>,
    %58 = arith.truncf %53 : vector<2x2x256xf32> to vector<2x2x256xbf16>
    %c0_36 = arith.constant 0 : index
    %c0_37 = arith.constant 0 : index
    %c1_38 = arith.constant 1 : index
    %c0_39 = arith.constant 0 : index
    %c0_40 = arith.constant 0 : index
    %59 = vector.load %arg7[%c0_36, %c0_37, %c1_38, %c0_39, %c0_40] : memref<1x2x2x2x256xbf16, #tpu.memory_space<vmem>>, vector<1x2x1x2x256xbf16>
    %60 = vector.shape_cast %59 : vector<1x2x1x2x256xbf16> to vector<2x2x256xbf16>
    %61 = vector.shape_cast %58 : vector<2x2x256xbf16> to vector<1x2x1x2x256xbf16>
    tpu.vector_store %arg7[%c0_36, %c0_37, %c1_38, %c0_39, %c0_40], %61 {strides = array<i32>} : memref<1x2x2x2x256xbf16, #tpu.memory_space<vmem>>, vector<1x2x1x2x256xbf16>,
    return
  }
  func.func @transform_0(%arg0: i32) -> (i32, i32, i32, i32) {
    %c0_i32 = arith.constant 0 : i32
    %c0_i32_0 = arith.constant 0 : i32
    %c0_i32_1 = arith.constant 0 : i32
    %c0_i32_2 = arith.constant 0 : i32
    return %arg0, %c0_i32, %c0_i32_0, %c0_i32_1 : i32, i32, i32, i32
  }
  func.func @transform_1(%arg0: i32) -> (i32, i32) {
    %c0_i32 = arith.constant 0 : i32
    %c0_i32_0 = arith.constant 0 : i32
    %c0_i32_1 = arith.constant 0 : i32
    return %c0_i32, %c0_i32_0 : i32, i32
  }
  func.func @transform_2(%arg0: i32) -> (i32, i32) {
    %c0_i32 = arith.constant 0 : i32
    %c0_i32_0 = arith.constant 0 : i32
    %c0_i32_1 = arith.constant 0 : i32
    return %c0_i32, %c0_i32_0 : i32, i32
  }
  func.func @transform_3(%arg0: i32) -> (i32, i32) {
    %c0_i32 = arith.constant 0 : i32
    %c0_i32_0 = arith.constant 0 : i32
    %c0_i32_1 = arith.constant 0 : i32
    return %c0_i32, %c0_i32_0 : i32, i32
  }
  func.func @transform_4(%arg0: i32) -> (i32, i32) {
    %c0_i32 = arith.constant 0 : i32
    %c0_i32_0 = arith.constant 0 : i32
    %c0_i32_1 = arith.constant 0 : i32
    return %c0_i32, %c0_i32_0 : i32, i32
  }
  func.func @transform_5(%arg0: i32) -> (i32, i32) {
    %c0_i32 = arith.constant 0 : i32
    %c0_i32_0 = arith.constant 0 : i32
    %c0_i32_1 = arith.constant 0 : i32
    return %c0_i32, %c0_i32_0 : i32, i32
  }
  func.func @transform_6(%arg0: i32) -> (i32, i32, i32, i32, i32) {
    %c0_i32 = arith.constant 0 : i32
    %c0_i32_0 = arith.constant 0 : i32
    %c0_i32_1 = arith.constant 0 : i32
    %c0_i32_2 = arith.constant 0 : i32
    %c0_i32_3 = arith.constant 0 : i32
    return %arg0, %c0_i32, %c0_i32_0, %c0_i32_1, %c0_i32_2 : i32, i32, i32, i32, i32
  }
}

module attributes {stable_mosaic.version = 11 : i64} {
  func.func @_convt_s2_kernel(%arg0: i32, %arg1: memref<1x5x5x128xbf16, #tpu.memory_space<vmem>>, %arg2: memref<128x256xbf16, #tpu.memory_space<vmem>>, %arg3: memref<128x128xbf16, #tpu.memory_space<vmem>>, %arg4: memref<128x128xbf16, #tpu.memory_space<vmem>>, %arg5: memref<128x64xbf16, #tpu.memory_space<vmem>>, %arg6: memref<1x64xf32, #tpu.memory_space<vmem>>, %arg7: memref<1x4x2x4x128xbf16, #tpu.memory_space<vmem>>) attributes {dimension_semantics = [#tpu.dimension_semantics<parallel>], iteration_bounds = array<i64: 2>, scalar_prefetch = 0 : i64, scratch_operands = 0 : i64, tpu.core_type = #tpu.core_type<tc>, window_params = [{transform_indices = @transform_0, window_bounds = array<i64: 1, 5, 5, 128>}, {pipeline_mode = #tpu.pipeline_mode<synchronous>, transform_indices = @transform_1, window_bounds = array<i64: 128, 256>}, {pipeline_mode = #tpu.pipeline_mode<synchronous>, transform_indices = @transform_2, window_bounds = array<i64: 128, 128>}, {pipeline_mode = #tpu.pipeline_mode<synchronous>, transform_indices = @transform_3, window_bounds = array<i64: 128, 128>}, {pipeline_mode = #tpu.pipeline_mode<synchronous>, transform_indices = @transform_4, window_bounds = array<i64: 128, 64>}, {pipeline_mode = #tpu.pipeline_mode<synchronous>, transform_indices = @transform_5, window_bounds = array<i64: 1, 64>}, {transform_indices = @transform_6, window_bounds = array<i64: 1, 4, 2, 4, 128>}]} {
    %c0 = arith.constant 0 : index
    %c0_0 = arith.constant 0 : index
    %c0_1 = arith.constant 0 : index
    %c0_2 = arith.constant 0 : index
    %0 = vector.load %arg1[%c0, %c0_0, %c0_1, %c0_2] : memref<1x5x5x128xbf16, #tpu.memory_space<vmem>>, vector<1x4x4x128xbf16>
    %1 = vector.shape_cast %0 : vector<1x4x4x128xbf16> to vector<4x4x128xbf16>
    %2 = vector.shape_cast %1 : vector<4x4x128xbf16> to vector<16x128xbf16>
    %c0_3 = arith.constant 0 : index
    %c0_4 = arith.constant 0 : index
    %c1 = arith.constant 1 : index
    %c0_5 = arith.constant 0 : index
    %3 = vector.load %arg1[%c0_3, %c0_4, %c1, %c0_5] : memref<1x5x5x128xbf16, #tpu.memory_space<vmem>>, vector<1x4x4x128xbf16>
    %4 = vector.shape_cast %3 : vector<1x4x4x128xbf16> to vector<4x4x128xbf16>
    %5 = vector.shape_cast %4 : vector<4x4x128xbf16> to vector<16x128xbf16>
    %c0_6 = arith.constant 0 : index
    %c1_7 = arith.constant 1 : index
    %c0_8 = arith.constant 0 : index
    %c0_9 = arith.constant 0 : index
    %6 = vector.load %arg1[%c0_6, %c1_7, %c0_8, %c0_9] : memref<1x5x5x128xbf16, #tpu.memory_space<vmem>>, vector<1x4x4x128xbf16>
    %7 = vector.shape_cast %6 : vector<1x4x4x128xbf16> to vector<4x4x128xbf16>
    %8 = vector.shape_cast %7 : vector<4x4x128xbf16> to vector<16x128xbf16>
    %c0_10 = arith.constant 0 : index
    %c1_11 = arith.constant 1 : index
    %c1_12 = arith.constant 1 : index
    %c0_13 = arith.constant 0 : index
    %9 = vector.load %arg1[%c0_10, %c1_11, %c1_12, %c0_13] : memref<1x5x5x128xbf16, #tpu.memory_space<vmem>>, vector<1x4x4x128xbf16>
    %10 = vector.shape_cast %9 : vector<1x4x4x128xbf16> to vector<4x4x128xbf16>
    %11 = vector.shape_cast %10 : vector<4x4x128xbf16> to vector<16x128xbf16>
    %c0_14 = arith.constant 0 : index
    %c0_15 = arith.constant 0 : index
    %12 = vector.load %arg2[%c0_14, %c0_15] : memref<128x256xbf16, #tpu.memory_space<vmem>>, vector<128x256xbf16>
    %cst = arith.constant dense<0.000000e+00> : vector<16x256xf32>
    %13 = tpu.matmul %2, %12, %cst {dimension_numbers = #tpu.dot_dimension_numbers<[1], [0], [0], [1], [0, 0, 1, 1], [], []>} : vector<16x128xbf16>, vector<128x256xbf16>, vector<16x256xf32> -> vector<16x256xf32>
    %c0_16 = arith.constant 0 : index
    %c0_17 = arith.constant 0 : index
    %14 = vector.load %arg3[%c0_16, %c0_17] : memref<128x128xbf16, #tpu.memory_space<vmem>>, vector<128x128xbf16>
    %cst_18 = arith.constant dense<0.000000e+00> : vector<16x128xf32>
    %15 = tpu.matmul %5, %14, %cst_18 {dimension_numbers = #tpu.dot_dimension_numbers<[1], [0], [0], [1], [0, 0, 1, 1], [], []>} : vector<16x128xbf16>, vector<128x128xbf16>, vector<16x128xf32> -> vector<16x128xf32>
    %c0_19 = arith.constant 0 : index
    %c0_20 = arith.constant 0 : index
    %16 = vector.load %arg4[%c0_19, %c0_20] : memref<128x128xbf16, #tpu.memory_space<vmem>>, vector<128x128xbf16>
    %cst_21 = arith.constant dense<0.000000e+00> : vector<16x128xf32>
    %17 = tpu.matmul %8, %16, %cst_21 {dimension_numbers = #tpu.dot_dimension_numbers<[1], [0], [0], [1], [0, 0, 1, 1], [], []>} : vector<16x128xbf16>, vector<128x128xbf16>, vector<16x128xf32> -> vector<16x128xf32>
    %c0_22 = arith.constant 0 : index
    %c0_23 = arith.constant 0 : index
    %18 = vector.load %arg5[%c0_22, %c0_23] : memref<128x64xbf16, #tpu.memory_space<vmem>>, vector<128x64xbf16>
    %cst_24 = arith.constant dense<0.000000e+00> : vector<16x64xf32>
    %19 = tpu.matmul %11, %18, %cst_24 {dimension_numbers = #tpu.dot_dimension_numbers<[1], [0], [0], [1], [0, 0, 1, 1], [], []>} : vector<16x128xbf16>, vector<128x64xbf16>, vector<16x64xf32> -> vector<16x64xf32>
    %c0_25 = arith.constant 0 : index
    %c0_26 = arith.constant 0 : index
    %20 = vector.load %arg6[%c0_25, %c0_26] : memref<1x64xf32, #tpu.memory_space<vmem>>, vector<1x64xf32>
    %21 = vector.extract_strided_slice %13 {offsets = [0, 0], sizes = [16, 64], strides = [1, 1]} : vector<16x256xf32> to vector<16x64xf32>
    %22 = vector.broadcast %20 : vector<1x64xf32> to vector<16x64xf32>
    %23 = arith.addf %21, %22 : vector<16x64xf32>
    %24 = vector.extract_strided_slice %13 {offsets = [0, 64], sizes = [16, 64], strides = [1, 1]} : vector<16x256xf32> to vector<16x64xf32>
    %25 = vector.extract_strided_slice %15 {offsets = [0, 0], sizes = [16, 64], strides = [1, 1]} : vector<16x128xf32> to vector<16x64xf32>
    %26 = arith.addf %24, %25 : vector<16x64xf32>
    %27 = vector.broadcast %20 : vector<1x64xf32> to vector<16x64xf32>
    %28 = arith.addf %26, %27 : vector<16x64xf32>
    %29 = vector.extract_strided_slice %13 {offsets = [0, 128], sizes = [16, 64], strides = [1, 1]} : vector<16x256xf32> to vector<16x64xf32>
    %30 = vector.extract_strided_slice %17 {offsets = [0, 0], sizes = [16, 64], strides = [1, 1]} : vector<16x128xf32> to vector<16x64xf32>
    %31 = arith.addf %29, %30 : vector<16x64xf32>
    %32 = vector.broadcast %20 : vector<1x64xf32> to vector<16x64xf32>
    %33 = arith.addf %31, %32 : vector<16x64xf32>
    %34 = vector.extract_strided_slice %13 {offsets = [0, 192], sizes = [16, 64], strides = [1, 1]} : vector<16x256xf32> to vector<16x64xf32>
    %35 = vector.extract_strided_slice %15 {offsets = [0, 64], sizes = [16, 64], strides = [1, 1]} : vector<16x128xf32> to vector<16x64xf32>
    %36 = arith.addf %34, %35 : vector<16x64xf32>
    %37 = vector.extract_strided_slice %17 {offsets = [0, 64], sizes = [16, 64], strides = [1, 1]} : vector<16x128xf32> to vector<16x64xf32>
    %38 = arith.addf %36, %37 : vector<16x64xf32>
    %39 = arith.addf %38, %19 : vector<16x64xf32>
    %40 = vector.broadcast %20 : vector<1x64xf32> to vector<16x64xf32>
    %41 = arith.addf %39, %40 : vector<16x64xf32>
    %cst_27 = arith.constant 0.000000e+00 : f32
    %42 = vector.broadcast %cst_27 : f32 to vector<16x64xf32>
    %43 = arith.maximumf %23, %42 : vector<16x64xf32>
    %cst_28 = arith.constant 0.000000e+00 : f32
    %44 = vector.broadcast %cst_28 : f32 to vector<16x64xf32>
    %45 = arith.maximumf %28, %44 : vector<16x64xf32>
    %cst_29 = arith.constant 0.000000e+00 : f32
    %46 = vector.broadcast %cst_29 : f32 to vector<16x64xf32>
    %47 = arith.maximumf %33, %46 : vector<16x64xf32>
    %cst_30 = arith.constant 0.000000e+00 : f32
    %48 = vector.broadcast %cst_30 : f32 to vector<16x64xf32>
    %49 = arith.maximumf %41, %48 : vector<16x64xf32>
    %50 = tpu.concatenate %43, %45 in 1 : vector<16x64xf32>, vector<16x64xf32> -> vector<16x128xf32>
    %51 = vector.shape_cast %50 : vector<16x128xf32> to vector<4x4x128xf32>
    %52 = tpu.concatenate %47, %49 in 1 : vector<16x64xf32>, vector<16x64xf32> -> vector<16x128xf32>
    %53 = vector.shape_cast %52 : vector<16x128xf32> to vector<4x4x128xf32>
    %54 = arith.truncf %51 : vector<4x4x128xf32> to vector<4x4x128xbf16>
    %c0_31 = arith.constant 0 : index
    %c0_32 = arith.constant 0 : index
    %c0_33 = arith.constant 0 : index
    %c0_34 = arith.constant 0 : index
    %c0_35 = arith.constant 0 : index
    %55 = vector.load %arg7[%c0_31, %c0_32, %c0_33, %c0_34, %c0_35] : memref<1x4x2x4x128xbf16, #tpu.memory_space<vmem>>, vector<1x4x1x4x128xbf16>
    %56 = vector.shape_cast %55 : vector<1x4x1x4x128xbf16> to vector<4x4x128xbf16>
    %57 = vector.shape_cast %54 : vector<4x4x128xbf16> to vector<1x4x1x4x128xbf16>
    tpu.vector_store %arg7[%c0_31, %c0_32, %c0_33, %c0_34, %c0_35], %57 {strides = array<i32>} : memref<1x4x2x4x128xbf16, #tpu.memory_space<vmem>>, vector<1x4x1x4x128xbf16>,
    %58 = arith.truncf %53 : vector<4x4x128xf32> to vector<4x4x128xbf16>
    %c0_36 = arith.constant 0 : index
    %c0_37 = arith.constant 0 : index
    %c1_38 = arith.constant 1 : index
    %c0_39 = arith.constant 0 : index
    %c0_40 = arith.constant 0 : index
    %59 = vector.load %arg7[%c0_36, %c0_37, %c1_38, %c0_39, %c0_40] : memref<1x4x2x4x128xbf16, #tpu.memory_space<vmem>>, vector<1x4x1x4x128xbf16>
    %60 = vector.shape_cast %59 : vector<1x4x1x4x128xbf16> to vector<4x4x128xbf16>
    %61 = vector.shape_cast %58 : vector<4x4x128xbf16> to vector<1x4x1x4x128xbf16>
    tpu.vector_store %arg7[%c0_36, %c0_37, %c1_38, %c0_39, %c0_40], %61 {strides = array<i32>} : memref<1x4x2x4x128xbf16, #tpu.memory_space<vmem>>, vector<1x4x1x4x128xbf16>,
    return
  }
  func.func @transform_0(%arg0: i32) -> (i32, i32, i32, i32) {
    %c0_i32 = arith.constant 0 : i32
    %c0_i32_0 = arith.constant 0 : i32
    %c0_i32_1 = arith.constant 0 : i32
    %c0_i32_2 = arith.constant 0 : i32
    return %arg0, %c0_i32, %c0_i32_0, %c0_i32_1 : i32, i32, i32, i32
  }
  func.func @transform_1(%arg0: i32) -> (i32, i32) {
    %c0_i32 = arith.constant 0 : i32
    %c0_i32_0 = arith.constant 0 : i32
    %c0_i32_1 = arith.constant 0 : i32
    return %c0_i32, %c0_i32_0 : i32, i32
  }
  func.func @transform_2(%arg0: i32) -> (i32, i32) {
    %c0_i32 = arith.constant 0 : i32
    %c0_i32_0 = arith.constant 0 : i32
    %c0_i32_1 = arith.constant 0 : i32
    return %c0_i32, %c0_i32_0 : i32, i32
  }
  func.func @transform_3(%arg0: i32) -> (i32, i32) {
    %c0_i32 = arith.constant 0 : i32
    %c0_i32_0 = arith.constant 0 : i32
    %c0_i32_1 = arith.constant 0 : i32
    return %c0_i32, %c0_i32_0 : i32, i32
  }
  func.func @transform_4(%arg0: i32) -> (i32, i32) {
    %c0_i32 = arith.constant 0 : i32
    %c0_i32_0 = arith.constant 0 : i32
    %c0_i32_1 = arith.constant 0 : i32
    return %c0_i32, %c0_i32_0 : i32, i32
  }
  func.func @transform_5(%arg0: i32) -> (i32, i32) {
    %c0_i32 = arith.constant 0 : i32
    %c0_i32_0 = arith.constant 0 : i32
    %c0_i32_1 = arith.constant 0 : i32
    return %c0_i32, %c0_i32_0 : i32, i32
  }
  func.func @transform_6(%arg0: i32) -> (i32, i32, i32, i32, i32) {
    %c0_i32 = arith.constant 0 : i32
    %c0_i32_0 = arith.constant 0 : i32
    %c0_i32_1 = arith.constant 0 : i32
    %c0_i32_2 = arith.constant 0 : i32
    %c0_i32_3 = arith.constant 0 : i32
    return %arg0, %c0_i32, %c0_i32_0, %c0_i32_1, %c0_i32_2 : i32, i32, i32, i32, i32
  }
}

module attributes {stable_mosaic.version = 11 : i64} {
  func.func @_convt_s2_kernel(%arg0: i32, %arg1: memref<1x9x9x64xbf16, #tpu.memory_space<vmem>>, %arg2: memref<64x512xbf16, #tpu.memory_space<vmem>>, %arg3: memref<64x256xbf16, #tpu.memory_space<vmem>>, %arg4: memref<64x256xbf16, #tpu.memory_space<vmem>>, %arg5: memref<64x128xbf16, #tpu.memory_space<vmem>>, %arg6: memref<1x128xf32, #tpu.memory_space<vmem>>, %arg7: memref<1x8x2x8x256xf32, #tpu.memory_space<vmem>>) attributes {dimension_semantics = [#tpu.dimension_semantics<parallel>], iteration_bounds = array<i64: 2>, scalar_prefetch = 0 : i64, scratch_operands = 0 : i64, tpu.core_type = #tpu.core_type<tc>, window_params = [{transform_indices = @transform_0, window_bounds = array<i64: 1, 9, 9, 64>}, {pipeline_mode = #tpu.pipeline_mode<synchronous>, transform_indices = @transform_1, window_bounds = array<i64: 64, 512>}, {pipeline_mode = #tpu.pipeline_mode<synchronous>, transform_indices = @transform_2, window_bounds = array<i64: 64, 256>}, {pipeline_mode = #tpu.pipeline_mode<synchronous>, transform_indices = @transform_3, window_bounds = array<i64: 64, 256>}, {pipeline_mode = #tpu.pipeline_mode<synchronous>, transform_indices = @transform_4, window_bounds = array<i64: 64, 128>}, {pipeline_mode = #tpu.pipeline_mode<synchronous>, transform_indices = @transform_5, window_bounds = array<i64: 1, 128>}, {transform_indices = @transform_6, window_bounds = array<i64: 1, 8, 2, 8, 256>}]} {
    %c0 = arith.constant 0 : index
    %c0_0 = arith.constant 0 : index
    %c0_1 = arith.constant 0 : index
    %c0_2 = arith.constant 0 : index
    %0 = vector.load %arg1[%c0, %c0_0, %c0_1, %c0_2] : memref<1x9x9x64xbf16, #tpu.memory_space<vmem>>, vector<1x8x8x64xbf16>
    %1 = vector.shape_cast %0 : vector<1x8x8x64xbf16> to vector<8x8x64xbf16>
    %2 = vector.shape_cast %1 : vector<8x8x64xbf16> to vector<64x64xbf16>
    %c0_3 = arith.constant 0 : index
    %c0_4 = arith.constant 0 : index
    %c1 = arith.constant 1 : index
    %c0_5 = arith.constant 0 : index
    %3 = vector.load %arg1[%c0_3, %c0_4, %c1, %c0_5] : memref<1x9x9x64xbf16, #tpu.memory_space<vmem>>, vector<1x8x8x64xbf16>
    %4 = vector.shape_cast %3 : vector<1x8x8x64xbf16> to vector<8x8x64xbf16>
    %5 = vector.shape_cast %4 : vector<8x8x64xbf16> to vector<64x64xbf16>
    %c0_6 = arith.constant 0 : index
    %c1_7 = arith.constant 1 : index
    %c0_8 = arith.constant 0 : index
    %c0_9 = arith.constant 0 : index
    %6 = vector.load %arg1[%c0_6, %c1_7, %c0_8, %c0_9] : memref<1x9x9x64xbf16, #tpu.memory_space<vmem>>, vector<1x8x8x64xbf16>
    %7 = vector.shape_cast %6 : vector<1x8x8x64xbf16> to vector<8x8x64xbf16>
    %8 = vector.shape_cast %7 : vector<8x8x64xbf16> to vector<64x64xbf16>
    %c0_10 = arith.constant 0 : index
    %c1_11 = arith.constant 1 : index
    %c1_12 = arith.constant 1 : index
    %c0_13 = arith.constant 0 : index
    %9 = vector.load %arg1[%c0_10, %c1_11, %c1_12, %c0_13] : memref<1x9x9x64xbf16, #tpu.memory_space<vmem>>, vector<1x8x8x64xbf16>
    %10 = vector.shape_cast %9 : vector<1x8x8x64xbf16> to vector<8x8x64xbf16>
    %11 = vector.shape_cast %10 : vector<8x8x64xbf16> to vector<64x64xbf16>
    %c0_14 = arith.constant 0 : index
    %c0_15 = arith.constant 0 : index
    %12 = vector.load %arg2[%c0_14, %c0_15] : memref<64x512xbf16, #tpu.memory_space<vmem>>, vector<64x512xbf16>
    %cst = arith.constant dense<0.000000e+00> : vector<64x512xf32>
    %13 = tpu.matmul %2, %12, %cst {dimension_numbers = #tpu.dot_dimension_numbers<[1], [0], [0], [1], [0, 0, 1, 1], [], []>} : vector<64x64xbf16>, vector<64x512xbf16>, vector<64x512xf32> -> vector<64x512xf32>
    %c0_16 = arith.constant 0 : index
    %c0_17 = arith.constant 0 : index
    %14 = vector.load %arg3[%c0_16, %c0_17] : memref<64x256xbf16, #tpu.memory_space<vmem>>, vector<64x256xbf16>
    %cst_18 = arith.constant dense<0.000000e+00> : vector<64x256xf32>
    %15 = tpu.matmul %5, %14, %cst_18 {dimension_numbers = #tpu.dot_dimension_numbers<[1], [0], [0], [1], [0, 0, 1, 1], [], []>} : vector<64x64xbf16>, vector<64x256xbf16>, vector<64x256xf32> -> vector<64x256xf32>
    %c0_19 = arith.constant 0 : index
    %c0_20 = arith.constant 0 : index
    %16 = vector.load %arg4[%c0_19, %c0_20] : memref<64x256xbf16, #tpu.memory_space<vmem>>, vector<64x256xbf16>
    %cst_21 = arith.constant dense<0.000000e+00> : vector<64x256xf32>
    %17 = tpu.matmul %8, %16, %cst_21 {dimension_numbers = #tpu.dot_dimension_numbers<[1], [0], [0], [1], [0, 0, 1, 1], [], []>} : vector<64x64xbf16>, vector<64x256xbf16>, vector<64x256xf32> -> vector<64x256xf32>
    %c0_22 = arith.constant 0 : index
    %c0_23 = arith.constant 0 : index
    %18 = vector.load %arg5[%c0_22, %c0_23] : memref<64x128xbf16, #tpu.memory_space<vmem>>, vector<64x128xbf16>
    %cst_24 = arith.constant dense<0.000000e+00> : vector<64x128xf32>
    %19 = tpu.matmul %11, %18, %cst_24 {dimension_numbers = #tpu.dot_dimension_numbers<[1], [0], [0], [1], [0, 0, 1, 1], [], []>} : vector<64x64xbf16>, vector<64x128xbf16>, vector<64x128xf32> -> vector<64x128xf32>
    %c0_25 = arith.constant 0 : index
    %c0_26 = arith.constant 0 : index
    %20 = vector.load %arg6[%c0_25, %c0_26] : memref<1x128xf32, #tpu.memory_space<vmem>>, vector<1x128xf32>
    %21 = vector.extract_strided_slice %13 {offsets = [0, 0], sizes = [64, 128], strides = [1, 1]} : vector<64x512xf32> to vector<64x128xf32>
    %22 = vector.broadcast %20 : vector<1x128xf32> to vector<64x128xf32>
    %23 = arith.addf %21, %22 : vector<64x128xf32>
    %24 = vector.extract_strided_slice %13 {offsets = [0, 128], sizes = [64, 128], strides = [1, 1]} : vector<64x512xf32> to vector<64x128xf32>
    %25 = vector.extract_strided_slice %15 {offsets = [0, 0], sizes = [64, 128], strides = [1, 1]} : vector<64x256xf32> to vector<64x128xf32>
    %26 = arith.addf %24, %25 : vector<64x128xf32>
    %27 = vector.broadcast %20 : vector<1x128xf32> to vector<64x128xf32>
    %28 = arith.addf %26, %27 : vector<64x128xf32>
    %29 = vector.extract_strided_slice %13 {offsets = [0, 256], sizes = [64, 128], strides = [1, 1]} : vector<64x512xf32> to vector<64x128xf32>
    %30 = vector.extract_strided_slice %17 {offsets = [0, 0], sizes = [64, 128], strides = [1, 1]} : vector<64x256xf32> to vector<64x128xf32>
    %31 = arith.addf %29, %30 : vector<64x128xf32>
    %32 = vector.broadcast %20 : vector<1x128xf32> to vector<64x128xf32>
    %33 = arith.addf %31, %32 : vector<64x128xf32>
    %34 = vector.extract_strided_slice %13 {offsets = [0, 384], sizes = [64, 128], strides = [1, 1]} : vector<64x512xf32> to vector<64x128xf32>
    %35 = vector.extract_strided_slice %15 {offsets = [0, 128], sizes = [64, 128], strides = [1, 1]} : vector<64x256xf32> to vector<64x128xf32>
    %36 = arith.addf %34, %35 : vector<64x128xf32>
    %37 = vector.extract_strided_slice %17 {offsets = [0, 128], sizes = [64, 128], strides = [1, 1]} : vector<64x256xf32> to vector<64x128xf32>
    %38 = arith.addf %36, %37 : vector<64x128xf32>
    %39 = arith.addf %38, %19 : vector<64x128xf32>
    %40 = vector.broadcast %20 : vector<1x128xf32> to vector<64x128xf32>
    %41 = arith.addf %39, %40 : vector<64x128xf32>
    %42 = tpu.concatenate %23, %28 in 1 : vector<64x128xf32>, vector<64x128xf32> -> vector<64x256xf32>
    %43 = vector.shape_cast %42 : vector<64x256xf32> to vector<8x8x256xf32>
    %44 = tpu.concatenate %33, %41 in 1 : vector<64x128xf32>, vector<64x128xf32> -> vector<64x256xf32>
    %45 = vector.shape_cast %44 : vector<64x256xf32> to vector<8x8x256xf32>
    %c0_27 = arith.constant 0 : index
    %c0_28 = arith.constant 0 : index
    %c0_29 = arith.constant 0 : index
    %c0_30 = arith.constant 0 : index
    %c0_31 = arith.constant 0 : index
    %46 = vector.load %arg7[%c0_27, %c0_28, %c0_29, %c0_30, %c0_31] : memref<1x8x2x8x256xf32, #tpu.memory_space<vmem>>, vector<1x8x1x8x256xf32>
    %47 = vector.shape_cast %46 : vector<1x8x1x8x256xf32> to vector<8x8x256xf32>
    %48 = vector.shape_cast %43 : vector<8x8x256xf32> to vector<1x8x1x8x256xf32>
    tpu.vector_store %arg7[%c0_27, %c0_28, %c0_29, %c0_30, %c0_31], %48 {strides = array<i32>} : memref<1x8x2x8x256xf32, #tpu.memory_space<vmem>>, vector<1x8x1x8x256xf32>,
    %c0_32 = arith.constant 0 : index
    %c0_33 = arith.constant 0 : index
    %c1_34 = arith.constant 1 : index
    %c0_35 = arith.constant 0 : index
    %c0_36 = arith.constant 0 : index
    %49 = vector.load %arg7[%c0_32, %c0_33, %c1_34, %c0_35, %c0_36] : memref<1x8x2x8x256xf32, #tpu.memory_space<vmem>>, vector<1x8x1x8x256xf32>
    %50 = vector.shape_cast %49 : vector<1x8x1x8x256xf32> to vector<8x8x256xf32>
    %51 = vector.shape_cast %45 : vector<8x8x256xf32> to vector<1x8x1x8x256xf32>
    tpu.vector_store %arg7[%c0_32, %c0_33, %c1_34, %c0_35, %c0_36], %51 {strides = array<i32>} : memref<1x8x2x8x256xf32, #tpu.memory_space<vmem>>, vector<1x8x1x8x256xf32>,
    return
  }
  func.func @transform_0(%arg0: i32) -> (i32, i32, i32, i32) {
    %c0_i32 = arith.constant 0 : i32
    %c0_i32_0 = arith.constant 0 : i32
    %c0_i32_1 = arith.constant 0 : i32
    %c0_i32_2 = arith.constant 0 : i32
    return %arg0, %c0_i32, %c0_i32_0, %c0_i32_1 : i32, i32, i32, i32
  }
  func.func @transform_1(%arg0: i32) -> (i32, i32) {
    %c0_i32 = arith.constant 0 : i32
    %c0_i32_0 = arith.constant 0 : i32
    %c0_i32_1 = arith.constant 0 : i32
    return %c0_i32, %c0_i32_0 : i32, i32
  }
  func.func @transform_2(%arg0: i32) -> (i32, i32) {
    %c0_i32 = arith.constant 0 : i32
    %c0_i32_0 = arith.constant 0 : i32
    %c0_i32_1 = arith.constant 0 : i32
    return %c0_i32, %c0_i32_0 : i32, i32
  }
  func.func @transform_3(%arg0: i32) -> (i32, i32) {
    %c0_i32 = arith.constant 0 : i32
    %c0_i32_0 = arith.constant 0 : i32
    %c0_i32_1 = arith.constant 0 : i32
    return %c0_i32, %c0_i32_0 : i32, i32
  }
  func.func @transform_4(%arg0: i32) -> (i32, i32) {
    %c0_i32 = arith.constant 0 : i32
    %c0_i32_0 = arith.constant 0 : i32
    %c0_i32_1 = arith.constant 0 : i32
    return %c0_i32, %c0_i32_0 : i32, i32
  }
  func.func @transform_5(%arg0: i32) -> (i32, i32) {
    %c0_i32 = arith.constant 0 : i32
    %c0_i32_0 = arith.constant 0 : i32
    %c0_i32_1 = arith.constant 0 : i32
    return %c0_i32, %c0_i32_0 : i32, i32
  }
  func.func @transform_6(%arg0: i32) -> (i32, i32, i32, i32, i32) {
    %c0_i32 = arith.constant 0 : i32
    %c0_i32_0 = arith.constant 0 : i32
    %c0_i32_1 = arith.constant 0 : i32
    %c0_i32_2 = arith.constant 0 : i32
    %c0_i32_3 = arith.constant 0 : i32
    return %arg0, %c0_i32, %c0_i32_0, %c0_i32_1, %c0_i32_2 : i32, i32, i32, i32, i32
  }
}

</mosaic_0001>

<llo_original>
// kernel: autoencoder_forward.7
$region0: #{autoencoder_forward.7}
  #allocation0 [shape = 'u32[]', space=smem, size = 0x4, offset = 0x4, fixed_abs, tag = 'smem constant byte address 0x4 - core index']
  #allocation1 [shape = 'u32[144,128]{1,0:T(1,128)}', space=vmem, size = 0x12000, scoped, tag = 'internal scratch']
  %s0 = inlined_call_operand.vmem [shape: bf16[2,5,5,64], index: 0, kind: input, shape index: {}]
  %s1 = inlined_call_operand.vmem [shape: bf16[2,5,5,64], index: 1, kind: input, shape index: {}]
  %s2 = inlined_call_operand.vmem [shape: bf16[2,5,5,64], index: 2, kind: input, shape index: {}]
  %s3 = inlined_call_operand.vmem [shape: bf16[2,5,5,64], index: 3, kind: input, shape index: {}]
  %s4 = inlined_call_operand.vmem [shape: bf16[9,64,128], index: 4, kind: input, shape index: {}]
  %s5 = inlined_call_operand.vmem [shape: f32[1,128], index: 5, kind: input, shape index: {}]
  %s6 = inlined_call_operand.vmem [shape: bf16[2,4,4,128], index: 6, kind: output, shape index: {}]
  %s7 = sld [smem:[#allocation0]]
  $region57: #{autoencoder_forward.7} parent=0
    _
  %s9 = ssub.s32 1, %s7
  %s10 = scalar_select 0, %s9, %s7
  loop: start=0, step=1, limit=4
  $region2: #{autoencoder_forward.7} parent=0 // loop_pre_header
    _
  $region3: #{autoencoder_forward.7} parent=0 // loop_header
    %s12 = sphi 0, %s16
    %p13 = scmp.ge.s32.totalorder %s12, 4
    %s22 = sphi 0, %s24
    %s25 = sphi 0, %s22
    %s26 = sphi 0, %s25
    %s42 = sphi 0, %s26
    %s48 = sphi 0, %s50
    %s51 = sphi 0, %s48
    %s52 = sphi 0, %s51
    %s68 = sphi 0, %s52
    %s74 = sphi 0, %s76
    %s77 = sphi 0, %s74
    %s78 = sphi 0, %s77
    %s94 = sphi 0, %s78
    %s100 = sphi 0, %s102
    %s103 = sphi 0, %s100
    %s104 = sphi 0, %s103
    %s120 = sphi 0, %s104
    %s124 = sphi 0, %s124
    %s126 = sphi 0, %s124
    %s127 = sphi 0, %s126
    %s141 = sphi 0, %s127
    %s145 = sphi 0, %s145
    %s147 = sphi 0, %s145
    %s148 = sphi 0, %s147
    %s162 = sphi 0, %s148
    %s168 = sphi 0, %s170
    %s171 = sphi 0, %s168
    %s172 = sphi 0, %s171
    %s188 = sphi 0, %s172
  $region4: #{autoencoder_forward.7} parent=0 // loop_header_branch
    %15 = sbr.rel (%p13) target = $region8
  $region5: #{autoencoder_forward.7} parent=0 // loop_body
    %s17 = ssub.s32 %s12, 1
    %s18 = ssub.s32 %s12, 2
    %s19 = sadd.s32 %s12, 1
    %s20 = ssub.s32 %s12, %s19
    %p21 = scmp.eq.s32.totalorder %s20, 0
    %s23 = sadd.s32 %s22, 1
    %s24 = scalar_select %p21, %s22, %s23
    %p27 = pneg %p21
    %p28 = scmp.eq.s32.totalorder %s12, 1
    %p29 = por %p27, %p28
    %p30 = scmp.ne.s32.totalorder %s22, %s25
    %p31 = scmp.eq.s32.totalorder %s12, 0
    %p32 = por %p30, %p31
    %p33 = scmp.ne.s32.totalorder %s22, %s25
    %p34 = scmp.eq.s32.totalorder %s17, 1
    %p35 = por %p33, %p34
    %p36 = scmp.ne.s32.totalorder %s25, %s26
    %p37 = scmp.eq.s32.totalorder %s17, 0
    %p38 = por %p36, %p37
    %p39 = scmp.ne.s32.totalorder %s25, %s26
    %p40 = scmp.eq.s32.totalorder %s18, 1
    %p41 = por %p39, %p40
    %p43 = scmp.ne.s32.totalorder %s26, %s42
    %p44 = scmp.eq.s32.totalorder %s18, 0
    %p45 = por %p43, %p44
    %s46 = ssub.s32 %s12, %s19
    %p47 = scmp.eq.s32.totalorder %s46, 0
    %s49 = sadd.s32 %s48, 1
    %s50 = scalar_select %p47, %s48, %s49
    %p53 = pneg %p47
    %p54 = scmp.eq.s32.totalorder %s12, 1
    %p55 = por %p53, %p54
    %p56 = scmp.ne.s32.totalorder %s48, %s51
    %p57 = scmp.eq.s32.totalorder %s12, 0
    %p58 = por %p56, %p57
    %p59 = scmp.ne.s32.totalorder %s48, %s51
    %p60 = scmp.eq.s32.totalorder %s17, 1
    %p61 = por %p59, %p60
    %p62 = scmp.ne.s32.totalorder %s51, %s52
    %p63 = scmp.eq.s32.totalorder %s17, 0
    %p64 = por %p62, %p63
    %p65 = scmp.ne.s32.totalorder %s51, %s52
    %p66 = scmp.eq.s32.totalorder %s18, 1
    %p67 = por %p65, %p66
    %p69 = scmp.ne.s32.totalorder %s52, %s68
    %p70 = scmp.eq.s32.totalorder %s18, 0
    %p71 = por %p69, %p70
    %s72 = ssub.s32 %s12, %s19
    %p73 = scmp.eq.s32.totalorder %s72, 0
    %s75 = sadd.s32 %s74, 1
    %s76 = scalar_select %p73, %s74, %s75
    %p79 = pneg %p73
    %p80 = scmp.eq.s32.totalorder %s12, 1
    %p81 = por %p79, %p80
    %p82 = scmp.ne.s32.totalorder %s74, %s77
    %p83 = scmp.eq.s32.totalorder %s12, 0
    %p84 = por %p82, %p83
    %p85 = scmp.ne.s32.totalorder %s74, %s77
    %p86 = scmp.eq.s32.totalorder %s17, 1
    %p87 = por %p85, %p86
    %p88 = scmp.ne.s32.totalorder %s77, %s78
    %p89 = scmp.eq.s32.totalorder %s17, 0
    %p90 = por %p88, %p89
    %p91 = scmp.ne.s32.totalorder %s77, %s78
    %p92 = scmp.eq.s32.totalorder %s18, 1
    %p93 = por %p91, %p92
    %p95 = scmp.ne.s32.totalorder %s78, %s94
    %p96 = scmp.eq.s32.totalorder %s18, 0
    %p97 = por %p95, %p96
    %s98 = ssub.s32 %s12, %s19
    %p99 = scmp.eq.s32.totalorder %s98, 0
    %s101 = sadd.s32 %s100, 1
    %s102 = scalar_select %p99, %s100, %s101
    %p105 = pneg %p99
    %p106 = scmp.eq.s32.totalorder %s12, 1
    %p107 = por %p105, %p106
    %p108 = scmp.ne.s32.totalorder %s100, %s103
    %p109 = scmp.eq.s32.totalorder %s12, 0
    %p110 = por %p108, %p109
    %p111 = scmp.ne.s32.totalorder %s100, %s103
    %p112 = scmp.eq.s32.totalorder %s17, 1
    %p113 = por %p111, %p112
    %p114 = scmp.ne.s32.totalorder %s103, %s104
    %p115 = scmp.eq.s32.totalorder %s17, 0
    %p116 = por %p114, %p115
    %p117 = scmp.ne.s32.totalorder %s103, %s104
    %p118 = scmp.eq.s32.totalorder %s18, 1
    %p119 = por %p117, %p118
    %p121 = scmp.ne.s32.totalorder %s104, %s120
    %p122 = scmp.eq.s32.totalorder %s18, 0
    %p123 = por %p121, %p122
    %s125 = sadd.s32 %s124, 1
    %p128 = scmp.eq.s32.totalorder %s12, 1
    %p129 = scmp.ne.s32.totalorder %s124, %s126
    %p130 = scmp.eq.s32.totalorder %s12, 0
    %p131 = por %p129, %p130
    %p132 = scmp.ne.s32.totalorder %s124, %s126
    %p133 = scmp.eq.s32.totalorder %s17, 1
    %p134 = por %p132, %p133
    %p135 = scmp.ne.s32.totalorder %s126, %s127
    %p136 = scmp.eq.s32.totalorder %s17, 0
    %p137 = por %p135, %p136
    %p138 = scmp.ne.s32.totalorder %s126, %s127
    %p139 = scmp.eq.s32.totalorder %s18, 1
    %p140 = por %p138, %p139
    %p142 = scmp.ne.s32.totalorder %s127, %s141
    %p143 = scmp.eq.s32.totalorder %s18, 0
    %p144 = por %p142, %p143
    %s146 = sadd.s32 %s145, 1
    %p149 = scmp.eq.s32.totalorder %s12, 1
    %p150 = scmp.ne.s32.totalorder %s145, %s147
    %p151 = scmp.eq.s32.totalorder %s12, 0
    %p152 = por %p150, %p151
    %p153 = scmp.ne.s32.totalorder %s145, %s147
    %p154 = scmp.eq.s32.totalorder %s17, 1
    %p155 = por %p153, %p154
    %p156 = scmp.ne.s32.totalorder %s147, %s148
    %p157 = scmp.eq.s32.totalorder %s17, 0
    %p158 = por %p156, %p157
    %p159 = scmp.ne.s32.totalorder %s147, %s148
    %p160 = scmp.eq.s32.totalorder %s18, 1
    %p161 = por %p159, %p160
    %p163 = scmp.ne.s32.totalorder %s148, %s162
    %p164 = scmp.eq.s32.totalorder %s18, 0
    %p165 = por %p163, %p164
    %s166 = ssub.s32 %s12, %s19
    %p167 = scmp.eq.s32.totalorder %s166, 0
    %s169 = sadd.s32 %s168, 1
    %s170 = scalar_select %p167, %s168, %s169
    %p173 = pneg %p167
    %p174 = scmp.eq.s32.totalorder %s12, 1
    %p175 = por %p173, %p174
    %p176 = scmp.ne.s32.totalorder %s168, %s171
    %p177 = scmp.eq.s32.totalorder %s12, 0
    %p178 = por %p176, %p177
    %p179 = scmp.ne.s32.totalorder %s168, %s171
    %p180 = scmp.eq.s32.totalorder %s17, 1
    %p181 = por %p179, %p180
    %p182 = scmp.ne.s32.totalorder %s171, %s172
    %p183 = scmp.eq.s32.totalorder %s17, 0
    %p184 = por %p182, %p183
    %p185 = scmp.ne.s32.totalorder %s171, %s172
    %p186 = scmp.eq.s32.totalorder %s18, 1
    %p187 = por %p185, %p186
    %p189 = scmp.ne.s32.totalorder %s172, %s188
    %p190 = scmp.eq.s32.totalorder %s18, 0
    %p191 = por %p189, %p190
    %p192 = scmp.le.s32.totalorder 1, %s12
    %p193 = scmp.lt.s32.totalorder %s12, 3
    %p194 = pnand %p192, %p193
    %p195 = pneg %p194
    // Predicated region
    $region9: #{autoencoder_forward.7} parent=5 // pred_check
      _
    $region10: #{autoencoder_forward.7} parent=5 // pred_check_branch
      %197 = sbr.rel (%p194) target = $region12
    $region11: #{autoencoder_forward.7} parent=5 // pred_region
      %s198 = ssub.s32 %s12, 1
      // Predicated region
      $region13: #{autoencoder_forward.7} parent=11 // pred_check
        %p199 = pneg %p137
      $region14: #{autoencoder_forward.7} parent=11 // pred_check_branch
        %201 = sbr.rel (%p199) target = $region16
      $region15: #{autoencoder_forward.7} parent=11 // pred_region
        _
      $region16: #{autoencoder_forward.7} parent=11 // pred_fallthru
        _
      // Predicated region
      $region17: #{autoencoder_forward.7} parent=11 // pred_check
        %p202 = pneg %p158
      $region18: #{autoencoder_forward.7} parent=11 // pred_check_branch
        %204 = sbr.rel (%p202) target = $region20
      $region19: #{autoencoder_forward.7} parent=11 // pred_region
        _
      $region20: #{autoencoder_forward.7} parent=11 // pred_fallthru
        _
    $region12: #{autoencoder_forward.7} parent=5 // pred_fallthru
      _
    %p205 = scmp.lt.s32.totalorder %s12, 2
    // Predicated region
    $region21: #{autoencoder_forward.7} parent=5 // pred_check
      %p206 = pneg %p205
    $region22: #{autoencoder_forward.7} parent=5 // pred_check_branch
      %208 = sbr.rel (%p206) target = $region24
    $region23: #{autoencoder_forward.7} parent=5 // pred_region
      // Predicated region
      $region25: #{autoencoder_forward.7} parent=23 // pred_check
        %p209 = pneg %p32
      $region26: #{autoencoder_forward.7} parent=23 // pred_check_branch
        %211 = sbr.rel (%p209) target = $region28
      $region27: #{autoencoder_forward.7} parent=23 // pred_region
        %p212 = scmp.lt.s32.totalorder %s12, 1
        %s213 = scalar_select %p212, %s12, 1
        %s214 = smul.addr %s213, 5
        %s215 = smul.addr %s214, 4
        %s216 = scalar_lea.vmem %s0, %s215
      $region28: #{autoencoder_forward.7} parent=23 // pred_fallthru
        _
      // Predicated region
      $region29: #{autoencoder_forward.7} parent=23 // pred_check
        %p217 = pneg %p58
      $region30: #{autoencoder_forward.7} parent=23 // pred_check_branch
        %219 = sbr.rel (%p217) target = $region32
      $region31: #{autoencoder_forward.7} parent=23 // pred_region
        %p220 = scmp.lt.s32.totalorder %s12, 1
        %s221 = scalar_select %p220, %s12, 1
        %s222 = smul.addr %s221, 5
        %s223 = smul.addr %s222, 4
        %s224 = scalar_lea.vmem %s1, %s223
      $region32: #{autoencoder_forward.7} parent=23 // pred_fallthru
        _
      // Predicated region
      $region33: #{autoencoder_forward.7} parent=23 // pred_check
        %p225 = pneg %p84
      $region34: #{autoencoder_forward.7} parent=23 // pred_check_branch
        %227 = sbr.rel (%p225) target = $region36
      $region35: #{autoencoder_forward.7} parent=23 // pred_region
        %p228 = scmp.lt.s32.totalorder %s12, 1
        %s229 = scalar_select %p228, %s12, 1
        %s230 = smul.addr %s229, 5
        %s231 = smul.addr %s230, 4
        %s232 = scalar_lea.vmem %s2, %s231
      $region36: #{autoencoder_forward.7} parent=23 // pred_fallthru
        _
      // Predicated region
      $region37: #{autoencoder_forward.7} parent=23 // pred_check
        %p233 = pneg %p110
      $region38: #{autoencoder_forward.7} parent=23 // pred_check_branch
        %235 = sbr.rel (%p233) target = $region40
      $region39: #{autoencoder_forward.7} parent=23 // pred_region
        %p236 = scmp.lt.s32.totalorder %s12, 1
        %s237 = scalar_select %p236, %s12, 1
        %s238 = smul.addr %s237, 5
        %s239 = smul.addr %s238, 4
        %s240 = scalar_lea.vmem %s3, %s239
      $region40: #{autoencoder_forward.7} parent=23 // pred_fallthru
        _
    $region24: #{autoencoder_forward.7} parent=5 // pred_fallthru
      _
    %p241 = scmp.le.s32.totalorder 1, %s12
    %p242 = scmp.lt.s32.totalorder %s12, 3
    %p243 = pnand %p241, %p242
    %p244 = pneg %p243
    // Predicated region
    $region41: #{autoencoder_forward.7} parent=5 // pred_check
      _
    $region42: #{autoencoder_forward.7} parent=5 // pred_check_branch
      %246 = sbr.rel (%p243) target = $region44
    $region43: #{autoencoder_forward.7} parent=5 // pred_region
      %s247 = ssub.s32 %s12, 1
      %p248 = scmp.lt.s32.totalorder %s17, 1
      %s249 = scalar_select %p248, %s17, 1
      %s250 = smul.addr %s249, 5
      %s251 = smul.addr %s250, 4
      %s252 = scalar_lea.vmem %s0, %s251
      %p253 = pneg %p38
      %p254 = pneg %p35
      %p255 = scmp.lt.s32.totalorder %s17, 1
      %s256 = scalar_select %p255, %s17, 1
      %s257 = smul.addr %s256, 5
      %s258 = smul.addr %s257, 4
      %s259 = scalar_lea.vmem %s1, %s258
      %p260 = pneg %p64
      %p261 = pneg %p61
      %p262 = scmp.lt.s32.totalorder %s17, 1
      %s263 = scalar_select %p262, %s17, 1
      %s264 = smul.addr %s263, 5
      %s265 = smul.addr %s264, 4
      %s266 = scalar_lea.vmem %s2, %s265
      %p267 = pneg %p90
      %p268 = pneg %p87
      %p269 = scmp.lt.s32.totalorder %s17, 1
      %s270 = scalar_select %p269, %s17, 1
      %s271 = smul.addr %s270, 5
      %s272 = smul.addr %s271, 4
      %s273 = scalar_lea.vmem %s3, %s272
      %p274 = pneg %p116
      %p275 = pneg %p113
      %p276 = pneg %p137
      %p277 = pneg %p134
      %p278 = pneg %p158
      %p279 = pneg %p155
      %p280 = pneg %p184
      %p281 = pneg %p181
      %p282 = scmp.lt.s32.totalorder %s17, 1
      %s283 = scalar_select %p282, %s17, 1
      %s284 = smul.addr %s283, 4
      %s285 = smul.addr %s284, 2
      %s286 = scalar_lea.vmem %s6, %s285
      %p287 = scmp.lt.s32.totalorder %s17, 1
      %s288 = scalar_select %p287, %s17, 1
      %s289 = smul.addr %s288, 5
      %s290 = smul.addr %s289, 4
      %s291 = scalar_lea.vmem %s0, %s290
      %p292 = scmp.lt.s32.totalorder %s17, 1
      %s293 = scalar_select %p292, %s17, 1
      %s294 = smul.addr %s293, 5
      %s295 = smul.addr %s294, 4
      %s296 = scalar_lea.vmem %s1, %s295
      %p297 = scmp.lt.s32.totalorder %s17, 1
      %s298 = scalar_select %p297, %s17, 1
      %s299 = smul.addr %s298, 5
      %s300 = smul.addr %s299, 4
      %s301 = scalar_lea.vmem %s2, %s300
      %p302 = scmp.lt.s32.totalorder %s17, 1
      %s303 = scalar_select %p302, %s17, 1
      %s304 = smul.addr %s303, 5
      %s305 = smul.addr %s304, 4
      %s306 = scalar_lea.vmem %s3, %s305
      %p307 = scmp.lt.s32.totalorder %s17, 1
      %s308 = scalar_select %p307, %s17, 1
      %s309 = smul.addr %s308, 4
      %s310 = smul.addr %s309, 2
      %s311 = scalar_lea.vmem %s6, %s310
      %v313 = vld [vmem:[%s291] sm:$0x3]
      %v314 = vld [vmem:[%s291 + $0x4] sm:$0x3]
      %v315 = vld [vmem:[%s291 + $0x8] sm:$0x3]
      %v316 = vld [vmem:[%s291 + $0xc] sm:$0x3]
      %v317 = vld [vmem:[%s4] sm:$0xf]
      %v318 = vld [vmem:[%s4 + $0x4] sm:$0xf]
      %v319 = vld [vmem:[%s4 + $0x8] sm:$0xf]
      %v320 = vld [vmem:[%s4 + $0xc] sm:$0xf]
      %v321 = vld [vmem:[%s4 + $0x10] sm:$0xf]
      %v322 = vld [vmem:[%s4 + $0x14] sm:$0xf]
      %v323 = vld [vmem:[%s4 + $0x18] sm:$0xf]
      %v324 = vld [vmem:[%s4 + $0x1c] sm:$0xf]
      %v325 = vld [vmem:[%s296] sm:$0x3]
      %v326 = vld [vmem:[%s296 + $0x4] sm:$0x3]
      %v327 = vld [vmem:[%s296 + $0x8] sm:$0x3]
      %v328 = vld [vmem:[%s296 + $0xc] sm:$0x3]
      %s329 = scalar_lea.vmem %s4, 32
      %v330 = vld [vmem:[%s329] sm:$0xf]
      %v331 = vld [vmem:[%s329 + $0x4] sm:$0xf]
      %v332 = vld [vmem:[%s329 + $0x8] sm:$0xf]
      %v333 = vld [vmem:[%s329 + $0xc] sm:$0xf]
      %v334 = vld [vmem:[%s329 + $0x10] sm:$0xf]
      %v335 = vld [vmem:[%s329 + $0x14] sm:$0xf]
      %v336 = vld [vmem:[%s329 + $0x18] sm:$0xf]
      %v337 = vld [vmem:[%s329 + $0x1c] sm:$0xf]
      %v342 = vcombine.low %v325, %v326
      %v343 = vcombine.low %v327, %v328
      %v345 = vunpack.c.l.s4 1983009808
      %v346 = vunpack.c.0.s8 %v345
      %v347 = vlaneseq
      %v348 = vshrl.u32 %v347, 7
      %v349 = vsub.s32 %v346, %v348
      %v350 = vrot.slane %v342, %v349
      %v352 = vunpack.c.l.s4 1983009808
      %v353 = vunpack.c.0.s8 %v352
      %v354 = vlaneseq
      %v355 = vshrl.u32 %v354, 7
      %v356 = vsub.s32 %v353, %v355
      %v357 = vrot.slane %v343, %v356
      %v358 = vcombine.low %v350, %v357
      %v367 = vunpack.c.l.b16 %v330
      %v368 = vunpack.c.l.b16 %v331
      %v369 = vunpack.c.l.b16 %v332
      %v370 = vunpack.c.l.b16 %v333
      %v371 = vunpack.c.l.b16 %v334
      %v372 = vunpack.c.l.b16 %v335
      %v373 = vunpack.c.l.b16 %v336
      %v374 = vunpack.c.l.b16 %v337
      %v375 = vpack.c.b16 %v368, %v367
      %v376 = vpack.c.b16 %v370, %v369
      %v377 = vpack.c.b16 %v372, %v371
      %v378 = vpack.c.b16 %v374, %v373
      %vm383 = vcmask 523264
      %v385 = vsel %vm383, %v358, 0
      %387 = vmatprep.subr.bf16.mxu0 0
      %388 = vmatpush1.bf16.msra.mxu0 %v375
      %389 = vmatprep.subr.bf16.mxu0 0
      %390 = vmatpush1.bf16.msra.mxu0 %v376
      %391 = vmatprep.subr.bf16.mxu0 0
      %392 = vmatpush1.bf16.msra.mxu0 %v377
      %393 = vmatprep.subr.bf16.mxu0 0
      %394 = vmatpush1.bf16.msra.mxu0 %v378
      %395 = vmatprep.subr.bf16.mxu0 0
      %396 = vmatpush1.bf16.msra.mxu0 0
      %397 = vmatprep.subr.bf16.mxu0 0
      %398 = vmatpush1.bf16.msra.mxu0 0
      %399 = vmatprep.subr.bf16.mxu0 0
      %400 = vmatpush1.bf16.msra.mxu0 0
      %401 = vmatprep.subr.bf16.mxu0 0
      %402 = vmatpush1.bf16.msra.mxu0 0
      %403 = vmatprep.subr.bf16.mxu0 0
      %404 = vmatpush1.bf16.msra.mxu0 0
      %405 = vmatprep.subr.bf16.mxu0 0
      %406 = vmatpush1.bf16.msra.mxu0 0
      %407 = vmatprep.subr.bf16.mxu0 0
      %408 = vmatpush1.bf16.msra.mxu0 0
      %409 = vmatprep.subr.bf16.mxu0 0
      %410 = vmatpush1.bf16.msra.mxu0 0
      %411 = vmatprep.subr.bf16.mxu0 0
      %412 = vmatpush1.bf16.msra.mxu0 0
      %413 = vmatprep.subr.bf16.mxu0 0
      %414 = vmatpush1.bf16.msra.mxu0 0
      %415 = vmatprep.subr.bf16.mxu0 0
      %416 = vmatpush1.bf16.msra.mxu0 0
      %417 = vmatprep.subr.bf16.mxu0 0
      %418 = vmatpush1.bf16.msra.mxu0 0
      %419 = vmatprep.mubr.bf16.mxu0 0
      %420 = vmatmul.mubr.bf16.gmra.mrb[0].mxu0 %v385
      %v421 = vpop.f32.mrb[0].mxu0
      %v422 = vadd.f32 0.0, %v421
      %v423 = vpop.f32.mrb[0].mxu0
      %v424 = vpop.f32.mrb[0].mxu0
      %v425 = vadd.f32 0.0, %v424
      %v426 = vpop.f32.mrb[0].mxu0
      %427 = vdwg.mxu0
      %v432 = vcombine.low %v313, %v314
      %v433 = vcombine.low %v315, %v316
      %v435 = vunpack.c.l.s4 1983009808
      %v436 = vunpack.c.0.s8 %v435
      %v437 = vlaneseq
      %v438 = vshrl.u32 %v437, 7
      %v439 = vsub.s32 %v436, %v438
      %v440 = vrot.slane %v432, %v439
      %v442 = vunpack.c.l.s4 1983009808
      %v443 = vunpack.c.0.s8 %v442
      %v444 = vlaneseq
      %v445 = vshrl.u32 %v444, 7
      %v446 = vsub.s32 %v443, %v445
      %v447 = vrot.slane %v433, %v446
      %v448 = vcombine.low %v440, %v447
      %v457 = vunpack.c.l.b16 %v317
      %v458 = vunpack.c.l.b16 %v318
      %v459 = vunpack.c.l.b16 %v319
      %v460 = vunpack.c.l.b16 %v320
      %v461 = vunpack.c.l.b16 %v321
      %v462 = vunpack.c.l.b16 %v322
      %v463 = vunpack.c.l.b16 %v323
      %v464 = vunpack.c.l.b16 %v324
      %v465 = vpack.c.b16 %v458, %v457
      %v466 = vpack.c.b16 %v460, %v459
      %v467 = vpack.c.b16 %v462, %v461
      %v468 = vpack.c.b16 %v464, %v463
      %v474 = vsel %vm383, %v448, 0
      %476 = vmatprep.subr.bf16.mxu0 0
      %477 = vmatpush1.bf16.msra.mxu0 %v465
      %478 = vmatprep.subr.bf16.mxu0 0
      %479 = vmatpush1.bf16.msra.mxu0 %v466
      %480 = vmatprep.subr.bf16.mxu0 0
      %481 = vmatpush1.bf16.msra.mxu0 %v467
      %482 = vmatprep.subr.bf16.mxu0 0
      %483 = vmatpush1.bf16.msra.mxu0 %v468
      %484 = vmatprep.subr.bf16.mxu0 0
      %485 = vmatpush1.bf16.msra.mxu0 0
      %486 = vmatprep.subr.bf16.mxu0 0
      %487 = vmatpush1.bf16.msra.mxu0 0
      %488 = vmatprep.subr.bf16.mxu0 0
      %489 = vmatpush1.bf16.msra.mxu0 0
      %490 = vmatprep.subr.bf16.mxu0 0
      %491 = vmatpush1.bf16.msra.mxu0 0
      %492 = vmatprep.subr.bf16.mxu0 0
      %493 = vmatpush1.bf16.msra.mxu0 0
      %494 = vmatprep.subr.bf16.mxu0 0
      %495 = vmatpush1.bf16.msra.mxu0 0
      %496 = vmatprep.subr.bf16.mxu0 0
      %497 = vmatpush1.bf16.msra.mxu0 0
      %498 = vmatprep.subr.bf16.mxu0 0
      %499 = vmatpush1.bf16.msra.mxu0 0
      %500 = vmatprep.subr.bf16.mxu0 0
      %501 = vmatpush1.bf16.msra.mxu0 0
      %502 = vmatprep.subr.bf16.mxu0 0
      %503 = vmatpush1.bf16.msra.mxu0 0
      %504 = vmatprep.subr.bf16.mxu0 0
      %505 = vmatpush1.bf16.msra.mxu0 0
      %506 = vmatprep.subr.bf16.mxu0 0
      %507 = vmatpush1.bf16.msra.mxu0 0
      %508 = vmatprep.mubr.bf16.mxu0 0
      %509 = vmatmul.mubr.bf16.gmra.mrb[0].mxu0 %v474
      %v510 = vpop.f32.mrb[0].mxu0
      %v511 = vadd.f32 %v422, %v510
      %v512 = vpop.f32.mrb[0].mxu0
      %v513 = vpop.f32.mrb[0].mxu0
      %v514 = vadd.f32 %v425, %v513
      %v515 = vpop.f32.mrb[0].mxu0
      %516 = vdwg.mxu0
      %v517 = vld [vmem:[%s291] sm:$0x7]
      %v518 = vld [vmem:[%s291 + $0x4] sm:$0x7]
      %v519 = vld [vmem:[%s291 + $0x8] sm:$0x7]
      %v520 = vld [vmem:[%s291 + $0xc] sm:$0x7]
      %v526 = vunpack.c.l.s4 1983009808
      %v527 = vunpack.c.0.s8 %v526
      %v528 = vlaneseq
      %v529 = vshrl.u32 %v528, 7
      %v530 = vsub.s32 %v527, %v529
      %v531 = vrot.slane %v517, %v530
      %v532 = vcombine.high %v531, %v531
      %v534 = vunpack.c.l.s4 1983009808
      %v535 = vunpack.c.0.s8 %v534
      %v536 = vlaneseq
      %v537 = vshrl.u32 %v536, 7
      %v538 = vsub.s32 %v535, %v537
      %v539 = vrot.slane %v518, %v538
      %v540 = vcombine.high %v539, %v539
      %v542 = vunpack.c.l.s4 1983009808
      %v543 = vunpack.c.0.s8 %v542
      %v544 = vlaneseq
      %v545 = vshrl.u32 %v544, 7
      %v546 = vsub.s32 %v543, %v545
      %v547 = vrot.slane %v519, %v546
      %v548 = vcombine.high %v547, %v547
      %v550 = vunpack.c.l.s4 1983009808
      %v551 = vunpack.c.0.s8 %v550
      %v552 = vlaneseq
      %v553 = vshrl.u32 %v552, 7
      %v554 = vsub.s32 %v551, %v553
      %v555 = vrot.slane %v520, %v554
      %v556 = vcombine.high %v555, %v555
      %vm557 = vsmask.f32 1280
      %vm558 = vsmask.f32 3336
      %vm559 = vmor %vm557, %vm558
      %vm560 = vsmask.f32 5392
      %vm561 = vmor %vm559, %vm560
      %vm562 = vsmask.f32 7448
      %vm563 = vmor %vm561, %vm562
      %v565 = vshrl.u32 %v531, 16
      %v567 = vrot.slane %v565, 6
      %v568 = vshll.u32 %v531, 16
      %v570 = vrot.slane %v568, 7
      %v571 = vor.u32 %v567, %v570
      %v572 = vrot.slane %v571, 2
      %v574 = vshll.u32 %v532, 16
      %v576 = vrot.slane %v574, 7
      %v577 = vsel %vm563, %v572, %v576
      %v579 = vshrl.u32 %v539, 16
      %v581 = vrot.slane %v579, 6
      %v582 = vshll.u32 %v539, 16
      %v584 = vrot.slane %v582, 7
      %v585 = vor.u32 %v581, %v584
      %v586 = vrot.slane %v585, 2
      %v588 = vshll.u32 %v540, 16
      %v590 = vrot.slane %v588, 7
      %v591 = vsel %vm563, %v586, %v590
      %v593 = vshrl.u32 %v547, 16
      %v595 = vrot.slane %v593, 6
      %v596 = vshll.u32 %v547, 16
      %v598 = vrot.slane %v596, 7
      %v599 = vor.u32 %v595, %v598
      %v600 = vrot.slane %v599, 2
      %v602 = vshll.u32 %v548, 16
      %v604 = vrot.slane %v602, 7
      %v605 = vsel %vm563, %v600, %v604
      %v607 = vshrl.u32 %v555, 16
      %v609 = vrot.slane %v607, 6
      %v610 = vshll.u32 %v555, 16
      %v612 = vrot.slane %v610, 7
      %v613 = vor.u32 %v609, %v612
      %v614 = vrot.slane %v613, 2
      %v616 = vshll.u32 %v556, 16
      %v618 = vrot.slane %v616, 7
      %v619 = vsel %vm563, %v614, %v618
      %s620 = scalar_lea.vmem %s4, 64
      %v621 = vld [vmem:[%s620] sm:$0xf]
      %v622 = vld [vmem:[%s620 + $0x4] sm:$0xf]
      %v623 = vld [vmem:[%s620 + $0x8] sm:$0xf]
      %v624 = vld [vmem:[%s620 + $0xc] sm:$0xf]
      %v625 = vld [vmem:[%s620 + $0x10] sm:$0xf]
      %v626 = vld [vmem:[%s620 + $0x14] sm:$0xf]
      %v627 = vld [vmem:[%s620 + $0x18] sm:$0xf]
      %v628 = vld [vmem:[%s620 + $0x1c] sm:$0xf]
      %v629 = vcombine.low %v577, %v591
      %v630 = vcombine.low %v605, %v619
      %v632 = vunpack.c.l.s4 1983009808
      %v633 = vunpack.c.0.s8 %v632
      %v634 = vlaneseq
      %v635 = vshrl.u32 %v634, 7
      %v636 = vsub.s32 %v633, %v635
      %v637 = vrot.slane %v629, %v636
      %v639 = vunpack.c.l.s4 1983009808
      %v640 = vunpack.c.0.s8 %v639
      %v641 = vlaneseq
      %v642 = vshrl.u32 %v641, 7
      %v643 = vsub.s32 %v640, %v642
      %v644 = vrot.slane %v630, %v643
      %v645 = vcombine.low %v637, %v644
      %v654 = vunpack.c.l.b16 %v621
      %v655 = vunpack.c.l.b16 %v622
      %v656 = vunpack.c.l.b16 %v623
      %v657 = vunpack.c.l.b16 %v624
      %v658 = vunpack.c.l.b16 %v625
      %v659 = vunpack.c.l.b16 %v626
      %v660 = vunpack.c.l.b16 %v627
      %v661 = vunpack.c.l.b16 %v628
      %v662 = vpack.c.b16 %v655, %v654
      %v663 = vpack.c.b16 %v657, %v656
      %v664 = vpack.c.b16 %v659, %v658
      %v665 = vpack.c.b16 %v661, %v660
      %v671 = vsel %vm383, %v645, 0
      %673 = vmatprep.subr.bf16.mxu0 0
      %674 = vmatpush1.bf16.msra.mxu0 %v662
      %675 = vmatprep.subr.bf16.mxu0 0
      %676 = vmatpush1.bf16.msra.mxu0 %v663
      %677 = vmatprep.subr.bf16.mxu0 0
      %678 = vmatpush1.bf16.msra.mxu0 %v664
      %679 = vmatprep.subr.bf16.mxu0 0
      %680 = vmatpush1.bf16.msra.mxu0 %v665
      %681 = vmatprep.subr.bf16.mxu0 0
      %682 = vmatpush1.bf16.msra.mxu0 0
      %683 = vmatprep.subr.bf16.mxu0 0
      %684 = vmatpush1.bf16.msra.mxu0 0
      %685 = vmatprep.subr.bf16.mxu0 0
      %686 = vmatpush1.bf16.msra.mxu0 0
      %687 = vmatprep.subr.bf16.mxu0 0
      %688 = vmatpush1.bf16.msra.mxu0 0
      %689 = vmatprep.subr.bf16.mxu0 0
      %690 = vmatpush1.bf16.msra.mxu0 0
      %691 = vmatprep.subr.bf16.mxu0 0
      %692 = vmatpush1.bf16.msra.mxu0 0
      %693 = vmatprep.subr.bf16.mxu0 0
      %694 = vmatpush1.bf16.msra.mxu0 0
      %695 = vmatprep.subr.bf16.mxu0 0
      %696 = vmatpush1.bf16.msra.mxu0 0
      %697 = vmatprep.subr.bf16.mxu0 0
      %698 = vmatpush1.bf16.msra.mxu0 0
      %699 = vmatprep.subr.bf16.mxu0 0
      %700 = vmatpush1.bf16.msra.mxu0 0
      %701 = vmatprep.subr.bf16.mxu0 0
      %702 = vmatpush1.bf16.msra.mxu0 0
      %703 = vmatprep.subr.bf16.mxu0 0
      %704 = vmatpush1.bf16.msra.mxu0 0
      %705 = vmatprep.mubr.bf16.mxu0 0
      %706 = vmatmul.mubr.bf16.gmra.mrb[0].mxu0 %v671
      %v707 = vpop.f32.mrb[0].mxu0
      %v708 = vadd.f32 0.0, %v707
      %v709 = vpop.f32.mrb[0].mxu0
      %v710 = vpop.f32.mrb[0].mxu0
      %v711 = vadd.f32 0.0, %v710
      %v712 = vpop.f32.mrb[0].mxu0
      %713 = vdwg.mxu0
      %v714 = vadd.f32 %v511, %v708
      %v715 = vadd.f32 %v514, %v711
      %v716 = vld [vmem:[%s301] sm:$0x3]
      %v717 = vld [vmem:[%s301 + $0x4] sm:$0x3]
      %v718 = vld [vmem:[%s301 + $0x8] sm:$0x3]
      %v719 = vld [vmem:[%s301 + $0xc] sm:$0x3]
      %s720 = scalar_lea.vmem %s4, 96
      %v721 = vld [vmem:[%s720] sm:$0xf]
      %v722 = vld [vmem:[%s720 + $0x4] sm:$0xf]
      %v723 = vld [vmem:[%s720 + $0x8] sm:$0xf]
      %v724 = vld [vmem:[%s720 + $0xc] sm:$0xf]
      %v725 = vld [vmem:[%s720 + $0x10] sm:$0xf]
      %v726 = vld [vmem:[%s720 + $0x14] sm:$0xf]
      %v727 = vld [vmem:[%s720 + $0x18] sm:$0xf]
      %v728 = vld [vmem:[%s720 + $0x1c] sm:$0xf]
      %v733 = vcombine.low %v716, %v717
      %v734 = vcombine.low %v718, %v719
      %v736 = vunpack.c.l.s4 1983009808
      %v737 = vunpack.c.0.s8 %v736
      %v738 = vlaneseq
      %v739 = vshrl.u32 %v738, 7
      %v740 = vsub.s32 %v737, %v739
      %v741 = vrot.slane %v733, %v740
      %v743 = vunpack.c.l.s4 1983009808
      %v744 = vunpack.c.0.s8 %v743
      %v745 = vlaneseq
      %v746 = vshrl.u32 %v745, 7
      %v747 = vsub.s32 %v744, %v746
      %v748 = vrot.slane %v734, %v747
      %v749 = vcombine.low %v741, %v748
      %v758 = vunpack.c.l.b16 %v721
      %v759 = vunpack.c.l.b16 %v722
      %v760 = vunpack.c.l.b16 %v723
      %v761 = vunpack.c.l.b16 %v724
      %v762 = vunpack.c.l.b16 %v725
      %v763 = vunpack.c.l.b16 %v726
      %v764 = vunpack.c.l.b16 %v727
      %v765 = vunpack.c.l.b16 %v728
      %v766 = vpack.c.b16 %v759, %v758
      %v767 = vpack.c.b16 %v761, %v760
      %v768 = vpack.c.b16 %v763, %v762
      %v769 = vpack.c.b16 %v765, %v764
      %v775 = vsel %vm383, %v749, 0
      %777 = vmatprep.subr.bf16.mxu0 0
      %778 = vmatpush1.bf16.msra.mxu0 %v766
      %779 = vmatprep.subr.bf16.mxu0 0
      %780 = vmatpush1.bf16.msra.mxu0 %v767
      %781 = vmatprep.subr.bf16.mxu0 0
      %782 = vmatpush1.bf16.msra.mxu0 %v768
      %783 = vmatprep.subr.bf16.mxu0 0
      %784 = vmatpush1.bf16.msra.mxu0 %v769
      %785 = vmatprep.subr.bf16.mxu0 0
      %786 = vmatpush1.bf16.msra.mxu0 0
      %787 = vmatprep.subr.bf16.mxu0 0
      %788 = vmatpush1.bf16.msra.mxu0 0
      %789 = vmatprep.subr.bf16.mxu0 0
      %790 = vmatpush1.bf16.msra.mxu0 0
      %791 = vmatprep.subr.bf16.mxu0 0
      %792 = vmatpush1.bf16.msra.mxu0 0
      %793 = vmatprep.subr.bf16.mxu0 0
      %794 = vmatpush1.bf16.msra.mxu0 0
      %795 = vmatprep.subr.bf16.mxu0 0
      %796 = vmatpush1.bf16.msra.mxu0 0
      %797 = vmatprep.subr.bf16.mxu0 0
      %798 = vmatpush1.bf16.msra.mxu0 0
      %799 = vmatprep.subr.bf16.mxu0 0
      %800 = vmatpush1.bf16.msra.mxu0 0
      %801 = vmatprep.subr.bf16.mxu0 0
      %802 = vmatpush1.bf16.msra.mxu0 0
      %803 = vmatprep.subr.bf16.mxu0 0
      %804 = vmatpush1.bf16.msra.mxu0 0
      %805 = vmatprep.subr.bf16.mxu0 0
      %806 = vmatpush1.bf16.msra.mxu0 0
      %807 = vmatprep.subr.bf16.mxu0 0
      %808 = vmatpush1.bf16.msra.mxu0 0
      %809 = vmatprep.mubr.bf16.mxu0 0
      %810 = vmatmul.mubr.bf16.gmra.mrb[0].mxu0 %v775
      %v811 = vpop.f32.mrb[0].mxu0
      %v812 = vadd.f32 0.0, %v811
      %v813 = vpop.f32.mrb[0].mxu0
      %v814 = vpop.f32.mrb[0].mxu0
      %v815 = vadd.f32 0.0, %v814
      %v816 = vpop.f32.mrb[0].mxu0
      %817 = vdwg.mxu0
      %v818 = vadd.f32 %v714, %v812
      %v819 = vadd.f32 %v715, %v815
      %v820 = vld [vmem:[%s306] sm:$0x3]
      %v821 = vld [vmem:[%s306 + $0x4] sm:$0x3]
      %v822 = vld [vmem:[%s306 + $0x8] sm:$0x3]
      %v823 = vld [vmem:[%s306 + $0xc] sm:$0x3]
      %s824 = scalar_lea.vmem %s4, 128
      %v825 = vld [vmem:[%s824] sm:$0xf]
      %v826 = vld [vmem:[%s824 + $0x4] sm:$0xf]
      %v827 = vld [vmem:[%s824 + $0x8] sm:$0xf]
      %v828 = vld [vmem:[%s824 + $0xc] sm:$0xf]
      %v829 = vld [vmem:[%s824 + $0x10] sm:$0xf]
      %v830 = vld [vmem:[%s824 + $0x14] sm:$0xf]
      %v831 = vld [vmem:[%s824 + $0x18] sm:$0xf]
      %v832 = vld [vmem:[%s824 + $0x1c] sm:$0xf]
      %v837 = vcombine.low %v820, %v821
      %v838 = vcombine.low %v822, %v823
      %v840 = vunpack.c.l.s4 1983009808
      %v841 = vunpack.c.0.s8 %v840
      %v842 = vlaneseq
      %v843 = vshrl.u32 %v842, 7
      %v844 = vsub.s32 %v841, %v843
      %v845 = vrot.slane %v837, %v844
      %v847 = vunpack.c.l.s4 1983009808
      %v848 = vunpack.c.0.s8 %v847
      %v849 = vlaneseq
      %v850 = vshrl.u32 %v849, 7
      %v851 = vsub.s32 %v848, %v850
      %v852 = vrot.slane %v838, %v851
      %v853 = vcombine.low %v845, %v852
      %v862 = vunpack.c.l.b16 %v825
      %v863 = vunpack.c.l.b16 %v826
      %v864 = vunpack.c.l.b16 %v827
      %v865 = vunpack.c.l.b16 %v828
      %v866 = vunpack.c.l.b16 %v829
      %v867 = vunpack.c.l.b16 %v830
      %v868 = vunpack.c.l.b16 %v831
      %v869 = vunpack.c.l.b16 %v832
      %v870 = vpack.c.b16 %v863, %v862
      %v871 = vpack.c.b16 %v865, %v864
      %v872 = vpack.c.b16 %v867, %v866
      %v873 = vpack.c.b16 %v869, %v868
      %v879 = vsel %vm383, %v853, 0
      %881 = vmatprep.subr.bf16.mxu0 0
      %882 = vmatpush1.bf16.msra.mxu0 %v870
      %883 = vmatprep.subr.bf16.mxu0 0
      %884 = vmatpush1.bf16.msra.mxu0 %v871
      %885 = vmatprep.subr.bf16.mxu0 0
      %886 = vmatpush1.bf16.msra.mxu0 %v872
      %887 = vmatprep.subr.bf16.mxu0 0
      %888 = vmatpush1.bf16.msra.mxu0 %v873
      %889 = vmatprep.subr.bf16.mxu0 0
      %890 = vmatpush1.bf16.msra.mxu0 0
      %891 = vmatprep.subr.bf16.mxu0 0
      %892 = vmatpush1.bf16.msra.mxu0 0
      %893 = vmatprep.subr.bf16.mxu0 0
      %894 = vmatpush1.bf16.msra.mxu0 0
      %895 = vmatprep.subr.bf16.mxu0 0
      %896 = vmatpush1.bf16.msra.mxu0 0
      %897 = vmatprep.subr.bf16.mxu0 0
      %898 = vmatpush1.bf16.msra.mxu0 0
      %899 = vmatprep.subr.bf16.mxu0 0
      %900 = vmatpush1.bf16.msra.mxu0 0
      %901 = vmatprep.subr.bf16.mxu0 0
      %902 = vmatpush1.bf16.msra.mxu0 0
      %903 = vmatprep.subr.bf16.mxu0 0
      %904 = vmatpush1.bf16.msra.mxu0 0
      %905 = vmatprep.subr.bf16.mxu0 0
      %906 = vmatpush1.bf16.msra.mxu0 0
      %907 = vmatprep.subr.bf16.mxu0 0
      %908 = vmatpush1.bf16.msra.mxu0 0
      %909 = vmatprep.subr.bf16.mxu0 0
      %910 = vmatpush1.bf16.msra.mxu0 0
      %911 = vmatprep.subr.bf16.mxu0 0
      %912 = vmatpush1.bf16.msra.mxu0 0
      %913 = vmatprep.mubr.bf16.mxu0 0
      %914 = vmatmul.mubr.bf16.gmra.mrb[0].mxu0 %v879
      %v915 = vpop.f32.mrb[0].mxu0
      %v916 = vadd.f32 0.0, %v915
      %v917 = vpop.f32.mrb[0].mxu0
      %v918 = vpop.f32.mrb[0].mxu0
      %v919 = vadd.f32 0.0, %v918
      %v920 = vpop.f32.mrb[0].mxu0
      %921 = vdwg.mxu0
      %v922 = vadd.f32 %v818, %v916
      %v923 = vadd.f32 %v819, %v919
      %v924 = vld [vmem:[%s301] sm:$0x7]
      %v925 = vld [vmem:[%s301 + $0x4] sm:$0x7]
      %v926 = vld [vmem:[%s301 + $0x8] sm:$0x7]
      %v927 = vld [vmem:[%s301 + $0xc] sm:$0x7]
      %v933 = vunpack.c.l.s4 1983009808
      %v934 = vunpack.c.0.s8 %v933
      %v935 = vlaneseq
      %v936 = vshrl.u32 %v935, 7
      %v937 = vsub.s32 %v934, %v936
      %v938 = vrot.slane %v924, %v937
      %v939 = vcombine.high %v938, %v938
      %v941 = vunpack.c.l.s4 1983009808
      %v942 = vunpack.c.0.s8 %v941
      %v943 = vlaneseq
      %v944 = vshrl.u32 %v943, 7
      %v945 = vsub.s32 %v942, %v944
      %v946 = vrot.slane %v925, %v945
      %v947 = vcombine.high %v946, %v946
      %v949 = vunpack.c.l.s4 1983009808
      %v950 = vunpack.c.0.s8 %v949
      %v951 = vlaneseq
      %v952 = vshrl.u32 %v951, 7
      %v953 = vsub.s32 %v950, %v952
      %v954 = vrot.slane %v926, %v953
      %v955 = vcombine.high %v954, %v954
      %v957 = vunpack.c.l.s4 1983009808
      %v958 = vunpack.c.0.s8 %v957
      %v959 = vlaneseq
      %v960 = vshrl.u32 %v959, 7
      %v961 = vsub.s32 %v958, %v960
      %v962 = vrot.slane %v927, %v961
      %v963 = vcombine.high %v962, %v962
      %v965 = vshrl.u32 %v938, 16
      %v967 = vrot.slane %v965, 6
      %v968 = vshll.u32 %v938, 16
      %v970 = vrot.slane %v968, 7
      %v971 = vor.u32 %v967, %v970
      %v972 = vrot.slane %v971, 2
      %v974 = vshll.u32 %v939, 16
      %v976 = vrot.slane %v974, 7
      %v977 = vsel %vm563, %v972, %v976
      %v979 = vshrl.u32 %v946, 16
      %v981 = vrot.slane %v979, 6
      %v982 = vshll.u32 %v946, 16
      %v984 = vrot.slane %v982, 7
      %v985 = vor.u32 %v981, %v984
      %v986 = vrot.slane %v985, 2
      %v988 = vshll.u32 %v947, 16
      %v990 = vrot.slane %v988, 7
      %v991 = vsel %vm563, %v986, %v990
      %v993 = vshrl.u32 %v954, 16
      %v995 = vrot.slane %v993, 6
      %v996 = vshll.u32 %v954, 16
      %v998 = vrot.slane %v996, 7
      %v999 = vor.u32 %v995, %v998
      %v1000 = vrot.slane %v999, 2
      %v1002 = vshll.u32 %v955, 16
      %v1004 = vrot.slane %v1002, 7
      %v1005 = vsel %vm563, %v1000, %v1004
      %v1007 = vshrl.u32 %v962, 16
      %v1009 = vrot.slane %v1007, 6
      %v1010 = vshll.u32 %v962, 16
      %v1012 = vrot.slane %v1010, 7
      %v1013 = vor.u32 %v1009, %v1012
      %v1014 = vrot.slane %v1013, 2
      %v1016 = vshll.u32 %v963, 16
      %v1018 = vrot.slane %v1016, 7
      %v1019 = vsel %vm563, %v1014, %v1018
      %s1020 = scalar_lea.vmem %s4, 160
      %v1021 = vld [vmem:[%s1020] sm:$0xf]
      %v1022 = vld [vmem:[%s1020 + $0x4] sm:$0xf]
      %v1023 = vld [vmem:[%s1020 + $0x8] sm:$0xf]
      %v1024 = vld [vmem:[%s1020 + $0xc] sm:$0xf]
      %v1025 = vld [vmem:[%s1020 + $0x10] sm:$0xf]
      %v1026 = vld [vmem:[%s1020 + $0x14] sm:$0xf]
      %v1027 = vld [vmem:[%s1020 + $0x18] sm:$0xf]
      %v1028 = vld [vmem:[%s1020 + $0x1c] sm:$0xf]
      %v1029 = vcombine.low %v977, %v991
      %v1030 = vcombine.low %v1005, %v1019
      %v1032 = vunpack.c.l.s4 1983009808
      %v1033 = vunpack.c.0.s8 %v1032
      %v1034 = vlaneseq
      %v1035 = vshrl.u32 %v1034, 7
      %v1036 = vsub.s32 %v1033, %v1035
      %v1037 = vrot.slane %v1029, %v1036
      %v1039 = vunpack.c.l.s4 1983009808
      %v1040 = vunpack.c.0.s8 %v1039
      %v1041 = vlaneseq
      %v1042 = vshrl.u32 %v1041, 7
      %v1043 = vsub.s32 %v1040, %v1042
      %v1044 = vrot.slane %v1030, %v1043
      %v1045 = vcombine.low %v1037, %v1044
      %v1054 = vunpack.c.l.b16 %v1021
      %v1055 = vunpack.c.l.b16 %v1022
      %v1056 = vunpack.c.l.b16 %v1023
      %v1057 = vunpack.c.l.b16 %v1024
      %v1058 = vunpack.c.l.b16 %v1025
      %v1059 = vunpack.c.l.b16 %v1026
      %v1060 = vunpack.c.l.b16 %v1027
      %v1061 = vunpack.c.l.b16 %v1028
      %v1062 = vpack.c.b16 %v1055, %v1054
      %v1063 = vpack.c.b16 %v1057, %v1056
      %v1064 = vpack.c.b16 %v1059, %v1058
      %v1065 = vpack.c.b16 %v1061, %v1060
      %v1071 = vsel %vm383, %v1045, 0
      %1073 = vmatprep.subr.bf16.mxu0 0
      %1074 = vmatpush1.bf16.msra.mxu0 %v1062
      %1075 = vmatprep.subr.bf16.mxu0 0
      %1076 = vmatpush1.bf16.msra.mxu0 %v1063
      %1077 = vmatprep.subr.bf16.mxu0 0
      %1078 = vmatpush1.bf16.msra.mxu0 %v1064
      %1079 = vmatprep.subr.bf16.mxu0 0
      %1080 = vmatpush1.bf16.msra.mxu0 %v1065
      %1081 = vmatprep.subr.bf16.mxu0 0
      %1082 = vmatpush1.bf16.msra.mxu0 0
      %1083 = vmatprep.subr.bf16.mxu0 0
      %1084 = vmatpush1.bf16.msra.mxu0 0
      %1085 = vmatprep.subr.bf16.mxu0 0
      %1086 = vmatpush1.bf16.msra.mxu0 0
      %1087 = vmatprep.subr.bf16.mxu0 0
      %1088 = vmatpush1.bf16.msra.mxu0 0
      %1089 = vmatprep.subr.bf16.mxu0 0
      %1090 = vmatpush1.bf16.msra.mxu0 0
      %1091 = vmatprep.subr.bf16.mxu0 0
      %1092 = vmatpush1.bf16.msra.mxu0 0
      %1093 = vmatprep.subr.bf16.mxu0 0
      %1094 = vmatpush1.bf16.msra.mxu0 0
      %1095 = vmatprep.subr.bf16.mxu0 0
      %1096 = vmatpush1.bf16.msra.mxu0 0
      %1097 = vmatprep.subr.bf16.mxu0 0
      %1098 = vmatpush1.bf16.msra.mxu0 0
      %1099 = vmatprep.subr.bf16.mxu0 0
      %1100 = vmatpush1.bf16.msra.mxu0 0
      %1101 = vmatprep.subr.bf16.mxu0 0
      %1102 = vmatpush1.bf16.msra.mxu0 0
      %1103 = vmatprep.subr.bf16.mxu0 0
      %1104 = vmatpush1.bf16.msra.mxu0 0
      %1105 = vmatprep.mubr.bf16.mxu0 0
      %1106 = vmatmul.mubr.bf16.gmra.mrb[0].mxu0 %v1071
      %v1107 = vpop.f32.mrb[0].mxu0
      %v1108 = vadd.f32 0.0, %v1107
      %v1109 = vpop.f32.mrb[0].mxu0
      %v1110 = vpop.f32.mrb[0].mxu0
      %v1111 = vadd.f32 0.0, %v1110
      %v1112 = vpop.f32.mrb[0].mxu0
      %1113 = vdwg.mxu0
      %v1114 = vadd.f32 %v922, %v1108
      %v1115 = vadd.f32 %v923, %v1111
      %s1116 = scalar_lea.vmem %s291, 4
      %v1117 = vld [vmem:[%s1116] sm:$0x3]
      %v1118 = vld [vmem:[%s1116 + $0x4] sm:$0x3]
      %v1119 = vld [vmem:[%s1116 + $0x8] sm:$0x3]
      %v1120 = vld [vmem:[%s1116 + $0xc] sm:$0x3]
      %s1121 = scalar_lea.vmem %s4, 192
      %v1122 = vld [vmem:[%s1121] sm:$0xf]
      %v1123 = vld [vmem:[%s1121 + $0x4] sm:$0xf]
      %v1124 = vld [vmem:[%s1121 + $0x8] sm:$0xf]
      %v1125 = vld [vmem:[%s1121 + $0xc] sm:$0xf]
      %v1126 = vld [vmem:[%s1121 + $0x10] sm:$0xf]
      %v1127 = vld [vmem:[%s1121 + $0x14] sm:$0xf]
      %v1128 = vld [vmem:[%s1121 + $0x18] sm:$0xf]
      %v1129 = vld [vmem:[%s1121 + $0x1c] sm:$0xf]
      %v1134 = vcombine.low %v1117, %v1118
      %v1135 = vcombine.low %v1119, %v1120
      %v1137 = vunpack.c.l.s4 1983009808
      %v1138 = vunpack.c.0.s8 %v1137
      %v1139 = vlaneseq
      %v1140 = vshrl.u32 %v1139, 7
      %v1141 = vsub.s32 %v1138, %v1140
      %v1142 = vrot.slane %v1134, %v1141
      %v1144 = vunpack.c.l.s4 1983009808
      %v1145 = vunpack.c.0.s8 %v1144
      %v1146 = vlaneseq
      %v1147 = vshrl.u32 %v1146, 7
      %v1148 = vsub.s32 %v1145, %v1147
      %v1149 = vrot.slane %v1135, %v1148
      %v1150 = vcombine.low %v1142, %v1149
      %v1159 = vunpack.c.l.b16 %v1122
      %v1160 = vunpack.c.l.b16 %v1123
      %v1161 = vunpack.c.l.b16 %v1124
      %v1162 = vunpack.c.l.b16 %v1125
      %v1163 = vunpack.c.l.b16 %v1126
      %v1164 = vunpack.c.l.b16 %v1127
      %v1165 = vunpack.c.l.b16 %v1128
      %v1166 = vunpack.c.l.b16 %v1129
      %v1167 = vpack.c.b16 %v1160, %v1159
      %v1168 = vpack.c.b16 %v1162, %v1161
      %v1169 = vpack.c.b16 %v1164, %v1163
      %v1170 = vpack.c.b16 %v1166, %v1165
      %v1176 = vsel %vm383, %v1150, 0
      %1178 = vmatprep.subr.bf16.mxu0 0
      %1179 = vmatpush1.bf16.msra.mxu0 %v1167
      %1180 = vmatprep.subr.bf16.mxu0 0
      %1181 = vmatpush1.bf16.msra.mxu0 %v1168
      %1182 = vmatprep.subr.bf16.mxu0 0
      %1183 = vmatpush1.bf16.msra.mxu0 %v1169
      %1184 = vmatprep.subr.bf16.mxu0 0
      %1185 = vmatpush1.bf16.msra.mxu0 %v1170
      %1186 = vmatprep.subr.bf16.mxu0 0
      %1187 = vmatpush1.bf16.msra.mxu0 0
      %1188 = vmatprep.subr.bf16.mxu0 0
      %1189 = vmatpush1.bf16.msra.mxu0 0
      %1190 = vmatprep.subr.bf16.mxu0 0
      %1191 = vmatpush1.bf16.msra.mxu0 0
      %1192 = vmatprep.subr.bf16.mxu0 0
      %1193 = vmatpush1.bf16.msra.mxu0 0
      %1194 = vmatprep.subr.bf16.mxu0 0
      %1195 = vmatpush1.bf16.msra.mxu0 0
      %1196 = vmatprep.subr.bf16.mxu0 0
      %1197 = vmatpush1.bf16.msra.mxu0 0
      %1198 = vmatprep.subr.bf16.mxu0 0
      %1199 = vmatpush1.bf16.msra.mxu0 0
      %1200 = vmatprep.subr.bf16.mxu0 0
      %1201 = vmatpush1.bf16.msra.mxu0 0
      %1202 = vmatprep.subr.bf16.mxu0 0
      %1203 = vmatpush1.bf16.msra.mxu0 0
      %1204 = vmatprep.subr.bf16.mxu0 0
      %1205 = vmatpush1.bf16.msra.mxu0 0
      %1206 = vmatprep.subr.bf16.mxu0 0
      %1207 = vmatpush1.bf16.msra.mxu0 0
      %1208 = vmatprep.subr.bf16.mxu0 0
      %1209 = vmatpush1.bf16.msra.mxu0 0
      %1210 = vmatprep.mubr.bf16.mxu0 0
      %1211 = vmatmul.mubr.bf16.gmra.mrb[0].mxu0 %v1176
      %v1212 = vpop.f32.mrb[0].mxu0
      %v1213 = vadd.f32 0.0, %v1212
      %v1214 = vpop.f32.mrb[0].mxu0
      %v1215 = vpop.f32.mrb[0].mxu0
      %v1216 = vadd.f32 0.0, %v1215
      %v1217 = vpop.f32.mrb[0].mxu0
      %1218 = vdwg.mxu0
      %v1219 = vadd.f32 %v1114, %v1213
      %v1220 = vadd.f32 %v1115, %v1216
      %s1221 = scalar_lea.vmem %s296, 4
      %v1222 = vld [vmem:[%s1221] sm:$0x3]
      %v1223 = vld [vmem:[%s1221 + $0x4] sm:$0x3]
      %v1224 = vld [vmem:[%s1221 + $0x8] sm:$0x3]
      %v1225 = vld [vmem:[%s1221 + $0xc] sm:$0x3]
      %s1226 = scalar_lea.vmem %s4, 224
      %v1227 = vld [vmem:[%s1226] sm:$0xf]
      %v1228 = vld [vmem:[%s1226 + $0x4] sm:$0xf]
      %v1229 = vld [vmem:[%s1226 + $0x8] sm:$0xf]
      %v1230 = vld [vmem:[%s1226 + $0xc] sm:$0xf]
      %v1231 = vld [vmem:[%s1226 + $0x10] sm:$0xf]
      %v1232 = vld [vmem:[%s1226 + $0x14] sm:$0xf]
      %v1233 = vld [vmem:[%s1226 + $0x18] sm:$0xf]
      %v1234 = vld [vmem:[%s1226 + $0x1c] sm:$0xf]
      %v1239 = vcombine.low %v1222, %v1223
      %v1240 = vcombine.low %v1224, %v1225
      %v1242 = vunpack.c.l.s4 1983009808
      %v1243 = vunpack.c.0.s8 %v1242
      %v1244 = vlaneseq
      %v1245 = vshrl.u32 %v1244, 7
      %v1246 = vsub.s32 %v1243, %v1245
      %v1247 = vrot.slane %v1239, %v1246
      %v1249 = vunpack.c.l.s4 1983009808
      %v1250 = vunpack.c.0.s8 %v1249
      %v1251 = vlaneseq
      %v1252 = vshrl.u32 %v1251, 7
      %v1253 = vsub.s32 %v1250, %v1252
      %v1254 = vrot.slane %v1240, %v1253
      %v1255 = vcombine.low %v1247, %v1254
      %v1264 = vunpack.c.l.b16 %v1227
      %v1265 = vunpack.c.l.b16 %v1228
      %v1266 = vunpack.c.l.b16 %v1229
      %v1267 = vunpack.c.l.b16 %v1230
      %v1268 = vunpack.c.l.b16 %v1231
      %v1269 = vunpack.c.l.b16 %v1232
      %v1270 = vunpack.c.l.b16 %v1233
      %v1271 = vunpack.c.l.b16 %v1234
      %v1272 = vpack.c.b16 %v1265, %v1264
      %v1273 = vpack.c.b16 %v1267, %v1266
      %v1274 = vpack.c.b16 %v1269, %v1268
      %v1275 = vpack.c.b16 %v1271, %v1270
      %v1281 = vsel %vm383, %v1255, 0
      %1283 = vmatprep.subr.bf16.mxu0 0
      %1284 = vmatpush1.bf16.msra.mxu0 %v1272
      %1285 = vmatprep.subr.bf16.mxu0 0
      %1286 = vmatpush1.bf16.msra.mxu0 %v1273
      %1287 = vmatprep.subr.bf16.mxu0 0
      %1288 = vmatpush1.bf16.msra.mxu0 %v1274
      %1289 = vmatprep.subr.bf16.mxu0 0
      %1290 = vmatpush1.bf16.msra.mxu0 %v1275
      %1291 = vmatprep.subr.bf16.mxu0 0
      %1292 = vmatpush1.bf16.msra.mxu0 0
      %1293 = vmatprep.subr.bf16.mxu0 0
      %1294 = vmatpush1.bf16.msra.mxu0 0
      %1295 = vmatprep.subr.bf16.mxu0 0
      %1296 = vmatpush1.bf16.msra.mxu0 0
      %1297 = vmatprep.subr.bf16.mxu0 0
      %1298 = vmatpush1.bf16.msra.mxu0 0
      %1299 = vmatprep.subr.bf16.mxu0 0
      %1300 = vmatpush1.bf16.msra.mxu0 0
      %1301 = vmatprep.subr.bf16.mxu0 0
      %1302 = vmatpush1.bf16.msra.mxu0 0
      %1303 = vmatprep.subr.bf16.mxu0 0
      %1304 = vmatpush1.bf16.msra.mxu0 0
      %1305 = vmatprep.subr.bf16.mxu0 0
      %1306 = vmatpush1.bf16.msra.mxu0 0
      %1307 = vmatprep.subr.bf16.mxu0 0
      %1308 = vmatpush1.bf16.msra.mxu0 0
      %1309 = vmatprep.subr.bf16.mxu0 0
      %1310 = vmatpush1.bf16.msra.mxu0 0
      %1311 = vmatprep.subr.bf16.mxu0 0
      %1312 = vmatpush1.bf16.msra.mxu0 0
      %1313 = vmatprep.subr.bf16.mxu0 0
      %1314 = vmatpush1.bf16.msra.mxu0 0
      %1315 = vmatprep.mubr.bf16.mxu0 0
      %1316 = vmatmul.mubr.bf16.gmra.mrb[0].mxu0 %v1281
      %v1317 = vpop.f32.mrb[0].mxu0
      %v1318 = vadd.f32 0.0, %v1317
      %v1319 = vpop.f32.mrb[0].mxu0
      %v1320 = vpop.f32.mrb[0].mxu0
      %v1321 = vadd.f32 0.0, %v1320
      %v1322 = vpop.f32.mrb[0].mxu0
      %1323 = vdwg.mxu0
      %v1324 = vadd.f32 %v1219, %v1318
      %v1325 = vadd.f32 %v1220, %v1321
      %v1326 = vld [vmem:[%s1116] sm:$0x7]
      %v1327 = vld [vmem:[%s1116 + $0x4] sm:$0x7]
      %v1328 = vld [vmem:[%s1116 + $0x8] sm:$0x7]
      %v1329 = vld [vmem:[%s1116 + $0xc] sm:$0x7]
      %v1335 = vunpack.c.l.s4 1983009808
      %v1336 = vunpack.c.0.s8 %v1335
      %v1337 = vlaneseq
      %v1338 = vshrl.u32 %v1337, 7
      %v1339 = vsub.s32 %v1336, %v1338
      %v1340 = vrot.slane %v1326, %v1339
      %v1341 = vcombine.high %v1340, %v1340
      %v1343 = vunpack.c.l.s4 1983009808
      %v1344 = vunpack.c.0.s8 %v1343
      %v1345 = vlaneseq
      %v1346 = vshrl.u32 %v1345, 7
      %v1347 = vsub.s32 %v1344, %v1346
      %v1348 = vrot.slane %v1327, %v1347
      %v1349 = vcombine.high %v1348, %v1348
      %v1351 = vunpack.c.l.s4 1983009808
      %v1352 = vunpack.c.0.s8 %v1351
      %v1353 = vlaneseq
      %v1354 = vshrl.u32 %v1353, 7
      %v1355 = vsub.s32 %v1352, %v1354
      %v1356 = vrot.slane %v1328, %v1355
      %v1357 = vcombine.high %v1356, %v1356
      %v1359 = vunpack.c.l.s4 1983009808
      %v1360 = vunpack.c.0.s8 %v1359
      %v1361 = vlaneseq
      %v1362 = vshrl.u32 %v1361, 7
      %v1363 = vsub.s32 %v1360, %v1362
      %v1364 = vrot.slane %v1329, %v1363
      %v1365 = vcombine.high %v1364, %v1364
      %v1367 = vshrl.u32 %v1340, 16
      %v1369 = vrot.slane %v1367, 6
      %v1370 = vshll.u32 %v1340, 16
      %v1372 = vrot.slane %v1370, 7
      %v1373 = vor.u32 %v1369, %v1372
      %v1374 = vrot.slane %v1373, 2
      %v1376 = vshll.u32 %v1341, 16
      %v1378 = vrot.slane %v1376, 7
      %v1379 = vsel %vm563, %v1374, %v1378
      %v1381 = vshrl.u32 %v1348, 16
      %v1383 = vrot.slane %v1381, 6
      %v1384 = vshll.u32 %v1348, 16
      %v1386 = vrot.slane %v1384, 7
      %v1387 = vor.u32 %v1383, %v1386
      %v1388 = vrot.slane %v1387, 2
      %v1390 = vshll.u32 %v1349, 16
      %v1392 = vrot.slane %v1390, 7
      %v1393 = vsel %vm563, %v1388, %v1392
      %v1395 = vshrl.u32 %v1356, 16
      %v1397 = vrot.slane %v1395, 6
      %v1398 = vshll.u32 %v1356, 16
      %v1400 = vrot.slane %v1398, 7
      %v1401 = vor.u32 %v1397, %v1400
      %v1402 = vrot.slane %v1401, 2
      %v1404 = vshll.u32 %v1357, 16
      %v1406 = vrot.slane %v1404, 7
      %v1407 = vsel %vm563, %v1402, %v1406
      %v1409 = vshrl.u32 %v1364, 16
      %v1411 = vrot.slane %v1409, 6
      %v1412 = vshll.u32 %v1364, 16
      %v1414 = vrot.slane %v1412, 7
      %v1415 = vor.u32 %v1411, %v1414
      %v1416 = vrot.slane %v1415, 2
      %v1418 = vshll.u32 %v1365, 16
      %v1420 = vrot.slane %v1418, 7
      %v1421 = vsel %vm563, %v1416, %v1420
      %s1422 = scalar_lea.vmem %s4, 256
      %v1423 = vld [vmem:[%s1422] sm:$0xf]
      %v1424 = vld [vmem:[%s1422 + $0x4] sm:$0xf]
      %v1425 = vld [vmem:[%s1422 + $0x8] sm:$0xf]
      %v1426 = vld [vmem:[%s1422 + $0xc] sm:$0xf]
      %v1427 = vld [vmem:[%s1422 + $0x10] sm:$0xf]
      %v1428 = vld [vmem:[%s1422 + $0x14] sm:$0xf]
      %v1429 = vld [vmem:[%s1422 + $0x18] sm:$0xf]
      %v1430 = vld [vmem:[%s1422 + $0x1c] sm:$0xf]
      %v1431 = vcombine.low %v1379, %v1393
      %v1432 = vcombine.low %v1407, %v1421
      %v1434 = vunpack.c.l.s4 1983009808
      %v1435 = vunpack.c.0.s8 %v1434
      %v1436 = vlaneseq
      %v1437 = vshrl.u32 %v1436, 7
      %v1438 = vsub.s32 %v1435, %v1437
      %v1439 = vrot.slane %v1431, %v1438
      %v1441 = vunpack.c.l.s4 1983009808
      %v1442 = vunpack.c.0.s8 %v1441
      %v1443 = vlaneseq
      %v1444 = vshrl.u32 %v1443, 7
      %v1445 = vsub.s32 %v1442, %v1444
      %v1446 = vrot.slane %v1432, %v1445
      %v1447 = vcombine.low %v1439, %v1446
      %v1456 = vunpack.c.l.b16 %v1423
      %v1457 = vunpack.c.l.b16 %v1424
      %v1458 = vunpack.c.l.b16 %v1425
      %v1459 = vunpack.c.l.b16 %v1426
      %v1460 = vunpack.c.l.b16 %v1427
      %v1461 = vunpack.c.l.b16 %v1428
      %v1462 = vunpack.c.l.b16 %v1429
      %v1463 = vunpack.c.l.b16 %v1430
      %v1464 = vpack.c.b16 %v1457, %v1456
      %v1465 = vpack.c.b16 %v1459, %v1458
      %v1466 = vpack.c.b16 %v1461, %v1460
      %v1467 = vpack.c.b16 %v1463, %v1462
      %v1473 = vsel %vm383, %v1447, 0
      %1475 = vmatprep.subr.bf16.mxu0 0
      %1476 = vmatpush1.bf16.msra.mxu0 %v1464
      %1477 = vmatprep.subr.bf16.mxu0 0
      %1478 = vmatpush1.bf16.msra.mxu0 %v1465
      %1479 = vmatprep.subr.bf16.mxu0 0
      %1480 = vmatpush1.bf16.msra.mxu0 %v1466
      %1481 = vmatprep.subr.bf16.mxu0 0
      %1482 = vmatpush1.bf16.msra.mxu0 %v1467
      %1483 = vmatprep.subr.bf16.mxu0 0
      %1484 = vmatpush1.bf16.msra.mxu0 0
      %1485 = vmatprep.subr.bf16.mxu0 0
      %1486 = vmatpush1.bf16.msra.mxu0 0
      %1487 = vmatprep.subr.bf16.mxu0 0
      %1488 = vmatpush1.bf16.msra.mxu0 0
      %1489 = vmatprep.subr.bf16.mxu0 0
      %1490 = vmatpush1.bf16.msra.mxu0 0
      %1491 = vmatprep.subr.bf16.mxu0 0
      %1492 = vmatpush1.bf16.msra.mxu0 0
      %1493 = vmatprep.subr.bf16.mxu0 0
      %1494 = vmatpush1.bf16.msra.mxu0 0
      %1495 = vmatprep.subr.bf16.mxu0 0
      %1496 = vmatpush1.bf16.msra.mxu0 0
      %1497 = vmatprep.subr.bf16.mxu0 0
      %1498 = vmatpush1.bf16.msra.mxu0 0
      %1499 = vmatprep.subr.bf16.mxu0 0
      %1500 = vmatpush1.bf16.msra.mxu0 0
      %1501 = vmatprep.subr.bf16.mxu0 0
      %1502 = vmatpush1.bf16.msra.mxu0 0
      %1503 = vmatprep.subr.bf16.mxu0 0
      %1504 = vmatpush1.bf16.msra.mxu0 0
      %1505 = vmatprep.subr.bf16.mxu0 0
      %1506 = vmatpush1.bf16.msra.mxu0 0
      %1507 = vmatprep.mubr.bf16.mxu0 0
      %1508 = vmatmul.mubr.bf16.gmra.mrb[0].mxu0 %v1473
      %v1509 = vpop.f32.mrb[0].mxu0
      %v1510 = vadd.f32 0.0, %v1509
      %v1511 = vpop.f32.mrb[0].mxu0
      %v1512 = vpop.f32.mrb[0].mxu0
      %v1513 = vadd.f32 0.0, %v1512
      %v1514 = vpop.f32.mrb[0].mxu0
      %1515 = vdwg.mxu0
      %v1516 = vadd.f32 %v1324, %v1510
      %v1517 = vadd.f32 %v1325, %v1513
      %v1518 = vld [vmem:[%s5] sm:$0x1]
      %v1520 = vlaneseq
      %v1521 = vshrl.u32 %v1520, 7
      %v1522 = vsub.s32 0, %v1521
      %v1523 = vrot.slane %v1518, %v1522
      %v1525 = vadd.f32 %v1516, %v1523
      %v1526 = vadd.f32 %v1517, %v1523
      %v1527 = vmax.f32 %v1525, 0.0
      %v1528 = vmax.f32 %v1526, 0.0
      %v1531 = vcombine.high %v1527, %v1527
      %v1532 = vcombine.high %v1528, %v1528
      %v1535 = vpack.c.bf16 %v1527, %v1527
      %v1536 = vpack.c.bf16 %v1531, %v1531
      %v1537 = vpack.c.bf16 %v1528, %v1528
      %v1538 = vpack.c.bf16 %v1532, %v1532
      %1539 = vst [vmem:[%s311] sm:$0x3] %v1535
      %1540 = vst [vmem:[%s311 + $0x2] sm:$0x3] %v1536
      %1541 = vst [vmem:[%s311 + $0x4] sm:$0x3] %v1537
      %1542 = vst [vmem:[%s311 + $0x6] sm:$0x3] %v1538
      %p1543 = scmp.lt.s32.totalorder %s17, 1
      %s1544 = scalar_select %p1543, %s17, 1
      %s1545 = smul.addr %s1544, 4
      %s1546 = smul.addr %s1545, 2
      %s1547 = scalar_lea.vmem %s6, %s1546
      // Predicated region
      $region45: #{autoencoder_forward.7} parent=43 // pred_check
        %p1548 = pneg %p181
      $region46: #{autoencoder_forward.7} parent=43 // pred_check_branch
        %1550 = sbr.rel (%p1548) target = $region48
      $region47: #{autoencoder_forward.7} parent=43 // pred_region
        _
      $region48: #{autoencoder_forward.7} parent=43 // pred_fallthru
        _
    $region44: #{autoencoder_forward.7} parent=5 // pred_fallthru
      _
    %p1551 = scmp.le.s32.totalorder 2, %s12
    // Predicated region
    $region49: #{autoencoder_forward.7} parent=5 // pred_check
      %p1552 = pneg %p1551
    $region50: #{autoencoder_forward.7} parent=5 // pred_check_branch
      %1554 = sbr.rel (%p1552) target = $region52
    $region51: #{autoencoder_forward.7} parent=5 // pred_region
      %s1555 = ssub.s32 %s12, 2
      // Predicated region
      $region53: #{autoencoder_forward.7} parent=51 // pred_check
        %p1556 = pneg %p187
      $region54: #{autoencoder_forward.7} parent=51 // pred_check_branch
        %1558 = sbr.rel (%p1556) target = $region56
      $region55: #{autoencoder_forward.7} parent=51 // pred_region
        %p1559 = scmp.lt.s32.totalorder %s18, 1
        %s1560 = scalar_select %p1559, %s18, 1
        %s1561 = smul.addr %s1560, 4
        %s1562 = smul.addr %s1561, 2
        %s1563 = scalar_lea.vmem %s6, %s1562
      $region56: #{autoencoder_forward.7} parent=51 // pred_fallthru
        _
    $region52: #{autoencoder_forward.7} parent=5 // pred_fallthru
      _
  $region6: #{autoencoder_forward.7} parent=0 // loop_footer
    %s16 = sadd.s32 1, %s12
  $region7: #{autoencoder_forward.7} parent=0 // loop_footer_branch
    %11 = sbr.rel target = $region3
  $region8: #{autoencoder_forward.7} parent=0 // loop_exit
    _

// kernel: autoencoder_forward.6
$region0: #{autoencoder_forward.6}
  #allocation0 [shape = 'u32[]', space=smem, size = 0x4, offset = 0x4, fixed_abs, tag = 'smem constant byte address 0x4 - core index']
  #allocation1 [shape = 'u32[144,128]{1,0:T(1,128)}', space=vmem, size = 0x12000, scoped, tag = 'internal scratch']
  %s0 = inlined_call_operand.vmem [shape: bf16[2,9,9,3], index: 0, kind: input, shape index: {}]
  %s1 = inlined_call_operand.vmem [shape: bf16[2,9,9,3], index: 1, kind: input, shape index: {}]
  %s2 = inlined_call_operand.vmem [shape: bf16[2,9,9,3], index: 2, kind: input, shape index: {}]
  %s3 = inlined_call_operand.vmem [shape: bf16[2,9,9,3], index: 3, kind: input, shape index: {}]
  %s4 = inlined_call_operand.vmem [shape: bf16[9,3,64], index: 4, kind: input, shape index: {}]
  %s5 = inlined_call_operand.vmem [shape: f32[1,64], index: 5, kind: input, shape index: {}]
  %s6 = inlined_call_operand.vmem [shape: bf16[2,8,8,64], index: 6, kind: output, shape index: {}]
  %s7 = sld [smem:[#allocation0]]
  $region57: #{autoencoder_forward.6} parent=0
    _
  %s9 = ssub.s32 1, %s7
  %s10 = scalar_select 0, %s9, %s7
  loop: start=0, step=1, limit=4
  $region2: #{autoencoder_forward.6} parent=0 // loop_pre_header
    _
  $region3: #{autoencoder_forward.6} parent=0 // loop_header
    %s12 = sphi 0, %s16
    %p13 = scmp.ge.s32.totalorder %s12, 4
    %s22 = sphi 0, %s24
    %s25 = sphi 0, %s22
    %s26 = sphi 0, %s25
    %s42 = sphi 0, %s26
    %s48 = sphi 0, %s50
    %s51 = sphi 0, %s48
    %s52 = sphi 0, %s51
    %s68 = sphi 0, %s52
    %s74 = sphi 0, %s76
    %s77 = sphi 0, %s74
    %s78 = sphi 0, %s77
    %s94 = sphi 0, %s78
    %s100 = sphi 0, %s102
    %s103 = sphi 0, %s100
    %s104 = sphi 0, %s103
    %s120 = sphi 0, %s104
    %s124 = sphi 0, %s124
    %s126 = sphi 0, %s124
    %s127 = sphi 0, %s126
    %s141 = sphi 0, %s127
    %s145 = sphi 0, %s145
    %s147 = sphi 0, %s145
    %s148 = sphi 0, %s147
    %s162 = sphi 0, %s148
    %s168 = sphi 0, %s170
    %s171 = sphi 0, %s168
    %s172 = sphi 0, %s171
    %s188 = sphi 0, %s172
  $region4: #{autoencoder_forward.6} parent=0 // loop_header_branch
    %15 = sbr.rel (%p13) target = $region8
  $region5: #{autoencoder_forward.6} parent=0 // loop_body
    %s17 = ssub.s32 %s12, 1
    %s18 = ssub.s32 %s12, 2
    %s19 = sadd.s32 %s12, 1
    %s20 = ssub.s32 %s12, %s19
    %p21 = scmp.eq.s32.totalorder %s20, 0
    %s23 = sadd.s32 %s22, 1
    %s24 = scalar_select %p21, %s22, %s23
    %p27 = pneg %p21
    %p28 = scmp.eq.s32.totalorder %s12, 1
    %p29 = por %p27, %p28
    %p30 = scmp.ne.s32.totalorder %s22, %s25
    %p31 = scmp.eq.s32.totalorder %s12, 0
    %p32 = por %p30, %p31
    %p33 = scmp.ne.s32.totalorder %s22, %s25
    %p34 = scmp.eq.s32.totalorder %s17, 1
    %p35 = por %p33, %p34
    %p36 = scmp.ne.s32.totalorder %s25, %s26
    %p37 = scmp.eq.s32.totalorder %s17, 0
    %p38 = por %p36, %p37
    %p39 = scmp.ne.s32.totalorder %s25, %s26
    %p40 = scmp.eq.s32.totalorder %s18, 1
    %p41 = por %p39, %p40
    %p43 = scmp.ne.s32.totalorder %s26, %s42
    %p44 = scmp.eq.s32.totalorder %s18, 0
    %p45 = por %p43, %p44
    %s46 = ssub.s32 %s12, %s19
    %p47 = scmp.eq.s32.totalorder %s46, 0
    %s49 = sadd.s32 %s48, 1
    %s50 = scalar_select %p47, %s48, %s49
    %p53 = pneg %p47
    %p54 = scmp.eq.s32.totalorder %s12, 1
    %p55 = por %p53, %p54
    %p56 = scmp.ne.s32.totalorder %s48, %s51
    %p57 = scmp.eq.s32.totalorder %s12, 0
    %p58 = por %p56, %p57
    %p59 = scmp.ne.s32.totalorder %s48, %s51
    %p60 = scmp.eq.s32.totalorder %s17, 1
    %p61 = por %p59, %p60
    %p62 = scmp.ne.s32.totalorder %s51, %s52
    %p63 = scmp.eq.s32.totalorder %s17, 0
    %p64 = por %p62, %p63
    %p65 = scmp.ne.s32.totalorder %s51, %s52
    %p66 = scmp.eq.s32.totalorder %s18, 1
    %p67 = por %p65, %p66
    %p69 = scmp.ne.s32.totalorder %s52, %s68
    %p70 = scmp.eq.s32.totalorder %s18, 0
    %p71 = por %p69, %p70
    %s72 = ssub.s32 %s12, %s19
    %p73 = scmp.eq.s32.totalorder %s72, 0
    %s75 = sadd.s32 %s74, 1
    %s76 = scalar_select %p73, %s74, %s75
    %p79 = pneg %p73
    %p80 = scmp.eq.s32.totalorder %s12, 1
    %p81 = por %p79, %p80
    %p82 = scmp.ne.s32.totalorder %s74, %s77
    %p83 = scmp.eq.s32.totalorder %s12, 0
    %p84 = por %p82, %p83
    %p85 = scmp.ne.s32.totalorder %s74, %s77
    %p86 = scmp.eq.s32.totalorder %s17, 1
    %p87 = por %p85, %p86
    %p88 = scmp.ne.s32.totalorder %s77, %s78
    %p89 = scmp.eq.s32.totalorder %s17, 0
    %p90 = por %p88, %p89
    %p91 = scmp.ne.s32.totalorder %s77, %s78
    %p92 = scmp.eq.s32.totalorder %s18, 1
    %p93 = por %p91, %p92
    %p95 = scmp.ne.s32.totalorder %s78, %s94
    %p96 = scmp.eq.s32.totalorder %s18, 0
    %p97 = por %p95, %p96
    %s98 = ssub.s32 %s12, %s19
    %p99 = scmp.eq.s32.totalorder %s98, 0
    %s101 = sadd.s32 %s100, 1
    %s102 = scalar_select %p99, %s100, %s101
    %p105 = pneg %p99
    %p106 = scmp.eq.s32.totalorder %s12, 1
    %p107 = por %p105, %p106
    %p108 = scmp.ne.s32.totalorder %s100, %s103
    %p109 = scmp.eq.s32.totalorder %s12, 0
    %p110 = por %p108, %p109
    %p111 = scmp.ne.s32.totalorder %s100, %s103
    %p112 = scmp.eq.s32.totalorder %s17, 1
    %p113 = por %p111, %p112
    %p114 = scmp.ne.s32.totalorder %s103, %s104
    %p115 = scmp.eq.s32.totalorder %s17, 0
    %p116 = por %p114, %p115
    %p117 = scmp.ne.s32.totalorder %s103, %s104
    %p118 = scmp.eq.s32.totalorder %s18, 1
    %p119 = por %p117, %p118
    %p121 = scmp.ne.s32.totalorder %s104, %s120
    %p122 = scmp.eq.s32.totalorder %s18, 0
    %p123 = por %p121, %p122
    %s125 = sadd.s32 %s124, 1
    %p128 = scmp.eq.s32.totalorder %s12, 1
    %p129 = scmp.ne.s32.totalorder %s124, %s126
    %p130 = scmp.eq.s32.totalorder %s12, 0
    %p131 = por %p129, %p130
    %p132 = scmp.ne.s32.totalorder %s124, %s126
    %p133 = scmp.eq.s32.totalorder %s17, 1
    %p134 = por %p132, %p133
    %p135 = scmp.ne.s32.totalorder %s126, %s127
    %p136 = scmp.eq.s32.totalorder %s17, 0
    %p137 = por %p135, %p136
    %p138 = scmp.ne.s32.totalorder %s126, %s127
    %p139 = scmp.eq.s32.totalorder %s18, 1
    %p140 = por %p138, %p139
    %p142 = scmp.ne.s32.totalorder %s127, %s141
    %p143 = scmp.eq.s32.totalorder %s18, 0
    %p144 = por %p142, %p143
    %s146 = sadd.s32 %s145, 1
    %p149 = scmp.eq.s32.totalorder %s12, 1
    %p150 = scmp.ne.s32.totalorder %s145, %s147
    %p151 = scmp.eq.s32.totalorder %s12, 0
    %p152 = por %p150, %p151
    %p153 = scmp.ne.s32.totalorder %s145, %s147
    %p154 = scmp.eq.s32.totalorder %s17, 1
    %p155 = por %p153, %p154
    %p156 = scmp.ne.s32.totalorder %s147, %s148
    %p157 = scmp.eq.s32.totalorder %s17, 0
    %p158 = por %p156, %p157
    %p159 = scmp.ne.s32.totalorder %s147, %s148
    %p160 = scmp.eq.s32.totalorder %s18, 1
    %p161 = por %p159, %p160
    %p163 = scmp.ne.s32.totalorder %s148, %s162
    %p164 = scmp.eq.s32.totalorder %s18, 0
    %p165 = por %p163, %p164
    %s166 = ssub.s32 %s12, %s19
    %p167 = scmp.eq.s32.totalorder %s166, 0
    %s169 = sadd.s32 %s168, 1
    %s170 = scalar_select %p167, %s168, %s169
    %p173 = pneg %p167
    %p174 = scmp.eq.s32.totalorder %s12, 1
    %p175 = por %p173, %p174
    %p176 = scmp.ne.s32.totalorder %s168, %s171
    %p177 = scmp.eq.s32.totalorder %s12, 0
    %p178 = por %p176, %p177
    %p179 = scmp.ne.s32.totalorder %s168, %s171
    %p180 = scmp.eq.s32.totalorder %s17, 1
    %p181 = por %p179, %p180
    %p182 = scmp.ne.s32.totalorder %s171, %s172
    %p183 = scmp.eq.s32.totalorder %s17, 0
    %p184 = por %p182, %p183
    %p185 = scmp.ne.s32.totalorder %s171, %s172
    %p186 = scmp.eq.s32.totalorder %s18, 1
    %p187 = por %p185, %p186
    %p189 = scmp.ne.s32.totalorder %s172, %s188
    %p190 = scmp.eq.s32.totalorder %s18, 0
    %p191 = por %p189, %p190
    %p192 = scmp.le.s32.totalorder 1, %s12
    %p193 = scmp.lt.s32.totalorder %s12, 3
    %p194 = pnand %p192, %p193
    %p195 = pneg %p194
    // Predicated region
    $region9: #{autoencoder_forward.6} parent=5 // pred_check
      _
    $region10: #{autoencoder_forward.6} parent=5 // pred_check_branch
      %197 = sbr.rel (%p194) target = $region12
    $region11: #{autoencoder_forward.6} parent=5 // pred_region
      %s198 = ssub.s32 %s12, 1
      // Predicated region
      $region13: #{autoencoder_forward.6} parent=11 // pred_check
        %p199 = pneg %p137
      $region14: #{autoencoder_forward.6} parent=11 // pred_check_branch
        %201 = sbr.rel (%p199) target = $region16
      $region15: #{autoencoder_forward.6} parent=11 // pred_region
        _
      $region16: #{autoencoder_forward.6} parent=11 // pred_fallthru
        _
      // Predicated region
      $region17: #{autoencoder_forward.6} parent=11 // pred_check
        %p202 = pneg %p158
      $region18: #{autoencoder_forward.6} parent=11 // pred_check_branch
        %204 = sbr.rel (%p202) target = $region20
      $region19: #{autoencoder_forward.6} parent=11 // pred_region
        _
      $region20: #{autoencoder_forward.6} parent=11 // pred_fallthru
        _
    $region12: #{autoencoder_forward.6} parent=5 // pred_fallthru
      _
    %p205 = scmp.lt.s32.totalorder %s12, 2
    // Predicated region
    $region21: #{autoencoder_forward.6} parent=5 // pred_check
      %p206 = pneg %p205
    $region22: #{autoencoder_forward.6} parent=5 // pred_check_branch
      %208 = sbr.rel (%p206) target = $region24
    $region23: #{autoencoder_forward.6} parent=5 // pred_region
      // Predicated region
      $region25: #{autoencoder_forward.6} parent=23 // pred_check
        %p209 = pneg %p32
      $region26: #{autoencoder_forward.6} parent=23 // pred_check_branch
        %211 = sbr.rel (%p209) target = $region28
      $region27: #{autoencoder_forward.6} parent=23 // pred_region
        %p212 = scmp.lt.s32.totalorder %s12, 1
        %s213 = scalar_select %p212, %s12, 1
        %s214 = smul.addr %s213, 18
        %s215 = smul.addr %s214, 4
        %s216 = scalar_lea.vmem %s0, %s215
      $region28: #{autoencoder_forward.6} parent=23 // pred_fallthru
        _
      // Predicated region
      $region29: #{autoencoder_forward.6} parent=23 // pred_check
        %p217 = pneg %p58
      $region30: #{autoencoder_forward.6} parent=23 // pred_check_branch
        %219 = sbr.rel (%p217) target = $region32
      $region31: #{autoencoder_forward.6} parent=23 // pred_region
        %p220 = scmp.lt.s32.totalorder %s12, 1
        %s221 = scalar_select %p220, %s12, 1
        %s222 = smul.addr %s221, 18
        %s223 = smul.addr %s222, 4
        %s224 = scalar_lea.vmem %s1, %s223
      $region32: #{autoencoder_forward.6} parent=23 // pred_fallthru
        _
      // Predicated region
      $region33: #{autoencoder_forward.6} parent=23 // pred_check
        %p225 = pneg %p84
      $region34: #{autoencoder_forward.6} parent=23 // pred_check_branch
        %227 = sbr.rel (%p225) target = $region36
      $region35: #{autoencoder_forward.6} parent=23 // pred_region
        %p228 = scmp.lt.s32.totalorder %s12, 1
        %s229 = scalar_select %p228, %s12, 1
        %s230 = smul.addr %s229, 18
        %s231 = smul.addr %s230, 4
        %s232 = scalar_lea.vmem %s2, %s231
      $region36: #{autoencoder_forward.6} parent=23 // pred_fallthru
        _
      // Predicated region
      $region37: #{autoencoder_forward.6} parent=23 // pred_check
        %p233 = pneg %p110
      $region38: #{autoencoder_forward.6} parent=23 // pred_check_branch
        %235 = sbr.rel (%p233) target = $region40
      $region39: #{autoencoder_forward.6} parent=23 // pred_region
        %p236 = scmp.lt.s32.totalorder %s12, 1
        %s237 = scalar_select %p236, %s12, 1
        %s238 = smul.addr %s237, 18
        %s239 = smul.addr %s238, 4
        %s240 = scalar_lea.vmem %s3, %s239
      $region40: #{autoencoder_forward.6} parent=23 // pred_fallthru
        _
    $region24: #{autoencoder_forward.6} parent=5 // pred_fallthru
      _
    %p241 = scmp.le.s32.totalorder 1, %s12
    %p242 = scmp.lt.s32.totalorder %s12, 3
    %p243 = pnand %p241, %p242
    %p244 = pneg %p243
    // Predicated region
    $region41: #{autoencoder_forward.6} parent=5 // pred_check
      _
    $region42: #{autoencoder_forward.6} parent=5 // pred_check_branch
      %246 = sbr.rel (%p243) target = $region44
    $region43: #{autoencoder_forward.6} parent=5 // pred_region
      %s247 = ssub.s32 %s12, 1
      %p248 = scmp.lt.s32.totalorder %s17, 1
      %s249 = scalar_select %p248, %s17, 1
      %s250 = smul.addr %s249, 18
      %s251 = smul.addr %s250, 4
      %s252 = scalar_lea.vmem %s0, %s251
      %p253 = pneg %p38
      %p254 = pneg %p35
      %p255 = scmp.lt.s32.totalorder %s17, 1
      %s256 = scalar_select %p255, %s17, 1
      %s257 = smul.addr %s256, 18
      %s258 = smul.addr %s257, 4
      %s259 = scalar_lea.vmem %s1, %s258
      %p260 = pneg %p64
      %p261 = pneg %p61
      %p262 = scmp.lt.s32.totalorder %s17, 1
      %s263 = scalar_select %p262, %s17, 1
      %s264 = smul.addr %s263, 18
      %s265 = smul.addr %s264, 4
      %s266 = scalar_lea.vmem %s2, %s265
      %p267 = pneg %p90
      %p268 = pneg %p87
      %p269 = scmp.lt.s32.totalorder %s17, 1
      %s270 = scalar_select %p269, %s17, 1
      %s271 = smul.addr %s270, 18
      %s272 = smul.addr %s271, 4
      %s273 = scalar_lea.vmem %s3, %s272
      %p274 = pneg %p116
      %p275 = pneg %p113
      %p276 = pneg %p137
      %p277 = pneg %p134
      %p278 = pneg %p158
      %p279 = pneg %p155
      %p280 = pneg %p184
      %p281 = pneg %p181
      %p282 = scmp.lt.s32.totalorder %s17, 1
      %s283 = scalar_select %p282, %s17, 1
      %s284 = smul.addr %s283, 8
      %s285 = smul.addr %s284, 4
      %s286 = scalar_lea.vmem %s6, %s285
      %p287 = scmp.lt.s32.totalorder %s17, 1
      %s288 = scalar_select %p287, %s17, 1
      %s289 = smul.addr %s288, 18
      %s290 = smul.addr %s289, 4
      %s291 = scalar_lea.vmem %s0, %s290
      %p292 = scmp.lt.s32.totalorder %s17, 1
      %s293 = scalar_select %p292, %s17, 1
      %s294 = smul.addr %s293, 18
      %s295 = smul.addr %s294, 4
      %s296 = scalar_lea.vmem %s1, %s295
      %p297 = scmp.lt.s32.totalorder %s17, 1
      %s298 = scalar_select %p297, %s17, 1
      %s299 = smul.addr %s298, 18
      %s300 = smul.addr %s299, 4
      %s301 = scalar_lea.vmem %s2, %s300
      %p302 = scmp.lt.s32.totalorder %s17, 1
      %s303 = scalar_select %p302, %s17, 1
      %s304 = smul.addr %s303, 18
      %s305 = smul.addr %s304, 4
      %s306 = scalar_lea.vmem %s3, %s305
      %p307 = scmp.lt.s32.totalorder %s17, 1
      %s308 = scalar_select %p307, %s17, 1
      %s309 = smul.addr %s308, 8
      %s310 = smul.addr %s309, 4
      %s311 = scalar_lea.vmem %s6, %s310
      %v313 = vld [vmem:[%s291] sm:$0xf]
      %v314 = vld [vmem:[%s291 + $0x8] sm:$0xf]
      %v315 = vld [vmem:[%s291 + $0x10] sm:$0xf]
      %v316 = vld [vmem:[%s291 + $0x18] sm:$0xf]
      %v317 = vld [vmem:[%s291 + $0x20] sm:$0xf]
      %v318 = vld [vmem:[%s291 + $0x28] sm:$0xf]
      %v319 = vld [vmem:[%s291 + $0x30] sm:$0xf]
      %v320 = vld [vmem:[%s291 + $0x38] sm:$0xf]
      %v321 = vld [vmem:[%s4] sm:$0x3]
      %v322 = vld [vmem:[%s296] sm:$0xf]
      %v323 = vld [vmem:[%s296 + $0x8] sm:$0xf]
      %v324 = vld [vmem:[%s296 + $0x10] sm:$0xf]
      %v325 = vld [vmem:[%s296 + $0x18] sm:$0xf]
      %v326 = vld [vmem:[%s296 + $0x20] sm:$0xf]
      %v327 = vld [vmem:[%s296 + $0x28] sm:$0xf]
      %v328 = vld [vmem:[%s296 + $0x30] sm:$0xf]
      %v329 = vld [vmem:[%s296 + $0x38] sm:$0xf]
      %s330 = scalar_lea.vmem %s4, 2
      %v331 = vld [vmem:[%s330] sm:$0x3]
      %v340 = vunpack.c.l.b16 %v322
      %v341 = vunpack.c.l.b16 %v323
      %v342 = vunpack.c.l.b16 %v324
      %v343 = vunpack.c.l.b16 %v325
      %v344 = vunpack.c.l.b16 %v326
      %v345 = vunpack.c.l.b16 %v327
      %v346 = vunpack.c.l.b16 %v328
      %v347 = vunpack.c.l.b16 %v329
      %v348 = vpack.c.b16 %v341, %v340
      %v349 = vpack.c.b16 %v343, %v342
      %v350 = vpack.c.b16 %v345, %v344
      %v351 = vpack.c.b16 %v347, %v346
      %vm352 = vcmask 23552
      %v354 = vsel %vm352, %v348, 0
      %v357 = vsel %vm352, %v349, 0
      %v360 = vsel %vm352, %v350, 0
      %v363 = vsel %vm352, %v351, 0
      %vm365 = vcmask 1040384
      %vm366 = vcmask 1041408
      %v367 = vsel %vm365, 4294967295, 65535
      %v368 = vsel %vm366, %v367, 0
      %v370 = vand.u32 %v331, %v368
      %372 = vmatprep.subr.bf16.mxu0 0
      %373 = vmatpush1.bf16.msra.mxu0 %v370
      %374 = vmatprep.subr.bf16.mxu0 0
      %375 = vmatpush1.bf16.msra.mxu0 0
      %376 = vmatprep.subr.bf16.mxu0 0
      %377 = vmatpush1.bf16.msra.mxu0 0
      %378 = vmatprep.subr.bf16.mxu0 0
      %379 = vmatpush1.bf16.msra.mxu0 0
      %380 = vmatprep.subr.bf16.mxu0 0
      %381 = vmatpush1.bf16.msra.mxu0 0
      %382 = vmatprep.subr.bf16.mxu0 0
      %383 = vmatpush1.bf16.msra.mxu0 0
      %384 = vmatprep.subr.bf16.mxu0 0
      %385 = vmatpush1.bf16.msra.mxu0 0
      %386 = vmatprep.subr.bf16.mxu0 0
      %387 = vmatpush1.bf16.msra.mxu0 0
      %388 = vmatprep.subr.bf16.mxu0 0
      %389 = vmatpush1.bf16.msra.mxu0 0
      %390 = vmatprep.subr.bf16.mxu0 0
      %391 = vmatpush1.bf16.msra.mxu0 0
      %392 = vmatprep.subr.bf16.mxu0 0
      %393 = vmatpush1.bf16.msra.mxu0 0
      %394 = vmatprep.subr.bf16.mxu0 0
      %395 = vmatpush1.bf16.msra.mxu0 0
      %396 = vmatprep.subr.bf16.mxu0 0
      %397 = vmatpush1.bf16.msra.mxu0 0
      %398 = vmatprep.subr.bf16.mxu0 0
      %399 = vmatpush1.bf16.msra.mxu0 0
      %400 = vmatprep.subr.bf16.mxu0 0
      %401 = vmatpush1.bf16.msra.mxu0 0
      %402 = vmatprep.subr.bf16.mxu0 0
      %403 = vmatpush1.bf16.msra.mxu0 0
      %404 = vmatprep.mubr.bf16.mxu0 0
      %405 = vmatmul.mubr.bf16.gmra.mrb[0].mxu0 %v354
      %v406 = vpop.f32.mrb[0].mxu0
      %v407 = vadd.f32 0.0, %v406
      %v408 = vpop.f32.mrb[0].mxu0
      %v409 = vpop.f32.mrb[0].mxu0
      %v410 = vadd.f32 0.0, %v409
      %v411 = vpop.f32.mrb[0].mxu0
      %412 = vmatprep.mubr.bf16.mxu0 0
      %413 = vmatmul.mubr.bf16.gmra.mrb[0].mxu0 %v357
      %v414 = vpop.f32.mrb[0].mxu0
      %v415 = vadd.f32 0.0, %v414
      %v416 = vpop.f32.mrb[0].mxu0
      %v417 = vpop.f32.mrb[0].mxu0
      %v418 = vadd.f32 0.0, %v417
      %v419 = vpop.f32.mrb[0].mxu0
      %420 = vmatprep.mubr.bf16.mxu0 0
      %421 = vmatmul.mubr.bf16.gmra.mrb[0].mxu0 %v360
      %v422 = vpop.f32.mrb[0].mxu0
      %v423 = vadd.f32 0.0, %v422
      %v424 = vpop.f32.mrb[0].mxu0
      %v425 = vpop.f32.mrb[0].mxu0
      %v426 = vadd.f32 0.0, %v425
      %v427 = vpop.f32.mrb[0].mxu0
      %428 = vmatprep.mubr.bf16.mxu0 0
      %429 = vmatmul.mubr.bf16.gmra.mrb[0].mxu0 %v363
      %v430 = vpop.f32.mrb[0].mxu0
      %v431 = vadd.f32 0.0, %v430
      %v432 = vpop.f32.mrb[0].mxu0
      %v433 = vpop.f32.mrb[0].mxu0
      %v434 = vadd.f32 0.0, %v433
      %v435 = vpop.f32.mrb[0].mxu0
      %436 = vdwg.mxu0
      %v445 = vunpack.c.l.b16 %v313
      %v446 = vunpack.c.l.b16 %v314
      %v447 = vunpack.c.l.b16 %v315
      %v448 = vunpack.c.l.b16 %v316
      %v449 = vunpack.c.l.b16 %v317
      %v450 = vunpack.c.l.b16 %v318
      %v451 = vunpack.c.l.b16 %v319
      %v452 = vunpack.c.l.b16 %v320
      %v453 = vpack.c.b16 %v446, %v445
      %v454 = vpack.c.b16 %v448, %v447
      %v455 = vpack.c.b16 %v450, %v449
      %v456 = vpack.c.b16 %v452, %v451
      %v458 = vsel %vm352, %v453, 0
      %v461 = vsel %vm352, %v454, 0
      %v464 = vsel %vm352, %v455, 0
      %v467 = vsel %vm352, %v456, 0
      %v470 = vand.u32 %v321, %v368
      %472 = vmatprep.subr.bf16.mxu0 0
      %473 = vmatpush1.bf16.msra.mxu0 %v470
      %474 = vmatprep.subr.bf16.mxu0 0
      %475 = vmatpush1.bf16.msra.mxu0 0
      %476 = vmatprep.subr.bf16.mxu0 0
      %477 = vmatpush1.bf16.msra.mxu0 0
      %478 = vmatprep.subr.bf16.mxu0 0
      %479 = vmatpush1.bf16.msra.mxu0 0
      %480 = vmatprep.subr.bf16.mxu0 0
      %481 = vmatpush1.bf16.msra.mxu0 0
      %482 = vmatprep.subr.bf16.mxu0 0
      %483 = vmatpush1.bf16.msra.mxu0 0
      %484 = vmatprep.subr.bf16.mxu0 0
      %485 = vmatpush1.bf16.msra.mxu0 0
      %486 = vmatprep.subr.bf16.mxu0 0
      %487 = vmatpush1.bf16.msra.mxu0 0
      %488 = vmatprep.subr.bf16.mxu0 0
      %489 = vmatpush1.bf16.msra.mxu0 0
      %490 = vmatprep.subr.bf16.mxu0 0
      %491 = vmatpush1.bf16.msra.mxu0 0
      %492 = vmatprep.subr.bf16.mxu0 0
      %493 = vmatpush1.bf16.msra.mxu0 0
      %494 = vmatprep.subr.bf16.mxu0 0
      %495 = vmatpush1.bf16.msra.mxu0 0
      %496 = vmatprep.subr.bf16.mxu0 0
      %497 = vmatpush1.bf16.msra.mxu0 0
      %498 = vmatprep.subr.bf16.mxu0 0
      %499 = vmatpush1.bf16.msra.mxu0 0
      %500 = vmatprep.subr.bf16.mxu0 0
      %501 = vmatpush1.bf16.msra.mxu0 0
      %502 = vmatprep.subr.bf16.mxu0 0
      %503 = vmatpush1.bf16.msra.mxu0 0
      %504 = vmatprep.mubr.bf16.mxu0 0
      %505 = vmatmul.mubr.bf16.gmra.mrb[0].mxu0 %v458
      %v506 = vpop.f32.mrb[0].mxu0
      %v507 = vadd.f32 %v407, %v506
      %v508 = vpop.f32.mrb[0].mxu0
      %v509 = vpop.f32.mrb[0].mxu0
      %v510 = vadd.f32 %v410, %v509
      %v511 = vpop.f32.mrb[0].mxu0
      %512 = vmatprep.mubr.bf16.mxu0 0
      %513 = vmatmul.mubr.bf16.gmra.mrb[0].mxu0 %v461
      %v514 = vpop.f32.mrb[0].mxu0
      %v515 = vadd.f32 %v415, %v514
      %v516 = vpop.f32.mrb[0].mxu0
      %v517 = vpop.f32.mrb[0].mxu0
      %v518 = vadd.f32 %v418, %v517
      %v519 = vpop.f32.mrb[0].mxu0
      %520 = vmatprep.mubr.bf16.mxu0 0
      %521 = vmatmul.mubr.bf16.gmra.mrb[0].mxu0 %v464
      %v522 = vpop.f32.mrb[0].mxu0
      %v523 = vadd.f32 %v423, %v522
      %v524 = vpop.f32.mrb[0].mxu0
      %v525 = vpop.f32.mrb[0].mxu0
      %v526 = vadd.f32 %v426, %v525
      %v527 = vpop.f32.mrb[0].mxu0
      %528 = vmatprep.mubr.bf16.mxu0 0
      %529 = vmatmul.mubr.bf16.gmra.mrb[0].mxu0 %v467
      %v530 = vpop.f32.mrb[0].mxu0
      %v531 = vadd.f32 %v431, %v530
      %v532 = vpop.f32.mrb[0].mxu0
      %v533 = vpop.f32.mrb[0].mxu0
      %v534 = vadd.f32 %v434, %v533
      %v535 = vpop.f32.mrb[0].mxu0
      %536 = vdwg.mxu0
      %v537 = vld [vmem:[%s291] sm:$0xf]
      %v538 = vld [vmem:[%s291 + $0x4] sm:$0x1]
      %v539 = vld [vmem:[%s291 + $0x8] sm:$0xf]
      %v540 = vld [vmem:[%s291 + $0xc] sm:$0x1]
      %v541 = vld [vmem:[%s291 + $0x10] sm:$0xf]
      %v542 = vld [vmem:[%s291 + $0x14] sm:$0x1]
      %v543 = vld [vmem:[%s291 + $0x18] sm:$0xf]
      %v544 = vld [vmem:[%s291 + $0x1c] sm:$0x1]
      %v545 = vld [vmem:[%s291 + $0x20] sm:$0xf]
      %v546 = vld [vmem:[%s291 + $0x24] sm:$0x1]
      %v547 = vld [vmem:[%s291 + $0x28] sm:$0xf]
      %v548 = vld [vmem:[%s291 + $0x2c] sm:$0x1]
      %v549 = vld [vmem:[%s291 + $0x30] sm:$0xf]
      %v550 = vld [vmem:[%s291 + $0x34] sm:$0x1]
      %v551 = vld [vmem:[%s291 + $0x38] sm:$0xf]
      %v552 = vld [vmem:[%s291 + $0x3c] sm:$0x1]
      %vm553 = vsmask.f32 3328
      %vm554 = vsmask.f32 7440
      %vm555 = vmor %vm553, %vm554
      %v557 = vshrl.u32 %v537, 16
      %v559 = vrot.slane %v557, 4
      %v560 = vshll.u32 %v537, 16
      %v562 = vrot.slane %v560, 5
      %v563 = vor.u32 %v559, %v562
      %v564 = vrot.slane %v563, 4
      %v566 = vshll.u32 %v538, 16
      %v568 = vrot.slane %v566, 5
      %v569 = vsel %vm555, %v564, %v568
      %v571 = vshrl.u32 %v539, 16
      %v573 = vrot.slane %v571, 4
      %v574 = vshll.u32 %v539, 16
      %v576 = vrot.slane %v574, 5
      %v577 = vor.u32 %v573, %v576
      %v578 = vrot.slane %v577, 4
      %v580 = vshll.u32 %v540, 16
      %v582 = vrot.slane %v580, 5
      %v583 = vsel %vm555, %v578, %v582
      %v585 = vshrl.u32 %v541, 16
      %v587 = vrot.slane %v585, 4
      %v588 = vshll.u32 %v541, 16
      %v590 = vrot.slane %v588, 5
      %v591 = vor.u32 %v587, %v590
      %v592 = vrot.slane %v591, 4
      %v594 = vshll.u32 %v542, 16
      %v596 = vrot.slane %v594, 5
      %v597 = vsel %vm555, %v592, %v596
      %v599 = vshrl.u32 %v543, 16
      %v601 = vrot.slane %v599, 4
      %v602 = vshll.u32 %v543, 16
      %v604 = vrot.slane %v602, 5
      %v605 = vor.u32 %v601, %v604
      %v606 = vrot.slane %v605, 4
      %v608 = vshll.u32 %v544, 16
      %v610 = vrot.slane %v608, 5
      %v611 = vsel %vm555, %v606, %v610
      %v613 = vshrl.u32 %v545, 16
      %v615 = vrot.slane %v613, 4
      %v616 = vshll.u32 %v545, 16
      %v618 = vrot.slane %v616, 5
      %v619 = vor.u32 %v615, %v618
      %v620 = vrot.slane %v619, 4
      %v622 = vshll.u32 %v546, 16
      %v624 = vrot.slane %v622, 5
      %v625 = vsel %vm555, %v620, %v624
      %v627 = vshrl.u32 %v547, 16
      %v629 = vrot.slane %v627, 4
      %v630 = vshll.u32 %v547, 16
      %v632 = vrot.slane %v630, 5
      %v633 = vor.u32 %v629, %v632
      %v634 = vrot.slane %v633, 4
      %v636 = vshll.u32 %v548, 16
      %v638 = vrot.slane %v636, 5
      %v639 = vsel %vm555, %v634, %v638
      %v641 = vshrl.u32 %v549, 16
      %v643 = vrot.slane %v641, 4
      %v644 = vshll.u32 %v549, 16
      %v646 = vrot.slane %v644, 5
      %v647 = vor.u32 %v643, %v646
      %v648 = vrot.slane %v647, 4
      %v650 = vshll.u32 %v550, 16
      %v652 = vrot.slane %v650, 5
      %v653 = vsel %vm555, %v648, %v652
      %v655 = vshrl.u32 %v551, 16
      %v657 = vrot.slane %v655, 4
      %v658 = vshll.u32 %v551, 16
      %v660 = vrot.slane %v658, 5
      %v661 = vor.u32 %v657, %v660
      %v662 = vrot.slane %v661, 4
      %v664 = vshll.u32 %v552, 16
      %v666 = vrot.slane %v664, 5
      %v667 = vsel %vm555, %v662, %v666
      %s668 = scalar_lea.vmem %s4, 4
      %v669 = vld [vmem:[%s668] sm:$0x3]
      %v670 = vunpack.c.l.b16 %v569
      %v671 = vunpack.c.l.b16 %v583
      %v672 = vunpack.c.l.b16 %v597
      %v673 = vunpack.c.l.b16 %v611
      %v674 = vunpack.c.l.b16 %v625
      %v675 = vunpack.c.l.b16 %v639
      %v676 = vunpack.c.l.b16 %v653
      %v677 = vunpack.c.l.b16 %v667
      %v678 = vpack.c.b16 %v671, %v670
      %v679 = vpack.c.b16 %v673, %v672
      %v680 = vpack.c.b16 %v675, %v674
      %v681 = vpack.c.b16 %v677, %v676
      %v683 = vsel %vm352, %v678, 0
      %v686 = vsel %vm352, %v679, 0
      %v689 = vsel %vm352, %v680, 0
      %v692 = vsel %vm352, %v681, 0
      %v695 = vand.u32 %v669, %v368
      %697 = vmatprep.subr.bf16.mxu0 0
      %698 = vmatpush1.bf16.msra.mxu0 %v695
      %699 = vmatprep.subr.bf16.mxu0 0
      %700 = vmatpush1.bf16.msra.mxu0 0
      %701 = vmatprep.subr.bf16.mxu0 0
      %702 = vmatpush1.bf16.msra.mxu0 0
      %703 = vmatprep.subr.bf16.mxu0 0
      %704 = vmatpush1.bf16.msra.mxu0 0
      %705 = vmatprep.subr.bf16.mxu0 0
      %706 = vmatpush1.bf16.msra.mxu0 0
      %707 = vmatprep.subr.bf16.mxu0 0
      %708 = vmatpush1.bf16.msra.mxu0 0
      %709 = vmatprep.subr.bf16.mxu0 0
      %710 = vmatpush1.bf16.msra.mxu0 0
      %711 = vmatprep.subr.bf16.mxu0 0
      %712 = vmatpush1.bf16.msra.mxu0 0
      %713 = vmatprep.subr.bf16.mxu0 0
      %714 = vmatpush1.bf16.msra.mxu0 0
      %715 = vmatprep.subr.bf16.mxu0 0
      %716 = vmatpush1.bf16.msra.mxu0 0
      %717 = vmatprep.subr.bf16.mxu0 0
      %718 = vmatpush1.bf16.msra.mxu0 0
      %719 = vmatprep.subr.bf16.mxu0 0
      %720 = vmatpush1.bf16.msra.mxu0 0
      %721 = vmatprep.subr.bf16.mxu0 0
      %722 = vmatpush1.bf16.msra.mxu0 0
      %723 = vmatprep.subr.bf16.mxu0 0
      %724 = vmatpush1.bf16.msra.mxu0 0
      %725 = vmatprep.subr.bf16.mxu0 0
      %726 = vmatpush1.bf16.msra.mxu0 0
      %727 = vmatprep.subr.bf16.mxu0 0
      %728 = vmatpush1.bf16.msra.mxu0 0
      %729 = vmatprep.mubr.bf16.mxu0 0
      %730 = vmatmul.mubr.bf16.gmra.mrb[0].mxu0 %v683
      %v731 = vpop.f32.mrb[0].mxu0
      %v732 = vadd.f32 0.0, %v731
      %v733 = vpop.f32.mrb[0].mxu0
      %v734 = vpop.f32.mrb[0].mxu0
      %v735 = vadd.f32 0.0, %v734
      %v736 = vpop.f32.mrb[0].mxu0
      %737 = vmatprep.mubr.bf16.mxu0 0
      %738 = vmatmul.mubr.bf16.gmra.mrb[0].mxu0 %v686
      %v739 = vpop.f32.mrb[0].mxu0
      %v740 = vadd.f32 0.0, %v739
      %v741 = vpop.f32.mrb[0].mxu0
      %v742 = vpop.f32.mrb[0].mxu0
      %v743 = vadd.f32 0.0, %v742
      %v744 = vpop.f32.mrb[0].mxu0
      %745 = vmatprep.mubr.bf16.mxu0 0
      %746 = vmatmul.mubr.bf16.gmra.mrb[0].mxu0 %v689
      %v747 = vpop.f32.mrb[0].mxu0
      %v748 = vadd.f32 0.0, %v747
      %v749 = vpop.f32.mrb[0].mxu0
      %v750 = vpop.f32.mrb[0].mxu0
      %v751 = vadd.f32 0.0, %v750
      %v752 = vpop.f32.mrb[0].mxu0
      %753 = vmatprep.mubr.bf16.mxu0 0
      %754 = vmatmul.mubr.bf16.gmra.mrb[0].mxu0 %v692
      %v755 = vpop.f32.mrb[0].mxu0
      %v756 = vadd.f32 0.0, %v755
      %v757 = vpop.f32.mrb[0].mxu0
      %v758 = vpop.f32.mrb[0].mxu0
      %v759 = vadd.f32 0.0, %v758
      %v760 = vpop.f32.mrb[0].mxu0
      %761 = vdwg.mxu0
      %v762 = vadd.f32 %v507, %v732
      %v763 = vadd.f32 %v510, %v735
      %v764 = vadd.f32 %v515, %v740
      %v765 = vadd.f32 %v518, %v743
      %v766 = vadd.f32 %v523, %v748
      %v767 = vadd.f32 %v526, %v751
      %v768 = vadd.f32 %v531, %v756
      %v769 = vadd.f32 %v534, %v759
      %v770 = vld [vmem:[%s301] sm:$0xf]
      %v771 = vld [vmem:[%s301 + $0x8] sm:$0xf]
      %v772 = vld [vmem:[%s301 + $0x10] sm:$0xf]
      %v773 = vld [vmem:[%s301 + $0x18] sm:$0xf]
      %v774 = vld [vmem:[%s301 + $0x20] sm:$0xf]
      %v775 = vld [vmem:[%s301 + $0x28] sm:$0xf]
      %v776 = vld [vmem:[%s301 + $0x30] sm:$0xf]
      %v777 = vld [vmem:[%s301 + $0x38] sm:$0xf]
      %s778 = scalar_lea.vmem %s4, 6
      %v779 = vld [vmem:[%s778] sm:$0x3]
      %v788 = vunpack.c.l.b16 %v770
      %v789 = vunpack.c.l.b16 %v771
      %v790 = vunpack.c.l.b16 %v772
      %v791 = vunpack.c.l.b16 %v773
      %v792 = vunpack.c.l.b16 %v774
      %v793 = vunpack.c.l.b16 %v775
      %v794 = vunpack.c.l.b16 %v776
      %v795 = vunpack.c.l.b16 %v777
      %v796 = vpack.c.b16 %v789, %v788
      %v797 = vpack.c.b16 %v791, %v790
      %v798 = vpack.c.b16 %v793, %v792
      %v799 = vpack.c.b16 %v795, %v794
      %v801 = vsel %vm352, %v796, 0
      %v804 = vsel %vm352, %v797, 0
      %v807 = vsel %vm352, %v798, 0
      %v810 = vsel %vm352, %v799, 0
      %v813 = vand.u32 %v779, %v368
      %815 = vmatprep.subr.bf16.mxu0 0
      %816 = vmatpush1.bf16.msra.mxu0 %v813
      %817 = vmatprep.subr.bf16.mxu0 0
      %818 = vmatpush1.bf16.msra.mxu0 0
      %819 = vmatprep.subr.bf16.mxu0 0
      %820 = vmatpush1.bf16.msra.mxu0 0
      %821 = vmatprep.subr.bf16.mxu0 0
      %822 = vmatpush1.bf16.msra.mxu0 0
      %823 = vmatprep.subr.bf16.mxu0 0
      %824 = vmatpush1.bf16.msra.mxu0 0
      %825 = vmatprep.subr.bf16.mxu0 0
      %826 = vmatpush1.bf16.msra.mxu0 0
      %827 = vmatprep.subr.bf16.mxu0 0
      %828 = vmatpush1.bf16.msra.mxu0 0
      %829 = vmatprep.subr.bf16.mxu0 0
      %830 = vmatpush1.bf16.msra.mxu0 0
      %831 = vmatprep.subr.bf16.mxu0 0
      %832 = vmatpush1.bf16.msra.mxu0 0
      %833 = vmatprep.subr.bf16.mxu0 0
      %834 = vmatpush1.bf16.msra.mxu0 0
      %835 = vmatprep.subr.bf16.mxu0 0
      %836 = vmatpush1.bf16.msra.mxu0 0
      %837 = vmatprep.subr.bf16.mxu0 0
      %838 = vmatpush1.bf16.msra.mxu0 0
      %839 = vmatprep.subr.bf16.mxu0 0
      %840 = vmatpush1.bf16.msra.mxu0 0
      %841 = vmatprep.subr.bf16.mxu0 0
      %842 = vmatpush1.bf16.msra.mxu0 0
      %843 = vmatprep.subr.bf16.mxu0 0
      %844 = vmatpush1.bf16.msra.mxu0 0
      %845 = vmatprep.subr.bf16.mxu0 0
      %846 = vmatpush1.bf16.msra.mxu0 0
      %847 = vmatprep.mubr.bf16.mxu0 0
      %848 = vmatmul.mubr.bf16.gmra.mrb[0].mxu0 %v801
      %v849 = vpop.f32.mrb[0].mxu0
      %v850 = vadd.f32 0.0, %v849
      %v851 = vpop.f32.mrb[0].mxu0
      %v852 = vpop.f32.mrb[0].mxu0
      %v853 = vadd.f32 0.0, %v852
      %v854 = vpop.f32.mrb[0].mxu0
      %855 = vmatprep.mubr.bf16.mxu0 0
      %856 = vmatmul.mubr.bf16.gmra.mrb[0].mxu0 %v804
      %v857 = vpop.f32.mrb[0].mxu0
      %v858 = vadd.f32 0.0, %v857
      %v859 = vpop.f32.mrb[0].mxu0
      %v860 = vpop.f32.mrb[0].mxu0
      %v861 = vadd.f32 0.0, %v860
      %v862 = vpop.f32.mrb[0].mxu0
      %863 = vmatprep.mubr.bf16.mxu0 0
      %864 = vmatmul.mubr.bf16.gmra.mrb[0].mxu0 %v807
      %v865 = vpop.f32.mrb[0].mxu0
      %v866 = vadd.f32 0.0, %v865
      %v867 = vpop.f32.mrb[0].mxu0
      %v868 = vpop.f32.mrb[0].mxu0
      %v869 = vadd.f32 0.0, %v868
      %v870 = vpop.f32.mrb[0].mxu0
      %871 = vmatprep.mubr.bf16.mxu0 0
      %872 = vmatmul.mubr.bf16.gmra.mrb[0].mxu0 %v810
      %v873 = vpop.f32.mrb[0].mxu0
      %v874 = vadd.f32 0.0, %v873
      %v875 = vpop.f32.mrb[0].mxu0
      %v876 = vpop.f32.mrb[0].mxu0
      %v877 = vadd.f32 0.0, %v876
      %v878 = vpop.f32.mrb[0].mxu0
      %879 = vdwg.mxu0
      %v880 = vadd.f32 %v762, %v850
      %v881 = vadd.f32 %v763, %v853
      %v882 = vadd.f32 %v764, %v858
      %v883 = vadd.f32 %v765, %v861
      %v884 = vadd.f32 %v766, %v866
      %v885 = vadd.f32 %v767, %v869
      %v886 = vadd.f32 %v768, %v874
      %v887 = vadd.f32 %v769, %v877
      %v888 = vld [vmem:[%s306] sm:$0xf]
      %v889 = vld [vmem:[%s306 + $0x8] sm:$0xf]
      %v890 = vld [vmem:[%s306 + $0x10] sm:$0xf]
      %v891 = vld [vmem:[%s306 + $0x18] sm:$0xf]
      %v892 = vld [vmem:[%s306 + $0x20] sm:$0xf]
      %v893 = vld [vmem:[%s306 + $0x28] sm:$0xf]
      %v894 = vld [vmem:[%s306 + $0x30] sm:$0xf]
      %v895 = vld [vmem:[%s306 + $0x38] sm:$0xf]
      %s896 = scalar_lea.vmem %s4, 8
      %v897 = vld [vmem:[%s896] sm:$0x3]
      %v906 = vunpack.c.l.b16 %v888
      %v907 = vunpack.c.l.b16 %v889
      %v908 = vunpack.c.l.b16 %v890
      %v909 = vunpack.c.l.b16 %v891
      %v910 = vunpack.c.l.b16 %v892
      %v911 = vunpack.c.l.b16 %v893
      %v912 = vunpack.c.l.b16 %v894
      %v913 = vunpack.c.l.b16 %v895
      %v914 = vpack.c.b16 %v907, %v906
      %v915 = vpack.c.b16 %v909, %v908
      %v916 = vpack.c.b16 %v911, %v910
      %v917 = vpack.c.b16 %v913, %v912
      %v919 = vsel %vm352, %v914, 0
      %v922 = vsel %vm352, %v915, 0
      %v925 = vsel %vm352, %v916, 0
      %v928 = vsel %vm352, %v917, 0
      %v931 = vand.u32 %v897, %v368
      %933 = vmatprep.subr.bf16.mxu0 0
      %934 = vmatpush1.bf16.msra.mxu0 %v931
      %935 = vmatprep.subr.bf16.mxu0 0
      %936 = vmatpush1.bf16.msra.mxu0 0
      %937 = vmatprep.subr.bf16.mxu0 0
      %938 = vmatpush1.bf16.msra.mxu0 0
      %939 = vmatprep.subr.bf16.mxu0 0
      %940 = vmatpush1.bf16.msra.mxu0 0
      %941 = vmatprep.subr.bf16.mxu0 0
      %942 = vmatpush1.bf16.msra.mxu0 0
      %943 = vmatprep.subr.bf16.mxu0 0
      %944 = vmatpush1.bf16.msra.mxu0 0
      %945 = vmatprep.subr.bf16.mxu0 0
      %946 = vmatpush1.bf16.msra.mxu0 0
      %947 = vmatprep.subr.bf16.mxu0 0
      %948 = vmatpush1.bf16.msra.mxu0 0
      %949 = vmatprep.subr.bf16.mxu0 0
      %950 = vmatpush1.bf16.msra.mxu0 0
      %951 = vmatprep.subr.bf16.mxu0 0
      %952 = vmatpush1.bf16.msra.mxu0 0
      %953 = vmatprep.subr.bf16.mxu0 0
      %954 = vmatpush1.bf16.msra.mxu0 0
      %955 = vmatprep.subr.bf16.mxu0 0
      %956 = vmatpush1.bf16.msra.mxu0 0
      %957 = vmatprep.subr.bf16.mxu0 0
      %958 = vmatpush1.bf16.msra.mxu0 0
      %959 = vmatprep.subr.bf16.mxu0 0
      %960 = vmatpush1.bf16.msra.mxu0 0
      %961 = vmatprep.subr.bf16.mxu0 0
      %962 = vmatpush1.bf16.msra.mxu0 0
      %963 = vmatprep.subr.bf16.mxu0 0
      %964 = vmatpush1.bf16.msra.mxu0 0
      %965 = vmatprep.mubr.bf16.mxu0 0
      %966 = vmatmul.mubr.bf16.gmra.mrb[0].mxu0 %v919
      %v967 = vpop.f32.mrb[0].mxu0
      %v968 = vadd.f32 0.0, %v967
      %v969 = vpop.f32.mrb[0].mxu0
      %v970 = vpop.f32.mrb[0].mxu0
      %v971 = vadd.f32 0.0, %v970
      %v972 = vpop.f32.mrb[0].mxu0
      %973 = vmatprep.mubr.bf16.mxu0 0
      %974 = vmatmul.mubr.bf16.gmra.mrb[0].mxu0 %v922
      %v975 = vpop.f32.mrb[0].mxu0
      %v976 = vadd.f32 0.0, %v975
      %v977 = vpop.f32.mrb[0].mxu0
      %v978 = vpop.f32.mrb[0].mxu0
      %v979 = vadd.f32 0.0, %v978
      %v980 = vpop.f32.mrb[0].mxu0
      %981 = vmatprep.mubr.bf16.mxu0 0
      %982 = vmatmul.mubr.bf16.gmra.mrb[0].mxu0 %v925
      %v983 = vpop.f32.mrb[0].mxu0
      %v984 = vadd.f32 0.0, %v983
      %v985 = vpop.f32.mrb[0].mxu0
      %v986 = vpop.f32.mrb[0].mxu0
      %v987 = vadd.f32 0.0, %v986
      %v988 = vpop.f32.mrb[0].mxu0
      %989 = vmatprep.mubr.bf16.mxu0 0
      %990 = vmatmul.mubr.bf16.gmra.mrb[0].mxu0 %v928
      %v991 = vpop.f32.mrb[0].mxu0
      %v992 = vadd.f32 0.0, %v991
      %v993 = vpop.f32.mrb[0].mxu0
      %v994 = vpop.f32.mrb[0].mxu0
      %v995 = vadd.f32 0.0, %v994
      %v996 = vpop.f32.mrb[0].mxu0
      %997 = vdwg.mxu0
      %v998 = vadd.f32 %v880, %v968
      %v999 = vadd.f32 %v881, %v971
      %v1000 = vadd.f32 %v882, %v976
      %v1001 = vadd.f32 %v883, %v979
      %v1002 = vadd.f32 %v884, %v984
      %v1003 = vadd.f32 %v885, %v987
      %v1004 = vadd.f32 %v886, %v992
      %v1005 = vadd.f32 %v887, %v995
      %v1006 = vld [vmem:[%s301] sm:$0xf]
      %v1007 = vld [vmem:[%s301 + $0x4] sm:$0x1]
      %v1008 = vld [vmem:[%s301 + $0x8] sm:$0xf]
      %v1009 = vld [vmem:[%s301 + $0xc] sm:$0x1]
      %v1010 = vld [vmem:[%s301 + $0x10] sm:$0xf]
      %v1011 = vld [vmem:[%s301 + $0x14] sm:$0x1]
      %v1012 = vld [vmem:[%s301 + $0x18] sm:$0xf]
      %v1013 = vld [vmem:[%s301 + $0x1c] sm:$0x1]
      %v1014 = vld [vmem:[%s301 + $0x20] sm:$0xf]
      %v1015 = vld [vmem:[%s301 + $0x24] sm:$0x1]
      %v1016 = vld [vmem:[%s301 + $0x28] sm:$0xf]
      %v1017 = vld [vmem:[%s301 + $0x2c] sm:$0x1]
      %v1018 = vld [vmem:[%s301 + $0x30] sm:$0xf]
      %v1019 = vld [vmem:[%s301 + $0x34] sm:$0x1]
      %v1020 = vld [vmem:[%s301 + $0x38] sm:$0xf]
      %v1021 = vld [vmem:[%s301 + $0x3c] sm:$0x1]
      %v1023 = vshrl.u32 %v1006, 16
      %v1025 = vrot.slane %v1023, 4
      %v1026 = vshll.u32 %v1006, 16
      %v1028 = vrot.slane %v1026, 5
      %v1029 = vor.u32 %v1025, %v1028
      %v1030 = vrot.slane %v1029, 4
      %v1032 = vshll.u32 %v1007, 16
      %v1034 = vrot.slane %v1032, 5
      %v1035 = vsel %vm555, %v1030, %v1034
      %v1037 = vshrl.u32 %v1008, 16
      %v1039 = vrot.slane %v1037, 4
      %v1040 = vshll.u32 %v1008, 16
      %v1042 = vrot.slane %v1040, 5
      %v1043 = vor.u32 %v1039, %v1042
      %v1044 = vrot.slane %v1043, 4
      %v1046 = vshll.u32 %v1009, 16
      %v1048 = vrot.slane %v1046, 5
      %v1049 = vsel %vm555, %v1044, %v1048
      %v1051 = vshrl.u32 %v1010, 16
      %v1053 = vrot.slane %v1051, 4
      %v1054 = vshll.u32 %v1010, 16
      %v1056 = vrot.slane %v1054, 5
      %v1057 = vor.u32 %v1053, %v1056
      %v1058 = vrot.slane %v1057, 4
      %v1060 = vshll.u32 %v1011, 16
      %v1062 = vrot.slane %v1060, 5
      %v1063 = vsel %vm555, %v1058, %v1062
      %v1065 = vshrl.u32 %v1012, 16
      %v1067 = vrot.slane %v1065, 4
      %v1068 = vshll.u32 %v1012, 16
      %v1070 = vrot.slane %v1068, 5
      %v1071 = vor.u32 %v1067, %v1070
      %v1072 = vrot.slane %v1071, 4
      %v1074 = vshll.u32 %v1013, 16
      %v1076 = vrot.slane %v1074, 5
      %v1077 = vsel %vm555, %v1072, %v1076
      %v1079 = vshrl.u32 %v1014, 16
      %v1081 = vrot.slane %v1079, 4
      %v1082 = vshll.u32 %v1014, 16
      %v1084 = vrot.slane %v1082, 5
      %v1085 = vor.u32 %v1081, %v1084
      %v1086 = vrot.slane %v1085, 4
      %v1088 = vshll.u32 %v1015, 16
      %v1090 = vrot.slane %v1088, 5
      %v1091 = vsel %vm555, %v1086, %v1090
      %v1093 = vshrl.u32 %v1016, 16
      %v1095 = vrot.slane %v1093, 4
      %v1096 = vshll.u32 %v1016, 16
      %v1098 = vrot.slane %v1096, 5
      %v1099 = vor.u32 %v1095, %v1098
      %v1100 = vrot.slane %v1099, 4
      %v1102 = vshll.u32 %v1017, 16
      %v1104 = vrot.slane %v1102, 5
      %v1105 = vsel %vm555, %v1100, %v1104
      %v1107 = vshrl.u32 %v1018, 16
      %v1109 = vrot.slane %v1107, 4
      %v1110 = vshll.u32 %v1018, 16
      %v1112 = vrot.slane %v1110, 5
      %v1113 = vor.u32 %v1109, %v1112
      %v1114 = vrot.slane %v1113, 4
      %v1116 = vshll.u32 %v1019, 16
      %v1118 = vrot.slane %v1116, 5
      %v1119 = vsel %vm555, %v1114, %v1118
      %v1121 = vshrl.u32 %v1020, 16
      %v1123 = vrot.slane %v1121, 4
      %v1124 = vshll.u32 %v1020, 16
      %v1126 = vrot.slane %v1124, 5
      %v1127 = vor.u32 %v1123, %v1126
      %v1128 = vrot.slane %v1127, 4
      %v1130 = vshll.u32 %v1021, 16
      %v1132 = vrot.slane %v1130, 5
      %v1133 = vsel %vm555, %v1128, %v1132
      %s1134 = scalar_lea.vmem %s4, 10
      %v1135 = vld [vmem:[%s1134] sm:$0x3]
      %v1136 = vunpack.c.l.b16 %v1035
      %v1137 = vunpack.c.l.b16 %v1049
      %v1138 = vunpack.c.l.b16 %v1063
      %v1139 = vunpack.c.l.b16 %v1077
      %v1140 = vunpack.c.l.b16 %v1091
      %v1141 = vunpack.c.l.b16 %v1105
      %v1142 = vunpack.c.l.b16 %v1119
      %v1143 = vunpack.c.l.b16 %v1133
      %v1144 = vpack.c.b16 %v1137, %v1136
      %v1145 = vpack.c.b16 %v1139, %v1138
      %v1146 = vpack.c.b16 %v1141, %v1140
      %v1147 = vpack.c.b16 %v1143, %v1142
      %v1149 = vsel %vm352, %v1144, 0
      %v1152 = vsel %vm352, %v1145, 0
      %v1155 = vsel %vm352, %v1146, 0
      %v1158 = vsel %vm352, %v1147, 0
      %v1161 = vand.u32 %v1135, %v368
      %1163 = vmatprep.subr.bf16.mxu0 0
      %1164 = vmatpush1.bf16.msra.mxu0 %v1161
      %1165 = vmatprep.subr.bf16.mxu0 0
      %1166 = vmatpush1.bf16.msra.mxu0 0
      %1167 = vmatprep.subr.bf16.mxu0 0
      %1168 = vmatpush1.bf16.msra.mxu0 0
      %1169 = vmatprep.subr.bf16.mxu0 0
      %1170 = vmatpush1.bf16.msra.mxu0 0
      %1171 = vmatprep.subr.bf16.mxu0 0
      %1172 = vmatpush1.bf16.msra.mxu0 0
      %1173 = vmatprep.subr.bf16.mxu0 0
      %1174 = vmatpush1.bf16.msra.mxu0 0
      %1175 = vmatprep.subr.bf16.mxu0 0
      %1176 = vmatpush1.bf16.msra.mxu0 0
      %1177 = vmatprep.subr.bf16.mxu0 0
      %1178 = vmatpush1.bf16.msra.mxu0 0
      %1179 = vmatprep.subr.bf16.mxu0 0
      %1180 = vmatpush1.bf16.msra.mxu0 0
      %1181 = vmatprep.subr.bf16.mxu0 0
      %1182 = vmatpush1.bf16.msra.mxu0 0
      %1183 = vmatprep.subr.bf16.mxu0 0
      %1184 = vmatpush1.bf16.msra.mxu0 0
      %1185 = vmatprep.subr.bf16.mxu0 0
      %1186 = vmatpush1.bf16.msra.mxu0 0
      %1187 = vmatprep.subr.bf16.mxu0 0
      %1188 = vmatpush1.bf16.msra.mxu0 0
      %1189 = vmatprep.subr.bf16.mxu0 0
      %1190 = vmatpush1.bf16.msra.mxu0 0
      %1191 = vmatprep.subr.bf16.mxu0 0
      %1192 = vmatpush1.bf16.msra.mxu0 0
      %1193 = vmatprep.subr.bf16.mxu0 0
      %1194 = vmatpush1.bf16.msra.mxu0 0
      %1195 = vmatprep.mubr.bf16.mxu0 0
      %1196 = vmatmul.mubr.bf16.gmra.mrb[0].mxu0 %v1149
      %v1197 = vpop.f32.mrb[0].mxu0
      %v1198 = vadd.f32 0.0, %v1197
      %v1199 = vpop.f32.mrb[0].mxu0
      %v1200 = vpop.f32.mrb[0].mxu0
      %v1201 = vadd.f32 0.0, %v1200
      %v1202 = vpop.f32.mrb[0].mxu0
      %1203 = vmatprep.mubr.bf16.mxu0 0
      %1204 = vmatmul.mubr.bf16.gmra.mrb[0].mxu0 %v1152
      %v1205 = vpop.f32.mrb[0].mxu0
      %v1206 = vadd.f32 0.0, %v1205
      %v1207 = vpop.f32.mrb[0].mxu0
      %v1208 = vpop.f32.mrb[0].mxu0
      %v1209 = vadd.f32 0.0, %v1208
      %v1210 = vpop.f32.mrb[0].mxu0
      %1211 = vmatprep.mubr.bf16.mxu0 0
      %1212 = vmatmul.mubr.bf16.gmra.mrb[0].mxu0 %v1155
      %v1213 = vpop.f32.mrb[0].mxu0
      %v1214 = vadd.f32 0.0, %v1213
      %v1215 = vpop.f32.mrb[0].mxu0
      %v1216 = vpop.f32.mrb[0].mxu0
      %v1217 = vadd.f32 0.0, %v1216
      %v1218 = vpop.f32.mrb[0].mxu0
      %1219 = vmatprep.mubr.bf16.mxu0 0
      %1220 = vmatmul.mubr.bf16.gmra.mrb[0].mxu0 %v1158
      %v1221 = vpop.f32.mrb[0].mxu0
      %v1222 = vadd.f32 0.0, %v1221
      %v1223 = vpop.f32.mrb[0].mxu0
      %v1224 = vpop.f32.mrb[0].mxu0
      %v1225 = vadd.f32 0.0, %v1224
      %v1226 = vpop.f32.mrb[0].mxu0
      %1227 = vdwg.mxu0
      %v1228 = vadd.f32 %v998, %v1198
      %v1229 = vadd.f32 %v999, %v1201
      %v1230 = vadd.f32 %v1000, %v1206
      %v1231 = vadd.f32 %v1001, %v1209
      %v1232 = vadd.f32 %v1002, %v1214
      %v1233 = vadd.f32 %v1003, %v1217
      %v1234 = vadd.f32 %v1004, %v1222
      %v1235 = vadd.f32 %v1005, %v1225
      %s1236 = scalar_lea.vmem %s291, 8
      %v1237 = vld [vmem:[%s1236] sm:$0xf]
      %v1238 = vld [vmem:[%s1236 + $0x8] sm:$0xf]
      %v1239 = vld [vmem:[%s1236 + $0x10] sm:$0xf]
      %v1240 = vld [vmem:[%s1236 + $0x18] sm:$0xf]
      %v1241 = vld [vmem:[%s1236 + $0x20] sm:$0xf]
      %v1242 = vld [vmem:[%s1236 + $0x28] sm:$0xf]
      %v1243 = vld [vmem:[%s1236 + $0x30] sm:$0xf]
      %v1244 = vld [vmem:[%s1236 + $0x38] sm:$0xf]
      %s1245 = scalar_lea.vmem %s4, 12
      %v1246 = vld [vmem:[%s1245] sm:$0x3]
      %v1255 = vunpack.c.l.b16 %v1237
      %v1256 = vunpack.c.l.b16 %v1238
      %v1257 = vunpack.c.l.b16 %v1239
      %v1258 = vunpack.c.l.b16 %v1240
      %v1259 = vunpack.c.l.b16 %v1241
      %v1260 = vunpack.c.l.b16 %v1242
      %v1261 = vunpack.c.l.b16 %v1243
      %v1262 = vunpack.c.l.b16 %v1244
      %v1263 = vpack.c.b16 %v1256, %v1255
      %v1264 = vpack.c.b16 %v1258, %v1257
      %v1265 = vpack.c.b16 %v1260, %v1259
      %v1266 = vpack.c.b16 %v1262, %v1261
      %v1268 = vsel %vm352, %v1263, 0
      %v1271 = vsel %vm352, %v1264, 0
      %v1274 = vsel %vm352, %v1265, 0
      %v1277 = vsel %vm352, %v1266, 0
      %v1280 = vand.u32 %v1246, %v368
      %1282 = vmatprep.subr.bf16.mxu0 0
      %1283 = vmatpush1.bf16.msra.mxu0 %v1280
      %1284 = vmatprep.subr.bf16.mxu0 0
      %1285 = vmatpush1.bf16.msra.mxu0 0
      %1286 = vmatprep.subr.bf16.mxu0 0
      %1287 = vmatpush1.bf16.msra.mxu0 0
      %1288 = vmatprep.subr.bf16.mxu0 0
      %1289 = vmatpush1.bf16.msra.mxu0 0
      %1290 = vmatprep.subr.bf16.mxu0 0
      %1291 = vmatpush1.bf16.msra.mxu0 0
      %1292 = vmatprep.subr.bf16.mxu0 0
      %1293 = vmatpush1.bf16.msra.mxu0 0
      %1294 = vmatprep.subr.bf16.mxu0 0
      %1295 = vmatpush1.bf16.msra.mxu0 0
      %1296 = vmatprep.subr.bf16.mxu0 0
      %1297 = vmatpush1.bf16.msra.mxu0 0
      %1298 = vmatprep.subr.bf16.mxu0 0
      %1299 = vmatpush1.bf16.msra.mxu0 0
      %1300 = vmatprep.subr.bf16.mxu0 0
      %1301 = vmatpush1.bf16.msra.mxu0 0
      %1302 = vmatprep.subr.bf16.mxu0 0
      %1303 = vmatpush1.bf16.msra.mxu0 0
      %1304 = vmatprep.subr.bf16.mxu0 0
      %1305 = vmatpush1.bf16.msra.mxu0 0
      %1306 = vmatprep.subr.bf16.mxu0 0
      %1307 = vmatpush1.bf16.msra.mxu0 0
      %1308 = vmatprep.subr.bf16.mxu0 0
      %1309 = vmatpush1.bf16.msra.mxu0 0
      %1310 = vmatprep.subr.bf16.mxu0 0
      %1311 = vmatpush1.bf16.msra.mxu0 0
      %1312 = vmatprep.subr.bf16.mxu0 0
      %1313 = vmatpush1.bf16.msra.mxu0 0
      %1314 = vmatprep.mubr.bf16.mxu0 0
      %1315 = vmatmul.mubr.bf16.gmra.mrb[0].mxu0 %v1268
      %v1316 = vpop.f32.mrb[0].mxu0
      %v1317 = vadd.f32 0.0, %v1316
      %v1318 = vpop.f32.mrb[0].mxu0
      %v1319 = vpop.f32.mrb[0].mxu0
      %v1320 = vadd.f32 0.0, %v1319
      %v1321 = vpop.f32.mrb[0].mxu0
      %1322 = vmatprep.mubr.bf16.mxu0 0
      %1323 = vmatmul.mubr.bf16.gmra.mrb[0].mxu0 %v1271
      %v1324 = vpop.f32.mrb[0].mxu0
      %v1325 = vadd.f32 0.0, %v1324
      %v1326 = vpop.f32.mrb[0].mxu0
      %v1327 = vpop.f32.mrb[0].mxu0
      %v1328 = vadd.f32 0.0, %v1327
      %v1329 = vpop.f32.mrb[0].mxu0
      %1330 = vmatprep.mubr.bf16.mxu0 0
      %1331 = vmatmul.mubr.bf16.gmra.mrb[0].mxu0 %v1274
      %v1332 = vpop.f32.mrb[0].mxu0
      %v1333 = vadd.f32 0.0, %v1332
      %v1334 = vpop.f32.mrb[0].mxu0
      %v1335 = vpop.f32.mrb[0].mxu0
      %v1336 = vadd.f32 0.0, %v1335
      %v1337 = vpop.f32.mrb[0].mxu0
      %1338 = vmatprep.mubr.bf16.mxu0 0
      %1339 = vmatmul.mubr.bf16.gmra.mrb[0].mxu0 %v1277
      %v1340 = vpop.f32.mrb[0].mxu0
      %v1341 = vadd.f32 0.0, %v1340
      %v1342 = vpop.f32.mrb[0].mxu0
      %v1343 = vpop.f32.mrb[0].mxu0
      %v1344 = vadd.f32 0.0, %v1343
      %v1345 = vpop.f32.mrb[0].mxu0
      %1346 = vdwg.mxu0
      %v1347 = vadd.f32 %v1228, %v1317
      %v1348 = vadd.f32 %v1229, %v1320
      %v1349 = vadd.f32 %v1230, %v1325
      %v1350 = vadd.f32 %v1231, %v1328
      %v1351 = vadd.f32 %v1232, %v1333
      %v1352 = vadd.f32 %v1233, %v1336
      %v1353 = vadd.f32 %v1234, %v1341
      %v1354 = vadd.f32 %v1235, %v1344
      %s1355 = scalar_lea.vmem %s296, 8
      %v1356 = vld [vmem:[%s1355] sm:$0xf]
      %v1357 = vld [vmem:[%s1355 + $0x8] sm:$0xf]
      %v1358 = vld [vmem:[%s1355 + $0x10] sm:$0xf]
      %v1359 = vld [vmem:[%s1355 + $0x18] sm:$0xf]
      %v1360 = vld [vmem:[%s1355 + $0x20] sm:$0xf]
      %v1361 = vld [vmem:[%s1355 + $0x28] sm:$0xf]
      %v1362 = vld [vmem:[%s1355 + $0x30] sm:$0xf]
      %v1363 = vld [vmem:[%s1355 + $0x38] sm:$0xf]
      %s1364 = scalar_lea.vmem %s4, 14
      %v1365 = vld [vmem:[%s1364] sm:$0x3]
      %v1374 = vunpack.c.l.b16 %v1356
      %v1375 = vunpack.c.l.b16 %v1357
      %v1376 = vunpack.c.l.b16 %v1358
      %v1377 = vunpack.c.l.b16 %v1359
      %v1378 = vunpack.c.l.b16 %v1360
      %v1379 = vunpack.c.l.b16 %v1361
      %v1380 = vunpack.c.l.b16 %v1362
      %v1381 = vunpack.c.l.b16 %v1363
      %v1382 = vpack.c.b16 %v1375, %v1374
      %v1383 = vpack.c.b16 %v1377, %v1376
      %v1384 = vpack.c.b16 %v1379, %v1378
      %v1385 = vpack.c.b16 %v1381, %v1380
      %v1387 = vsel %vm352, %v1382, 0
      %v1390 = vsel %vm352, %v1383, 0
      %v1393 = vsel %vm352, %v1384, 0
      %v1396 = vsel %vm352, %v1385, 0
      %v1399 = vand.u32 %v1365, %v368
      %1401 = vmatprep.subr.bf16.mxu0 0
      %1402 = vmatpush1.bf16.msra.mxu0 %v1399
      %1403 = vmatprep.subr.bf16.mxu0 0
      %1404 = vmatpush1.bf16.msra.mxu0 0
      %1405 = vmatprep.subr.bf16.mxu0 0
      %1406 = vmatpush1.bf16.msra.mxu0 0
      %1407 = vmatprep.subr.bf16.mxu0 0
      %1408 = vmatpush1.bf16.msra.mxu0 0
      %1409 = vmatprep.subr.bf16.mxu0 0
      %1410 = vmatpush1.bf16.msra.mxu0 0
      %1411 = vmatprep.subr.bf16.mxu0 0
      %1412 = vmatpush1.bf16.msra.mxu0 0
      %1413 = vmatprep.subr.bf16.mxu0 0
      %1414 = vmatpush1.bf16.msra.mxu0 0
      %1415 = vmatprep.subr.bf16.mxu0 0
      %1416 = vmatpush1.bf16.msra.mxu0 0
      %1417 = vmatprep.subr.bf16.mxu0 0
      %1418 = vmatpush1.bf16.msra.mxu0 0
      %1419 = vmatprep.subr.bf16.mxu0 0
      %1420 = vmatpush1.bf16.msra.mxu0 0
      %1421 = vmatprep.subr.bf16.mxu0 0
      %1422 = vmatpush1.bf16.msra.mxu0 0
      %1423 = vmatprep.subr.bf16.mxu0 0
      %1424 = vmatpush1.bf16.msra.mxu0 0
      %1425 = vmatprep.subr.bf16.mxu0 0
      %1426 = vmatpush1.bf16.msra.mxu0 0
      %1427 = vmatprep.subr.bf16.mxu0 0
      %1428 = vmatpush1.bf16.msra.mxu0 0
      %1429 = vmatprep.subr.bf16.mxu0 0
      %1430 = vmatpush1.bf16.msra.mxu0 0
      %1431 = vmatprep.subr.bf16.mxu0 0
      %1432 = vmatpush1.bf16.msra.mxu0 0
      %1433 = vmatprep.mubr.bf16.mxu0 0
      %1434 = vmatmul.mubr.bf16.gmra.mrb[0].mxu0 %v1387
      %v1435 = vpop.f32.mrb[0].mxu0
      %v1436 = vadd.f32 0.0, %v1435
      %v1437 = vpop.f32.mrb[0].mxu0
      %v1438 = vpop.f32.mrb[0].mxu0
      %v1439 = vadd.f32 0.0, %v1438
      %v1440 = vpop.f32.mrb[0].mxu0
      %1441 = vmatprep.mubr.bf16.mxu0 0
      %1442 = vmatmul.mubr.bf16.gmra.mrb[0].mxu0 %v1390
      %v1443 = vpop.f32.mrb[0].mxu0
      %v1444 = vadd.f32 0.0, %v1443
      %v1445 = vpop.f32.mrb[0].mxu0
      %v1446 = vpop.f32.mrb[0].mxu0
      %v1447 = vadd.f32 0.0, %v1446
      %v1448 = vpop.f32.mrb[0].mxu0
      %1449 = vmatprep.mubr.bf16.mxu0 0
      %1450 = vmatmul.mubr.bf16.gmra.mrb[0].mxu0 %v1393
      %v1451 = vpop.f32.mrb[0].mxu0
      %v1452 = vadd.f32 0.0, %v1451
      %v1453 = vpop.f32.mrb[0].mxu0
      %v1454 = vpop.f32.mrb[0].mxu0
      %v1455 = vadd.f32 0.0, %v1454
      %v1456 = vpop.f32.mrb[0].mxu0
      %1457 = vmatprep.mubr.bf16.mxu0 0
      %1458 = vmatmul.mubr.bf16.gmra.mrb[0].mxu0 %v1396
      %v1459 = vpop.f32.mrb[0].mxu0
      %v1460 = vadd.f32 0.0, %v1459
      %v1461 = vpop.f32.mrb[0].mxu0
      %v1462 = vpop.f32.mrb[0].mxu0
      %v1463 = vadd.f32 0.0, %v1462
      %v1464 = vpop.f32.mrb[0].mxu0
      %1465 = vdwg.mxu0
      %v1466 = vadd.f32 %v1347, %v1436
      %v1467 = vadd.f32 %v1348, %v1439
      %v1468 = vadd.f32 %v1349, %v1444
      %v1469 = vadd.f32 %v1350, %v1447
      %v1470 = vadd.f32 %v1351, %v1452
      %v1471 = vadd.f32 %v1352, %v1455
      %v1472 = vadd.f32 %v1353, %v1460
      %v1473 = vadd.f32 %v1354, %v1463
      %v1474 = vld [vmem:[%s1236] sm:$0xf]
      %v1475 = vld [vmem:[%s1236 + $0x4] sm:$0x1]
      %v1476 = vld [vmem:[%s1236 + $0x8] sm:$0xf]
      %v1477 = vld [vmem:[%s1236 + $0xc] sm:$0x1]
      %v1478 = vld [vmem:[%s1236 + $0x10] sm:$0xf]
      %v1479 = vld [vmem:[%s1236 + $0x14] sm:$0x1]
      %v1480 = vld [vmem:[%s1236 + $0x18] sm:$0xf]
      %v1481 = vld [vmem:[%s1236 + $0x1c] sm:$0x1]
      %v1482 = vld [vmem:[%s1236 + $0x20] sm:$0xf]
      %v1483 = vld [vmem:[%s1236 + $0x24] sm:$0x1]
      %v1484 = vld [vmem:[%s1236 + $0x28] sm:$0xf]
      %v1485 = vld [vmem:[%s1236 + $0x2c] sm:$0x1]
      %v1486 = vld [vmem:[%s1236 + $0x30] sm:$0xf]
      %v1487 = vld [vmem:[%s1236 + $0x34] sm:$0x1]
      %v1488 = vld [vmem:[%s1236 + $0x38] sm:$0xf]
      %v1489 = vld [vmem:[%s1236 + $0x3c] sm:$0x1]
      %v1491 = vshrl.u32 %v1474, 16
      %v1493 = vrot.slane %v1491, 4
      %v1494 = vshll.u32 %v1474, 16
      %v1496 = vrot.slane %v1494, 5
      %v1497 = vor.u32 %v1493, %v1496
      %v1498 = vrot.slane %v1497, 4
      %v1500 = vshll.u32 %v1475, 16
      %v1502 = vrot.slane %v1500, 5
      %v1503 = vsel %vm555, %v1498, %v1502
      %v1505 = vshrl.u32 %v1476, 16
      %v1507 = vrot.slane %v1505, 4
      %v1508 = vshll.u32 %v1476, 16
      %v1510 = vrot.slane %v1508, 5
      %v1511 = vor.u32 %v1507, %v1510
      %v1512 = vrot.slane %v1511, 4
      %v1514 = vshll.u32 %v1477, 16
      %v1516 = vrot.slane %v1514, 5
      %v1517 = vsel %vm555, %v1512, %v1516
      %v1519 = vshrl.u32 %v1478, 16
      %v1521 = vrot.slane %v1519, 4
      %v1522 = vshll.u32 %v1478, 16
      %v1524 = vrot.slane %v1522, 5
      %v1525 = vor.u32 %v1521, %v1524
      %v1526 = vrot.slane %v1525, 4
      %v1528 = vshll.u32 %v1479, 16
      %v1530 = vrot.slane %v1528, 5
      %v1531 = vsel %vm555, %v1526, %v1530
      %v1533 = vshrl.u32 %v1480, 16
      %v1535 = vrot.slane %v1533, 4
      %v1536 = vshll.u32 %v1480, 16
      %v1538 = vrot.slane %v1536, 5
      %v1539 = vor.u32 %v1535, %v1538
      %v1540 = vrot.slane %v1539, 4
      %v1542 = vshll.u32 %v1481, 16
      %v1544 = vrot.slane %v1542, 5
      %v1545 = vsel %vm555, %v1540, %v1544
      %v1547 = vshrl.u32 %v1482, 16
      %v1549 = vrot.slane %v1547, 4
      %v1550 = vshll.u32 %v1482, 16
      %v1552 = vrot.slane %v1550, 5
      %v1553 = vor.u32 %v1549, %v1552
      %v1554 = vrot.slane %v1553, 4
      %v1556 = vshll.u32 %v1483, 16
      %v1558 = vrot.slane %v1556, 5
      %v1559 = vsel %vm555, %v1554, %v1558
      %v1561 = vshrl.u32 %v1484, 16
      %v1563 = vrot.slane %v1561, 4
      %v1564 = vshll.u32 %v1484, 16
      %v1566 = vrot.slane %v1564, 5
      %v1567 = vor.u32 %v1563, %v1566
      %v1568 = vrot.slane %v1567, 4
      %v1570 = vshll.u32 %v1485, 16
      %v1572 = vrot.slane %v1570, 5
      %v1573 = vsel %vm555, %v1568, %v1572
      %v1575 = vshrl.u32 %v1486, 16
      %v1577 = vrot.slane %v1575, 4
      %v1578 = vshll.u32 %v1486, 16
      %v1580 = vrot.slane %v1578, 5
      %v1581 = vor.u32 %v1577, %v1580
      %v1582 = vrot.slane %v1581, 4
      %v1584 = vshll.u32 %v1487, 16
      %v1586 = vrot.slane %v1584, 5
      %v1587 = vsel %vm555, %v1582, %v1586
      %v1589 = vshrl.u32 %v1488, 16
      %v1591 = vrot.slane %v1589, 4
      %v1592 = vshll.u32 %v1488, 16
      %v1594 = vrot.slane %v1592, 5
      %v1595 = vor.u32 %v1591, %v1594
      %v1596 = vrot.slane %v1595, 4
      %v1598 = vshll.u32 %v1489, 16
      %v1600 = vrot.slane %v1598, 5
      %v1601 = vsel %vm555, %v1596, %v1600
      %s1602 = scalar_lea.vmem %s4, 16
      %v1603 = vld [vmem:[%s1602] sm:$0x3]
      %v1604 = vunpack.c.l.b16 %v1503
      %v1605 = vunpack.c.l.b16 %v1517
      %v1606 = vunpack.c.l.b16 %v1531
      %v1607 = vunpack.c.l.b16 %v1545
      %v1608 = vunpack.c.l.b16 %v1559
      %v1609 = vunpack.c.l.b16 %v1573
      %v1610 = vunpack.c.l.b16 %v1587
      %v1611 = vunpack.c.l.b16 %v1601
      %v1612 = vpack.c.b16 %v1605, %v1604
      %v1613 = vpack.c.b16 %v1607, %v1606
      %v1614 = vpack.c.b16 %v1609, %v1608
      %v1615 = vpack.c.b16 %v1611, %v1610
      %v1617 = vsel %vm352, %v1612, 0
      %v1620 = vsel %vm352, %v1613, 0
      %v1623 = vsel %vm352, %v1614, 0
      %v1626 = vsel %vm352, %v1615, 0
      %v1629 = vand.u32 %v1603, %v368
      %1631 = vmatprep.subr.bf16.mxu0 0
      %1632 = vmatpush1.bf16.msra.mxu0 %v1629
      %1633 = vmatprep.subr.bf16.mxu0 0
      %1634 = vmatpush1.bf16.msra.mxu0 0
      %1635 = vmatprep.subr.bf16.mxu0 0
      %1636 = vmatpush1.bf16.msra.mxu0 0
      %1637 = vmatprep.subr.bf16.mxu0 0
      %1638 = vmatpush1.bf16.msra.mxu0 0
      %1639 = vmatprep.subr.bf16.mxu0 0
      %1640 = vmatpush1.bf16.msra.mxu0 0
      %1641 = vmatprep.subr.bf16.mxu0 0
      %1642 = vmatpush1.bf16.msra.mxu0 0
      %1643 = vmatprep.subr.bf16.mxu0 0
      %1644 = vmatpush1.bf16.msra.mxu0 0
      %1645 = vmatprep.subr.bf16.mxu0 0
      %1646 = vmatpush1.bf16.msra.mxu0 0
      %1647 = vmatprep.subr.bf16.mxu0 0
      %1648 = vmatpush1.bf16.msra.mxu0 0
      %1649 = vmatprep.subr.bf16.mxu0 0
      %1650 = vmatpush1.bf16.msra.mxu0 0
      %1651 = vmatprep.subr.bf16.mxu0 0
      %1652 = vmatpush1.bf16.msra.mxu0 0
      %1653 = vmatprep.subr.bf16.mxu0 0
      %1654 = vmatpush1.bf16.msra.mxu0 0
      %1655 = vmatprep.subr.bf16.mxu0 0
      %1656 = vmatpush1.bf16.msra.mxu0 0
      %1657 = vmatprep.subr.bf16.mxu0 0
      %1658 = vmatpush1.bf16.msra.mxu0 0
      %1659 = vmatprep.subr.bf16.mxu0 0
      %1660 = vmatpush1.bf16.msra.mxu0 0
      %1661 = vmatprep.subr.bf16.mxu0 0
      %1662 = vmatpush1.bf16.msra.mxu0 0
      %1663 = vmatprep.mubr.bf16.mxu0 0
      %1664 = vmatmul.mubr.bf16.gmra.mrb[0].mxu0 %v1617
      %v1665 = vpop.f32.mrb[0].mxu0
      %v1666 = vadd.f32 0.0, %v1665
      %v1667 = vpop.f32.mrb[0].mxu0
      %v1668 = vpop.f32.mrb[0].mxu0
      %v1669 = vadd.f32 0.0, %v1668
      %v1670 = vpop.f32.mrb[0].mxu0
      %1671 = vmatprep.mubr.bf16.mxu0 0
      %1672 = vmatmul.mubr.bf16.gmra.mrb[0].mxu0 %v1620
      %v1673 = vpop.f32.mrb[0].mxu0
      %v1674 = vadd.f32 0.0, %v1673
      %v1675 = vpop.f32.mrb[0].mxu0
      %v1676 = vpop.f32.mrb[0].mxu0
      %v1677 = vadd.f32 0.0, %v1676
      %v1678 = vpop.f32.mrb[0].mxu0
      %1679 = vmatprep.mubr.bf16.mxu0 0
      %1680 = vmatmul.mubr.bf16.gmra.mrb[0].mxu0 %v1623
      %v1681 = vpop.f32.mrb[0].mxu0
      %v1682 = vadd.f32 0.0, %v1681
      %v1683 = vpop.f32.mrb[0].mxu0
      %v1684 = vpop.f32.mrb[0].mxu0
      %v1685 = vadd.f32 0.0, %v1684
      %v1686 = vpop.f32.mrb[0].mxu0
      %1687 = vmatprep.mubr.bf16.mxu0 0
      %1688 = vmatmul.mubr.bf16.gmra.mrb[0].mxu0 %v1626
      %v1689 = vpop.f32.mrb[0].mxu0
      %v1690 = vadd.f32 0.0, %v1689
      %v1691 = vpop.f32.mrb[0].mxu0
      %v1692 = vpop.f32.mrb[0].mxu0
      %v1693 = vadd.f32 0.0, %v1692
      %v1694 = vpop.f32.mrb[0].mxu0
      %1695 = vdwg.mxu0
      %v1696 = vadd.f32 %v1466, %v1666
      %v1697 = vadd.f32 %v1467, %v1669
      %v1698 = vadd.f32 %v1468, %v1674
      %v1699 = vadd.f32 %v1469, %v1677
      %v1700 = vadd.f32 %v1470, %v1682
      %v1701 = vadd.f32 %v1471, %v1685
      %v1702 = vadd.f32 %v1472, %v1690
      %v1703 = vadd.f32 %v1473, %v1693
      %v1704 = vld [vmem:[%s5] sm:$0x1]
      %v1706 = vlaneseq
      %v1707 = vshrl.u32 %v1706, 7
      %v1708 = vsub.s32 0, %v1707
      %v1709 = vrot.slane %v1704, %v1708
      %v1711 = vadd.f32 %v1696, %v1709
      %v1712 = vadd.f32 %v1697, %v1709
      %v1713 = vadd.f32 %v1698, %v1709
      %v1714 = vadd.f32 %v1699, %v1709
      %v1715 = vadd.f32 %v1700, %v1709
      %v1716 = vadd.f32 %v1701, %v1709
      %v1717 = vadd.f32 %v1702, %v1709
      %v1718 = vadd.f32 %v1703, %v1709
      %v1719 = vmax.f32 %v1711, 0.0
      %v1720 = vmax.f32 %v1712, 0.0
      %v1721 = vmax.f32 %v1713, 0.0
      %v1722 = vmax.f32 %v1714, 0.0
      %v1723 = vmax.f32 %v1715, 0.0
      %v1724 = vmax.f32 %v1716, 0.0
      %v1725 = vmax.f32 %v1717, 0.0
      %v1726 = vmax.f32 %v1718, 0.0
      %v1727 = vpack.c.bf16 %v1719, %v1719
      %v1728 = vpack.c.bf16 %v1720, %v1720
      %v1729 = vpack.c.bf16 %v1721, %v1721
      %v1730 = vpack.c.bf16 %v1722, %v1722
      %v1731 = vpack.c.bf16 %v1723, %v1723
      %v1732 = vpack.c.bf16 %v1724, %v1724
      %v1733 = vpack.c.bf16 %v1725, %v1725
      %v1734 = vpack.c.bf16 %v1726, %v1726
      %vm1735 = vcmask 519168
      %1736 = vst.msk [vmem:[%s311] sm:$0xf] %vm1735, %v1727
      %1737 = vst.msk [vmem:[%s311 + $0x4] sm:$0xf] %vm1735, %v1728
      %1738 = vst.msk [vmem:[%s311 + $0x8] sm:$0xf] %vm1735, %v1729
      %1739 = vst.msk [vmem:[%s311 + $0xc] sm:$0xf] %vm1735, %v1730
      %1740 = vst.msk [vmem:[%s311 + $0x10] sm:$0xf] %vm1735, %v1731
      %1741 = vst.msk [vmem:[%s311 + $0x14] sm:$0xf] %vm1735, %v1732
      %1742 = vst.msk [vmem:[%s311 + $0x18] sm:$0xf] %vm1735, %v1733
      %1743 = vst.msk [vmem:[%s311 + $0x1c] sm:$0xf] %vm1735, %v1734
      %p1744 = scmp.lt.s32.totalorder %s17, 1
      %s1745 = scalar_select %p1744, %s17, 1
      %s1746 = smul.addr %s1745, 8
      %s1747 = smul.addr %s1746, 4
      %s1748 = scalar_lea.vmem %s6, %s1747
      // Predicated region
      $region45: #{autoencoder_forward.6} parent=43 // pred_check
        %p1749 = pneg %p181
      $region46: #{autoencoder_forward.6} parent=43 // pred_check_branch
        %1751 = sbr.rel (%p1749) target = $region48
      $region47: #{autoencoder_forward.6} parent=43 // pred_region
        _
      $region48: #{autoencoder_forward.6} parent=43 // pred_fallthru
        _
    $region44: #{autoencoder_forward.6} parent=5 // pred_fallthru
      _
    %p1752 = scmp.le.s32.totalorder 2, %s12
    // Predicated region
    $region49: #{autoencoder_forward.6} parent=5 // pred_check
      %p1753 = pneg %p1752
    $region50: #{autoencoder_forward.6} parent=5 // pred_check_branch
      %1755 = sbr.rel (%p1753) target = $region52
    $region51: #{autoencoder_forward.6} parent=5 // pred_region
      %s1756 = ssub.s32 %s12, 2
      // Predicated region
      $region53: #{autoencoder_forward.6} parent=51 // pred_check
        %p1757 = pneg %p187
      $region54: #{autoencoder_forward.6} parent=51 // pred_check_branch
        %1759 = sbr.rel (%p1757) target = $region56
      $region55: #{autoencoder_forward.6} parent=51 // pred_region
        %p1760 = scmp.lt.s32.totalorder %s18, 1
        %s1761 = scalar_select %p1760, %s18, 1
        %s1762 = smul.addr %s1761, 8
        %s1763 = smul.addr %s1762, 4
        %s1764 = scalar_lea.vmem %s6, %s1763
      $region56: #{autoencoder_forward.6} parent=51 // pred_fallthru
        _
    $region52: #{autoencoder_forward.6} parent=5 // pred_fallthru
      _
  $region6: #{autoencoder_forward.6} parent=0 // loop_footer
    %s16 = sadd.s32 1, %s12
  $region7: #{autoencoder_forward.6} parent=0 // loop_footer_branch
    %11 = sbr.rel target = $region3
  $region8: #{autoencoder_forward.6} parent=0 // loop_exit
    _

// kernel: autoencoder_forward.8
$region0: #{autoencoder_forward.8}
  #allocation0 [shape = 'u32[]', space=smem, size = 0x4, offset = 0x4, fixed_abs, tag = 'smem constant byte address 0x4 - core index']
  #allocation1 [shape = 'u32[144,128]{1,0:T(1,128)}', space=vmem, size = 0x12000, scoped, tag = 'internal scratch']
  %s0 = inlined_call_operand.vmem [shape: bf16[2,3,3,128], index: 0, kind: input, shape index: {}]
  %s1 = inlined_call_operand.vmem [shape: bf16[2,3,3,128], index: 1, kind: input, shape index: {}]
  %s2 = inlined_call_operand.vmem [shape: bf16[2,3,3,128], index: 2, kind: input, shape index: {}]
  %s3 = inlined_call_operand.vmem [shape: bf16[2,3,3,128], index: 3, kind: input, shape index: {}]
  %s4 = inlined_call_operand.vmem [shape: bf16[9,128,256], index: 4, kind: input, shape index: {}]
  %s5 = inlined_call_operand.vmem [shape: f32[1,256], index: 5, kind: input, shape index: {}]
  %s6 = inlined_call_operand.vmem [shape: bf16[2,2,2,256], index: 6, kind: output, shape index: {}]
  %s7 = sld [smem:[#allocation0]]
  $region57: #{autoencoder_forward.8} parent=0
    _
  %s9 = ssub.s32 1, %s7
  %s10 = scalar_select 0, %s9, %s7
  loop: start=0, step=1, limit=4
  $region2: #{autoencoder_forward.8} parent=0 // loop_pre_header
    _
  $region3: #{autoencoder_forward.8} parent=0 // loop_header
    %s12 = sphi 0, %s16
    %p13 = scmp.ge.s32.totalorder %s12, 4
    %s22 = sphi 0, %s24
    %s25 = sphi 0, %s22
    %s26 = sphi 0, %s25
    %s42 = sphi 0, %s26
    %s48 = sphi 0, %s50
    %s51 = sphi 0, %s48
    %s52 = sphi 0, %s51
    %s68 = sphi 0, %s52
    %s74 = sphi 0, %s76
    %s77 = sphi 0, %s74
    %s78 = sphi 0, %s77
    %s94 = sphi 0, %s78
    %s100 = sphi 0, %s102
    %s103 = sphi 0, %s100
    %s104 = sphi 0, %s103
    %s120 = sphi 0, %s104
    %s124 = sphi 0, %s124
    %s126 = sphi 0, %s124
    %s127 = sphi 0, %s126
    %s141 = sphi 0, %s127
    %s145 = sphi 0, %s145
    %s147 = sphi 0, %s145
    %s148 = sphi 0, %s147
    %s162 = sphi 0, %s148
    %s168 = sphi 0, %s170
    %s171 = sphi 0, %s168
    %s172 = sphi 0, %s171
    %s188 = sphi 0, %s172
  $region4: #{autoencoder_forward.8} parent=0 // loop_header_branch
    %15 = sbr.rel (%p13) target = $region8
  $region5: #{autoencoder_forward.8} parent=0 // loop_body
    %s17 = ssub.s32 %s12, 1
    %s18 = ssub.s32 %s12, 2
    %s19 = sadd.s32 %s12, 1
    %s20 = ssub.s32 %s12, %s19
    %p21 = scmp.eq.s32.totalorder %s20, 0
    %s23 = sadd.s32 %s22, 1
    %s24 = scalar_select %p21, %s22, %s23
    %p27 = pneg %p21
    %p28 = scmp.eq.s32.totalorder %s12, 1
    %p29 = por %p27, %p28
    %p30 = scmp.ne.s32.totalorder %s22, %s25
    %p31 = scmp.eq.s32.totalorder %s12, 0
    %p32 = por %p30, %p31
    %p33 = scmp.ne.s32.totalorder %s22, %s25
    %p34 = scmp.eq.s32.totalorder %s17, 1
    %p35 = por %p33, %p34
    %p36 = scmp.ne.s32.totalorder %s25, %s26
    %p37 = scmp.eq.s32.totalorder %s17, 0
    %p38 = por %p36, %p37
    %p39 = scmp.ne.s32.totalorder %s25, %s26
    %p40 = scmp.eq.s32.totalorder %s18, 1
    %p41 = por %p39, %p40
    %p43 = scmp.ne.s32.totalorder %s26, %s42
    %p44 = scmp.eq.s32.totalorder %s18, 0
    %p45 = por %p43, %p44
    %s46 = ssub.s32 %s12, %s19
    %p47 = scmp.eq.s32.totalorder %s46, 0
    %s49 = sadd.s32 %s48, 1
    %s50 = scalar_select %p47, %s48, %s49
    %p53 = pneg %p47
    %p54 = scmp.eq.s32.totalorder %s12, 1
    %p55 = por %p53, %p54
    %p56 = scmp.ne.s32.totalorder %s48, %s51
    %p57 = scmp.eq.s32.totalorder %s12, 0
    %p58 = por %p56, %p57
    %p59 = scmp.ne.s32.totalorder %s48, %s51
    %p60 = scmp.eq.s32.totalorder %s17, 1
    %p61 = por %p59, %p60
    %p62 = scmp.ne.s32.totalorder %s51, %s52
    %p63 = scmp.eq.s32.totalorder %s17, 0
    %p64 = por %p62, %p63
    %p65 = scmp.ne.s32.totalorder %s51, %s52
    %p66 = scmp.eq.s32.totalorder %s18, 1
    %p67 = por %p65, %p66
    %p69 = scmp.ne.s32.totalorder %s52, %s68
    %p70 = scmp.eq.s32.totalorder %s18, 0
    %p71 = por %p69, %p70
    %s72 = ssub.s32 %s12, %s19
    %p73 = scmp.eq.s32.totalorder %s72, 0
    %s75 = sadd.s32 %s74, 1
    %s76 = scalar_select %p73, %s74, %s75
    %p79 = pneg %p73
    %p80 = scmp.eq.s32.totalorder %s12, 1
    %p81 = por %p79, %p80
    %p82 = scmp.ne.s32.totalorder %s74, %s77
    %p83 = scmp.eq.s32.totalorder %s12, 0
    %p84 = por %p82, %p83
    %p85 = scmp.ne.s32.totalorder %s74, %s77
    %p86 = scmp.eq.s32.totalorder %s17, 1
    %p87 = por %p85, %p86
    %p88 = scmp.ne.s32.totalorder %s77, %s78
    %p89 = scmp.eq.s32.totalorder %s17, 0
    %p90 = por %p88, %p89
    %p91 = scmp.ne.s32.totalorder %s77, %s78
    %p92 = scmp.eq.s32.totalorder %s18, 1
    %p93 = por %p91, %p92
    %p95 = scmp.ne.s32.totalorder %s78, %s94
    %p96 = scmp.eq.s32.totalorder %s18, 0
    %p97 = por %p95, %p96
    %s98 = ssub.s32 %s12, %s19
    %p99 = scmp.eq.s32.totalorder %s98, 0
    %s101 = sadd.s32 %s100, 1
    %s102 = scalar_select %p99, %s100, %s101
    %p105 = pneg %p99
    %p106 = scmp.eq.s32.totalorder %s12, 1
    %p107 = por %p105, %p106
    %p108 = scmp.ne.s32.totalorder %s100, %s103
    %p109 = scmp.eq.s32.totalorder %s12, 0
    %p110 = por %p108, %p109
    %p111 = scmp.ne.s32.totalorder %s100, %s103
    %p112 = scmp.eq.s32.totalorder %s17, 1
    %p113 = por %p111, %p112
    %p114 = scmp.ne.s32.totalorder %s103, %s104
    %p115 = scmp.eq.s32.totalorder %s17, 0
    %p116 = por %p114, %p115
    %p117 = scmp.ne.s32.totalorder %s103, %s104
    %p118 = scmp.eq.s32.totalorder %s18, 1
    %p119 = por %p117, %p118
    %p121 = scmp.ne.s32.totalorder %s104, %s120
    %p122 = scmp.eq.s32.totalorder %s18, 0
    %p123 = por %p121, %p122
    %s125 = sadd.s32 %s124, 1
    %p128 = scmp.eq.s32.totalorder %s12, 1
    %p129 = scmp.ne.s32.totalorder %s124, %s126
    %p130 = scmp.eq.s32.totalorder %s12, 0
    %p131 = por %p129, %p130
    %p132 = scmp.ne.s32.totalorder %s124, %s126
    %p133 = scmp.eq.s32.totalorder %s17, 1
    %p134 = por %p132, %p133
    %p135 = scmp.ne.s32.totalorder %s126, %s127
    %p136 = scmp.eq.s32.totalorder %s17, 0
    %p137 = por %p135, %p136
    %p138 = scmp.ne.s32.totalorder %s126, %s127
    %p139 = scmp.eq.s32.totalorder %s18, 1
    %p140 = por %p138, %p139
    %p142 = scmp.ne.s32.totalorder %s127, %s141
    %p143 = scmp.eq.s32.totalorder %s18, 0
    %p144 = por %p142, %p143
    %s146 = sadd.s32 %s145, 1
    %p149 = scmp.eq.s32.totalorder %s12, 1
    %p150 = scmp.ne.s32.totalorder %s145, %s147
    %p151 = scmp.eq.s32.totalorder %s12, 0
    %p152 = por %p150, %p151
    %p153 = scmp.ne.s32.totalorder %s145, %s147
    %p154 = scmp.eq.s32.totalorder %s17, 1
    %p155 = por %p153, %p154
    %p156 = scmp.ne.s32.totalorder %s147, %s148
    %p157 = scmp.eq.s32.totalorder %s17, 0
    %p158 = por %p156, %p157
    %p159 = scmp.ne.s32.totalorder %s147, %s148
    %p160 = scmp.eq.s32.totalorder %s18, 1
    %p161 = por %p159, %p160
    %p163 = scmp.ne.s32.totalorder %s148, %s162
    %p164 = scmp.eq.s32.totalorder %s18, 0
    %p165 = por %p163, %p164
    %s166 = ssub.s32 %s12, %s19
    %p167 = scmp.eq.s32.totalorder %s166, 0
    %s169 = sadd.s32 %s168, 1
    %s170 = scalar_select %p167, %s168, %s169
    %p173 = pneg %p167
    %p174 = scmp.eq.s32.totalorder %s12, 1
    %p175 = por %p173, %p174
    %p176 = scmp.ne.s32.totalorder %s168, %s171
    %p177 = scmp.eq.s32.totalorder %s12, 0
    %p178 = por %p176, %p177
    %p179 = scmp.ne.s32.totalorder %s168, %s171
    %p180 = scmp.eq.s32.totalorder %s17, 1
    %p181 = por %p179, %p180
    %p182 = scmp.ne.s32.totalorder %s171, %s172
    %p183 = scmp.eq.s32.totalorder %s17, 0
    %p184 = por %p182, %p183
    %p185 = scmp.ne.s32.totalorder %s171, %s172
    %p186 = scmp.eq.s32.totalorder %s18, 1
    %p187 = por %p185, %p186
    %p189 = scmp.ne.s32.totalorder %s172, %s188
    %p190 = scmp.eq.s32.totalorder %s18, 0
    %p191 = por %p189, %p190
    %p192 = scmp.le.s32.totalorder 1, %s12
    %p193 = scmp.lt.s32.totalorder %s12, 3
    %p194 = pnand %p192, %p193
    %p195 = pneg %p194
    // Predicated region
    $region9: #{autoencoder_forward.8} parent=5 // pred_check
      _
    $region10: #{autoencoder_forward.8} parent=5 // pred_check_branch
      %197 = sbr.rel (%p194) target = $region12
    $region11: #{autoencoder_forward.8} parent=5 // pred_region
      %s198 = ssub.s32 %s12, 1
      // Predicated region
      $region13: #{autoencoder_forward.8} parent=11 // pred_check
        %p199 = pneg %p137
      $region14: #{autoencoder_forward.8} parent=11 // pred_check_branch
        %201 = sbr.rel (%p199) target = $region16
      $region15: #{autoencoder_forward.8} parent=11 // pred_region
        _
      $region16: #{autoencoder_forward.8} parent=11 // pred_fallthru
        _
      // Predicated region
      $region17: #{autoencoder_forward.8} parent=11 // pred_check
        %p202 = pneg %p158
      $region18: #{autoencoder_forward.8} parent=11 // pred_check_branch
        %204 = sbr.rel (%p202) target = $region20
      $region19: #{autoencoder_forward.8} parent=11 // pred_region
        _
      $region20: #{autoencoder_forward.8} parent=11 // pred_fallthru
        _
    $region12: #{autoencoder_forward.8} parent=5 // pred_fallthru
      _
    %p205 = scmp.lt.s32.totalorder %s12, 2
    // Predicated region
    $region21: #{autoencoder_forward.8} parent=5 // pred_check
      %p206 = pneg %p205
    $region22: #{autoencoder_forward.8} parent=5 // pred_check_branch
      %208 = sbr.rel (%p206) target = $region24
    $region23: #{autoencoder_forward.8} parent=5 // pred_region
      // Predicated region
      $region25: #{autoencoder_forward.8} parent=23 // pred_check
        %p209 = pneg %p32
      $region26: #{autoencoder_forward.8} parent=23 // pred_check_branch
        %211 = sbr.rel (%p209) target = $region28
      $region27: #{autoencoder_forward.8} parent=23 // pred_region
        %p212 = scmp.lt.s32.totalorder %s12, 1
        %s213 = scalar_select %p212, %s12, 1
        %s214 = smul.addr %s213, 3
        %s215 = smul.addr %s214, 2
        %s216 = scalar_lea.vmem %s0, %s215
      $region28: #{autoencoder_forward.8} parent=23 // pred_fallthru
        _
      // Predicated region
      $region29: #{autoencoder_forward.8} parent=23 // pred_check
        %p217 = pneg %p58
      $region30: #{autoencoder_forward.8} parent=23 // pred_check_branch
        %219 = sbr.rel (%p217) target = $region32
      $region31: #{autoencoder_forward.8} parent=23 // pred_region
        %p220 = scmp.lt.s32.totalorder %s12, 1
        %s221 = scalar_select %p220, %s12, 1
        %s222 = smul.addr %s221, 3
        %s223 = smul.addr %s222, 2
        %s224 = scalar_lea.vmem %s1, %s223
      $region32: #{autoencoder_forward.8} parent=23 // pred_fallthru
        _
      // Predicated region
      $region33: #{autoencoder_forward.8} parent=23 // pred_check
        %p225 = pneg %p84
      $region34: #{autoencoder_forward.8} parent=23 // pred_check_branch
        %227 = sbr.rel (%p225) target = $region36
      $region35: #{autoencoder_forward.8} parent=23 // pred_region
        %p228 = scmp.lt.s32.totalorder %s12, 1
        %s229 = scalar_select %p228, %s12, 1
        %s230 = smul.addr %s229, 3
        %s231 = smul.addr %s230, 2
        %s232 = scalar_lea.vmem %s2, %s231
      $region36: #{autoencoder_forward.8} parent=23 // pred_fallthru
        _
      // Predicated region
      $region37: #{autoencoder_forward.8} parent=23 // pred_check
        %p233 = pneg %p110
      $region38: #{autoencoder_forward.8} parent=23 // pred_check_branch
        %235 = sbr.rel (%p233) target = $region40
      $region39: #{autoencoder_forward.8} parent=23 // pred_region
        %p236 = scmp.lt.s32.totalorder %s12, 1
        %s237 = scalar_select %p236, %s12, 1
        %s238 = smul.addr %s237, 3
        %s239 = smul.addr %s238, 2
        %s240 = scalar_lea.vmem %s3, %s239
      $region40: #{autoencoder_forward.8} parent=23 // pred_fallthru
        _
    $region24: #{autoencoder_forward.8} parent=5 // pred_fallthru
      _
    %p241 = scmp.le.s32.totalorder 1, %s12
    %p242 = scmp.lt.s32.totalorder %s12, 3
    %p243 = pnand %p241, %p242
    %p244 = pneg %p243
    // Predicated region
    $region41: #{autoencoder_forward.8} parent=5 // pred_check
      _
    $region42: #{autoencoder_forward.8} parent=5 // pred_check_branch
      %246 = sbr.rel (%p243) target = $region44
    $region43: #{autoencoder_forward.8} parent=5 // pred_region
      %s247 = ssub.s32 %s12, 1
      %p248 = scmp.lt.s32.totalorder %s17, 1
      %s249 = scalar_select %p248, %s17, 1
      %s250 = smul.addr %s249, 3
      %s251 = smul.addr %s250, 2
      %s252 = scalar_lea.vmem %s0, %s251
      %p253 = pneg %p38
      %p254 = pneg %p35
      %p255 = scmp.lt.s32.totalorder %s17, 1
      %s256 = scalar_select %p255, %s17, 1
      %s257 = smul.addr %s256, 3
      %s258 = smul.addr %s257, 2
      %s259 = scalar_lea.vmem %s1, %s258
      %p260 = pneg %p64
      %p261 = pneg %p61
      %p262 = scmp.lt.s32.totalorder %s17, 1
      %s263 = scalar_select %p262, %s17, 1
      %s264 = smul.addr %s263, 3
      %s265 = smul.addr %s264, 2
      %s266 = scalar_lea.vmem %s2, %s265
      %p267 = pneg %p90
      %p268 = pneg %p87
      %p269 = scmp.lt.s32.totalorder %s17, 1
      %s270 = scalar_select %p269, %s17, 1
      %s271 = smul.addr %s270, 3
      %s272 = smul.addr %s271, 2
      %s273 = scalar_lea.vmem %s3, %s272
      %p274 = pneg %p116
      %p275 = pneg %p113
      %p276 = pneg %p137
      %p277 = pneg %p134
      %p278 = pneg %p158
      %p279 = pneg %p155
      %p280 = pneg %p184
      %p281 = pneg %p181
      %p282 = scmp.lt.s32.totalorder %s17, 1
      %s283 = scalar_select %p282, %s17, 1
      %s284 = smul.addr %s283, 4
      %s285 = scalar_lea.vmem %s6, %s284
      %p286 = scmp.lt.s32.totalorder %s17, 1
      %s287 = scalar_select %p286, %s17, 1
      %s288 = smul.addr %s287, 3
      %s289 = smul.addr %s288, 2
      %s290 = scalar_lea.vmem %s0, %s289
      %p291 = scmp.lt.s32.totalorder %s17, 1
      %s292 = scalar_select %p291, %s17, 1
      %s293 = smul.addr %s292, 3
      %s294 = smul.addr %s293, 2
      %s295 = scalar_lea.vmem %s1, %s294
      %p296 = scmp.lt.s32.totalorder %s17, 1
      %s297 = scalar_select %p296, %s17, 1
      %s298 = smul.addr %s297, 3
      %s299 = smul.addr %s298, 2
      %s300 = scalar_lea.vmem %s2, %s299
      %p301 = scmp.lt.s32.totalorder %s17, 1
      %s302 = scalar_select %p301, %s17, 1
      %s303 = smul.addr %s302, 3
      %s304 = smul.addr %s303, 2
      %s305 = scalar_lea.vmem %s3, %s304
      %p306 = scmp.lt.s32.totalorder %s17, 1
      %s307 = scalar_select %p306, %s17, 1
      %s308 = smul.addr %s307, 4
      %s309 = scalar_lea.vmem %s6, %s308
      %v311 = vld [vmem:[%s290] sm:$0x1]
      %v312 = vld [vmem:[%s290 + $0x2] sm:$0x1]
      %v313 = vld [vmem:[%s4] sm:$0xff]
      %v314 = vld [vmem:[%s4 + $0x8] sm:$0xff]
      %v315 = vld [vmem:[%s4 + $0x10] sm:$0xff]
      %v316 = vld [vmem:[%s4 + $0x18] sm:$0xff]
      %v317 = vld [vmem:[%s4 + $0x20] sm:$0xff]
      %v318 = vld [vmem:[%s4 + $0x28] sm:$0xff]
      %v319 = vld [vmem:[%s4 + $0x30] sm:$0xff]
      %v320 = vld [vmem:[%s4 + $0x38] sm:$0xff]
      %v321 = vld [vmem:[%s4 + $0x40] sm:$0xff]
      %v322 = vld [vmem:[%s4 + $0x48] sm:$0xff]
      %v323 = vld [vmem:[%s4 + $0x50] sm:$0xff]
      %v324 = vld [vmem:[%s4 + $0x58] sm:$0xff]
      %v325 = vld [vmem:[%s4 + $0x60] sm:$0xff]
      %v326 = vld [vmem:[%s4 + $0x68] sm:$0xff]
      %v327 = vld [vmem:[%s4 + $0x70] sm:$0xff]
      %v328 = vld [vmem:[%s4 + $0x78] sm:$0xff]
      %v329 = vld [vmem:[%s295] sm:$0x1]
      %v330 = vld [vmem:[%s295 + $0x2] sm:$0x1]
      %s331 = scalar_lea.vmem %s4, 128
      %v332 = vld [vmem:[%s331] sm:$0xff]
      %v333 = vld [vmem:[%s331 + $0x8] sm:$0xff]
      %v334 = vld [vmem:[%s331 + $0x10] sm:$0xff]
      %v335 = vld [vmem:[%s331 + $0x18] sm:$0xff]
      %v336 = vld [vmem:[%s331 + $0x20] sm:$0xff]
      %v337 = vld [vmem:[%s331 + $0x28] sm:$0xff]
      %v338 = vld [vmem:[%s331 + $0x30] sm:$0xff]
      %v339 = vld [vmem:[%s331 + $0x38] sm:$0xff]
      %v340 = vld [vmem:[%s331 + $0x40] sm:$0xff]
      %v341 = vld [vmem:[%s331 + $0x48] sm:$0xff]
      %v342 = vld [vmem:[%s331 + $0x50] sm:$0xff]
      %v343 = vld [vmem:[%s331 + $0x58] sm:$0xff]
      %v344 = vld [vmem:[%s331 + $0x60] sm:$0xff]
      %v345 = vld [vmem:[%s331 + $0x68] sm:$0xff]
      %v346 = vld [vmem:[%s331 + $0x70] sm:$0xff]
      %v347 = vld [vmem:[%s331 + $0x78] sm:$0xff]
      %v350 = vcombine.low %v329, %v330
      %v352 = vunpack.c.l.s4 1966171168
      %v353 = vunpack.c.0.s8 %v352
      %v354 = vlaneseq
      %v355 = vshrl.u32 %v354, 7
      %v356 = vsub.s32 %v353, %v355
      %v357 = vrot.slane %v350, %v356
      %v359 = vunpack.c.l.s4 1966171168
      %v360 = vunpack.c.0.s8 %v359
      %v361 = vlaneseq
      %v362 = vshrl.u32 %v361, 7
      %v363 = vsub.s32 %v360, %v362
      %v364 = vrot.slane %v357, %v363
      %v382 = vunpack.c.l.b16 %v332
      %v383 = vunpack.c.h.b16 %v332
      %v384 = vunpack.c.l.b16 %v333
      %v385 = vunpack.c.h.b16 %v333
      %v386 = vunpack.c.l.b16 %v334
      %v387 = vunpack.c.h.b16 %v334
      %v388 = vunpack.c.l.b16 %v335
      %v389 = vunpack.c.h.b16 %v335
      %v390 = vunpack.c.l.b16 %v336
      %v391 = vunpack.c.h.b16 %v336
      %v392 = vunpack.c.l.b16 %v337
      %v393 = vunpack.c.h.b16 %v337
      %v394 = vunpack.c.l.b16 %v338
      %v395 = vunpack.c.h.b16 %v338
      %v396 = vunpack.c.l.b16 %v339
      %v397 = vunpack.c.h.b16 %v339
      %v398 = vunpack.c.l.b16 %v340
      %v399 = vunpack.c.h.b16 %v340
      %v400 = vunpack.c.l.b16 %v341
      %v401 = vunpack.c.h.b16 %v341
      %v402 = vunpack.c.l.b16 %v342
      %v403 = vunpack.c.h.b16 %v342
      %v404 = vunpack.c.l.b16 %v343
      %v405 = vunpack.c.h.b16 %v343
      %v406 = vunpack.c.l.b16 %v344
      %v407 = vunpack.c.h.b16 %v344
      %v408 = vunpack.c.l.b16 %v345
      %v409 = vunpack.c.h.b16 %v345
      %v410 = vunpack.c.l.b16 %v346
      %v411 = vunpack.c.h.b16 %v346
      %v412 = vunpack.c.l.b16 %v347
      %v413 = vunpack.c.h.b16 %v347
      %v414 = vpack.c.b16 %v384, %v382
      %v415 = vpack.c.b16 %v385, %v383
      %v416 = vpack.c.b16 %v388, %v386
      %v417 = vpack.c.b16 %v389, %v387
      %v418 = vpack.c.b16 %v392, %v390
      %v419 = vpack.c.b16 %v393, %v391
      %v420 = vpack.c.b16 %v396, %v394
      %v421 = vpack.c.b16 %v397, %v395
      %v422 = vpack.c.b16 %v400, %v398
      %v423 = vpack.c.b16 %v401, %v399
      %v424 = vpack.c.b16 %v404, %v402
      %v425 = vpack.c.b16 %v405, %v403
      %v426 = vpack.c.b16 %v408, %v406
      %v427 = vpack.c.b16 %v409, %v407
      %v428 = vpack.c.b16 %v412, %v410
      %v429 = vpack.c.b16 %v413, %v411
      %446 = vmatprep.subr.bf16.mxu0 %v415
      %447 = vmatpush1.bf16.msra.mxu0 %v414
      %448 = vmatprep.subr.bf16.mxu0 %v417
      %449 = vmatpush1.bf16.msra.mxu0 %v416
      %450 = vmatprep.subr.bf16.mxu0 %v419
      %451 = vmatpush1.bf16.msra.mxu0 %v418
      %452 = vmatprep.subr.bf16.mxu0 %v421
      %453 = vmatpush1.bf16.msra.mxu0 %v420
      %454 = vmatprep.subr.bf16.mxu0 %v423
      %455 = vmatpush1.bf16.msra.mxu0 %v422
      %456 = vmatprep.subr.bf16.mxu0 %v425
      %457 = vmatpush1.bf16.msra.mxu0 %v424
      %458 = vmatprep.subr.bf16.mxu0 %v427
      %459 = vmatpush1.bf16.msra.mxu0 %v426
      %460 = vmatprep.subr.bf16.mxu0 %v429
      %461 = vmatpush1.bf16.msra.mxu0 %v428
      %462 = vmatprep.subr.bf16.mxu0 0
      %463 = vmatpush1.bf16.msra.mxu0 0
      %464 = vmatprep.subr.bf16.mxu0 0
      %465 = vmatpush1.bf16.msra.mxu0 0
      %466 = vmatprep.subr.bf16.mxu0 0
      %467 = vmatpush1.bf16.msra.mxu0 0
      %468 = vmatprep.subr.bf16.mxu0 0
      %469 = vmatpush1.bf16.msra.mxu0 0
      %470 = vmatprep.subr.bf16.mxu0 0
      %471 = vmatpush1.bf16.msra.mxu0 0
      %472 = vmatprep.subr.bf16.mxu0 0
      %473 = vmatpush1.bf16.msra.mxu0 0
      %474 = vmatprep.subr.bf16.mxu0 0
      %475 = vmatpush1.bf16.msra.mxu0 0
      %476 = vmatprep.subr.bf16.mxu0 0
      %477 = vmatpush1.bf16.msra.mxu0 0
      %478 = vmatprep.mubr.bf16.mxu0 0
      %479 = vmatmul.mubr.bf16.gmra.mrb[0].mxu0 %v364
      %v480 = vpop.f32.mrb[0].mxu0
      %v481 = vadd.f32 0.0, %v480
      %v482 = vpop.f32.mrb[0].mxu0
      %v483 = vadd.f32 0.0, %v482
      %v484 = vpop.f32.mrb[0].mxu0
      %v485 = vpop.f32.mrb[0].mxu0
      %486 = vdwg.mxu0
      %v489 = vcombine.low %v311, %v312
      %v491 = vunpack.c.l.s4 1966171168
      %v492 = vunpack.c.0.s8 %v491
      %v493 = vlaneseq
      %v494 = vshrl.u32 %v493, 7
      %v495 = vsub.s32 %v492, %v494
      %v496 = vrot.slane %v489, %v495
      %v498 = vunpack.c.l.s4 1966171168
      %v499 = vunpack.c.0.s8 %v498
      %v500 = vlaneseq
      %v501 = vshrl.u32 %v500, 7
      %v502 = vsub.s32 %v499, %v501
      %v503 = vrot.slane %v496, %v502
      %v521 = vunpack.c.l.b16 %v313
      %v522 = vunpack.c.h.b16 %v313
      %v523 = vunpack.c.l.b16 %v314
      %v524 = vunpack.c.h.b16 %v314
      %v525 = vunpack.c.l.b16 %v315
      %v526 = vunpack.c.h.b16 %v315
      %v527 = vunpack.c.l.b16 %v316
      %v528 = vunpack.c.h.b16 %v316
      %v529 = vunpack.c.l.b16 %v317
      %v530 = vunpack.c.h.b16 %v317
      %v531 = vunpack.c.l.b16 %v318
      %v532 = vunpack.c.h.b16 %v318
      %v533 = vunpack.c.l.b16 %v319
      %v534 = vunpack.c.h.b16 %v319
      %v535 = vunpack.c.l.b16 %v320
      %v536 = vunpack.c.h.b16 %v320
      %v537 = vunpack.c.l.b16 %v321
      %v538 = vunpack.c.h.b16 %v321
      %v539 = vunpack.c.l.b16 %v322
      %v540 = vunpack.c.h.b16 %v322
      %v541 = vunpack.c.l.b16 %v323
      %v542 = vunpack.c.h.b16 %v323
      %v543 = vunpack.c.l.b16 %v324
      %v544 = vunpack.c.h.b16 %v324
      %v545 = vunpack.c.l.b16 %v325
      %v546 = vunpack.c.h.b16 %v325
      %v547 = vunpack.c.l.b16 %v326
      %v548 = vunpack.c.h.b16 %v326
      %v549 = vunpack.c.l.b16 %v327
      %v550 = vunpack.c.h.b16 %v327
      %v551 = vunpack.c.l.b16 %v328
      %v552 = vunpack.c.h.b16 %v328
      %v553 = vpack.c.b16 %v523, %v521
      %v554 = vpack.c.b16 %v524, %v522
      %v555 = vpack.c.b16 %v527, %v525
      %v556 = vpack.c.b16 %v528, %v526
      %v557 = vpack.c.b16 %v531, %v529
      %v558 = vpack.c.b16 %v532, %v530
      %v559 = vpack.c.b16 %v535, %v533
      %v560 = vpack.c.b16 %v536, %v534
      %v561 = vpack.c.b16 %v539, %v537
      %v562 = vpack.c.b16 %v540, %v538
      %v563 = vpack.c.b16 %v543, %v541
      %v564 = vpack.c.b16 %v544, %v542
      %v565 = vpack.c.b16 %v547, %v545
      %v566 = vpack.c.b16 %v548, %v546
      %v567 = vpack.c.b16 %v551, %v549
      %v568 = vpack.c.b16 %v552, %v550
      %585 = vmatprep.subr.bf16.mxu0 %v554
      %586 = vmatpush1.bf16.msra.mxu0 %v553
      %587 = vmatprep.subr.bf16.mxu0 %v556
      %588 = vmatpush1.bf16.msra.mxu0 %v555
      %589 = vmatprep.subr.bf16.mxu0 %v558
      %590 = vmatpush1.bf16.msra.mxu0 %v557
      %591 = vmatprep.subr.bf16.mxu0 %v560
      %592 = vmatpush1.bf16.msra.mxu0 %v559
      %593 = vmatprep.subr.bf16.mxu0 %v562
      %594 = vmatpush1.bf16.msra.mxu0 %v561
      %595 = vmatprep.subr.bf16.mxu0 %v564
      %596 = vmatpush1.bf16.msra.mxu0 %v563
      %597 = vmatprep.subr.bf16.mxu0 %v566
      %598 = vmatpush1.bf16.msra.mxu0 %v565
      %599 = vmatprep.subr.bf16.mxu0 %v568
      %600 = vmatpush1.bf16.msra.mxu0 %v567
      %601 = vmatprep.subr.bf16.mxu0 0
      %602 = vmatpush1.bf16.msra.mxu0 0
      %603 = vmatprep.subr.bf16.mxu0 0
      %604 = vmatpush1.bf16.msra.mxu0 0
      %605 = vmatprep.subr.bf16.mxu0 0
      %606 = vmatpush1.bf16.msra.mxu0 0
      %607 = vmatprep.subr.bf16.mxu0 0
      %608 = vmatpush1.bf16.msra.mxu0 0
      %609 = vmatprep.subr.bf16.mxu0 0
      %610 = vmatpush1.bf16.msra.mxu0 0
      %611 = vmatprep.subr.bf16.mxu0 0
      %612 = vmatpush1.bf16.msra.mxu0 0
      %613 = vmatprep.subr.bf16.mxu0 0
      %614 = vmatpush1.bf16.msra.mxu0 0
      %615 = vmatprep.subr.bf16.mxu0 0
      %616 = vmatpush1.bf16.msra.mxu0 0
      %617 = vmatprep.mubr.bf16.mxu0 0
      %618 = vmatmul.mubr.bf16.gmra.mrb[0].mxu0 %v503
      %v619 = vpop.f32.mrb[0].mxu0
      %v620 = vadd.f32 %v481, %v619
      %v621 = vpop.f32.mrb[0].mxu0
      %v622 = vadd.f32 %v483, %v621
      %v623 = vpop.f32.mrb[0].mxu0
      %v624 = vpop.f32.mrb[0].mxu0
      %625 = vdwg.mxu0
      %v626 = vld [vmem:[%s290] sm:$0x3]
      %v627 = vld [vmem:[%s290 + $0x2] sm:$0x3]
      %v631 = vunpack.c.l.s4 1966171168
      %v632 = vunpack.c.0.s8 %v631
      %v633 = vlaneseq
      %v634 = vshrl.u32 %v633, 7
      %v635 = vsub.s32 %v632, %v634
      %v636 = vrot.slane %v626, %v635
      %v637 = vcombine.high %v636, %v636
      %v639 = vunpack.c.l.s4 1966171168
      %v640 = vunpack.c.0.s8 %v639
      %v641 = vlaneseq
      %v642 = vshrl.u32 %v641, 7
      %v643 = vsub.s32 %v640, %v642
      %v644 = vrot.slane %v627, %v643
      %v645 = vcombine.high %v644, %v644
      %vm646 = vsmask.f32 256
      %vm647 = vsmask.f32 1284
      %vm648 = vmor %vm646, %vm647
      %vm649 = vsmask.f32 2312
      %vm650 = vmor %vm648, %vm649
      %vm651 = vsmask.f32 3340
      %vm652 = vmor %vm650, %vm651
      %vm653 = vsmask.f32 4368
      %vm654 = vmor %vm652, %vm653
      %vm655 = vsmask.f32 5396
      %vm656 = vmor %vm654, %vm655
      %vm657 = vsmask.f32 6424
      %vm658 = vmor %vm656, %vm657
      %vm659 = vsmask.f32 7452
      %vm660 = vmor %vm658, %vm659
      %v662 = vshrl.u32 %v636, 16
      %v664 = vrot.slane %v662, 7
      %v665 = vrot.slane %v664, 1
      %v667 = vshll.u32 %v637, 16
      %v669 = vsel %vm660, %v665, %v667
      %v671 = vshrl.u32 %v644, 16
      %v673 = vrot.slane %v671, 7
      %v674 = vrot.slane %v673, 1
      %v676 = vshll.u32 %v645, 16
      %v678 = vsel %vm660, %v674, %v676
      %s679 = scalar_lea.vmem %s4, 256
      %v680 = vld [vmem:[%s679] sm:$0xff]
      %v681 = vld [vmem:[%s679 + $0x8] sm:$0xff]
      %v682 = vld [vmem:[%s679 + $0x10] sm:$0xff]
      %v683 = vld [vmem:[%s679 + $0x18] sm:$0xff]
      %v684 = vld [vmem:[%s679 + $0x20] sm:$0xff]
      %v685 = vld [vmem:[%s679 + $0x28] sm:$0xff]
      %v686 = vld [vmem:[%s679 + $0x30] sm:$0xff]
      %v687 = vld [vmem:[%s679 + $0x38] sm:$0xff]
      %v688 = vld [vmem:[%s679 + $0x40] sm:$0xff]
      %v689 = vld [vmem:[%s679 + $0x48] sm:$0xff]
      %v690 = vld [vmem:[%s679 + $0x50] sm:$0xff]
      %v691 = vld [vmem:[%s679 + $0x58] sm:$0xff]
      %v692 = vld [vmem:[%s679 + $0x60] sm:$0xff]
      %v693 = vld [vmem:[%s679 + $0x68] sm:$0xff]
      %v694 = vld [vmem:[%s679 + $0x70] sm:$0xff]
      %v695 = vld [vmem:[%s679 + $0x78] sm:$0xff]
      %v696 = vcombine.low %v669, %v678
      %v698 = vunpack.c.l.s4 1966171168
      %v699 = vunpack.c.0.s8 %v698
      %v700 = vlaneseq
      %v701 = vshrl.u32 %v700, 7
      %v702 = vsub.s32 %v699, %v701
      %v703 = vrot.slane %v696, %v702
      %v705 = vunpack.c.l.s4 1966171168
      %v706 = vunpack.c.0.s8 %v705
      %v707 = vlaneseq
      %v708 = vshrl.u32 %v707, 7
      %v709 = vsub.s32 %v706, %v708
      %v710 = vrot.slane %v703, %v709
      %v728 = vunpack.c.l.b16 %v680
      %v729 = vunpack.c.h.b16 %v680
      %v730 = vunpack.c.l.b16 %v681
      %v731 = vunpack.c.h.b16 %v681
      %v732 = vunpack.c.l.b16 %v682
      %v733 = vunpack.c.h.b16 %v682
      %v734 = vunpack.c.l.b16 %v683
      %v735 = vunpack.c.h.b16 %v683
      %v736 = vunpack.c.l.b16 %v684
      %v737 = vunpack.c.h.b16 %v684
      %v738 = vunpack.c.l.b16 %v685
      %v739 = vunpack.c.h.b16 %v685
      %v740 = vunpack.c.l.b16 %v686
      %v741 = vunpack.c.h.b16 %v686
      %v742 = vunpack.c.l.b16 %v687
      %v743 = vunpack.c.h.b16 %v687
      %v744 = vunpack.c.l.b16 %v688
      %v745 = vunpack.c.h.b16 %v688
      %v746 = vunpack.c.l.b16 %v689
      %v747 = vunpack.c.h.b16 %v689
      %v748 = vunpack.c.l.b16 %v690
      %v749 = vunpack.c.h.b16 %v690
      %v750 = vunpack.c.l.b16 %v691
      %v751 = vunpack.c.h.b16 %v691
      %v752 = vunpack.c.l.b16 %v692
      %v753 = vunpack.c.h.b16 %v692
      %v754 = vunpack.c.l.b16 %v693
      %v755 = vunpack.c.h.b16 %v693
      %v756 = vunpack.c.l.b16 %v694
      %v757 = vunpack.c.h.b16 %v694
      %v758 = vunpack.c.l.b16 %v695
      %v759 = vunpack.c.h.b16 %v695
      %v760 = vpack.c.b16 %v730, %v728
      %v761 = vpack.c.b16 %v731, %v729
      %v762 = vpack.c.b16 %v734, %v732
      %v763 = vpack.c.b16 %v735, %v733
      %v764 = vpack.c.b16 %v738, %v736
      %v765 = vpack.c.b16 %v739, %v737
      %v766 = vpack.c.b16 %v742, %v740
      %v767 = vpack.c.b16 %v743, %v741
      %v768 = vpack.c.b16 %v746, %v744
      %v769 = vpack.c.b16 %v747, %v745
      %v770 = vpack.c.b16 %v750, %v748
      %v771 = vpack.c.b16 %v751, %v749
      %v772 = vpack.c.b16 %v754, %v752
      %v773 = vpack.c.b16 %v755, %v753
      %v774 = vpack.c.b16 %v758, %v756
      %v775 = vpack.c.b16 %v759, %v757
      %792 = vmatprep.subr.bf16.mxu0 %v761
      %793 = vmatpush1.bf16.msra.mxu0 %v760
      %794 = vmatprep.subr.bf16.mxu0 %v763
      %795 = vmatpush1.bf16.msra.mxu0 %v762
      %796 = vmatprep.subr.bf16.mxu0 %v765
      %797 = vmatpush1.bf16.msra.mxu0 %v764
      %798 = vmatprep.subr.bf16.mxu0 %v767
      %799 = vmatpush1.bf16.msra.mxu0 %v766
      %800 = vmatprep.subr.bf16.mxu0 %v769
      %801 = vmatpush1.bf16.msra.mxu0 %v768
      %802 = vmatprep.subr.bf16.mxu0 %v771
      %803 = vmatpush1.bf16.msra.mxu0 %v770
      %804 = vmatprep.subr.bf16.mxu0 %v773
      %805 = vmatpush1.bf16.msra.mxu0 %v772
      %806 = vmatprep.subr.bf16.mxu0 %v775
      %807 = vmatpush1.bf16.msra.mxu0 %v774
      %808 = vmatprep.subr.bf16.mxu0 0
      %809 = vmatpush1.bf16.msra.mxu0 0
      %810 = vmatprep.subr.bf16.mxu0 0
      %811 = vmatpush1.bf16.msra.mxu0 0
      %812 = vmatprep.subr.bf16.mxu0 0
      %813 = vmatpush1.bf16.msra.mxu0 0
      %814 = vmatprep.subr.bf16.mxu0 0
      %815 = vmatpush1.bf16.msra.mxu0 0
      %816 = vmatprep.subr.bf16.mxu0 0
      %817 = vmatpush1.bf16.msra.mxu0 0
      %818 = vmatprep.subr.bf16.mxu0 0
      %819 = vmatpush1.bf16.msra.mxu0 0
      %820 = vmatprep.subr.bf16.mxu0 0
      %821 = vmatpush1.bf16.msra.mxu0 0
      %822 = vmatprep.subr.bf16.mxu0 0
      %823 = vmatpush1.bf16.msra.mxu0 0
      %824 = vmatprep.mubr.bf16.mxu0 0
      %825 = vmatmul.mubr.bf16.gmra.mrb[0].mxu0 %v710
      %v826 = vpop.f32.mrb[0].mxu0
      %v827 = vadd.f32 0.0, %v826
      %v828 = vpop.f32.mrb[0].mxu0
      %v829 = vadd.f32 0.0, %v828
      %v830 = vpop.f32.mrb[0].mxu0
      %v831 = vpop.f32.mrb[0].mxu0
      %832 = vdwg.mxu0
      %v833 = vadd.f32 %v620, %v827
      %v834 = vadd.f32 %v622, %v829
      %v835 = vld [vmem:[%s300] sm:$0x1]
      %v836 = vld [vmem:[%s300 + $0x2] sm:$0x1]
      %s837 = scalar_lea.vmem %s4, 384
      %v838 = vld [vmem:[%s837] sm:$0xff]
      %v839 = vld [vmem:[%s837 + $0x8] sm:$0xff]
      %v840 = vld [vmem:[%s837 + $0x10] sm:$0xff]
      %v841 = vld [vmem:[%s837 + $0x18] sm:$0xff]
      %v842 = vld [vmem:[%s837 + $0x20] sm:$0xff]
      %v843 = vld [vmem:[%s837 + $0x28] sm:$0xff]
      %v844 = vld [vmem:[%s837 + $0x30] sm:$0xff]
      %v845 = vld [vmem:[%s837 + $0x38] sm:$0xff]
      %v846 = vld [vmem:[%s837 + $0x40] sm:$0xff]
      %v847 = vld [vmem:[%s837 + $0x48] sm:$0xff]
      %v848 = vld [vmem:[%s837 + $0x50] sm:$0xff]
      %v849 = vld [vmem:[%s837 + $0x58] sm:$0xff]
      %v850 = vld [vmem:[%s837 + $0x60] sm:$0xff]
      %v851 = vld [vmem:[%s837 + $0x68] sm:$0xff]
      %v852 = vld [vmem:[%s837 + $0x70] sm:$0xff]
      %v853 = vld [vmem:[%s837 + $0x78] sm:$0xff]
      %v856 = vcombine.low %v835, %v836
      %v858 = vunpack.c.l.s4 1966171168
      %v859 = vunpack.c.0.s8 %v858
      %v860 = vlaneseq
      %v861 = vshrl.u32 %v860, 7
      %v862 = vsub.s32 %v859, %v861
      %v863 = vrot.slane %v856, %v862
      %v865 = vunpack.c.l.s4 1966171168
      %v866 = vunpack.c.0.s8 %v865
      %v867 = vlaneseq
      %v868 = vshrl.u32 %v867, 7
      %v869 = vsub.s32 %v866, %v868
      %v870 = vrot.slane %v863, %v869
      %v888 = vunpack.c.l.b16 %v838
      %v889 = vunpack.c.h.b16 %v838
      %v890 = vunpack.c.l.b16 %v839
      %v891 = vunpack.c.h.b16 %v839
      %v892 = vunpack.c.l.b16 %v840
      %v893 = vunpack.c.h.b16 %v840
      %v894 = vunpack.c.l.b16 %v841
      %v895 = vunpack.c.h.b16 %v841
      %v896 = vunpack.c.l.b16 %v842
      %v897 = vunpack.c.h.b16 %v842
      %v898 = vunpack.c.l.b16 %v843
      %v899 = vunpack.c.h.b16 %v843
      %v900 = vunpack.c.l.b16 %v844
      %v901 = vunpack.c.h.b16 %v844
      %v902 = vunpack.c.l.b16 %v845
      %v903 = vunpack.c.h.b16 %v845
      %v904 = vunpack.c.l.b16 %v846
      %v905 = vunpack.c.h.b16 %v846
      %v906 = vunpack.c.l.b16 %v847
      %v907 = vunpack.c.h.b16 %v847
      %v908 = vunpack.c.l.b16 %v848
      %v909 = vunpack.c.h.b16 %v848
      %v910 = vunpack.c.l.b16 %v849
      %v911 = vunpack.c.h.b16 %v849
      %v912 = vunpack.c.l.b16 %v850
      %v913 = vunpack.c.h.b16 %v850
      %v914 = vunpack.c.l.b16 %v851
      %v915 = vunpack.c.h.b16 %v851
      %v916 = vunpack.c.l.b16 %v852
      %v917 = vunpack.c.h.b16 %v852
      %v918 = vunpack.c.l.b16 %v853
      %v919 = vunpack.c.h.b16 %v853
      %v920 = vpack.c.b16 %v890, %v888
      %v921 = vpack.c.b16 %v891, %v889
      %v922 = vpack.c.b16 %v894, %v892
      %v923 = vpack.c.b16 %v895, %v893
      %v924 = vpack.c.b16 %v898, %v896
      %v925 = vpack.c.b16 %v899, %v897
      %v926 = vpack.c.b16 %v902, %v900
      %v927 = vpack.c.b16 %v903, %v901
      %v928 = vpack.c.b16 %v906, %v904
      %v929 = vpack.c.b16 %v907, %v905
      %v930 = vpack.c.b16 %v910, %v908
      %v931 = vpack.c.b16 %v911, %v909
      %v932 = vpack.c.b16 %v914, %v912
      %v933 = vpack.c.b16 %v915, %v913
      %v934 = vpack.c.b16 %v918, %v916
      %v935 = vpack.c.b16 %v919, %v917
      %952 = vmatprep.subr.bf16.mxu0 %v921
      %953 = vmatpush1.bf16.msra.mxu0 %v920
      %954 = vmatprep.subr.bf16.mxu0 %v923
      %955 = vmatpush1.bf16.msra.mxu0 %v922
      %956 = vmatprep.subr.bf16.mxu0 %v925
      %957 = vmatpush1.bf16.msra.mxu0 %v924
      %958 = vmatprep.subr.bf16.mxu0 %v927
      %959 = vmatpush1.bf16.msra.mxu0 %v926
      %960 = vmatprep.subr.bf16.mxu0 %v929
      %961 = vmatpush1.bf16.msra.mxu0 %v928
      %962 = vmatprep.subr.bf16.mxu0 %v931
      %963 = vmatpush1.bf16.msra.mxu0 %v930
      %964 = vmatprep.subr.bf16.mxu0 %v933
      %965 = vmatpush1.bf16.msra.mxu0 %v932
      %966 = vmatprep.subr.bf16.mxu0 %v935
      %967 = vmatpush1.bf16.msra.mxu0 %v934
      %968 = vmatprep.subr.bf16.mxu0 0
      %969 = vmatpush1.bf16.msra.mxu0 0
      %970 = vmatprep.subr.bf16.mxu0 0
      %971 = vmatpush1.bf16.msra.mxu0 0
      %972 = vmatprep.subr.bf16.mxu0 0
      %973 = vmatpush1.bf16.msra.mxu0 0
      %974 = vmatprep.subr.bf16.mxu0 0
      %975 = vmatpush1.bf16.msra.mxu0 0
      %976 = vmatprep.subr.bf16.mxu0 0
      %977 = vmatpush1.bf16.msra.mxu0 0
      %978 = vmatprep.subr.bf16.mxu0 0
      %979 = vmatpush1.bf16.msra.mxu0 0
      %980 = vmatprep.subr.bf16.mxu0 0
      %981 = vmatpush1.bf16.msra.mxu0 0
      %982 = vmatprep.subr.bf16.mxu0 0
      %983 = vmatpush1.bf16.msra.mxu0 0
      %984 = vmatprep.mubr.bf16.mxu0 0
      %985 = vmatmul.mubr.bf16.gmra.mrb[0].mxu0 %v870
      %v986 = vpop.f32.mrb[0].mxu0
      %v987 = vadd.f32 0.0, %v986
      %v988 = vpop.f32.mrb[0].mxu0
      %v989 = vadd.f32 0.0, %v988
      %v990 = vpop.f32.mrb[0].mxu0
      %v991 = vpop.f32.mrb[0].mxu0
      %992 = vdwg.mxu0
      %v993 = vadd.f32 %v833, %v987
      %v994 = vadd.f32 %v834, %v989
      %v995 = vld [vmem:[%s305] sm:$0x1]
      %v996 = vld [vmem:[%s305 + $0x2] sm:$0x1]
      %s997 = scalar_lea.vmem %s4, 512
      %v998 = vld [vmem:[%s997] sm:$0xff]
      %v999 = vld [vmem:[%s997 + $0x8] sm:$0xff]
      %v1000 = vld [vmem:[%s997 + $0x10] sm:$0xff]
      %v1001 = vld [vmem:[%s997 + $0x18] sm:$0xff]
      %v1002 = vld [vmem:[%s997 + $0x20] sm:$0xff]
      %v1003 = vld [vmem:[%s997 + $0x28] sm:$0xff]
      %v1004 = vld [vmem:[%s997 + $0x30] sm:$0xff]
      %v1005 = vld [vmem:[%s997 + $0x38] sm:$0xff]
      %v1006 = vld [vmem:[%s997 + $0x40] sm:$0xff]
      %v1007 = vld [vmem:[%s997 + $0x48] sm:$0xff]
      %v1008 = vld [vmem:[%s997 + $0x50] sm:$0xff]
      %v1009 = vld [vmem:[%s997 + $0x58] sm:$0xff]
      %v1010 = vld [vmem:[%s997 + $0x60] sm:$0xff]
      %v1011 = vld [vmem:[%s997 + $0x68] sm:$0xff]
      %v1012 = vld [vmem:[%s997 + $0x70] sm:$0xff]
      %v1013 = vld [vmem:[%s997 + $0x78] sm:$0xff]
      %v1016 = vcombine.low %v995, %v996
      %v1018 = vunpack.c.l.s4 1966171168
      %v1019 = vunpack.c.0.s8 %v1018
      %v1020 = vlaneseq
      %v1021 = vshrl.u32 %v1020, 7
      %v1022 = vsub.s32 %v1019, %v1021
      %v1023 = vrot.slane %v1016, %v1022
      %v1025 = vunpack.c.l.s4 1966171168
      %v1026 = vunpack.c.0.s8 %v1025
      %v1027 = vlaneseq
      %v1028 = vshrl.u32 %v1027, 7
      %v1029 = vsub.s32 %v1026, %v1028
      %v1030 = vrot.slane %v1023, %v1029
      %v1048 = vunpack.c.l.b16 %v998
      %v1049 = vunpack.c.h.b16 %v998
      %v1050 = vunpack.c.l.b16 %v999
      %v1051 = vunpack.c.h.b16 %v999
      %v1052 = vunpack.c.l.b16 %v1000
      %v1053 = vunpack.c.h.b16 %v1000
      %v1054 = vunpack.c.l.b16 %v1001
      %v1055 = vunpack.c.h.b16 %v1001
      %v1056 = vunpack.c.l.b16 %v1002
      %v1057 = vunpack.c.h.b16 %v1002
      %v1058 = vunpack.c.l.b16 %v1003
      %v1059 = vunpack.c.h.b16 %v1003
      %v1060 = vunpack.c.l.b16 %v1004
      %v1061 = vunpack.c.h.b16 %v1004
      %v1062 = vunpack.c.l.b16 %v1005
      %v1063 = vunpack.c.h.b16 %v1005
      %v1064 = vunpack.c.l.b16 %v1006
      %v1065 = vunpack.c.h.b16 %v1006
      %v1066 = vunpack.c.l.b16 %v1007
      %v1067 = vunpack.c.h.b16 %v1007
      %v1068 = vunpack.c.l.b16 %v1008
      %v1069 = vunpack.c.h.b16 %v1008
      %v1070 = vunpack.c.l.b16 %v1009
      %v1071 = vunpack.c.h.b16 %v1009
      %v1072 = vunpack.c.l.b16 %v1010
      %v1073 = vunpack.c.h.b16 %v1010
      %v1074 = vunpack.c.l.b16 %v1011
      %v1075 = vunpack.c.h.b16 %v1011
      %v1076 = vunpack.c.l.b16 %v1012
      %v1077 = vunpack.c.h.b16 %v1012
      %v1078 = vunpack.c.l.b16 %v1013
      %v1079 = vunpack.c.h.b16 %v1013
      %v1080 = vpack.c.b16 %v1050, %v1048
      %v1081 = vpack.c.b16 %v1051, %v1049
      %v1082 = vpack.c.b16 %v1054, %v1052
      %v1083 = vpack.c.b16 %v1055, %v1053
      %v1084 = vpack.c.b16 %v1058, %v1056
      %v1085 = vpack.c.b16 %v1059, %v1057
      %v1086 = vpack.c.b16 %v1062, %v1060
      %v1087 = vpack.c.b16 %v1063, %v1061
      %v1088 = vpack.c.b16 %v1066, %v1064
      %v1089 = vpack.c.b16 %v1067, %v1065
      %v1090 = vpack.c.b16 %v1070, %v1068
      %v1091 = vpack.c.b16 %v1071, %v1069
      %v1092 = vpack.c.b16 %v1074, %v1072
      %v1093 = vpack.c.b16 %v1075, %v1073
      %v1094 = vpack.c.b16 %v1078, %v1076
      %v1095 = vpack.c.b16 %v1079, %v1077
      %1112 = vmatprep.subr.bf16.mxu0 %v1081
      %1113 = vmatpush1.bf16.msra.mxu0 %v1080
      %1114 = vmatprep.subr.bf16.mxu0 %v1083
      %1115 = vmatpush1.bf16.msra.mxu0 %v1082
      %1116 = vmatprep.subr.bf16.mxu0 %v1085
      %1117 = vmatpush1.bf16.msra.mxu0 %v1084
      %1118 = vmatprep.subr.bf16.mxu0 %v1087
      %1119 = vmatpush1.bf16.msra.mxu0 %v1086
      %1120 = vmatprep.subr.bf16.mxu0 %v1089
      %1121 = vmatpush1.bf16.msra.mxu0 %v1088
      %1122 = vmatprep.subr.bf16.mxu0 %v1091
      %1123 = vmatpush1.bf16.msra.mxu0 %v1090
      %1124 = vmatprep.subr.bf16.mxu0 %v1093
      %1125 = vmatpush1.bf16.msra.mxu0 %v1092
      %1126 = vmatprep.subr.bf16.mxu0 %v1095
      %1127 = vmatpush1.bf16.msra.mxu0 %v1094
      %1128 = vmatprep.subr.bf16.mxu0 0
      %1129 = vmatpush1.bf16.msra.mxu0 0
      %1130 = vmatprep.subr.bf16.mxu0 0
      %1131 = vmatpush1.bf16.msra.mxu0 0
      %1132 = vmatprep.subr.bf16.mxu0 0
      %1133 = vmatpush1.bf16.msra.mxu0 0
      %1134 = vmatprep.subr.bf16.mxu0 0
      %1135 = vmatpush1.bf16.msra.mxu0 0
      %1136 = vmatprep.subr.bf16.mxu0 0
      %1137 = vmatpush1.bf16.msra.mxu0 0
      %1138 = vmatprep.subr.bf16.mxu0 0
      %1139 = vmatpush1.bf16.msra.mxu0 0
      %1140 = vmatprep.subr.bf16.mxu0 0
      %1141 = vmatpush1.bf16.msra.mxu0 0
      %1142 = vmatprep.subr.bf16.mxu0 0
      %1143 = vmatpush1.bf16.msra.mxu0 0
      %1144 = vmatprep.mubr.bf16.mxu0 0
      %1145 = vmatmul.mubr.bf16.gmra.mrb[0].mxu0 %v1030
      %v1146 = vpop.f32.mrb[0].mxu0
      %v1147 = vadd.f32 0.0, %v1146
      %v1148 = vpop.f32.mrb[0].mxu0
      %v1149 = vadd.f32 0.0, %v1148
      %v1150 = vpop.f32.mrb[0].mxu0
      %v1151 = vpop.f32.mrb[0].mxu0
      %1152 = vdwg.mxu0
      %v1153 = vadd.f32 %v993, %v1147
      %v1154 = vadd.f32 %v994, %v1149
      %v1155 = vld [vmem:[%s300] sm:$0x3]
      %v1156 = vld [vmem:[%s300 + $0x2] sm:$0x3]
      %v1160 = vunpack.c.l.s4 1966171168
      %v1161 = vunpack.c.0.s8 %v1160
      %v1162 = vlaneseq
      %v1163 = vshrl.u32 %v1162, 7
      %v1164 = vsub.s32 %v1161, %v1163
      %v1165 = vrot.slane %v1155, %v1164
      %v1166 = vcombine.high %v1165, %v1165
      %v1168 = vunpack.c.l.s4 1966171168
      %v1169 = vunpack.c.0.s8 %v1168
      %v1170 = vlaneseq
      %v1171 = vshrl.u32 %v1170, 7
      %v1172 = vsub.s32 %v1169, %v1171
      %v1173 = vrot.slane %v1156, %v1172
      %v1174 = vcombine.high %v1173, %v1173
      %v1176 = vshrl.u32 %v1165, 16
      %v1178 = vrot.slane %v1176, 7
      %v1179 = vrot.slane %v1178, 1
      %v1181 = vshll.u32 %v1166, 16
      %v1183 = vsel %vm660, %v1179, %v1181
      %v1185 = vshrl.u32 %v1173, 16
      %v1187 = vrot.slane %v1185, 7
      %v1188 = vrot.slane %v1187, 1
      %v1190 = vshll.u32 %v1174, 16
      %v1192 = vsel %vm660, %v1188, %v1190
      %s1193 = scalar_lea.vmem %s4, 640
      %v1194 = vld [vmem:[%s1193] sm:$0xff]
      %v1195 = vld [vmem:[%s1193 + $0x8] sm:$0xff]
      %v1196 = vld [vmem:[%s1193 + $0x10] sm:$0xff]
      %v1197 = vld [vmem:[%s1193 + $0x18] sm:$0xff]
      %v1198 = vld [vmem:[%s1193 + $0x20] sm:$0xff]
      %v1199 = vld [vmem:[%s1193 + $0x28] sm:$0xff]
      %v1200 = vld [vmem:[%s1193 + $0x30] sm:$0xff]
      %v1201 = vld [vmem:[%s1193 + $0x38] sm:$0xff]
      %v1202 = vld [vmem:[%s1193 + $0x40] sm:$0xff]
      %v1203 = vld [vmem:[%s1193 + $0x48] sm:$0xff]
      %v1204 = vld [vmem:[%s1193 + $0x50] sm:$0xff]
      %v1205 = vld [vmem:[%s1193 + $0x58] sm:$0xff]
      %v1206 = vld [vmem:[%s1193 + $0x60] sm:$0xff]
      %v1207 = vld [vmem:[%s1193 + $0x68] sm:$0xff]
      %v1208 = vld [vmem:[%s1193 + $0x70] sm:$0xff]
      %v1209 = vld [vmem:[%s1193 + $0x78] sm:$0xff]
      %v1210 = vcombine.low %v1183, %v1192
      %v1212 = vunpack.c.l.s4 1966171168
      %v1213 = vunpack.c.0.s8 %v1212
      %v1214 = vlaneseq
      %v1215 = vshrl.u32 %v1214, 7
      %v1216 = vsub.s32 %v1213, %v1215
      %v1217 = vrot.slane %v1210, %v1216
      %v1219 = vunpack.c.l.s4 1966171168
      %v1220 = vunpack.c.0.s8 %v1219
      %v1221 = vlaneseq
      %v1222 = vshrl.u32 %v1221, 7
      %v1223 = vsub.s32 %v1220, %v1222
      %v1224 = vrot.slane %v1217, %v1223
      %v1242 = vunpack.c.l.b16 %v1194
      %v1243 = vunpack.c.h.b16 %v1194
      %v1244 = vunpack.c.l.b16 %v1195
      %v1245 = vunpack.c.h.b16 %v1195
      %v1246 = vunpack.c.l.b16 %v1196
      %v1247 = vunpack.c.h.b16 %v1196
      %v1248 = vunpack.c.l.b16 %v1197
      %v1249 = vunpack.c.h.b16 %v1197
      %v1250 = vunpack.c.l.b16 %v1198
      %v1251 = vunpack.c.h.b16 %v1198
      %v1252 = vunpack.c.l.b16 %v1199
      %v1253 = vunpack.c.h.b16 %v1199
      %v1254 = vunpack.c.l.b16 %v1200
      %v1255 = vunpack.c.h.b16 %v1200
      %v1256 = vunpack.c.l.b16 %v1201
      %v1257 = vunpack.c.h.b16 %v1201
      %v1258 = vunpack.c.l.b16 %v1202
      %v1259 = vunpack.c.h.b16 %v1202
      %v1260 = vunpack.c.l.b16 %v1203
      %v1261 = vunpack.c.h.b16 %v1203
      %v1262 = vunpack.c.l.b16 %v1204
      %v1263 = vunpack.c.h.b16 %v1204
      %v1264 = vunpack.c.l.b16 %v1205
      %v1265 = vunpack.c.h.b16 %v1205
      %v1266 = vunpack.c.l.b16 %v1206
      %v1267 = vunpack.c.h.b16 %v1206
      %v1268 = vunpack.c.l.b16 %v1207
      %v1269 = vunpack.c.h.b16 %v1207
      %v1270 = vunpack.c.l.b16 %v1208
      %v1271 = vunpack.c.h.b16 %v1208
      %v1272 = vunpack.c.l.b16 %v1209
      %v1273 = vunpack.c.h.b16 %v1209
      %v1274 = vpack.c.b16 %v1244, %v1242
      %v1275 = vpack.c.b16 %v1245, %v1243
      %v1276 = vpack.c.b16 %v1248, %v1246
      %v1277 = vpack.c.b16 %v1249, %v1247
      %v1278 = vpack.c.b16 %v1252, %v1250
      %v1279 = vpack.c.b16 %v1253, %v1251
      %v1280 = vpack.c.b16 %v1256, %v1254
      %v1281 = vpack.c.b16 %v1257, %v1255
      %v1282 = vpack.c.b16 %v1260, %v1258
      %v1283 = vpack.c.b16 %v1261, %v1259
      %v1284 = vpack.c.b16 %v1264, %v1262
      %v1285 = vpack.c.b16 %v1265, %v1263
      %v1286 = vpack.c.b16 %v1268, %v1266
      %v1287 = vpack.c.b16 %v1269, %v1267
      %v1288 = vpack.c.b16 %v1272, %v1270
      %v1289 = vpack.c.b16 %v1273, %v1271
      %1306 = vmatprep.subr.bf16.mxu0 %v1275
      %1307 = vmatpush1.bf16.msra.mxu0 %v1274
      %1308 = vmatprep.subr.bf16.mxu0 %v1277
      %1309 = vmatpush1.bf16.msra.mxu0 %v1276
      %1310 = vmatprep.subr.bf16.mxu0 %v1279
      %1311 = vmatpush1.bf16.msra.mxu0 %v1278
      %1312 = vmatprep.subr.bf16.mxu0 %v1281
      %1313 = vmatpush1.bf16.msra.mxu0 %v1280
      %1314 = vmatprep.subr.bf16.mxu0 %v1283
      %1315 = vmatpush1.bf16.msra.mxu0 %v1282
      %1316 = vmatprep.subr.bf16.mxu0 %v1285
      %1317 = vmatpush1.bf16.msra.mxu0 %v1284
      %1318 = vmatprep.subr.bf16.mxu0 %v1287
      %1319 = vmatpush1.bf16.msra.mxu0 %v1286
      %1320 = vmatprep.subr.bf16.mxu0 %v1289
      %1321 = vmatpush1.bf16.msra.mxu0 %v1288
      %1322 = vmatprep.subr.bf16.mxu0 0
      %1323 = vmatpush1.bf16.msra.mxu0 0
      %1324 = vmatprep.subr.bf16.mxu0 0
      %1325 = vmatpush1.bf16.msra.mxu0 0
      %1326 = vmatprep.subr.bf16.mxu0 0
      %1327 = vmatpush1.bf16.msra.mxu0 0
      %1328 = vmatprep.subr.bf16.mxu0 0
      %1329 = vmatpush1.bf16.msra.mxu0 0
      %1330 = vmatprep.subr.bf16.mxu0 0
      %1331 = vmatpush1.bf16.msra.mxu0 0
      %1332 = vmatprep.subr.bf16.mxu0 0
      %1333 = vmatpush1.bf16.msra.mxu0 0
      %1334 = vmatprep.subr.bf16.mxu0 0
      %1335 = vmatpush1.bf16.msra.mxu0 0
      %1336 = vmatprep.subr.bf16.mxu0 0
      %1337 = vmatpush1.bf16.msra.mxu0 0
      %1338 = vmatprep.mubr.bf16.mxu0 0
      %1339 = vmatmul.mubr.bf16.gmra.mrb[0].mxu0 %v1224
      %v1340 = vpop.f32.mrb[0].mxu0
      %v1341 = vadd.f32 0.0, %v1340
      %v1342 = vpop.f32.mrb[0].mxu0
      %v1343 = vadd.f32 0.0, %v1342
      %v1344 = vpop.f32.mrb[0].mxu0
      %v1345 = vpop.f32.mrb[0].mxu0
      %1346 = vdwg.mxu0
      %v1347 = vadd.f32 %v1153, %v1341
      %v1348 = vadd.f32 %v1154, %v1343
      %s1349 = scalar_lea.vmem %s290, 2
      %v1350 = vld [vmem:[%s1349] sm:$0x1]
      %v1351 = vld [vmem:[%s1349 + $0x2] sm:$0x1]
      %s1352 = scalar_lea.vmem %s4, 768
      %v1353 = vld [vmem:[%s1352] sm:$0xff]
      %v1354 = vld [vmem:[%s1352 + $0x8] sm:$0xff]
      %v1355 = vld [vmem:[%s1352 + $0x10] sm:$0xff]
      %v1356 = vld [vmem:[%s1352 + $0x18] sm:$0xff]
      %v1357 = vld [vmem:[%s1352 + $0x20] sm:$0xff]
      %v1358 = vld [vmem:[%s1352 + $0x28] sm:$0xff]
      %v1359 = vld [vmem:[%s1352 + $0x30] sm:$0xff]
      %v1360 = vld [vmem:[%s1352 + $0x38] sm:$0xff]
      %v1361 = vld [vmem:[%s1352 + $0x40] sm:$0xff]
      %v1362 = vld [vmem:[%s1352 + $0x48] sm:$0xff]
      %v1363 = vld [vmem:[%s1352 + $0x50] sm:$0xff]
      %v1364 = vld [vmem:[%s1352 + $0x58] sm:$0xff]
      %v1365 = vld [vmem:[%s1352 + $0x60] sm:$0xff]
      %v1366 = vld [vmem:[%s1352 + $0x68] sm:$0xff]
      %v1367 = vld [vmem:[%s1352 + $0x70] sm:$0xff]
      %v1368 = vld [vmem:[%s1352 + $0x78] sm:$0xff]
      %v1371 = vcombine.low %v1350, %v1351
      %v1373 = vunpack.c.l.s4 1966171168
      %v1374 = vunpack.c.0.s8 %v1373
      %v1375 = vlaneseq
      %v1376 = vshrl.u32 %v1375, 7
      %v1377 = vsub.s32 %v1374, %v1376
      %v1378 = vrot.slane %v1371, %v1377
      %v1380 = vunpack.c.l.s4 1966171168
      %v1381 = vunpack.c.0.s8 %v1380
      %v1382 = vlaneseq
      %v1383 = vshrl.u32 %v1382, 7
      %v1384 = vsub.s32 %v1381, %v1383
      %v1385 = vrot.slane %v1378, %v1384
      %v1403 = vunpack.c.l.b16 %v1353
      %v1404 = vunpack.c.h.b16 %v1353
      %v1405 = vunpack.c.l.b16 %v1354
      %v1406 = vunpack.c.h.b16 %v1354
      %v1407 = vunpack.c.l.b16 %v1355
      %v1408 = vunpack.c.h.b16 %v1355
      %v1409 = vunpack.c.l.b16 %v1356
      %v1410 = vunpack.c.h.b16 %v1356
      %v1411 = vunpack.c.l.b16 %v1357
      %v1412 = vunpack.c.h.b16 %v1357
      %v1413 = vunpack.c.l.b16 %v1358
      %v1414 = vunpack.c.h.b16 %v1358
      %v1415 = vunpack.c.l.b16 %v1359
      %v1416 = vunpack.c.h.b16 %v1359
      %v1417 = vunpack.c.l.b16 %v1360
      %v1418 = vunpack.c.h.b16 %v1360
      %v1419 = vunpack.c.l.b16 %v1361
      %v1420 = vunpack.c.h.b16 %v1361
      %v1421 = vunpack.c.l.b16 %v1362
      %v1422 = vunpack.c.h.b16 %v1362
      %v1423 = vunpack.c.l.b16 %v1363
      %v1424 = vunpack.c.h.b16 %v1363
      %v1425 = vunpack.c.l.b16 %v1364
      %v1426 = vunpack.c.h.b16 %v1364
      %v1427 = vunpack.c.l.b16 %v1365
      %v1428 = vunpack.c.h.b16 %v1365
      %v1429 = vunpack.c.l.b16 %v1366
      %v1430 = vunpack.c.h.b16 %v1366
      %v1431 = vunpack.c.l.b16 %v1367
      %v1432 = vunpack.c.h.b16 %v1367
      %v1433 = vunpack.c.l.b16 %v1368
      %v1434 = vunpack.c.h.b16 %v1368
      %v1435 = vpack.c.b16 %v1405, %v1403
      %v1436 = vpack.c.b16 %v1406, %v1404
      %v1437 = vpack.c.b16 %v1409, %v1407
      %v1438 = vpack.c.b16 %v1410, %v1408
      %v1439 = vpack.c.b16 %v1413, %v1411
      %v1440 = vpack.c.b16 %v1414, %v1412
      %v1441 = vpack.c.b16 %v1417, %v1415
      %v1442 = vpack.c.b16 %v1418, %v1416
      %v1443 = vpack.c.b16 %v1421, %v1419
      %v1444 = vpack.c.b16 %v1422, %v1420
      %v1445 = vpack.c.b16 %v1425, %v1423
      %v1446 = vpack.c.b16 %v1426, %v1424
      %v1447 = vpack.c.b16 %v1429, %v1427
      %v1448 = vpack.c.b16 %v1430, %v1428
      %v1449 = vpack.c.b16 %v1433, %v1431
      %v1450 = vpack.c.b16 %v1434, %v1432
      %1467 = vmatprep.subr.bf16.mxu0 %v1436
      %1468 = vmatpush1.bf16.msra.mxu0 %v1435
      %1469 = vmatprep.subr.bf16.mxu0 %v1438
      %1470 = vmatpush1.bf16.msra.mxu0 %v1437
      %1471 = vmatprep.subr.bf16.mxu0 %v1440
      %1472 = vmatpush1.bf16.msra.mxu0 %v1439
      %1473 = vmatprep.subr.bf16.mxu0 %v1442
      %1474 = vmatpush1.bf16.msra.mxu0 %v1441
      %1475 = vmatprep.subr.bf16.mxu0 %v1444
      %1476 = vmatpush1.bf16.msra.mxu0 %v1443
      %1477 = vmatprep.subr.bf16.mxu0 %v1446
      %1478 = vmatpush1.bf16.msra.mxu0 %v1445
      %1479 = vmatprep.subr.bf16.mxu0 %v1448
      %1480 = vmatpush1.bf16.msra.mxu0 %v1447
      %1481 = vmatprep.subr.bf16.mxu0 %v1450
      %1482 = vmatpush1.bf16.msra.mxu0 %v1449
      %1483 = vmatprep.subr.bf16.mxu0 0
      %1484 = vmatpush1.bf16.msra.mxu0 0
      %1485 = vmatprep.subr.bf16.mxu0 0
      %1486 = vmatpush1.bf16.msra.mxu0 0
      %1487 = vmatprep.subr.bf16.mxu0 0
      %1488 = vmatpush1.bf16.msra.mxu0 0
      %1489 = vmatprep.subr.bf16.mxu0 0
      %1490 = vmatpush1.bf16.msra.mxu0 0
      %1491 = vmatprep.subr.bf16.mxu0 0
      %1492 = vmatpush1.bf16.msra.mxu0 0
      %1493 = vmatprep.subr.bf16.mxu0 0
      %1494 = vmatpush1.bf16.msra.mxu0 0
      %1495 = vmatprep.subr.bf16.mxu0 0
      %1496 = vmatpush1.bf16.msra.mxu0 0
      %1497 = vmatprep.subr.bf16.mxu0 0
      %1498 = vmatpush1.bf16.msra.mxu0 0
      %1499 = vmatprep.mubr.bf16.mxu0 0
      %1500 = vmatmul.mubr.bf16.gmra.mrb[0].mxu0 %v1385
      %v1501 = vpop.f32.mrb[0].mxu0
      %v1502 = vadd.f32 0.0, %v1501
      %v1503 = vpop.f32.mrb[0].mxu0
      %v1504 = vadd.f32 0.0, %v1503
      %v1505 = vpop.f32.mrb[0].mxu0
      %v1506 = vpop.f32.mrb[0].mxu0
      %1507 = vdwg.mxu0
      %v1508 = vadd.f32 %v1347, %v1502
      %v1509 = vadd.f32 %v1348, %v1504
      %s1510 = scalar_lea.vmem %s295, 2
      %v1511 = vld [vmem:[%s1510] sm:$0x1]
      %v1512 = vld [vmem:[%s1510 + $0x2] sm:$0x1]
      %s1513 = scalar_lea.vmem %s4, 896
      %v1514 = vld [vmem:[%s1513] sm:$0xff]
      %v1515 = vld [vmem:[%s1513 + $0x8] sm:$0xff]
      %v1516 = vld [vmem:[%s1513 + $0x10] sm:$0xff]
      %v1517 = vld [vmem:[%s1513 + $0x18] sm:$0xff]
      %v1518 = vld [vmem:[%s1513 + $0x20] sm:$0xff]
      %v1519 = vld [vmem:[%s1513 + $0x28] sm:$0xff]
      %v1520 = vld [vmem:[%s1513 + $0x30] sm:$0xff]
      %v1521 = vld [vmem:[%s1513 + $0x38] sm:$0xff]
      %v1522 = vld [vmem:[%s1513 + $0x40] sm:$0xff]
      %v1523 = vld [vmem:[%s1513 + $0x48] sm:$0xff]
      %v1524 = vld [vmem:[%s1513 + $0x50] sm:$0xff]
      %v1525 = vld [vmem:[%s1513 + $0x58] sm:$0xff]
      %v1526 = vld [vmem:[%s1513 + $0x60] sm:$0xff]
      %v1527 = vld [vmem:[%s1513 + $0x68] sm:$0xff]
      %v1528 = vld [vmem:[%s1513 + $0x70] sm:$0xff]
      %v1529 = vld [vmem:[%s1513 + $0x78] sm:$0xff]
      %v1532 = vcombine.low %v1511, %v1512
      %v1534 = vunpack.c.l.s4 1966171168
      %v1535 = vunpack.c.0.s8 %v1534
      %v1536 = vlaneseq
      %v1537 = vshrl.u32 %v1536, 7
      %v1538 = vsub.s32 %v1535, %v1537
      %v1539 = vrot.slane %v1532, %v1538
      %v1541 = vunpack.c.l.s4 1966171168
      %v1542 = vunpack.c.0.s8 %v1541
      %v1543 = vlaneseq
      %v1544 = vshrl.u32 %v1543, 7
      %v1545 = vsub.s32 %v1542, %v1544
      %v1546 = vrot.slane %v1539, %v1545
      %v1564 = vunpack.c.l.b16 %v1514
      %v1565 = vunpack.c.h.b16 %v1514
      %v1566 = vunpack.c.l.b16 %v1515
      %v1567 = vunpack.c.h.b16 %v1515
      %v1568 = vunpack.c.l.b16 %v1516
      %v1569 = vunpack.c.h.b16 %v1516
      %v1570 = vunpack.c.l.b16 %v1517
      %v1571 = vunpack.c.h.b16 %v1517
      %v1572 = vunpack.c.l.b16 %v1518
      %v1573 = vunpack.c.h.b16 %v1518
      %v1574 = vunpack.c.l.b16 %v1519
      %v1575 = vunpack.c.h.b16 %v1519
      %v1576 = vunpack.c.l.b16 %v1520
      %v1577 = vunpack.c.h.b16 %v1520
      %v1578 = vunpack.c.l.b16 %v1521
      %v1579 = vunpack.c.h.b16 %v1521
      %v1580 = vunpack.c.l.b16 %v1522
      %v1581 = vunpack.c.h.b16 %v1522
      %v1582 = vunpack.c.l.b16 %v1523
      %v1583 = vunpack.c.h.b16 %v1523
      %v1584 = vunpack.c.l.b16 %v1524
      %v1585 = vunpack.c.h.b16 %v1524
      %v1586 = vunpack.c.l.b16 %v1525
      %v1587 = vunpack.c.h.b16 %v1525
      %v1588 = vunpack.c.l.b16 %v1526
      %v1589 = vunpack.c.h.b16 %v1526
      %v1590 = vunpack.c.l.b16 %v1527
      %v1591 = vunpack.c.h.b16 %v1527
      %v1592 = vunpack.c.l.b16 %v1528
      %v1593 = vunpack.c.h.b16 %v1528
      %v1594 = vunpack.c.l.b16 %v1529
      %v1595 = vunpack.c.h.b16 %v1529
      %v1596 = vpack.c.b16 %v1566, %v1564
      %v1597 = vpack.c.b16 %v1567, %v1565
      %v1598 = vpack.c.b16 %v1570, %v1568
      %v1599 = vpack.c.b16 %v1571, %v1569
      %v1600 = vpack.c.b16 %v1574, %v1572
      %v1601 = vpack.c.b16 %v1575, %v1573
      %v1602 = vpack.c.b16 %v1578, %v1576
      %v1603 = vpack.c.b16 %v1579, %v1577
      %v1604 = vpack.c.b16 %v1582, %v1580
      %v1605 = vpack.c.b16 %v1583, %v1581
      %v1606 = vpack.c.b16 %v1586, %v1584
      %v1607 = vpack.c.b16 %v1587, %v1585
      %v1608 = vpack.c.b16 %v1590, %v1588
      %v1609 = vpack.c.b16 %v1591, %v1589
      %v1610 = vpack.c.b16 %v1594, %v1592
      %v1611 = vpack.c.b16 %v1595, %v1593
      %1628 = vmatprep.subr.bf16.mxu0 %v1597
      %1629 = vmatpush1.bf16.msra.mxu0 %v1596
      %1630 = vmatprep.subr.bf16.mxu0 %v1599
      %1631 = vmatpush1.bf16.msra.mxu0 %v1598
      %1632 = vmatprep.subr.bf16.mxu0 %v1601
      %1633 = vmatpush1.bf16.msra.mxu0 %v1600
      %1634 = vmatprep.subr.bf16.mxu0 %v1603
      %1635 = vmatpush1.bf16.msra.mxu0 %v1602
      %1636 = vmatprep.subr.bf16.mxu0 %v1605
      %1637 = vmatpush1.bf16.msra.mxu0 %v1604
      %1638 = vmatprep.subr.bf16.mxu0 %v1607
      %1639 = vmatpush1.bf16.msra.mxu0 %v1606
      %1640 = vmatprep.subr.bf16.mxu0 %v1609
      %1641 = vmatpush1.bf16.msra.mxu0 %v1608
      %1642 = vmatprep.subr.bf16.mxu0 %v1611
      %1643 = vmatpush1.bf16.msra.mxu0 %v1610
      %1644 = vmatprep.subr.bf16.mxu0 0
      %1645 = vmatpush1.bf16.msra.mxu0 0
      %1646 = vmatprep.subr.bf16.mxu0 0
      %1647 = vmatpush1.bf16.msra.mxu0 0
      %1648 = vmatprep.subr.bf16.mxu0 0
      %1649 = vmatpush1.bf16.msra.mxu0 0
      %1650 = vmatprep.subr.bf16.mxu0 0
      %1651 = vmatpush1.bf16.msra.mxu0 0
      %1652 = vmatprep.subr.bf16.mxu0 0
      %1653 = vmatpush1.bf16.msra.mxu0 0
      %1654 = vmatprep.subr.bf16.mxu0 0
      %1655 = vmatpush1.bf16.msra.mxu0 0
      %1656 = vmatprep.subr.bf16.mxu0 0
      %1657 = vmatpush1.bf16.msra.mxu0 0
      %1658 = vmatprep.subr.bf16.mxu0 0
      %1659 = vmatpush1.bf16.msra.mxu0 0
      %1660 = vmatprep.mubr.bf16.mxu0 0
      %1661 = vmatmul.mubr.bf16.gmra.mrb[0].mxu0 %v1546
      %v1662 = vpop.f32.mrb[0].mxu0
      %v1663 = vadd.f32 0.0, %v1662
      %v1664 = vpop.f32.mrb[0].mxu0
      %v1665 = vadd.f32 0.0, %v1664
      %v1666 = vpop.f32.mrb[0].mxu0
      %v1667 = vpop.f32.mrb[0].mxu0
      %1668 = vdwg.mxu0
      %v1669 = vadd.f32 %v1508, %v1663
      %v1670 = vadd.f32 %v1509, %v1665
      %v1671 = vld [vmem:[%s1349] sm:$0x3]
      %v1672 = vld [vmem:[%s1349 + $0x2] sm:$0x3]
      %v1676 = vunpack.c.l.s4 1966171168
      %v1677 = vunpack.c.0.s8 %v1676
      %v1678 = vlaneseq
      %v1679 = vshrl.u32 %v1678, 7
      %v1680 = vsub.s32 %v1677, %v1679
      %v1681 = vrot.slane %v1671, %v1680
      %v1682 = vcombine.high %v1681, %v1681
      %v1684 = vunpack.c.l.s4 1966171168
      %v1685 = vunpack.c.0.s8 %v1684
      %v1686 = vlaneseq
      %v1687 = vshrl.u32 %v1686, 7
      %v1688 = vsub.s32 %v1685, %v1687
      %v1689 = vrot.slane %v1672, %v1688
      %v1690 = vcombine.high %v1689, %v1689
      %v1692 = vshrl.u32 %v1681, 16
      %v1694 = vrot.slane %v1692, 7
      %v1695 = vrot.slane %v1694, 1
      %v1697 = vshll.u32 %v1682, 16
      %v1699 = vsel %vm660, %v1695, %v1697
      %v1701 = vshrl.u32 %v1689, 16
      %v1703 = vrot.slane %v1701, 7
      %v1704 = vrot.slane %v1703, 1
      %v1706 = vshll.u32 %v1690, 16
      %v1708 = vsel %vm660, %v1704, %v1706
      %s1709 = scalar_lea.vmem %s4, 1024
      %v1710 = vld [vmem:[%s1709] sm:$0xff]
      %v1711 = vld [vmem:[%s1709 + $0x8] sm:$0xff]
      %v1712 = vld [vmem:[%s1709 + $0x10] sm:$0xff]
      %v1713 = vld [vmem:[%s1709 + $0x18] sm:$0xff]
      %v1714 = vld [vmem:[%s1709 + $0x20] sm:$0xff]
      %v1715 = vld [vmem:[%s1709 + $0x28] sm:$0xff]
      %v1716 = vld [vmem:[%s1709 + $0x30] sm:$0xff]
      %v1717 = vld [vmem:[%s1709 + $0x38] sm:$0xff]
      %v1718 = vld [vmem:[%s1709 + $0x40] sm:$0xff]
      %v1719 = vld [vmem:[%s1709 + $0x48] sm:$0xff]
      %v1720 = vld [vmem:[%s1709 + $0x50] sm:$0xff]
      %v1721 = vld [vmem:[%s1709 + $0x58] sm:$0xff]
      %v1722 = vld [vmem:[%s1709 + $0x60] sm:$0xff]
      %v1723 = vld [vmem:[%s1709 + $0x68] sm:$0xff]
      %v1724 = vld [vmem:[%s1709 + $0x70] sm:$0xff]
      %v1725 = vld [vmem:[%s1709 + $0x78] sm:$0xff]
      %v1726 = vcombine.low %v1699, %v1708
      %v1728 = vunpack.c.l.s4 1966171168
      %v1729 = vunpack.c.0.s8 %v1728
      %v1730 = vlaneseq
      %v1731 = vshrl.u32 %v1730, 7
      %v1732 = vsub.s32 %v1729, %v1731
      %v1733 = vrot.slane %v1726, %v1732
      %v1735 = vunpack.c.l.s4 1966171168
      %v1736 = vunpack.c.0.s8 %v1735
      %v1737 = vlaneseq
      %v1738 = vshrl.u32 %v1737, 7
      %v1739 = vsub.s32 %v1736, %v1738
      %v1740 = vrot.slane %v1733, %v1739
      %v1758 = vunpack.c.l.b16 %v1710
      %v1759 = vunpack.c.h.b16 %v1710
      %v1760 = vunpack.c.l.b16 %v1711
      %v1761 = vunpack.c.h.b16 %v1711
      %v1762 = vunpack.c.l.b16 %v1712
      %v1763 = vunpack.c.h.b16 %v1712
      %v1764 = vunpack.c.l.b16 %v1713
      %v1765 = vunpack.c.h.b16 %v1713
      %v1766 = vunpack.c.l.b16 %v1714
      %v1767 = vunpack.c.h.b16 %v1714
      %v1768 = vunpack.c.l.b16 %v1715
      %v1769 = vunpack.c.h.b16 %v1715
      %v1770 = vunpack.c.l.b16 %v1716
      %v1771 = vunpack.c.h.b16 %v1716
      %v1772 = vunpack.c.l.b16 %v1717
      %v1773 = vunpack.c.h.b16 %v1717
      %v1774 = vunpack.c.l.b16 %v1718
      %v1775 = vunpack.c.h.b16 %v1718
      %v1776 = vunpack.c.l.b16 %v1719
      %v1777 = vunpack.c.h.b16 %v1719
      %v1778 = vunpack.c.l.b16 %v1720
      %v1779 = vunpack.c.h.b16 %v1720
      %v1780 = vunpack.c.l.b16 %v1721
      %v1781 = vunpack.c.h.b16 %v1721
      %v1782 = vunpack.c.l.b16 %v1722
      %v1783 = vunpack.c.h.b16 %v1722
      %v1784 = vunpack.c.l.b16 %v1723
      %v1785 = vunpack.c.h.b16 %v1723
      %v1786 = vunpack.c.l.b16 %v1724
      %v1787 = vunpack.c.h.b16 %v1724
      %v1788 = vunpack.c.l.b16 %v1725
      %v1789 = vunpack.c.h.b16 %v1725
      %v1790 = vpack.c.b16 %v1760, %v1758
      %v1791 = vpack.c.b16 %v1761, %v1759
      %v1792 = vpack.c.b16 %v1764, %v1762
      %v1793 = vpack.c.b16 %v1765, %v1763
      %v1794 = vpack.c.b16 %v1768, %v1766
      %v1795 = vpack.c.b16 %v1769, %v1767
      %v1796 = vpack.c.b16 %v1772, %v1770
      %v1797 = vpack.c.b16 %v1773, %v1771
      %v1798 = vpack.c.b16 %v1776, %v1774
      %v1799 = vpack.c.b16 %v1777, %v1775
      %v1800 = vpack.c.b16 %v1780, %v1778
      %v1801 = vpack.c.b16 %v1781, %v1779
      %v1802 = vpack.c.b16 %v1784, %v1782
      %v1803 = vpack.c.b16 %v1785, %v1783
      %v1804 = vpack.c.b16 %v1788, %v1786
      %v1805 = vpack.c.b16 %v1789, %v1787
      %1822 = vmatprep.subr.bf16.mxu0 %v1791
      %1823 = vmatpush1.bf16.msra.mxu0 %v1790
      %1824 = vmatprep.subr.bf16.mxu0 %v1793
      %1825 = vmatpush1.bf16.msra.mxu0 %v1792
      %1826 = vmatprep.subr.bf16.mxu0 %v1795
      %1827 = vmatpush1.bf16.msra.mxu0 %v1794
      %1828 = vmatprep.subr.bf16.mxu0 %v1797
      %1829 = vmatpush1.bf16.msra.mxu0 %v1796
      %1830 = vmatprep.subr.bf16.mxu0 %v1799
      %1831 = vmatpush1.bf16.msra.mxu0 %v1798
      %1832 = vmatprep.subr.bf16.mxu0 %v1801
      %1833 = vmatpush1.bf16.msra.mxu0 %v1800
      %1834 = vmatprep.subr.bf16.mxu0 %v1803
      %1835 = vmatpush1.bf16.msra.mxu0 %v1802
      %1836 = vmatprep.subr.bf16.mxu0 %v1805
      %1837 = vmatpush1.bf16.msra.mxu0 %v1804
      %1838 = vmatprep.subr.bf16.mxu0 0
      %1839 = vmatpush1.bf16.msra.mxu0 0
      %1840 = vmatprep.subr.bf16.mxu0 0
      %1841 = vmatpush1.bf16.msra.mxu0 0
      %1842 = vmatprep.subr.bf16.mxu0 0
      %1843 = vmatpush1.bf16.msra.mxu0 0
      %1844 = vmatprep.subr.bf16.mxu0 0
      %1845 = vmatpush1.bf16.msra.mxu0 0
      %1846 = vmatprep.subr.bf16.mxu0 0
      %1847 = vmatpush1.bf16.msra.mxu0 0
      %1848 = vmatprep.subr.bf16.mxu0 0
      %1849 = vmatpush1.bf16.msra.mxu0 0
      %1850 = vmatprep.subr.bf16.mxu0 0
      %1851 = vmatpush1.bf16.msra.mxu0 0
      %1852 = vmatprep.subr.bf16.mxu0 0
      %1853 = vmatpush1.bf16.msra.mxu0 0
      %1854 = vmatprep.mubr.bf16.mxu0 0
      %1855 = vmatmul.mubr.bf16.gmra.mrb[0].mxu0 %v1740
      %v1856 = vpop.f32.mrb[0].mxu0
      %v1857 = vadd.f32 0.0, %v1856
      %v1858 = vpop.f32.mrb[0].mxu0
      %v1859 = vadd.f32 0.0, %v1858
      %v1860 = vpop.f32.mrb[0].mxu0
      %v1861 = vpop.f32.mrb[0].mxu0
      %1862 = vdwg.mxu0
      %v1863 = vadd.f32 %v1669, %v1857
      %v1864 = vadd.f32 %v1670, %v1859
      %v1865 = vld [vmem:[%s5] sm:$0x3]
      %v1867 = vlaneseq
      %v1868 = vshrl.u32 %v1867, 7
      %v1869 = vsub.s32 0, %v1868
      %v1870 = vrot.slane %v1865, %v1869
      %v1871 = vlaneseq
      %v1872 = vshrl.u32 %v1871, 7
      %v1873 = vsub.s32 1, %v1872
      %v1874 = vrot.slane %v1865, %v1873
      %v1877 = vadd.f32 %v1863, %v1870
      %v1878 = vadd.f32 %v1864, %v1874
      %v1879 = vmax.f32 %v1877, 0.0
      %v1880 = vmax.f32 %v1878, 0.0
      %v1883 = vcombine.low %v1879, %v1880
      %v1885 = vunpack.c.l.s4 1983009808
      %v1886 = vunpack.c.0.s8 %v1885
      %v1887 = vlaneseq
      %v1888 = vshrl.u32 %v1887, 7
      %v1889 = vsub.s32 %v1886, %v1888
      %v1890 = vrot.slane %v1883, %v1889
      %v1891 = vcombine.high %v1890, %v1890
      %v1893 = vunpack.c.l.s4 1983009808
      %v1894 = vunpack.c.0.s8 %v1893
      %v1895 = vlaneseq
      %v1896 = vshrl.u32 %v1895, 7
      %v1897 = vsub.s32 %v1894, %v1896
      %v1898 = vrot.slane %v1890, %v1897
      %v1899 = vcombine.high %v1898, %v1898
      %v1901 = vunpack.c.l.s4 1983009808
      %v1902 = vunpack.c.0.s8 %v1901
      %v1903 = vlaneseq
      %v1904 = vshrl.u32 %v1903, 7
      %v1905 = vsub.s32 %v1902, %v1904
      %v1906 = vrot.slane %v1891, %v1905
      %v1907 = vcombine.high %v1906, %v1906
      %v1912 = vpack.c.bf16 %v1898, %v1898
      %v1913 = vpack.c.bf16 %v1899, %v1899
      %v1914 = vpack.c.bf16 %v1906, %v1906
      %v1915 = vpack.c.bf16 %v1907, %v1907
      %v1920 = vcombine.low %v1912, %v1913
      %v1922 = vunpack.c.l.s4 1966171168
      %v1923 = vunpack.c.0.s8 %v1922
      %v1924 = vlaneseq
      %v1925 = vshrl.u32 %v1924, 7
      %v1926 = vsub.s32 %v1923, %v1925
      %v1927 = vrot.slane %v1920, %v1926
      %v1929 = vunpack.c.l.s4 1966171168
      %v1930 = vunpack.c.0.s8 %v1929
      %v1931 = vlaneseq
      %v1932 = vshrl.u32 %v1931, 7
      %v1933 = vsub.s32 %v1930, %v1932
      %v1934 = vrot.slane %v1927, %v1933
      %v1935 = vcombine.low %v1914, %v1915
      %v1937 = vunpack.c.l.s4 1966171168
      %v1938 = vunpack.c.0.s8 %v1937
      %v1939 = vlaneseq
      %v1940 = vshrl.u32 %v1939, 7
      %v1941 = vsub.s32 %v1938, %v1940
      %v1942 = vrot.slane %v1935, %v1941
      %v1944 = vunpack.c.l.s4 1966171168
      %v1945 = vunpack.c.0.s8 %v1944
      %v1946 = vlaneseq
      %v1947 = vshrl.u32 %v1946, 7
      %v1948 = vsub.s32 %v1945, %v1947
      %v1949 = vrot.slane %v1942, %v1948
      %1952 = vst [vmem:[%s309] sm:$0x3] %v1934
      %1953 = vst [vmem:[%s309 + $0x2] sm:$0x3] %v1949
      %p1954 = scmp.lt.s32.totalorder %s17, 1
      %s1955 = scalar_select %p1954, %s17, 1
      %s1956 = smul.addr %s1955, 4
      %s1957 = scalar_lea.vmem %s6, %s1956
      // Predicated region
      $region45: #{autoencoder_forward.8} parent=43 // pred_check
        %p1958 = pneg %p181
      $region46: #{autoencoder_forward.8} parent=43 // pred_check_branch
        %1960 = sbr.rel (%p1958) target = $region48
      $region47: #{autoencoder_forward.8} parent=43 // pred_region
        _
      $region48: #{autoencoder_forward.8} parent=43 // pred_fallthru
        _
    $region44: #{autoencoder_forward.8} parent=5 // pred_fallthru
      _
    %p1961 = scmp.le.s32.totalorder 2, %s12
    // Predicated region
    $region49: #{autoencoder_forward.8} parent=5 // pred_check
      %p1962 = pneg %p1961
    $region50: #{autoencoder_forward.8} parent=5 // pred_check_branch
      %1964 = sbr.rel (%p1962) target = $region52
    $region51: #{autoencoder_forward.8} parent=5 // pred_region
      %s1965 = ssub.s32 %s12, 2
      // Predicated region
      $region53: #{autoencoder_forward.8} parent=51 // pred_check
        %p1966 = pneg %p187
      $region54: #{autoencoder_forward.8} parent=51 // pred_check_branch
        %1968 = sbr.rel (%p1966) target = $region56
      $region55: #{autoencoder_forward.8} parent=51 // pred_region
        %p1969 = scmp.lt.s32.totalorder %s18, 1
        %s1970 = scalar_select %p1969, %s18, 1
        %s1971 = smul.addr %s1970, 4
        %s1972 = scalar_lea.vmem %s6, %s1971
      $region56: #{autoencoder_forward.8} parent=51 // pred_fallthru
        _
    $region52: #{autoencoder_forward.8} parent=5 // pred_fallthru
      _
  $region6: #{autoencoder_forward.8} parent=0 // loop_footer
    %s16 = sadd.s32 1, %s12
  $region7: #{autoencoder_forward.8} parent=0 // loop_footer_branch
    %11 = sbr.rel target = $region3
  $region8: #{autoencoder_forward.8} parent=0 // loop_exit
    _

// kernel: autoencoder_forward.10
$region0: #{autoencoder_forward.10}
  #allocation0 [shape = 'u32[]', space=smem, size = 0x4, offset = 0x4, fixed_abs, tag = 'smem constant byte address 0x4 - core index']
  #allocation1 [shape = 'u32[144,128]{1,0:T(1,128)}', space=vmem, size = 0x12000, scoped, tag = 'internal scratch']
  %s0 = inlined_call_operand.vmem [shape: bf16[2,5,5,128], index: 0, kind: input, shape index: {}]
  %s1 = inlined_call_operand.vmem [shape: bf16[128,256], index: 1, kind: input, shape index: {}]
  %s2 = inlined_call_operand.vmem [shape: bf16[128,128], index: 2, kind: input, shape index: {}]
  %s3 = inlined_call_operand.vmem [shape: bf16[128,128], index: 3, kind: input, shape index: {}]
  %s4 = inlined_call_operand.vmem [shape: bf16[128,64], index: 4, kind: input, shape index: {}]
  %s5 = inlined_call_operand.vmem [shape: f32[1,64], index: 5, kind: input, shape index: {}]
  %s6 = inlined_call_operand.vmem [shape: bf16[2,4,2,4,128], index: 6, kind: output, shape index: {}]
  %s7 = sld [smem:[#allocation0]]
  $region57: #{autoencoder_forward.10} parent=0
    _
  %s9 = ssub.s32 1, %s7
  %s10 = scalar_select 0, %s9, %s7
  loop: start=0, step=1, limit=4
  $region2: #{autoencoder_forward.10} parent=0 // loop_pre_header
    _
  $region3: #{autoencoder_forward.10} parent=0 // loop_header
    %s12 = sphi 0, %s16
    %p13 = scmp.ge.s32.totalorder %s12, 4
    %s22 = sphi 0, %s24
    %s25 = sphi 0, %s22
    %s26 = sphi 0, %s25
    %s42 = sphi 0, %s26
    %s46 = sphi 0, %s46
    %s48 = sphi 0, %s46
    %s49 = sphi 0, %s48
    %s63 = sphi 0, %s49
    %s67 = sphi 0, %s67
    %s69 = sphi 0, %s67
    %s70 = sphi 0, %s69
    %s84 = sphi 0, %s70
    %s88 = sphi 0, %s88
    %s90 = sphi 0, %s88
    %s91 = sphi 0, %s90
    %s105 = sphi 0, %s91
    %s109 = sphi 0, %s109
    %s111 = sphi 0, %s109
    %s112 = sphi 0, %s111
    %s126 = sphi 0, %s112
    %s130 = sphi 0, %s130
    %s132 = sphi 0, %s130
    %s133 = sphi 0, %s132
    %s147 = sphi 0, %s133
    %s153 = sphi 0, %s155
    %s156 = sphi 0, %s153
    %s157 = sphi 0, %s156
    %s173 = sphi 0, %s157
  $region4: #{autoencoder_forward.10} parent=0 // loop_header_branch
    %15 = sbr.rel (%p13) target = $region8
  $region5: #{autoencoder_forward.10} parent=0 // loop_body
    %s17 = ssub.s32 %s12, 1
    %s18 = ssub.s32 %s12, 2
    %s19 = sadd.s32 %s12, 1
    %s20 = ssub.s32 %s12, %s19
    %p21 = scmp.eq.s32.totalorder %s20, 0
    %s23 = sadd.s32 %s22, 1
    %s24 = scalar_select %p21, %s22, %s23
    %p27 = pneg %p21
    %p28 = scmp.eq.s32.totalorder %s12, 1
    %p29 = por %p27, %p28
    %p30 = scmp.ne.s32.totalorder %s22, %s25
    %p31 = scmp.eq.s32.totalorder %s12, 0
    %p32 = por %p30, %p31
    %p33 = scmp.ne.s32.totalorder %s22, %s25
    %p34 = scmp.eq.s32.totalorder %s17, 1
    %p35 = por %p33, %p34
    %p36 = scmp.ne.s32.totalorder %s25, %s26
    %p37 = scmp.eq.s32.totalorder %s17, 0
    %p38 = por %p36, %p37
    %p39 = scmp.ne.s32.totalorder %s25, %s26
    %p40 = scmp.eq.s32.totalorder %s18, 1
    %p41 = por %p39, %p40
    %p43 = scmp.ne.s32.totalorder %s26, %s42
    %p44 = scmp.eq.s32.totalorder %s18, 0
    %p45 = por %p43, %p44
    %s47 = sadd.s32 %s46, 1
    %p50 = scmp.eq.s32.totalorder %s12, 1
    %p51 = scmp.ne.s32.totalorder %s46, %s48
    %p52 = scmp.eq.s32.totalorder %s12, 0
    %p53 = por %p51, %p52
    %p54 = scmp.ne.s32.totalorder %s46, %s48
    %p55 = scmp.eq.s32.totalorder %s17, 1
    %p56 = por %p54, %p55
    %p57 = scmp.ne.s32.totalorder %s48, %s49
    %p58 = scmp.eq.s32.totalorder %s17, 0
    %p59 = por %p57, %p58
    %p60 = scmp.ne.s32.totalorder %s48, %s49
    %p61 = scmp.eq.s32.totalorder %s18, 1
    %p62 = por %p60, %p61
    %p64 = scmp.ne.s32.totalorder %s49, %s63
    %p65 = scmp.eq.s32.totalorder %s18, 0
    %p66 = por %p64, %p65
    %s68 = sadd.s32 %s67, 1
    %p71 = scmp.eq.s32.totalorder %s12, 1
    %p72 = scmp.ne.s32.totalorder %s67, %s69
    %p73 = scmp.eq.s32.totalorder %s12, 0
    %p74 = por %p72, %p73
    %p75 = scmp.ne.s32.totalorder %s67, %s69
    %p76 = scmp.eq.s32.totalorder %s17, 1
    %p77 = por %p75, %p76
    %p78 = scmp.ne.s32.totalorder %s69, %s70
    %p79 = scmp.eq.s32.totalorder %s17, 0
    %p80 = por %p78, %p79
    %p81 = scmp.ne.s32.totalorder %s69, %s70
    %p82 = scmp.eq.s32.totalorder %s18, 1
    %p83 = por %p81, %p82
    %p85 = scmp.ne.s32.totalorder %s70, %s84
    %p86 = scmp.eq.s32.totalorder %s18, 0
    %p87 = por %p85, %p86
    %s89 = sadd.s32 %s88, 1
    %p92 = scmp.eq.s32.totalorder %s12, 1
    %p93 = scmp.ne.s32.totalorder %s88, %s90
    %p94 = scmp.eq.s32.totalorder %s12, 0
    %p95 = por %p93, %p94
    %p96 = scmp.ne.s32.totalorder %s88, %s90
    %p97 = scmp.eq.s32.totalorder %s17, 1
    %p98 = por %p96, %p97
    %p99 = scmp.ne.s32.totalorder %s90, %s91
    %p100 = scmp.eq.s32.totalorder %s17, 0
    %p101 = por %p99, %p100
    %p102 = scmp.ne.s32.totalorder %s90, %s91
    %p103 = scmp.eq.s32.totalorder %s18, 1
    %p104 = por %p102, %p103
    %p106 = scmp.ne.s32.totalorder %s91, %s105
    %p107 = scmp.eq.s32.totalorder %s18, 0
    %p108 = por %p106, %p107
    %s110 = sadd.s32 %s109, 1
    %p113 = scmp.eq.s32.totalorder %s12, 1
    %p114 = scmp.ne.s32.totalorder %s109, %s111
    %p115 = scmp.eq.s32.totalorder %s12, 0
    %p116 = por %p114, %p115
    %p117 = scmp.ne.s32.totalorder %s109, %s111
    %p118 = scmp.eq.s32.totalorder %s17, 1
    %p119 = por %p117, %p118
    %p120 = scmp.ne.s32.totalorder %s111, %s112
    %p121 = scmp.eq.s32.totalorder %s17, 0
    %p122 = por %p120, %p121
    %p123 = scmp.ne.s32.totalorder %s111, %s112
    %p124 = scmp.eq.s32.totalorder %s18, 1
    %p125 = por %p123, %p124
    %p127 = scmp.ne.s32.totalorder %s112, %s126
    %p128 = scmp.eq.s32.totalorder %s18, 0
    %p129 = por %p127, %p128
    %s131 = sadd.s32 %s130, 1
    %p134 = scmp.eq.s32.totalorder %s12, 1
    %p135 = scmp.ne.s32.totalorder %s130, %s132
    %p136 = scmp.eq.s32.totalorder %s12, 0
    %p137 = por %p135, %p136
    %p138 = scmp.ne.s32.totalorder %s130, %s132
    %p139 = scmp.eq.s32.totalorder %s17, 1
    %p140 = por %p138, %p139
    %p141 = scmp.ne.s32.totalorder %s132, %s133
    %p142 = scmp.eq.s32.totalorder %s17, 0
    %p143 = por %p141, %p142
    %p144 = scmp.ne.s32.totalorder %s132, %s133
    %p145 = scmp.eq.s32.totalorder %s18, 1
    %p146 = por %p144, %p145
    %p148 = scmp.ne.s32.totalorder %s133, %s147
    %p149 = scmp.eq.s32.totalorder %s18, 0
    %p150 = por %p148, %p149
    %s151 = ssub.s32 %s12, %s19
    %p152 = scmp.eq.s32.totalorder %s151, 0
    %s154 = sadd.s32 %s153, 1
    %s155 = scalar_select %p152, %s153, %s154
    %p158 = pneg %p152
    %p159 = scmp.eq.s32.totalorder %s12, 1
    %p160 = por %p158, %p159
    %p161 = scmp.ne.s32.totalorder %s153, %s156
    %p162 = scmp.eq.s32.totalorder %s12, 0
    %p163 = por %p161, %p162
    %p164 = scmp.ne.s32.totalorder %s153, %s156
    %p165 = scmp.eq.s32.totalorder %s17, 1
    %p166 = por %p164, %p165
    %p167 = scmp.ne.s32.totalorder %s156, %s157
    %p168 = scmp.eq.s32.totalorder %s17, 0
    %p169 = por %p167, %p168
    %p170 = scmp.ne.s32.totalorder %s156, %s157
    %p171 = scmp.eq.s32.totalorder %s18, 1
    %p172 = por %p170, %p171
    %p174 = scmp.ne.s32.totalorder %s157, %s173
    %p175 = scmp.eq.s32.totalorder %s18, 0
    %p176 = por %p174, %p175
    %p177 = scmp.le.s32.totalorder 1, %s12
    %p178 = scmp.lt.s32.totalorder %s12, 3
    %p179 = pnand %p177, %p178
    %p180 = pneg %p179
    // Predicated region
    $region9: #{autoencoder_forward.10} parent=5 // pred_check
      _
    $region10: #{autoencoder_forward.10} parent=5 // pred_check_branch
      %182 = sbr.rel (%p179) target = $region12
    $region11: #{autoencoder_forward.10} parent=5 // pred_region
      %s183 = ssub.s32 %s12, 1
      // Predicated region
      $region13: #{autoencoder_forward.10} parent=11 // pred_check
        %p184 = pneg %p59
      $region14: #{autoencoder_forward.10} parent=11 // pred_check_branch
        %186 = sbr.rel (%p184) target = $region16
      $region15: #{autoencoder_forward.10} parent=11 // pred_region
        _
      $region16: #{autoencoder_forward.10} parent=11 // pred_fallthru
        _
      // Predicated region
      $region17: #{autoencoder_forward.10} parent=11 // pred_check
        %p187 = pneg %p80
      $region18: #{autoencoder_forward.10} parent=11 // pred_check_branch
        %189 = sbr.rel (%p187) target = $region20
      $region19: #{autoencoder_forward.10} parent=11 // pred_region
        _
      $region20: #{autoencoder_forward.10} parent=11 // pred_fallthru
        _
      // Predicated region
      $region21: #{autoencoder_forward.10} parent=11 // pred_check
        %p190 = pneg %p101
      $region22: #{autoencoder_forward.10} parent=11 // pred_check_branch
        %192 = sbr.rel (%p190) target = $region24
      $region23: #{autoencoder_forward.10} parent=11 // pred_region
        _
      $region24: #{autoencoder_forward.10} parent=11 // pred_fallthru
        _
      // Predicated region
      $region25: #{autoencoder_forward.10} parent=11 // pred_check
        %p193 = pneg %p122
      $region26: #{autoencoder_forward.10} parent=11 // pred_check_branch
        %195 = sbr.rel (%p193) target = $region28
      $region27: #{autoencoder_forward.10} parent=11 // pred_region
        _
      $region28: #{autoencoder_forward.10} parent=11 // pred_fallthru
        _
      // Predicated region
      $region29: #{autoencoder_forward.10} parent=11 // pred_check
        %p196 = pneg %p143
      $region30: #{autoencoder_forward.10} parent=11 // pred_check_branch
        %198 = sbr.rel (%p196) target = $region32
      $region31: #{autoencoder_forward.10} parent=11 // pred_region
        _
      $region32: #{autoencoder_forward.10} parent=11 // pred_fallthru
        _
    $region12: #{autoencoder_forward.10} parent=5 // pred_fallthru
      _
    %p199 = scmp.lt.s32.totalorder %s12, 2
    // Predicated region
    $region33: #{autoencoder_forward.10} parent=5 // pred_check
      %p200 = pneg %p199
    $region34: #{autoencoder_forward.10} parent=5 // pred_check_branch
      %202 = sbr.rel (%p200) target = $region36
    $region35: #{autoencoder_forward.10} parent=5 // pred_region
      // Predicated region
      $region37: #{autoencoder_forward.10} parent=35 // pred_check
        %p203 = pneg %p32
      $region38: #{autoencoder_forward.10} parent=35 // pred_check_branch
        %205 = sbr.rel (%p203) target = $region40
      $region39: #{autoencoder_forward.10} parent=35 // pred_region
        %p206 = scmp.lt.s32.totalorder %s12, 1
        %s207 = scalar_select %p206, %s12, 1
        %s208 = smul.addr %s207, 5
        %s209 = smul.addr %s208, 4
        %s210 = scalar_lea.vmem %s0, %s209
      $region40: #{autoencoder_forward.10} parent=35 // pred_fallthru
        _
    $region36: #{autoencoder_forward.10} parent=5 // pred_fallthru
      _
    %p211 = scmp.le.s32.totalorder 1, %s12
    %p212 = scmp.lt.s32.totalorder %s12, 3
    %p213 = pnand %p211, %p212
    %p214 = pneg %p213
    // Predicated region
    $region41: #{autoencoder_forward.10} parent=5 // pred_check
      _
    $region42: #{autoencoder_forward.10} parent=5 // pred_check_branch
      %216 = sbr.rel (%p213) target = $region44
    $region43: #{autoencoder_forward.10} parent=5 // pred_region
      %s217 = ssub.s32 %s12, 1
      %p218 = scmp.lt.s32.totalorder %s17, 1
      %s219 = scalar_select %p218, %s17, 1
      %s220 = smul.addr %s219, 5
      %s221 = smul.addr %s220, 4
      %s222 = scalar_lea.vmem %s0, %s221
      %p223 = pneg %p38
      %p224 = pneg %p35
      %p225 = pneg %p59
      %p226 = pneg %p56
      %p227 = pneg %p80
      %p228 = pneg %p77
      %p229 = pneg %p101
      %p230 = pneg %p98
      %p231 = pneg %p122
      %p232 = pneg %p119
      %p233 = pneg %p143
      %p234 = pneg %p140
      %p235 = pneg %p169
      %p236 = pneg %p166
      %p237 = scmp.lt.s32.totalorder %s17, 1
      %s238 = scalar_select %p237, %s17, 1
      %s239 = smul.addr %s238, 8
      %s240 = smul.addr %s239, 2
      %s241 = scalar_lea.vmem %s6, %s240
      %p242 = scmp.lt.s32.totalorder %s17, 1
      %s243 = scalar_select %p242, %s17, 1
      %s244 = smul.addr %s243, 5
      %s245 = smul.addr %s244, 4
      %s246 = scalar_lea.vmem %s0, %s245
      %p247 = scmp.lt.s32.totalorder %s17, 1
      %s248 = scalar_select %p247, %s17, 1
      %s249 = smul.addr %s248, 8
      %s250 = smul.addr %s249, 2
      %s251 = scalar_lea.vmem %s6, %s250
      %v253 = vld [vmem:[%s246] sm:$0x3]
      %v254 = vld [vmem:[%s246 + $0x4] sm:$0x3]
      %v255 = vld [vmem:[%s246 + $0x8] sm:$0x3]
      %v256 = vld [vmem:[%s246 + $0xc] sm:$0x3]
      %v257 = vld [vmem:[%s246] sm:$0x7]
      %v258 = vld [vmem:[%s246 + $0x4] sm:$0x7]
      %v259 = vld [vmem:[%s246 + $0x8] sm:$0x7]
      %v260 = vld [vmem:[%s246 + $0xc] sm:$0x7]
      %v266 = vunpack.c.l.s4 1983009808
      %v267 = vunpack.c.0.s8 %v266
      %v268 = vlaneseq
      %v269 = vshrl.u32 %v268, 7
      %v270 = vsub.s32 %v267, %v269
      %v271 = vrot.slane %v257, %v270
      %v272 = vcombine.high %v271, %v271
      %v274 = vunpack.c.l.s4 1983009808
      %v275 = vunpack.c.0.s8 %v274
      %v276 = vlaneseq
      %v277 = vshrl.u32 %v276, 7
      %v278 = vsub.s32 %v275, %v277
      %v279 = vrot.slane %v258, %v278
      %v280 = vcombine.high %v279, %v279
      %v282 = vunpack.c.l.s4 1983009808
      %v283 = vunpack.c.0.s8 %v282
      %v284 = vlaneseq
      %v285 = vshrl.u32 %v284, 7
      %v286 = vsub.s32 %v283, %v285
      %v287 = vrot.slane %v259, %v286
      %v288 = vcombine.high %v287, %v287
      %v290 = vunpack.c.l.s4 1983009808
      %v291 = vunpack.c.0.s8 %v290
      %v292 = vlaneseq
      %v293 = vshrl.u32 %v292, 7
      %v294 = vsub.s32 %v291, %v293
      %v295 = vrot.slane %v260, %v294
      %v296 = vcombine.high %v295, %v295
      %vm297 = vsmask.f32 1280
      %vm298 = vsmask.f32 3336
      %vm299 = vmor %vm297, %vm298
      %vm300 = vsmask.f32 5392
      %vm301 = vmor %vm299, %vm300
      %vm302 = vsmask.f32 7448
      %vm303 = vmor %vm301, %vm302
      %v305 = vshrl.u32 %v271, 16
      %v307 = vrot.slane %v305, 6
      %v308 = vshll.u32 %v271, 16
      %v310 = vrot.slane %v308, 7
      %v311 = vor.u32 %v307, %v310
      %v312 = vrot.slane %v311, 2
      %v314 = vshll.u32 %v272, 16
      %v316 = vrot.slane %v314, 7
      %v317 = vsel %vm303, %v312, %v316
      %v319 = vshrl.u32 %v279, 16
      %v321 = vrot.slane %v319, 6
      %v322 = vshll.u32 %v279, 16
      %v324 = vrot.slane %v322, 7
      %v325 = vor.u32 %v321, %v324
      %v326 = vrot.slane %v325, 2
      %v328 = vshll.u32 %v280, 16
      %v330 = vrot.slane %v328, 7
      %v331 = vsel %vm303, %v326, %v330
      %v333 = vshrl.u32 %v287, 16
      %v335 = vrot.slane %v333, 6
      %v336 = vshll.u32 %v287, 16
      %v338 = vrot.slane %v336, 7
      %v339 = vor.u32 %v335, %v338
      %v340 = vrot.slane %v339, 2
      %v342 = vshll.u32 %v288, 16
      %v344 = vrot.slane %v342, 7
      %v345 = vsel %vm303, %v340, %v344
      %v347 = vshrl.u32 %v295, 16
      %v349 = vrot.slane %v347, 6
      %v350 = vshll.u32 %v295, 16
      %v352 = vrot.slane %v350, 7
      %v353 = vor.u32 %v349, %v352
      %v354 = vrot.slane %v353, 2
      %v356 = vshll.u32 %v296, 16
      %v358 = vrot.slane %v356, 7
      %v359 = vsel %vm303, %v354, %v358
      %s360 = scalar_lea.vmem %s246, 4
      %v361 = vld [vmem:[%s360] sm:$0x3]
      %v362 = vld [vmem:[%s360 + $0x4] sm:$0x3]
      %v363 = vld [vmem:[%s360 + $0x8] sm:$0x3]
      %v364 = vld [vmem:[%s360 + $0xc] sm:$0x3]
      %v365 = vld [vmem:[%s360] sm:$0x7]
      %v366 = vld [vmem:[%s360 + $0x4] sm:$0x7]
      %v367 = vld [vmem:[%s360 + $0x8] sm:$0x7]
      %v368 = vld [vmem:[%s360 + $0xc] sm:$0x7]
      %v374 = vunpack.c.l.s4 1983009808
      %v375 = vunpack.c.0.s8 %v374
      %v376 = vlaneseq
      %v377 = vshrl.u32 %v376, 7
      %v378 = vsub.s32 %v375, %v377
      %v379 = vrot.slane %v365, %v378
      %v380 = vcombine.high %v379, %v379
      %v382 = vunpack.c.l.s4 1983009808
      %v383 = vunpack.c.0.s8 %v382
      %v384 = vlaneseq
      %v385 = vshrl.u32 %v384, 7
      %v386 = vsub.s32 %v383, %v385
      %v387 = vrot.slane %v366, %v386
      %v388 = vcombine.high %v387, %v387
      %v390 = vunpack.c.l.s4 1983009808
      %v391 = vunpack.c.0.s8 %v390
      %v392 = vlaneseq
      %v393 = vshrl.u32 %v392, 7
      %v394 = vsub.s32 %v391, %v393
      %v395 = vrot.slane %v367, %v394
      %v396 = vcombine.high %v395, %v395
      %v398 = vunpack.c.l.s4 1983009808
      %v399 = vunpack.c.0.s8 %v398
      %v400 = vlaneseq
      %v401 = vshrl.u32 %v400, 7
      %v402 = vsub.s32 %v399, %v401
      %v403 = vrot.slane %v368, %v402
      %v404 = vcombine.high %v403, %v403
      %v406 = vshrl.u32 %v379, 16
      %v408 = vrot.slane %v406, 6
      %v409 = vshll.u32 %v379, 16
      %v411 = vrot.slane %v409, 7
      %v412 = vor.u32 %v408, %v411
      %v413 = vrot.slane %v412, 2
      %v415 = vshll.u32 %v380, 16
      %v417 = vrot.slane %v415, 7
      %v418 = vsel %vm303, %v413, %v417
      %v420 = vshrl.u32 %v387, 16
      %v422 = vrot.slane %v420, 6
      %v423 = vshll.u32 %v387, 16
      %v425 = vrot.slane %v423, 7
      %v426 = vor.u32 %v422, %v425
      %v427 = vrot.slane %v426, 2
      %v429 = vshll.u32 %v388, 16
      %v431 = vrot.slane %v429, 7
      %v432 = vsel %vm303, %v427, %v431
      %v434 = vshrl.u32 %v395, 16
      %v436 = vrot.slane %v434, 6
      %v437 = vshll.u32 %v395, 16
      %v439 = vrot.slane %v437, 7
      %v440 = vor.u32 %v436, %v439
      %v441 = vrot.slane %v440, 2
      %v443 = vshll.u32 %v396, 16
      %v445 = vrot.slane %v443, 7
      %v446 = vsel %vm303, %v441, %v445
      %v448 = vshrl.u32 %v403, 16
      %v450 = vrot.slane %v448, 6
      %v451 = vshll.u32 %v403, 16
      %v453 = vrot.slane %v451, 7
      %v454 = vor.u32 %v450, %v453
      %v455 = vrot.slane %v454, 2
      %v457 = vshll.u32 %v404, 16
      %v459 = vrot.slane %v457, 7
      %v460 = vsel %vm303, %v455, %v459
      %v461 = vld [vmem:[%s1] sm:$0xff]
      %v462 = vld [vmem:[%s1 + $0x8] sm:$0xff]
      %v463 = vld [vmem:[%s1 + $0x10] sm:$0xff]
      %v464 = vld [vmem:[%s1 + $0x18] sm:$0xff]
      %v465 = vld [vmem:[%s1 + $0x20] sm:$0xff]
      %v466 = vld [vmem:[%s1 + $0x28] sm:$0xff]
      %v467 = vld [vmem:[%s1 + $0x30] sm:$0xff]
      %v468 = vld [vmem:[%s1 + $0x38] sm:$0xff]
      %v469 = vld [vmem:[%s1 + $0x40] sm:$0xff]
      %v470 = vld [vmem:[%s1 + $0x48] sm:$0xff]
      %v471 = vld [vmem:[%s1 + $0x50] sm:$0xff]
      %v472 = vld [vmem:[%s1 + $0x58] sm:$0xff]
      %v473 = vld [vmem:[%s1 + $0x60] sm:$0xff]
      %v474 = vld [vmem:[%s1 + $0x68] sm:$0xff]
      %v475 = vld [vmem:[%s1 + $0x70] sm:$0xff]
      %v476 = vld [vmem:[%s1 + $0x78] sm:$0xff]
      %v481 = vcombine.low %v253, %v254
      %v482 = vcombine.low %v255, %v256
      %v484 = vunpack.c.l.s4 1983009808
      %v485 = vunpack.c.0.s8 %v484
      %v486 = vlaneseq
      %v487 = vshrl.u32 %v486, 7
      %v488 = vsub.s32 %v485, %v487
      %v489 = vrot.slane %v481, %v488
      %v491 = vunpack.c.l.s4 1983009808
      %v492 = vunpack.c.0.s8 %v491
      %v493 = vlaneseq
      %v494 = vshrl.u32 %v493, 7
      %v495 = vsub.s32 %v492, %v494
      %v496 = vrot.slane %v482, %v495
      %v497 = vcombine.low %v489, %v496
      %v515 = vunpack.c.l.b16 %v461
      %v516 = vunpack.c.h.b16 %v461
      %v517 = vunpack.c.l.b16 %v462
      %v518 = vunpack.c.h.b16 %v462
      %v519 = vunpack.c.l.b16 %v463
      %v520 = vunpack.c.h.b16 %v463
      %v521 = vunpack.c.l.b16 %v464
      %v522 = vunpack.c.h.b16 %v464
      %v523 = vunpack.c.l.b16 %v465
      %v524 = vunpack.c.h.b16 %v465
      %v525 = vunpack.c.l.b16 %v466
      %v526 = vunpack.c.h.b16 %v466
      %v527 = vunpack.c.l.b16 %v467
      %v528 = vunpack.c.h.b16 %v467
      %v529 = vunpack.c.l.b16 %v468
      %v530 = vunpack.c.h.b16 %v468
      %v531 = vunpack.c.l.b16 %v469
      %v532 = vunpack.c.h.b16 %v469
      %v533 = vunpack.c.l.b16 %v470
      %v534 = vunpack.c.h.b16 %v470
      %v535 = vunpack.c.l.b16 %v471
      %v536 = vunpack.c.h.b16 %v471
      %v537 = vunpack.c.l.b16 %v472
      %v538 = vunpack.c.h.b16 %v472
      %v539 = vunpack.c.l.b16 %v473
      %v540 = vunpack.c.h.b16 %v473
      %v541 = vunpack.c.l.b16 %v474
      %v542 = vunpack.c.h.b16 %v474
      %v543 = vunpack.c.l.b16 %v475
      %v544 = vunpack.c.h.b16 %v475
      %v545 = vunpack.c.l.b16 %v476
      %v546 = vunpack.c.h.b16 %v476
      %v547 = vpack.c.b16 %v517, %v515
      %v548 = vpack.c.b16 %v518, %v516
      %v549 = vpack.c.b16 %v521, %v519
      %v550 = vpack.c.b16 %v522, %v520
      %v551 = vpack.c.b16 %v525, %v523
      %v552 = vpack.c.b16 %v526, %v524
      %v553 = vpack.c.b16 %v529, %v527
      %v554 = vpack.c.b16 %v530, %v528
      %v555 = vpack.c.b16 %v533, %v531
      %v556 = vpack.c.b16 %v534, %v532
      %v557 = vpack.c.b16 %v537, %v535
      %v558 = vpack.c.b16 %v538, %v536
      %v559 = vpack.c.b16 %v541, %v539
      %v560 = vpack.c.b16 %v542, %v540
      %v561 = vpack.c.b16 %v545, %v543
      %v562 = vpack.c.b16 %v546, %v544
      %579 = vmatprep.subr.bf16.mxu0 %v548
      %580 = vmatpush1.bf16.msra.mxu0 %v547
      %581 = vmatprep.subr.bf16.mxu0 %v550
      %582 = vmatpush1.bf16.msra.mxu0 %v549
      %583 = vmatprep.subr.bf16.mxu0 %v552
      %584 = vmatpush1.bf16.msra.mxu0 %v551
      %585 = vmatprep.subr.bf16.mxu0 %v554
      %586 = vmatpush1.bf16.msra.mxu0 %v553
      %587 = vmatprep.subr.bf16.mxu0 %v556
      %588 = vmatpush1.bf16.msra.mxu0 %v555
      %589 = vmatprep.subr.bf16.mxu0 %v558
      %590 = vmatpush1.bf16.msra.mxu0 %v557
      %591 = vmatprep.subr.bf16.mxu0 %v560
      %592 = vmatpush1.bf16.msra.mxu0 %v559
      %593 = vmatprep.subr.bf16.mxu0 %v562
      %594 = vmatpush1.bf16.msra.mxu0 %v561
      %595 = vmatprep.subr.bf16.mxu0 0
      %596 = vmatpush1.bf16.msra.mxu0 0
      %597 = vmatprep.subr.bf16.mxu0 0
      %598 = vmatpush1.bf16.msra.mxu0 0
      %599 = vmatprep.subr.bf16.mxu0 0
      %600 = vmatpush1.bf16.msra.mxu0 0
      %601 = vmatprep.subr.bf16.mxu0 0
      %602 = vmatpush1.bf16.msra.mxu0 0
      %603 = vmatprep.subr.bf16.mxu0 0
      %604 = vmatpush1.bf16.msra.mxu0 0
      %605 = vmatprep.subr.bf16.mxu0 0
      %606 = vmatpush1.bf16.msra.mxu0 0
      %607 = vmatprep.subr.bf16.mxu0 0
      %608 = vmatpush1.bf16.msra.mxu0 0
      %609 = vmatprep.subr.bf16.mxu0 0
      %610 = vmatpush1.bf16.msra.mxu0 0
      %611 = vmatprep.mubr.bf16.mxu0 0
      %612 = vmatmul.mubr.bf16.gmra.mrb[0].mxu0 %v497
      %v613 = vpop.f32.mrb[0].mxu0
      %v614 = vadd.f32 0.0, %v613
      %v615 = vpop.f32.mrb[0].mxu0
      %v616 = vadd.f32 0.0, %v615
      %v617 = vpop.f32.mrb[0].mxu0
      %v618 = vadd.f32 0.0, %v617
      %v619 = vpop.f32.mrb[0].mxu0
      %v620 = vadd.f32 0.0, %v619
      %621 = vdwg.mxu0
      %v622 = vld [vmem:[%s2] sm:$0xf]
      %v623 = vld [vmem:[%s2 + $0x4] sm:$0xf]
      %v624 = vld [vmem:[%s2 + $0x8] sm:$0xf]
      %v625 = vld [vmem:[%s2 + $0xc] sm:$0xf]
      %v626 = vld [vmem:[%s2 + $0x10] sm:$0xf]
      %v627 = vld [vmem:[%s2 + $0x14] sm:$0xf]
      %v628 = vld [vmem:[%s2 + $0x18] sm:$0xf]
      %v629 = vld [vmem:[%s2 + $0x1c] sm:$0xf]
      %v630 = vld [vmem:[%s2 + $0x20] sm:$0xf]
      %v631 = vld [vmem:[%s2 + $0x24] sm:$0xf]
      %v632 = vld [vmem:[%s2 + $0x28] sm:$0xf]
      %v633 = vld [vmem:[%s2 + $0x2c] sm:$0xf]
      %v634 = vld [vmem:[%s2 + $0x30] sm:$0xf]
      %v635 = vld [vmem:[%s2 + $0x34] sm:$0xf]
      %v636 = vld [vmem:[%s2 + $0x38] sm:$0xf]
      %v637 = vld [vmem:[%s2 + $0x3c] sm:$0xf]
      %v638 = vcombine.low %v317, %v331
      %v639 = vcombine.low %v345, %v359
      %v641 = vunpack.c.l.s4 1983009808
      %v642 = vunpack.c.0.s8 %v641
      %v643 = vlaneseq
      %v644 = vshrl.u32 %v643, 7
      %v645 = vsub.s32 %v642, %v644
      %v646 = vrot.slane %v638, %v645
      %v648 = vunpack.c.l.s4 1983009808
      %v649 = vunpack.c.0.s8 %v648
      %v650 = vlaneseq
      %v651 = vshrl.u32 %v650, 7
      %v652 = vsub.s32 %v649, %v651
      %v653 = vrot.slane %v639, %v652
      %v654 = vcombine.low %v646, %v653
      %v672 = vunpack.c.l.b16 %v622
      %v673 = vunpack.c.l.b16 %v623
      %v674 = vunpack.c.l.b16 %v624
      %v675 = vunpack.c.l.b16 %v625
      %v676 = vunpack.c.l.b16 %v626
      %v677 = vunpack.c.l.b16 %v627
      %v678 = vunpack.c.l.b16 %v628
      %v679 = vunpack.c.l.b16 %v629
      %v680 = vunpack.c.l.b16 %v630
      %v681 = vunpack.c.l.b16 %v631
      %v682 = vunpack.c.l.b16 %v632
      %v683 = vunpack.c.l.b16 %v633
      %v684 = vunpack.c.l.b16 %v634
      %v685 = vunpack.c.l.b16 %v635
      %v686 = vunpack.c.l.b16 %v636
      %v687 = vunpack.c.l.b16 %v637
      %v688 = vpack.c.b16 %v673, %v672
      %v689 = vpack.c.b16 %v675, %v674
      %v690 = vpack.c.b16 %v677, %v676
      %v691 = vpack.c.b16 %v679, %v678
      %v692 = vpack.c.b16 %v681, %v680
      %v693 = vpack.c.b16 %v683, %v682
      %v694 = vpack.c.b16 %v685, %v684
      %v695 = vpack.c.b16 %v687, %v686
      %704 = vmatprep.subr.bf16.mxu0 0
      %705 = vmatpush1.bf16.msra.mxu0 %v688
      %706 = vmatprep.subr.bf16.mxu0 0
      %707 = vmatpush1.bf16.msra.mxu0 %v689
      %708 = vmatprep.subr.bf16.mxu0 0
      %709 = vmatpush1.bf16.msra.mxu0 %v690
      %710 = vmatprep.subr.bf16.mxu0 0
      %711 = vmatpush1.bf16.msra.mxu0 %v691
      %712 = vmatprep.subr.bf16.mxu0 0
      %713 = vmatpush1.bf16.msra.mxu0 %v692
      %714 = vmatprep.subr.bf16.mxu0 0
      %715 = vmatpush1.bf16.msra.mxu0 %v693
      %716 = vmatprep.subr.bf16.mxu0 0
      %717 = vmatpush1.bf16.msra.mxu0 %v694
      %718 = vmatprep.subr.bf16.mxu0 0
      %719 = vmatpush1.bf16.msra.mxu0 %v695
      %720 = vmatprep.subr.bf16.mxu0 0
      %721 = vmatpush1.bf16.msra.mxu0 0
      %722 = vmatprep.subr.bf16.mxu0 0
      %723 = vmatpush1.bf16.msra.mxu0 0
      %724 = vmatprep.subr.bf16.mxu0 0
      %725 = vmatpush1.bf16.msra.mxu0 0
      %726 = vmatprep.subr.bf16.mxu0 0
      %727 = vmatpush1.bf16.msra.mxu0 0
      %728 = vmatprep.subr.bf16.mxu0 0
      %729 = vmatpush1.bf16.msra.mxu0 0
      %730 = vmatprep.subr.bf16.mxu0 0
      %731 = vmatpush1.bf16.msra.mxu0 0
      %732 = vmatprep.subr.bf16.mxu0 0
      %733 = vmatpush1.bf16.msra.mxu0 0
      %734 = vmatprep.subr.bf16.mxu0 0
      %735 = vmatpush1.bf16.msra.mxu0 0
      %736 = vmatprep.mubr.bf16.mxu0 0
      %737 = vmatmul.mubr.bf16.gmra.mrb[0].mxu0 %v654
      %v738 = vpop.f32.mrb[0].mxu0
      %v739 = vadd.f32 0.0, %v738
      %v740 = vpop.f32.mrb[0].mxu0
      %v741 = vpop.f32.mrb[0].mxu0
      %v742 = vadd.f32 0.0, %v741
      %v743 = vpop.f32.mrb[0].mxu0
      %744 = vdwg.mxu0
      %v745 = vld [vmem:[%s3] sm:$0xf]
      %v746 = vld [vmem:[%s3 + $0x4] sm:$0xf]
      %v747 = vld [vmem:[%s3 + $0x8] sm:$0xf]
      %v748 = vld [vmem:[%s3 + $0xc] sm:$0xf]
      %v749 = vld [vmem:[%s3 + $0x10] sm:$0xf]
      %v750 = vld [vmem:[%s3 + $0x14] sm:$0xf]
      %v751 = vld [vmem:[%s3 + $0x18] sm:$0xf]
      %v752 = vld [vmem:[%s3 + $0x1c] sm:$0xf]
      %v753 = vld [vmem:[%s3 + $0x20] sm:$0xf]
      %v754 = vld [vmem:[%s3 + $0x24] sm:$0xf]
      %v755 = vld [vmem:[%s3 + $0x28] sm:$0xf]
      %v756 = vld [vmem:[%s3 + $0x2c] sm:$0xf]
      %v757 = vld [vmem:[%s3 + $0x30] sm:$0xf]
      %v758 = vld [vmem:[%s3 + $0x34] sm:$0xf]
      %v759 = vld [vmem:[%s3 + $0x38] sm:$0xf]
      %v760 = vld [vmem:[%s3 + $0x3c] sm:$0xf]
      %v765 = vcombine.low %v361, %v362
      %v766 = vcombine.low %v363, %v364
      %v768 = vunpack.c.l.s4 1983009808
      %v769 = vunpack.c.0.s8 %v768
      %v770 = vlaneseq
      %v771 = vshrl.u32 %v770, 7
      %v772 = vsub.s32 %v769, %v771
      %v773 = vrot.slane %v765, %v772
      %v775 = vunpack.c.l.s4 1983009808
      %v776 = vunpack.c.0.s8 %v775
      %v777 = vlaneseq
      %v778 = vshrl.u32 %v777, 7
      %v779 = vsub.s32 %v776, %v778
      %v780 = vrot.slane %v766, %v779
      %v781 = vcombine.low %v773, %v780
      %v799 = vunpack.c.l.b16 %v745
      %v800 = vunpack.c.l.b16 %v746
      %v801 = vunpack.c.l.b16 %v747
      %v802 = vunpack.c.l.b16 %v748
      %v803 = vunpack.c.l.b16 %v749
      %v804 = vunpack.c.l.b16 %v750
      %v805 = vunpack.c.l.b16 %v751
      %v806 = vunpack.c.l.b16 %v752
      %v807 = vunpack.c.l.b16 %v753
      %v808 = vunpack.c.l.b16 %v754
      %v809 = vunpack.c.l.b16 %v755
      %v810 = vunpack.c.l.b16 %v756
      %v811 = vunpack.c.l.b16 %v757
      %v812 = vunpack.c.l.b16 %v758
      %v813 = vunpack.c.l.b16 %v759
      %v814 = vunpack.c.l.b16 %v760
      %v815 = vpack.c.b16 %v800, %v799
      %v816 = vpack.c.b16 %v802, %v801
      %v817 = vpack.c.b16 %v804, %v803
      %v818 = vpack.c.b16 %v806, %v805
      %v819 = vpack.c.b16 %v808, %v807
      %v820 = vpack.c.b16 %v810, %v809
      %v821 = vpack.c.b16 %v812, %v811
      %v822 = vpack.c.b16 %v814, %v813
      %831 = vmatprep.subr.bf16.mxu0 0
      %832 = vmatpush1.bf16.msra.mxu0 %v815
      %833 = vmatprep.subr.bf16.mxu0 0
      %834 = vmatpush1.bf16.msra.mxu0 %v816
      %835 = vmatprep.subr.bf16.mxu0 0
      %836 = vmatpush1.bf16.msra.mxu0 %v817
      %837 = vmatprep.subr.bf16.mxu0 0
      %838 = vmatpush1.bf16.msra.mxu0 %v818
      %839 = vmatprep.subr.bf16.mxu0 0
      %840 = vmatpush1.bf16.msra.mxu0 %v819
      %841 = vmatprep.subr.bf16.mxu0 0
      %842 = vmatpush1.bf16.msra.mxu0 %v820
      %843 = vmatprep.subr.bf16.mxu0 0
      %844 = vmatpush1.bf16.msra.mxu0 %v821
      %845 = vmatprep.subr.bf16.mxu0 0
      %846 = vmatpush1.bf16.msra.mxu0 %v822
      %847 = vmatprep.subr.bf16.mxu0 0
      %848 = vmatpush1.bf16.msra.mxu0 0
      %849 = vmatprep.subr.bf16.mxu0 0
      %850 = vmatpush1.bf16.msra.mxu0 0
      %851 = vmatprep.subr.bf16.mxu0 0
      %852 = vmatpush1.bf16.msra.mxu0 0
      %853 = vmatprep.subr.bf16.mxu0 0
      %854 = vmatpush1.bf16.msra.mxu0 0
      %855 = vmatprep.subr.bf16.mxu0 0
      %856 = vmatpush1.bf16.msra.mxu0 0
      %857 = vmatprep.subr.bf16.mxu0 0
      %858 = vmatpush1.bf16.msra.mxu0 0
      %859 = vmatprep.subr.bf16.mxu0 0
      %860 = vmatpush1.bf16.msra.mxu0 0
      %861 = vmatprep.subr.bf16.mxu0 0
      %862 = vmatpush1.bf16.msra.mxu0 0
      %863 = vmatprep.mubr.bf16.mxu0 0
      %864 = vmatmul.mubr.bf16.gmra.mrb[0].mxu0 %v781
      %v865 = vpop.f32.mrb[0].mxu0
      %v866 = vadd.f32 0.0, %v865
      %v867 = vpop.f32.mrb[0].mxu0
      %v868 = vpop.f32.mrb[0].mxu0
      %v869 = vadd.f32 0.0, %v868
      %v870 = vpop.f32.mrb[0].mxu0
      %871 = vdwg.mxu0
      %v872 = vld [vmem:[%s4] sm:$0xf]
      %v873 = vld [vmem:[%s4 + $0x4] sm:$0xf]
      %v874 = vld [vmem:[%s4 + $0x8] sm:$0xf]
      %v875 = vld [vmem:[%s4 + $0xc] sm:$0xf]
      %v876 = vld [vmem:[%s4 + $0x10] sm:$0xf]
      %v877 = vld [vmem:[%s4 + $0x14] sm:$0xf]
      %v878 = vld [vmem:[%s4 + $0x18] sm:$0xf]
      %v879 = vld [vmem:[%s4 + $0x1c] sm:$0xf]
      %v880 = vld [vmem:[%s4 + $0x20] sm:$0xf]
      %v881 = vld [vmem:[%s4 + $0x24] sm:$0xf]
      %v882 = vld [vmem:[%s4 + $0x28] sm:$0xf]
      %v883 = vld [vmem:[%s4 + $0x2c] sm:$0xf]
      %v884 = vld [vmem:[%s4 + $0x30] sm:$0xf]
      %v885 = vld [vmem:[%s4 + $0x34] sm:$0xf]
      %v886 = vld [vmem:[%s4 + $0x38] sm:$0xf]
      %v887 = vld [vmem:[%s4 + $0x3c] sm:$0xf]
      %v888 = vcombine.low %v418, %v432
      %v889 = vcombine.low %v446, %v460
      %v891 = vunpack.c.l.s4 1983009808
      %v892 = vunpack.c.0.s8 %v891
      %v893 = vlaneseq
      %v894 = vshrl.u32 %v893, 7
      %v895 = vsub.s32 %v892, %v894
      %v896 = vrot.slane %v888, %v895
      %v898 = vunpack.c.l.s4 1983009808
      %v899 = vunpack.c.0.s8 %v898
      %v900 = vlaneseq
      %v901 = vshrl.u32 %v900, 7
      %v902 = vsub.s32 %v899, %v901
      %v903 = vrot.slane %v889, %v902
      %v904 = vcombine.low %v896, %v903
      %v922 = vunpack.c.l.b16 %v872
      %v923 = vunpack.c.l.b16 %v873
      %v924 = vunpack.c.l.b16 %v874
      %v925 = vunpack.c.l.b16 %v875
      %v926 = vunpack.c.l.b16 %v876
      %v927 = vunpack.c.l.b16 %v877
      %v928 = vunpack.c.l.b16 %v878
      %v929 = vunpack.c.l.b16 %v879
      %v930 = vunpack.c.l.b16 %v880
      %v931 = vunpack.c.l.b16 %v881
      %v932 = vunpack.c.l.b16 %v882
      %v933 = vunpack.c.l.b16 %v883
      %v934 = vunpack.c.l.b16 %v884
      %v935 = vunpack.c.l.b16 %v885
      %v936 = vunpack.c.l.b16 %v886
      %v937 = vunpack.c.l.b16 %v887
      %v938 = vpack.c.b16 %v923, %v922
      %v939 = vpack.c.b16 %v925, %v924
      %v940 = vpack.c.b16 %v927, %v926
      %v941 = vpack.c.b16 %v929, %v928
      %v942 = vpack.c.b16 %v931, %v930
      %v943 = vpack.c.b16 %v933, %v932
      %v944 = vpack.c.b16 %v935, %v934
      %v945 = vpack.c.b16 %v937, %v936
      %954 = vmatprep.subr.bf16.mxu0 0
      %955 = vmatpush1.bf16.msra.mxu0 %v938
      %956 = vmatprep.subr.bf16.mxu0 0
      %957 = vmatpush1.bf16.msra.mxu0 %v939
      %958 = vmatprep.subr.bf16.mxu0 0
      %959 = vmatpush1.bf16.msra.mxu0 %v940
      %960 = vmatprep.subr.bf16.mxu0 0
      %961 = vmatpush1.bf16.msra.mxu0 %v941
      %962 = vmatprep.subr.bf16.mxu0 0
      %963 = vmatpush1.bf16.msra.mxu0 %v942
      %964 = vmatprep.subr.bf16.mxu0 0
      %965 = vmatpush1.bf16.msra.mxu0 %v943
      %966 = vmatprep.subr.bf16.mxu0 0
      %967 = vmatpush1.bf16.msra.mxu0 %v944
      %968 = vmatprep.subr.bf16.mxu0 0
      %969 = vmatpush1.bf16.msra.mxu0 %v945
      %970 = vmatprep.subr.bf16.mxu0 0
      %971 = vmatpush1.bf16.msra.mxu0 0
      %972 = vmatprep.subr.bf16.mxu0 0
      %973 = vmatpush1.bf16.msra.mxu0 0
      %974 = vmatprep.subr.bf16.mxu0 0
      %975 = vmatpush1.bf16.msra.mxu0 0
      %976 = vmatprep.subr.bf16.mxu0 0
      %977 = vmatpush1.bf16.msra.mxu0 0
      %978 = vmatprep.subr.bf16.mxu0 0
      %979 = vmatpush1.bf16.msra.mxu0 0
      %980 = vmatprep.subr.bf16.mxu0 0
      %981 = vmatpush1.bf16.msra.mxu0 0
      %982 = vmatprep.subr.bf16.mxu0 0
      %983 = vmatpush1.bf16.msra.mxu0 0
      %984 = vmatprep.subr.bf16.mxu0 0
      %985 = vmatpush1.bf16.msra.mxu0 0
      %986 = vmatprep.mubr.bf16.mxu0 0
      %987 = vmatmul.mubr.bf16.gmra.mrb[0].mxu0 %v904
      %v988 = vpop.f32.mrb[0].mxu0
      %v989 = vadd.f32 0.0, %v988
      %v990 = vpop.f32.mrb[0].mxu0
      %v991 = vpop.f32.mrb[0].mxu0
      %v992 = vadd.f32 0.0, %v991
      %v993 = vpop.f32.mrb[0].mxu0
      %994 = vdwg.mxu0
      %v995 = vld [vmem:[%s5] sm:$0x1]
      %v997 = vlaneseq
      %v998 = vshrl.u32 %v997, 7
      %v999 = vsub.s32 0, %v998
      %v1000 = vrot.slane %v995, %v999
      %v1002 = vadd.f32 %v614, %v1000
      %v1003 = vadd.f32 %v618, %v1000
      %1006 = vrot.lane.b32.xlu0 %v739, 64
      %v1007 = vpop.permute.xlu0 %1006
      %1008 = vrot.lane.b32.xlu0 %v742, 64
      %v1009 = vpop.permute.xlu0 %1008
      %v1012 = vadd.f32 %v614, %v1007
      %v1013 = vadd.f32 %v618, %v1009
      %1014 = vrot.lane.b32.xlu0 %v1000, 64
      %v1015 = vpop.permute.xlu0 %1014
      %v1017 = vadd.f32 %v1012, %v1015
      %v1018 = vadd.f32 %v1013, %v1015
      %v1019 = vadd.f32 %v616, %v866
      %v1020 = vadd.f32 %v620, %v869
      %v1021 = vadd.f32 %v1019, %v1000
      %v1022 = vadd.f32 %v1020, %v1000
      %v1023 = vadd.f32 %v616, %v739
      %v1024 = vadd.f32 %v620, %v742
      %v1025 = vadd.f32 %v1023, %v866
      %v1026 = vadd.f32 %v1024, %v869
      %1029 = vrot.lane.b32.xlu0 %v989, 64
      %v1030 = vpop.permute.xlu0 %1029
      %1031 = vrot.lane.b32.xlu0 %v992, 64
      %v1032 = vpop.permute.xlu0 %1031
      %v1035 = vadd.f32 %v1025, %v1030
      %v1036 = vadd.f32 %v1026, %v1032
      %v1037 = vadd.f32 %v1035, %v1015
      %v1038 = vadd.f32 %v1036, %v1015
      %v1039 = vmax.f32 %v1002, 0.0
      %v1040 = vmax.f32 %v1003, 0.0
      %v1041 = vmax.f32 %v1017, 0.0
      %v1042 = vmax.f32 %v1018, 0.0
      %v1043 = vmax.f32 %v1021, 0.0
      %v1044 = vmax.f32 %v1022, 0.0
      %v1045 = vmax.f32 %v1037, 0.0
      %v1046 = vmax.f32 %v1038, 0.0
      %vm1047 = vcmask 523264
      %v1048 = vsel %vm1047, %v1039, %v1041
      %v1049 = vsel %vm1047, %v1040, %v1042
      %v1052 = vcombine.high %v1048, %v1048
      %v1053 = vcombine.high %v1049, %v1049
      %v1056 = vsel %vm1047, %v1043, %v1045
      %v1057 = vsel %vm1047, %v1044, %v1046
      %v1060 = vcombine.high %v1056, %v1056
      %v1061 = vcombine.high %v1057, %v1057
      %v1064 = vpack.c.bf16 %v1048, %v1048
      %v1065 = vpack.c.bf16 %v1052, %v1052
      %v1066 = vpack.c.bf16 %v1049, %v1049
      %v1067 = vpack.c.bf16 %v1053, %v1053
      %1068 = vst [vmem:[%s251] sm:$0x3] %v1064
      %1069 = vst [vmem:[%s251 + $0x4] sm:$0x3] %v1065
      %1070 = vst [vmem:[%s251 + $0x8] sm:$0x3] %v1066
      %1071 = vst [vmem:[%s251 + $0xc] sm:$0x3] %v1067
      %v1072 = vpack.c.bf16 %v1056, %v1056
      %v1073 = vpack.c.bf16 %v1060, %v1060
      %v1074 = vpack.c.bf16 %v1057, %v1057
      %v1075 = vpack.c.bf16 %v1061, %v1061
      %s1076 = scalar_lea.vmem %s251, 2
      %1077 = vst [vmem:[%s1076] sm:$0x3] %v1072
      %1078 = vst [vmem:[%s1076 + $0x4] sm:$0x3] %v1073
      %1079 = vst [vmem:[%s1076 + $0x8] sm:$0x3] %v1074
      %1080 = vst [vmem:[%s1076 + $0xc] sm:$0x3] %v1075
      %p1081 = scmp.lt.s32.totalorder %s17, 1
      %s1082 = scalar_select %p1081, %s17, 1
      %s1083 = smul.addr %s1082, 8
      %s1084 = smul.addr %s1083, 2
      %s1085 = scalar_lea.vmem %s6, %s1084
      // Predicated region
      $region45: #{autoencoder_forward.10} parent=43 // pred_check
        %p1086 = pneg %p166
      $region46: #{autoencoder_forward.10} parent=43 // pred_check_branch
        %1088 = sbr.rel (%p1086) target = $region48
      $region47: #{autoencoder_forward.10} parent=43 // pred_region
        _
      $region48: #{autoencoder_forward.10} parent=43 // pred_fallthru
        _
    $region44: #{autoencoder_forward.10} parent=5 // pred_fallthru
      _
    %p1089 = scmp.le.s32.totalorder 2, %s12
    // Predicated region
    $region49: #{autoencoder_forward.10} parent=5 // pred_check
      %p1090 = pneg %p1089
    $region50: #{autoencoder_forward.10} parent=5 // pred_check_branch
      %1092 = sbr.rel (%p1090) target = $region52
    $region51: #{autoencoder_forward.10} parent=5 // pred_region
      %s1093 = ssub.s32 %s12, 2
      // Predicated region
      $region53: #{autoencoder_forward.10} parent=51 // pred_check
        %p1094 = pneg %p172
      $region54: #{autoencoder_forward.10} parent=51 // pred_check_branch
        %1096 = sbr.rel (%p1094) target = $region56
      $region55: #{autoencoder_forward.10} parent=51 // pred_region
        %p1097 = scmp.lt.s32.totalorder %s18, 1
        %s1098 = scalar_select %p1097, %s18, 1
        %s1099 = smul.addr %s1098, 8
        %s1100 = smul.addr %s1099, 2
        %s1101 = scalar_lea.vmem %s6, %s1100
      $region56: #{autoencoder_forward.10} parent=51 // pred_fallthru
        _
    $region52: #{autoencoder_forward.10} parent=5 // pred_fallthru
      _
  $region6: #{autoencoder_forward.10} parent=0 // loop_footer
    %s16 = sadd.s32 1, %s12
  $region7: #{autoencoder_forward.10} parent=0 // loop_footer_branch
    %11 = sbr.rel target = $region3
  $region8: #{autoencoder_forward.10} parent=0 // loop_exit
    _

// kernel: autoencoder_forward.9
$region0: #{autoencoder_forward.9}
  #allocation0 [shape = 'u32[]', space=smem, size = 0x4, offset = 0x4, fixed_abs, tag = 'smem constant byte address 0x4 - core index']
  #allocation1 [shape = 'u32[144,128]{1,0:T(1,128)}', space=vmem, size = 0x12000, scoped, tag = 'internal scratch']
  %s0 = inlined_call_operand.vmem [shape: bf16[2,3,3,256], index: 0, kind: input, shape index: {}]
  %s1 = inlined_call_operand.vmem [shape: bf16[256,512], index: 1, kind: input, shape index: {}]
  %s2 = inlined_call_operand.vmem [shape: bf16[256,256], index: 2, kind: input, shape index: {}]
  %s3 = inlined_call_operand.vmem [shape: bf16[256,256], index: 3, kind: input, shape index: {}]
  %s4 = inlined_call_operand.vmem [shape: bf16[256,128], index: 4, kind: input, shape index: {}]
  %s5 = inlined_call_operand.vmem [shape: f32[1,128], index: 5, kind: input, shape index: {}]
  %s6 = inlined_call_operand.vmem [shape: bf16[2,2,2,2,256], index: 6, kind: output, shape index: {}]
  %s7 = sld [smem:[#allocation0]]
  $region57: #{autoencoder_forward.9} parent=0
    _
  %s9 = ssub.s32 1, %s7
  %s10 = scalar_select 0, %s9, %s7
  loop: start=0, step=1, limit=4
  $region2: #{autoencoder_forward.9} parent=0 // loop_pre_header
    _
  $region3: #{autoencoder_forward.9} parent=0 // loop_header
    %s12 = sphi 0, %s16
    %p13 = scmp.ge.s32.totalorder %s12, 4
    %s22 = sphi 0, %s24
    %s25 = sphi 0, %s22
    %s26 = sphi 0, %s25
    %s42 = sphi 0, %s26
    %s46 = sphi 0, %s46
    %s48 = sphi 0, %s46
    %s49 = sphi 0, %s48
    %s63 = sphi 0, %s49
    %s67 = sphi 0, %s67
    %s69 = sphi 0, %s67
    %s70 = sphi 0, %s69
    %s84 = sphi 0, %s70
    %s88 = sphi 0, %s88
    %s90 = sphi 0, %s88
    %s91 = sphi 0, %s90
    %s105 = sphi 0, %s91
    %s109 = sphi 0, %s109
    %s111 = sphi 0, %s109
    %s112 = sphi 0, %s111
    %s126 = sphi 0, %s112
    %s130 = sphi 0, %s130
    %s132 = sphi 0, %s130
    %s133 = sphi 0, %s132
    %s147 = sphi 0, %s133
    %s153 = sphi 0, %s155
    %s156 = sphi 0, %s153
    %s157 = sphi 0, %s156
    %s173 = sphi 0, %s157
  $region4: #{autoencoder_forward.9} parent=0 // loop_header_branch
    %15 = sbr.rel (%p13) target = $region8
  $region5: #{autoencoder_forward.9} parent=0 // loop_body
    %s17 = ssub.s32 %s12, 1
    %s18 = ssub.s32 %s12, 2
    %s19 = sadd.s32 %s12, 1
    %s20 = ssub.s32 %s12, %s19
    %p21 = scmp.eq.s32.totalorder %s20, 0
    %s23 = sadd.s32 %s22, 1
    %s24 = scalar_select %p21, %s22, %s23
    %p27 = pneg %p21
    %p28 = scmp.eq.s32.totalorder %s12, 1
    %p29 = por %p27, %p28
    %p30 = scmp.ne.s32.totalorder %s22, %s25
    %p31 = scmp.eq.s32.totalorder %s12, 0
    %p32 = por %p30, %p31
    %p33 = scmp.ne.s32.totalorder %s22, %s25
    %p34 = scmp.eq.s32.totalorder %s17, 1
    %p35 = por %p33, %p34
    %p36 = scmp.ne.s32.totalorder %s25, %s26
    %p37 = scmp.eq.s32.totalorder %s17, 0
    %p38 = por %p36, %p37
    %p39 = scmp.ne.s32.totalorder %s25, %s26
    %p40 = scmp.eq.s32.totalorder %s18, 1
    %p41 = por %p39, %p40
    %p43 = scmp.ne.s32.totalorder %s26, %s42
    %p44 = scmp.eq.s32.totalorder %s18, 0
    %p45 = por %p43, %p44
    %s47 = sadd.s32 %s46, 1
    %p50 = scmp.eq.s32.totalorder %s12, 1
    %p51 = scmp.ne.s32.totalorder %s46, %s48
    %p52 = scmp.eq.s32.totalorder %s12, 0
    %p53 = por %p51, %p52
    %p54 = scmp.ne.s32.totalorder %s46, %s48
    %p55 = scmp.eq.s32.totalorder %s17, 1
    %p56 = por %p54, %p55
    %p57 = scmp.ne.s32.totalorder %s48, %s49
    %p58 = scmp.eq.s32.totalorder %s17, 0
    %p59 = por %p57, %p58
    %p60 = scmp.ne.s32.totalorder %s48, %s49
    %p61 = scmp.eq.s32.totalorder %s18, 1
    %p62 = por %p60, %p61
    %p64 = scmp.ne.s32.totalorder %s49, %s63
    %p65 = scmp.eq.s32.totalorder %s18, 0
    %p66 = por %p64, %p65
    %s68 = sadd.s32 %s67, 1
    %p71 = scmp.eq.s32.totalorder %s12, 1
    %p72 = scmp.ne.s32.totalorder %s67, %s69
    %p73 = scmp.eq.s32.totalorder %s12, 0
    %p74 = por %p72, %p73
    %p75 = scmp.ne.s32.totalorder %s67, %s69
    %p76 = scmp.eq.s32.totalorder %s17, 1
    %p77 = por %p75, %p76
    %p78 = scmp.ne.s32.totalorder %s69, %s70
    %p79 = scmp.eq.s32.totalorder %s17, 0
    %p80 = por %p78, %p79
    %p81 = scmp.ne.s32.totalorder %s69, %s70
    %p82 = scmp.eq.s32.totalorder %s18, 1
    %p83 = por %p81, %p82
    %p85 = scmp.ne.s32.totalorder %s70, %s84
    %p86 = scmp.eq.s32.totalorder %s18, 0
    %p87 = por %p85, %p86
    %s89 = sadd.s32 %s88, 1
    %p92 = scmp.eq.s32.totalorder %s12, 1
    %p93 = scmp.ne.s32.totalorder %s88, %s90
    %p94 = scmp.eq.s32.totalorder %s12, 0
    %p95 = por %p93, %p94
    %p96 = scmp.ne.s32.totalorder %s88, %s90
    %p97 = scmp.eq.s32.totalorder %s17, 1
    %p98 = por %p96, %p97
    %p99 = scmp.ne.s32.totalorder %s90, %s91
    %p100 = scmp.eq.s32.totalorder %s17, 0
    %p101 = por %p99, %p100
    %p102 = scmp.ne.s32.totalorder %s90, %s91
    %p103 = scmp.eq.s32.totalorder %s18, 1
    %p104 = por %p102, %p103
    %p106 = scmp.ne.s32.totalorder %s91, %s105
    %p107 = scmp.eq.s32.totalorder %s18, 0
    %p108 = por %p106, %p107
    %s110 = sadd.s32 %s109, 1
    %p113 = scmp.eq.s32.totalorder %s12, 1
    %p114 = scmp.ne.s32.totalorder %s109, %s111
    %p115 = scmp.eq.s32.totalorder %s12, 0
    %p116 = por %p114, %p115
    %p117 = scmp.ne.s32.totalorder %s109, %s111
    %p118 = scmp.eq.s32.totalorder %s17, 1
    %p119 = por %p117, %p118
    %p120 = scmp.ne.s32.totalorder %s111, %s112
    %p121 = scmp.eq.s32.totalorder %s17, 0
    %p122 = por %p120, %p121
    %p123 = scmp.ne.s32.totalorder %s111, %s112
    %p124 = scmp.eq.s32.totalorder %s18, 1
    %p125 = por %p123, %p124
    %p127 = scmp.ne.s32.totalorder %s112, %s126
    %p128 = scmp.eq.s32.totalorder %s18, 0
    %p129 = por %p127, %p128
    %s131 = sadd.s32 %s130, 1
    %p134 = scmp.eq.s32.totalorder %s12, 1
    %p135 = scmp.ne.s32.totalorder %s130, %s132
    %p136 = scmp.eq.s32.totalorder %s12, 0
    %p137 = por %p135, %p136
    %p138 = scmp.ne.s32.totalorder %s130, %s132
    %p139 = scmp.eq.s32.totalorder %s17, 1
    %p140 = por %p138, %p139
    %p141 = scmp.ne.s32.totalorder %s132, %s133
    %p142 = scmp.eq.s32.totalorder %s17, 0
    %p143 = por %p141, %p142
    %p144 = scmp.ne.s32.totalorder %s132, %s133
    %p145 = scmp.eq.s32.totalorder %s18, 1
    %p146 = por %p144, %p145
    %p148 = scmp.ne.s32.totalorder %s133, %s147
    %p149 = scmp.eq.s32.totalorder %s18, 0
    %p150 = por %p148, %p149
    %s151 = ssub.s32 %s12, %s19
    %p152 = scmp.eq.s32.totalorder %s151, 0
    %s154 = sadd.s32 %s153, 1
    %s155 = scalar_select %p152, %s153, %s154
    %p158 = pneg %p152
    %p159 = scmp.eq.s32.totalorder %s12, 1
    %p160 = por %p158, %p159
    %p161 = scmp.ne.s32.totalorder %s153, %s156
    %p162 = scmp.eq.s32.totalorder %s12, 0
    %p163 = por %p161, %p162
    %p164 = scmp.ne.s32.totalorder %s153, %s156
    %p165 = scmp.eq.s32.totalorder %s17, 1
    %p166 = por %p164, %p165
    %p167 = scmp.ne.s32.totalorder %s156, %s157
    %p168 = scmp.eq.s32.totalorder %s17, 0
    %p169 = por %p167, %p168
    %p170 = scmp.ne.s32.totalorder %s156, %s157
    %p171 = scmp.eq.s32.totalorder %s18, 1
    %p172 = por %p170, %p171
    %p174 = scmp.ne.s32.totalorder %s157, %s173
    %p175 = scmp.eq.s32.totalorder %s18, 0
    %p176 = por %p174, %p175
    %p177 = scmp.le.s32.totalorder 1, %s12
    %p178 = scmp.lt.s32.totalorder %s12, 3
    %p179 = pnand %p177, %p178
    %p180 = pneg %p179
    // Predicated region
    $region9: #{autoencoder_forward.9} parent=5 // pred_check
      _
    $region10: #{autoencoder_forward.9} parent=5 // pred_check_branch
      %182 = sbr.rel (%p179) target = $region12
    $region11: #{autoencoder_forward.9} parent=5 // pred_region
      %s183 = ssub.s32 %s12, 1
      // Predicated region
      $region13: #{autoencoder_forward.9} parent=11 // pred_check
        %p184 = pneg %p59
      $region14: #{autoencoder_forward.9} parent=11 // pred_check_branch
        %186 = sbr.rel (%p184) target = $region16
      $region15: #{autoencoder_forward.9} parent=11 // pred_region
        _
      $region16: #{autoencoder_forward.9} parent=11 // pred_fallthru
        _
      // Predicated region
      $region17: #{autoencoder_forward.9} parent=11 // pred_check
        %p187 = pneg %p80
      $region18: #{autoencoder_forward.9} parent=11 // pred_check_branch
        %189 = sbr.rel (%p187) target = $region20
      $region19: #{autoencoder_forward.9} parent=11 // pred_region
        _
      $region20: #{autoencoder_forward.9} parent=11 // pred_fallthru
        _
      // Predicated region
      $region21: #{autoencoder_forward.9} parent=11 // pred_check
        %p190 = pneg %p101
      $region22: #{autoencoder_forward.9} parent=11 // pred_check_branch
        %192 = sbr.rel (%p190) target = $region24
      $region23: #{autoencoder_forward.9} parent=11 // pred_region
        _
      $region24: #{autoencoder_forward.9} parent=11 // pred_fallthru
        _
      // Predicated region
      $region25: #{autoencoder_forward.9} parent=11 // pred_check
        %p193 = pneg %p122
      $region26: #{autoencoder_forward.9} parent=11 // pred_check_branch
        %195 = sbr.rel (%p193) target = $region28
      $region27: #{autoencoder_forward.9} parent=11 // pred_region
        _
      $region28: #{autoencoder_forward.9} parent=11 // pred_fallthru
        _
      // Predicated region
      $region29: #{autoencoder_forward.9} parent=11 // pred_check
        %p196 = pneg %p143
      $region30: #{autoencoder_forward.9} parent=11 // pred_check_branch
        %198 = sbr.rel (%p196) target = $region32
      $region31: #{autoencoder_forward.9} parent=11 // pred_region
        _
      $region32: #{autoencoder_forward.9} parent=11 // pred_fallthru
        _
    $region12: #{autoencoder_forward.9} parent=5 // pred_fallthru
      _
    %p199 = scmp.lt.s32.totalorder %s12, 2
    // Predicated region
    $region33: #{autoencoder_forward.9} parent=5 // pred_check
      %p200 = pneg %p199
    $region34: #{autoencoder_forward.9} parent=5 // pred_check_branch
      %202 = sbr.rel (%p200) target = $region36
    $region35: #{autoencoder_forward.9} parent=5 // pred_region
      // Predicated region
      $region37: #{autoencoder_forward.9} parent=35 // pred_check
        %p203 = pneg %p32
      $region38: #{autoencoder_forward.9} parent=35 // pred_check_branch
        %205 = sbr.rel (%p203) target = $region40
      $region39: #{autoencoder_forward.9} parent=35 // pred_region
        %p206 = scmp.lt.s32.totalorder %s12, 1
        %s207 = scalar_select %p206, %s12, 1
        %s208 = smul.addr %s207, 6
        %s209 = smul.addr %s208, 2
        %s210 = scalar_lea.vmem %s0, %s209
      $region40: #{autoencoder_forward.9} parent=35 // pred_fallthru
        _
    $region36: #{autoencoder_forward.9} parent=5 // pred_fallthru
      _
    %p211 = scmp.le.s32.totalorder 1, %s12
    %p212 = scmp.lt.s32.totalorder %s12, 3
    %p213 = pnand %p211, %p212
    %p214 = pneg %p213
    // Predicated region
    $region41: #{autoencoder_forward.9} parent=5 // pred_check
      _
    $region42: #{autoencoder_forward.9} parent=5 // pred_check_branch
      %216 = sbr.rel (%p213) target = $region44
    $region43: #{autoencoder_forward.9} parent=5 // pred_region
      %s217 = ssub.s32 %s12, 1
      %p218 = scmp.lt.s32.totalorder %s17, 1
      %s219 = scalar_select %p218, %s17, 1
      %s220 = smul.addr %s219, 6
      %s221 = smul.addr %s220, 2
      %s222 = scalar_lea.vmem %s0, %s221
      %p223 = pneg %p38
      %p224 = pneg %p35
      %p225 = pneg %p59
      %p226 = pneg %p56
      %p227 = pneg %p80
      %p228 = pneg %p77
      %p229 = pneg %p101
      %p230 = pneg %p98
      %p231 = pneg %p122
      %p232 = pneg %p119
      %p233 = pneg %p143
      %p234 = pneg %p140
      %p235 = pneg %p169
      %p236 = pneg %p166
      %p237 = scmp.lt.s32.totalorder %s17, 1
      %s238 = scalar_select %p237, %s17, 1
      %s239 = smul.addr %s238, 8
      %s240 = scalar_lea.vmem %s6, %s239
      %p241 = scmp.lt.s32.totalorder %s17, 1
      %s242 = scalar_select %p241, %s17, 1
      %s243 = smul.addr %s242, 6
      %s244 = smul.addr %s243, 2
      %s245 = scalar_lea.vmem %s0, %s244
      %p246 = scmp.lt.s32.totalorder %s17, 1
      %s247 = scalar_select %p246, %s17, 1
      %s248 = smul.addr %s247, 8
      %s249 = scalar_lea.vmem %s6, %s248
      %v251 = vld [vmem:[%s245] sm:$0x5]
      %v252 = vld [vmem:[%s245 + $0x4] sm:$0x5]
      %v256 = vunpack.c.l.s4 1966171168
      %v257 = vunpack.c.0.s8 %v256
      %v258 = vlaneseq
      %v259 = vshrl.u32 %v258, 7
      %v260 = vsub.s32 %v257, %v259
      %v261 = vrot.slane %v251, %v260
      %v263 = vunpack.c.l.s4 1966171168
      %v264 = vunpack.c.0.s8 %v263
      %v265 = vlaneseq
      %v266 = vshrl.u32 %v265, 7
      %v267 = vsub.s32 %v264, %v266
      %v268 = vrot.slane %v252, %v267
      %v269 = vld [vmem:[%s245] sm:$0xf]
      %v270 = vld [vmem:[%s245 + $0x4] sm:$0xf]
      %v274 = vunpack.c.l.s4 1966171168
      %v275 = vunpack.c.0.s8 %v274
      %v276 = vlaneseq
      %v277 = vshrl.u32 %v276, 7
      %v278 = vsub.s32 %v275, %v277
      %v279 = vrot.slane %v269, %v278
      %v280 = vcombine.high %v279, %v279
      %v282 = vunpack.c.l.s4 1966171168
      %v283 = vunpack.c.0.s8 %v282
      %v284 = vlaneseq
      %v285 = vshrl.u32 %v284, 7
      %v286 = vsub.s32 %v283, %v285
      %v287 = vrot.slane %v270, %v286
      %v288 = vcombine.high %v287, %v287
      %vm289 = vsmask.f32 256
      %vm290 = vsmask.f32 1284
      %vm291 = vmor %vm289, %vm290
      %vm292 = vsmask.f32 2312
      %vm293 = vmor %vm291, %vm292
      %vm294 = vsmask.f32 3340
      %vm295 = vmor %vm293, %vm294
      %vm296 = vsmask.f32 4368
      %vm297 = vmor %vm295, %vm296
      %vm298 = vsmask.f32 5396
      %vm299 = vmor %vm297, %vm298
      %vm300 = vsmask.f32 6424
      %vm301 = vmor %vm299, %vm300
      %vm302 = vsmask.f32 7452
      %vm303 = vmor %vm301, %vm302
      %v305 = vshrl.u32 %v279, 16
      %v307 = vrot.slane %v305, 7
      %v308 = vrot.slane %v307, 1
      %v310 = vshll.u32 %v280, 16
      %v312 = vsel %vm303, %v308, %v310
      %v314 = vshrl.u32 %v287, 16
      %v316 = vrot.slane %v314, 7
      %v317 = vrot.slane %v316, 1
      %v319 = vshll.u32 %v288, 16
      %v321 = vsel %vm303, %v317, %v319
      %s322 = scalar_lea.vmem %s245, 4
      %v323 = vld [vmem:[%s322] sm:$0x5]
      %v324 = vld [vmem:[%s322 + $0x4] sm:$0x5]
      %v328 = vunpack.c.l.s4 1966171168
      %v329 = vunpack.c.0.s8 %v328
      %v330 = vlaneseq
      %v331 = vshrl.u32 %v330, 7
      %v332 = vsub.s32 %v329, %v331
      %v333 = vrot.slane %v323, %v332
      %v335 = vunpack.c.l.s4 1966171168
      %v336 = vunpack.c.0.s8 %v335
      %v337 = vlaneseq
      %v338 = vshrl.u32 %v337, 7
      %v339 = vsub.s32 %v336, %v338
      %v340 = vrot.slane %v324, %v339
      %v341 = vld [vmem:[%s322] sm:$0xf]
      %v342 = vld [vmem:[%s322 + $0x4] sm:$0xf]
      %v346 = vunpack.c.l.s4 1966171168
      %v347 = vunpack.c.0.s8 %v346
      %v348 = vlaneseq
      %v349 = vshrl.u32 %v348, 7
      %v350 = vsub.s32 %v347, %v349
      %v351 = vrot.slane %v341, %v350
      %v352 = vcombine.high %v351, %v351
      %v354 = vunpack.c.l.s4 1966171168
      %v355 = vunpack.c.0.s8 %v354
      %v356 = vlaneseq
      %v357 = vshrl.u32 %v356, 7
      %v358 = vsub.s32 %v355, %v357
      %v359 = vrot.slane %v342, %v358
      %v360 = vcombine.high %v359, %v359
      %v362 = vshrl.u32 %v351, 16
      %v364 = vrot.slane %v362, 7
      %v365 = vrot.slane %v364, 1
      %v367 = vshll.u32 %v352, 16
      %v369 = vsel %vm303, %v365, %v367
      %v371 = vshrl.u32 %v359, 16
      %v373 = vrot.slane %v371, 7
      %v374 = vrot.slane %v373, 1
      %v376 = vshll.u32 %v360, 16
      %v378 = vsel %vm303, %v374, %v376
      %v379 = vld [vmem:[%s1] sm:$0xff]
      %v380 = vld [vmem:[%s1 + $0x8] sm:$0xff]
      %v381 = vld [vmem:[%s1 + $0x10] sm:$0xff]
      %v382 = vld [vmem:[%s1 + $0x18] sm:$0xff]
      %v383 = vld [vmem:[%s1 + $0x20] sm:$0xff]
      %v384 = vld [vmem:[%s1 + $0x28] sm:$0xff]
      %v385 = vld [vmem:[%s1 + $0x30] sm:$0xff]
      %v386 = vld [vmem:[%s1 + $0x38] sm:$0xff]
      %v387 = vld [vmem:[%s1 + $0x40] sm:$0xff]
      %v388 = vld [vmem:[%s1 + $0x48] sm:$0xff]
      %v389 = vld [vmem:[%s1 + $0x50] sm:$0xff]
      %v390 = vld [vmem:[%s1 + $0x58] sm:$0xff]
      %v391 = vld [vmem:[%s1 + $0x60] sm:$0xff]
      %v392 = vld [vmem:[%s1 + $0x68] sm:$0xff]
      %v393 = vld [vmem:[%s1 + $0x70] sm:$0xff]
      %v394 = vld [vmem:[%s1 + $0x78] sm:$0xff]
      %v395 = vld [vmem:[%s1 + $0x80] sm:$0xff]
      %v396 = vld [vmem:[%s1 + $0x88] sm:$0xff]
      %v397 = vld [vmem:[%s1 + $0x90] sm:$0xff]
      %v398 = vld [vmem:[%s1 + $0x98] sm:$0xff]
      %v399 = vld [vmem:[%s1 + $0xa0] sm:$0xff]
      %v400 = vld [vmem:[%s1 + $0xa8] sm:$0xff]
      %v401 = vld [vmem:[%s1 + $0xb0] sm:$0xff]
      %v402 = vld [vmem:[%s1 + $0xb8] sm:$0xff]
      %v403 = vld [vmem:[%s1 + $0xc0] sm:$0xff]
      %v404 = vld [vmem:[%s1 + $0xc8] sm:$0xff]
      %v405 = vld [vmem:[%s1 + $0xd0] sm:$0xff]
      %v406 = vld [vmem:[%s1 + $0xd8] sm:$0xff]
      %v407 = vld [vmem:[%s1 + $0xe0] sm:$0xff]
      %v408 = vld [vmem:[%s1 + $0xe8] sm:$0xff]
      %v409 = vld [vmem:[%s1 + $0xf0] sm:$0xff]
      %v410 = vld [vmem:[%s1 + $0xf8] sm:$0xff]
      %v411 = vld [vmem:[%s1 + $0x100] sm:$0xff]
      %v412 = vld [vmem:[%s1 + $0x108] sm:$0xff]
      %v413 = vld [vmem:[%s1 + $0x110] sm:$0xff]
      %v414 = vld [vmem:[%s1 + $0x118] sm:$0xff]
      %v415 = vld [vmem:[%s1 + $0x120] sm:$0xff]
      %v416 = vld [vmem:[%s1 + $0x128] sm:$0xff]
      %v417 = vld [vmem:[%s1 + $0x130] sm:$0xff]
      %v418 = vld [vmem:[%s1 + $0x138] sm:$0xff]
      %v419 = vld [vmem:[%s1 + $0x140] sm:$0xff]
      %v420 = vld [vmem:[%s1 + $0x148] sm:$0xff]
      %v421 = vld [vmem:[%s1 + $0x150] sm:$0xff]
      %v422 = vld [vmem:[%s1 + $0x158] sm:$0xff]
      %v423 = vld [vmem:[%s1 + $0x160] sm:$0xff]
      %v424 = vld [vmem:[%s1 + $0x168] sm:$0xff]
      %v425 = vld [vmem:[%s1 + $0x170] sm:$0xff]
      %v426 = vld [vmem:[%s1 + $0x178] sm:$0xff]
      %v427 = vld [vmem:[%s1 + $0x180] sm:$0xff]
      %v428 = vld [vmem:[%s1 + $0x188] sm:$0xff]
      %v429 = vld [vmem:[%s1 + $0x190] sm:$0xff]
      %v430 = vld [vmem:[%s1 + $0x198] sm:$0xff]
      %v431 = vld [vmem:[%s1 + $0x1a0] sm:$0xff]
      %v432 = vld [vmem:[%s1 + $0x1a8] sm:$0xff]
      %v433 = vld [vmem:[%s1 + $0x1b0] sm:$0xff]
      %v434 = vld [vmem:[%s1 + $0x1b8] sm:$0xff]
      %v435 = vld [vmem:[%s1 + $0x1c0] sm:$0xff]
      %v436 = vld [vmem:[%s1 + $0x1c8] sm:$0xff]
      %v437 = vld [vmem:[%s1 + $0x1d0] sm:$0xff]
      %v438 = vld [vmem:[%s1 + $0x1d8] sm:$0xff]
      %v439 = vld [vmem:[%s1 + $0x1e0] sm:$0xff]
      %v440 = vld [vmem:[%s1 + $0x1e8] sm:$0xff]
      %v441 = vld [vmem:[%s1 + $0x1f0] sm:$0xff]
      %v442 = vld [vmem:[%s1 + $0x1f8] sm:$0xff]
      %v443 = vcombine.low %v261, %v268
      %v445 = vunpack.c.l.s4 1966171168
      %v446 = vunpack.c.0.s8 %v445
      %v447 = vlaneseq
      %v448 = vshrl.u32 %v447, 7
      %v449 = vsub.s32 %v446, %v448
      %v450 = vrot.slane %v443, %v449
      %v451 = vcombine.high %v450, %v450
      %v453 = vunpack.c.l.s4 1966171168
      %v454 = vunpack.c.0.s8 %v453
      %v455 = vlaneseq
      %v456 = vshrl.u32 %v455, 7
      %v457 = vsub.s32 %v454, %v456
      %v458 = vrot.slane %v450, %v457
      %v460 = vunpack.c.l.s4 1966171168
      %v461 = vunpack.c.0.s8 %v460
      %v462 = vlaneseq
      %v463 = vshrl.u32 %v462, 7
      %v464 = vsub.s32 %v461, %v463
      %v465 = vrot.slane %v451, %v464
      %v532 = vunpack.c.l.b16 %v379
      %v533 = vunpack.c.h.b16 %v379
      %v534 = vunpack.c.l.b16 %v380
      %v535 = vunpack.c.h.b16 %v380
      %v536 = vunpack.c.l.b16 %v381
      %v537 = vunpack.c.h.b16 %v381
      %v538 = vunpack.c.l.b16 %v382
      %v539 = vunpack.c.h.b16 %v382
      %v540 = vunpack.c.l.b16 %v383
      %v541 = vunpack.c.h.b16 %v383
      %v542 = vunpack.c.l.b16 %v384
      %v543 = vunpack.c.h.b16 %v384
      %v544 = vunpack.c.l.b16 %v385
      %v545 = vunpack.c.h.b16 %v385
      %v546 = vunpack.c.l.b16 %v386
      %v547 = vunpack.c.h.b16 %v386
      %v548 = vunpack.c.l.b16 %v387
      %v549 = vunpack.c.h.b16 %v387
      %v550 = vunpack.c.l.b16 %v388
      %v551 = vunpack.c.h.b16 %v388
      %v552 = vunpack.c.l.b16 %v389
      %v553 = vunpack.c.h.b16 %v389
      %v554 = vunpack.c.l.b16 %v390
      %v555 = vunpack.c.h.b16 %v390
      %v556 = vunpack.c.l.b16 %v391
      %v557 = vunpack.c.h.b16 %v391
      %v558 = vunpack.c.l.b16 %v392
      %v559 = vunpack.c.h.b16 %v392
      %v560 = vunpack.c.l.b16 %v393
      %v561 = vunpack.c.h.b16 %v393
      %v562 = vunpack.c.l.b16 %v394
      %v563 = vunpack.c.h.b16 %v394
      %v564 = vunpack.c.l.b16 %v395
      %v565 = vunpack.c.h.b16 %v395
      %v566 = vunpack.c.l.b16 %v396
      %v567 = vunpack.c.h.b16 %v396
      %v568 = vunpack.c.l.b16 %v397
      %v569 = vunpack.c.h.b16 %v397
      %v570 = vunpack.c.l.b16 %v398
      %v571 = vunpack.c.h.b16 %v398
      %v572 = vunpack.c.l.b16 %v399
      %v573 = vunpack.c.h.b16 %v399
      %v574 = vunpack.c.l.b16 %v400
      %v575 = vunpack.c.h.b16 %v400
      %v576 = vunpack.c.l.b16 %v401
      %v577 = vunpack.c.h.b16 %v401
      %v578 = vunpack.c.l.b16 %v402
      %v579 = vunpack.c.h.b16 %v402
      %v580 = vunpack.c.l.b16 %v403
      %v581 = vunpack.c.h.b16 %v403
      %v582 = vunpack.c.l.b16 %v404
      %v583 = vunpack.c.h.b16 %v404
      %v584 = vunpack.c.l.b16 %v405
      %v585 = vunpack.c.h.b16 %v405
      %v586 = vunpack.c.l.b16 %v406
      %v587 = vunpack.c.h.b16 %v406
      %v588 = vunpack.c.l.b16 %v407
      %v589 = vunpack.c.h.b16 %v407
      %v590 = vunpack.c.l.b16 %v408
      %v591 = vunpack.c.h.b16 %v408
      %v592 = vunpack.c.l.b16 %v409
      %v593 = vunpack.c.h.b16 %v409
      %v594 = vunpack.c.l.b16 %v410
      %v595 = vunpack.c.h.b16 %v410
      %v596 = vunpack.c.l.b16 %v411
      %v597 = vunpack.c.h.b16 %v411
      %v598 = vunpack.c.l.b16 %v412
      %v599 = vunpack.c.h.b16 %v412
      %v600 = vunpack.c.l.b16 %v413
      %v601 = vunpack.c.h.b16 %v413
      %v602 = vunpack.c.l.b16 %v414
      %v603 = vunpack.c.h.b16 %v414
      %v604 = vunpack.c.l.b16 %v415
      %v605 = vunpack.c.h.b16 %v415
      %v606 = vunpack.c.l.b16 %v416
      %v607 = vunpack.c.h.b16 %v416
      %v608 = vunpack.c.l.b16 %v417
      %v609 = vunpack.c.h.b16 %v417
      %v610 = vunpack.c.l.b16 %v418
      %v611 = vunpack.c.h.b16 %v418
      %v612 = vunpack.c.l.b16 %v419
      %v613 = vunpack.c.h.b16 %v419
      %v614 = vunpack.c.l.b16 %v420
      %v615 = vunpack.c.h.b16 %v420
      %v616 = vunpack.c.l.b16 %v421
      %v617 = vunpack.c.h.b16 %v421
      %v618 = vunpack.c.l.b16 %v422
      %v619 = vunpack.c.h.b16 %v422
      %v620 = vunpack.c.l.b16 %v423
      %v621 = vunpack.c.h.b16 %v423
      %v622 = vunpack.c.l.b16 %v424
      %v623 = vunpack.c.h.b16 %v424
      %v624 = vunpack.c.l.b16 %v425
      %v625 = vunpack.c.h.b16 %v425
      %v626 = vunpack.c.l.b16 %v426
      %v627 = vunpack.c.h.b16 %v426
      %v628 = vunpack.c.l.b16 %v427
      %v629 = vunpack.c.h.b16 %v427
      %v630 = vunpack.c.l.b16 %v428
      %v631 = vunpack.c.h.b16 %v428
      %v632 = vunpack.c.l.b16 %v429
      %v633 = vunpack.c.h.b16 %v429
      %v634 = vunpack.c.l.b16 %v430
      %v635 = vunpack.c.h.b16 %v430
      %v636 = vunpack.c.l.b16 %v431
      %v637 = vunpack.c.h.b16 %v431
      %v638 = vunpack.c.l.b16 %v432
      %v639 = vunpack.c.h.b16 %v432
      %v640 = vunpack.c.l.b16 %v433
      %v641 = vunpack.c.h.b16 %v433
      %v642 = vunpack.c.l.b16 %v434
      %v643 = vunpack.c.h.b16 %v434
      %v644 = vunpack.c.l.b16 %v435
      %v645 = vunpack.c.h.b16 %v435
      %v646 = vunpack.c.l.b16 %v436
      %v647 = vunpack.c.h.b16 %v436
      %v648 = vunpack.c.l.b16 %v437
      %v649 = vunpack.c.h.b16 %v437
      %v650 = vunpack.c.l.b16 %v438
      %v651 = vunpack.c.h.b16 %v438
      %v652 = vunpack.c.l.b16 %v439
      %v653 = vunpack.c.h.b16 %v439
      %v654 = vunpack.c.l.b16 %v440
      %v655 = vunpack.c.h.b16 %v440
      %v656 = vunpack.c.l.b16 %v441
      %v657 = vunpack.c.h.b16 %v441
      %v658 = vunpack.c.l.b16 %v442
      %v659 = vunpack.c.h.b16 %v442
      %v660 = vpack.c.b16 %v536, %v532
      %v661 = vpack.c.b16 %v537, %v533
      %v662 = vpack.c.b16 %v538, %v534
      %v663 = vpack.c.b16 %v539, %v535
      %v664 = vpack.c.b16 %v544, %v540
      %v665 = vpack.c.b16 %v545, %v541
      %v666 = vpack.c.b16 %v546, %v542
      %v667 = vpack.c.b16 %v547, %v543
      %v668 = vpack.c.b16 %v552, %v548
      %v669 = vpack.c.b16 %v553, %v549
      %v670 = vpack.c.b16 %v554, %v550
      %v671 = vpack.c.b16 %v555, %v551
      %v672 = vpack.c.b16 %v560, %v556
      %v673 = vpack.c.b16 %v561, %v557
      %v674 = vpack.c.b16 %v562, %v558
      %v675 = vpack.c.b16 %v563, %v559
      %v676 = vpack.c.b16 %v568, %v564
      %v677 = vpack.c.b16 %v569, %v565
      %v678 = vpack.c.b16 %v570, %v566
      %v679 = vpack.c.b16 %v571, %v567
      %v680 = vpack.c.b16 %v576, %v572
      %v681 = vpack.c.b16 %v577, %v573
      %v682 = vpack.c.b16 %v578, %v574
      %v683 = vpack.c.b16 %v579, %v575
      %v684 = vpack.c.b16 %v584, %v580
      %v685 = vpack.c.b16 %v585, %v581
      %v686 = vpack.c.b16 %v586, %v582
      %v687 = vpack.c.b16 %v587, %v583
      %v688 = vpack.c.b16 %v592, %v588
      %v689 = vpack.c.b16 %v593, %v589
      %v690 = vpack.c.b16 %v594, %v590
      %v691 = vpack.c.b16 %v595, %v591
      %v692 = vpack.c.b16 %v600, %v596
      %v693 = vpack.c.b16 %v601, %v597
      %v694 = vpack.c.b16 %v602, %v598
      %v695 = vpack.c.b16 %v603, %v599
      %v696 = vpack.c.b16 %v608, %v604
      %v697 = vpack.c.b16 %v609, %v605
      %v698 = vpack.c.b16 %v610, %v606
      %v699 = vpack.c.b16 %v611, %v607
      %v700 = vpack.c.b16 %v616, %v612
      %v701 = vpack.c.b16 %v617, %v613
      %v702 = vpack.c.b16 %v618, %v614
      %v703 = vpack.c.b16 %v619, %v615
      %v704 = vpack.c.b16 %v624, %v620
      %v705 = vpack.c.b16 %v625, %v621
      %v706 = vpack.c.b16 %v626, %v622
      %v707 = vpack.c.b16 %v627, %v623
      %v708 = vpack.c.b16 %v632, %v628
      %v709 = vpack.c.b16 %v633, %v629
      %v710 = vpack.c.b16 %v634, %v630
      %v711 = vpack.c.b16 %v635, %v631
      %v712 = vpack.c.b16 %v640, %v636
      %v713 = vpack.c.b16 %v641, %v637
      %v714 = vpack.c.b16 %v642, %v638
      %v715 = vpack.c.b16 %v643, %v639
      %v716 = vpack.c.b16 %v648, %v644
      %v717 = vpack.c.b16 %v649, %v645
      %v718 = vpack.c.b16 %v650, %v646
      %v719 = vpack.c.b16 %v651, %v647
      %v720 = vpack.c.b16 %v656, %v652
      %v721 = vpack.c.b16 %v657, %v653
      %v722 = vpack.c.b16 %v658, %v654
      %v723 = vpack.c.b16 %v659, %v655
      %788 = vmatprep.subr.bf16.mxu0 %v661
      %789 = vmatpush1.bf16.msra.mxu0 %v660
      %790 = vmatprep.subr.bf16.mxu0 %v665
      %791 = vmatpush1.bf16.msra.mxu0 %v664
      %792 = vmatprep.subr.bf16.mxu0 %v669
      %793 = vmatpush1.bf16.msra.mxu0 %v668
      %794 = vmatprep.subr.bf16.mxu0 %v673
      %795 = vmatpush1.bf16.msra.mxu0 %v672
      %796 = vmatprep.subr.bf16.mxu0 %v677
      %797 = vmatpush1.bf16.msra.mxu0 %v676
      %798 = vmatprep.subr.bf16.mxu0 %v681
      %799 = vmatpush1.bf16.msra.mxu0 %v680
      %800 = vmatprep.subr.bf16.mxu0 %v685
      %801 = vmatpush1.bf16.msra.mxu0 %v684
      %802 = vmatprep.subr.bf16.mxu0 %v689
      %803 = vmatpush1.bf16.msra.mxu0 %v688
      %804 = vmatprep.subr.bf16.mxu0 %v693
      %805 = vmatpush1.bf16.msra.mxu0 %v692
      %806 = vmatprep.subr.bf16.mxu0 %v697
      %807 = vmatpush1.bf16.msra.mxu0 %v696
      %808 = vmatprep.subr.bf16.mxu0 %v701
      %809 = vmatpush1.bf16.msra.mxu0 %v700
      %810 = vmatprep.subr.bf16.mxu0 %v705
      %811 = vmatpush1.bf16.msra.mxu0 %v704
      %812 = vmatprep.subr.bf16.mxu0 %v709
      %813 = vmatpush1.bf16.msra.mxu0 %v708
      %814 = vmatprep.subr.bf16.mxu0 %v713
      %815 = vmatpush1.bf16.msra.mxu0 %v712
      %816 = vmatprep.subr.bf16.mxu0 %v717
      %817 = vmatpush1.bf16.msra.mxu0 %v716
      %818 = vmatprep.subr.bf16.mxu0 %v721
      %819 = vmatpush1.bf16.msra.mxu0 %v720
      %820 = vmatprep.mubr.bf16.mxu0 %v465
      %821 = vmatmul.mubr.bf16.gmra.mrb[0].mxu0 %v458
      %v822 = vpop.f32.mrb[0].mxu0
      %v823 = vadd.f32 0.0, %v822
      %v824 = vpop.f32.mrb[0].mxu0
      %v825 = vadd.f32 0.0, %v824
      %v826 = vpop.f32.mrb[0].mxu0
      %v827 = vpop.f32.mrb[0].mxu0
      %828 = vdwg.mxu0
      %829 = vmatprep.subr.bf16.mxu0 %v663
      %830 = vmatpush1.bf16.msra.mxu0 %v662
      %831 = vmatprep.subr.bf16.mxu0 %v667
      %832 = vmatpush1.bf16.msra.mxu0 %v666
      %833 = vmatprep.subr.bf16.mxu0 %v671
      %834 = vmatpush1.bf16.msra.mxu0 %v670
      %835 = vmatprep.subr.bf16.mxu0 %v675
      %836 = vmatpush1.bf16.msra.mxu0 %v674
      %837 = vmatprep.subr.bf16.mxu0 %v679
      %838 = vmatpush1.bf16.msra.mxu0 %v678
      %839 = vmatprep.subr.bf16.mxu0 %v683
      %840 = vmatpush1.bf16.msra.mxu0 %v682
      %841 = vmatprep.subr.bf16.mxu0 %v687
      %842 = vmatpush1.bf16.msra.mxu0 %v686
      %843 = vmatprep.subr.bf16.mxu0 %v691
      %844 = vmatpush1.bf16.msra.mxu0 %v690
      %845 = vmatprep.subr.bf16.mxu0 %v695
      %846 = vmatpush1.bf16.msra.mxu0 %v694
      %847 = vmatprep.subr.bf16.mxu0 %v699
      %848 = vmatpush1.bf16.msra.mxu0 %v698
      %849 = vmatprep.subr.bf16.mxu0 %v703
      %850 = vmatpush1.bf16.msra.mxu0 %v702
      %851 = vmatprep.subr.bf16.mxu0 %v707
      %852 = vmatpush1.bf16.msra.mxu0 %v706
      %853 = vmatprep.subr.bf16.mxu0 %v711
      %854 = vmatpush1.bf16.msra.mxu0 %v710
      %855 = vmatprep.subr.bf16.mxu0 %v715
      %856 = vmatpush1.bf16.msra.mxu0 %v714
      %857 = vmatprep.subr.bf16.mxu0 %v719
      %858 = vmatpush1.bf16.msra.mxu0 %v718
      %859 = vmatprep.subr.bf16.mxu0 %v723
      %860 = vmatpush1.bf16.msra.mxu0 %v722
      %861 = vmatprep.mubr.bf16.mxu0 %v465
      %862 = vmatmul.mubr.bf16.gmra.mrb[0].mxu0 %v458
      %v863 = vpop.f32.mrb[0].mxu0
      %v864 = vadd.f32 0.0, %v863
      %v865 = vpop.f32.mrb[0].mxu0
      %v866 = vadd.f32 0.0, %v865
      %v867 = vpop.f32.mrb[0].mxu0
      %v868 = vpop.f32.mrb[0].mxu0
      %869 = vdwg.mxu0
      %v870 = vld [vmem:[%s2] sm:$0xff]
      %v871 = vld [vmem:[%s2 + $0x8] sm:$0xff]
      %v872 = vld [vmem:[%s2 + $0x10] sm:$0xff]
      %v873 = vld [vmem:[%s2 + $0x18] sm:$0xff]
      %v874 = vld [vmem:[%s2 + $0x20] sm:$0xff]
      %v875 = vld [vmem:[%s2 + $0x28] sm:$0xff]
      %v876 = vld [vmem:[%s2 + $0x30] sm:$0xff]
      %v877 = vld [vmem:[%s2 + $0x38] sm:$0xff]
      %v878 = vld [vmem:[%s2 + $0x40] sm:$0xff]
      %v879 = vld [vmem:[%s2 + $0x48] sm:$0xff]
      %v880 = vld [vmem:[%s2 + $0x50] sm:$0xff]
      %v881 = vld [vmem:[%s2 + $0x58] sm:$0xff]
      %v882 = vld [vmem:[%s2 + $0x60] sm:$0xff]
      %v883 = vld [vmem:[%s2 + $0x68] sm:$0xff]
      %v884 = vld [vmem:[%s2 + $0x70] sm:$0xff]
      %v885 = vld [vmem:[%s2 + $0x78] sm:$0xff]
      %v886 = vld [vmem:[%s2 + $0x80] sm:$0xff]
      %v887 = vld [vmem:[%s2 + $0x88] sm:$0xff]
      %v888 = vld [vmem:[%s2 + $0x90] sm:$0xff]
      %v889 = vld [vmem:[%s2 + $0x98] sm:$0xff]
      %v890 = vld [vmem:[%s2 + $0xa0] sm:$0xff]
      %v891 = vld [vmem:[%s2 + $0xa8] sm:$0xff]
      %v892 = vld [vmem:[%s2 + $0xb0] sm:$0xff]
      %v893 = vld [vmem:[%s2 + $0xb8] sm:$0xff]
      %v894 = vld [vmem:[%s2 + $0xc0] sm:$0xff]
      %v895 = vld [vmem:[%s2 + $0xc8] sm:$0xff]
      %v896 = vld [vmem:[%s2 + $0xd0] sm:$0xff]
      %v897 = vld [vmem:[%s2 + $0xd8] sm:$0xff]
      %v898 = vld [vmem:[%s2 + $0xe0] sm:$0xff]
      %v899 = vld [vmem:[%s2 + $0xe8] sm:$0xff]
      %v900 = vld [vmem:[%s2 + $0xf0] sm:$0xff]
      %v901 = vld [vmem:[%s2 + $0xf8] sm:$0xff]
      %v902 = vcombine.low %v312, %v321
      %v904 = vunpack.c.l.s4 1966171168
      %v905 = vunpack.c.0.s8 %v904
      %v906 = vlaneseq
      %v907 = vshrl.u32 %v906, 7
      %v908 = vsub.s32 %v905, %v907
      %v909 = vrot.slane %v902, %v908
      %v910 = vcombine.high %v909, %v909
      %v912 = vunpack.c.l.s4 1966171168
      %v913 = vunpack.c.0.s8 %v912
      %v914 = vlaneseq
      %v915 = vshrl.u32 %v914, 7
      %v916 = vsub.s32 %v913, %v915
      %v917 = vrot.slane %v909, %v916
      %v919 = vunpack.c.l.s4 1966171168
      %v920 = vunpack.c.0.s8 %v919
      %v921 = vlaneseq
      %v922 = vshrl.u32 %v921, 7
      %v923 = vsub.s32 %v920, %v922
      %v924 = vrot.slane %v910, %v923
      %v959 = vunpack.c.l.b16 %v870
      %v960 = vunpack.c.h.b16 %v870
      %v961 = vunpack.c.l.b16 %v871
      %v962 = vunpack.c.h.b16 %v871
      %v963 = vunpack.c.l.b16 %v872
      %v964 = vunpack.c.h.b16 %v872
      %v965 = vunpack.c.l.b16 %v873
      %v966 = vunpack.c.h.b16 %v873
      %v967 = vunpack.c.l.b16 %v874
      %v968 = vunpack.c.h.b16 %v874
      %v969 = vunpack.c.l.b16 %v875
      %v970 = vunpack.c.h.b16 %v875
      %v971 = vunpack.c.l.b16 %v876
      %v972 = vunpack.c.h.b16 %v876
      %v973 = vunpack.c.l.b16 %v877
      %v974 = vunpack.c.h.b16 %v877
      %v975 = vunpack.c.l.b16 %v878
      %v976 = vunpack.c.h.b16 %v878
      %v977 = vunpack.c.l.b16 %v879
      %v978 = vunpack.c.h.b16 %v879
      %v979 = vunpack.c.l.b16 %v880
      %v980 = vunpack.c.h.b16 %v880
      %v981 = vunpack.c.l.b16 %v881
      %v982 = vunpack.c.h.b16 %v881
      %v983 = vunpack.c.l.b16 %v882
      %v984 = vunpack.c.h.b16 %v882
      %v985 = vunpack.c.l.b16 %v883
      %v986 = vunpack.c.h.b16 %v883
      %v987 = vunpack.c.l.b16 %v884
      %v988 = vunpack.c.h.b16 %v884
      %v989 = vunpack.c.l.b16 %v885
      %v990 = vunpack.c.h.b16 %v885
      %v991 = vunpack.c.l.b16 %v886
      %v992 = vunpack.c.h.b16 %v886
      %v993 = vunpack.c.l.b16 %v887
      %v994 = vunpack.c.h.b16 %v887
      %v995 = vunpack.c.l.b16 %v888
      %v996 = vunpack.c.h.b16 %v888
      %v997 = vunpack.c.l.b16 %v889
      %v998 = vunpack.c.h.b16 %v889
      %v999 = vunpack.c.l.b16 %v890
      %v1000 = vunpack.c.h.b16 %v890
      %v1001 = vunpack.c.l.b16 %v891
      %v1002 = vunpack.c.h.b16 %v891
      %v1003 = vunpack.c.l.b16 %v892
      %v1004 = vunpack.c.h.b16 %v892
      %v1005 = vunpack.c.l.b16 %v893
      %v1006 = vunpack.c.h.b16 %v893
      %v1007 = vunpack.c.l.b16 %v894
      %v1008 = vunpack.c.h.b16 %v894
      %v1009 = vunpack.c.l.b16 %v895
      %v1010 = vunpack.c.h.b16 %v895
      %v1011 = vunpack.c.l.b16 %v896
      %v1012 = vunpack.c.h.b16 %v896
      %v1013 = vunpack.c.l.b16 %v897
      %v1014 = vunpack.c.h.b16 %v897
      %v1015 = vunpack.c.l.b16 %v898
      %v1016 = vunpack.c.h.b16 %v898
      %v1017 = vunpack.c.l.b16 %v899
      %v1018 = vunpack.c.h.b16 %v899
      %v1019 = vunpack.c.l.b16 %v900
      %v1020 = vunpack.c.h.b16 %v900
      %v1021 = vunpack.c.l.b16 %v901
      %v1022 = vunpack.c.h.b16 %v901
      %v1023 = vpack.c.b16 %v961, %v959
      %v1024 = vpack.c.b16 %v962, %v960
      %v1025 = vpack.c.b16 %v965, %v963
      %v1026 = vpack.c.b16 %v966, %v964
      %v1027 = vpack.c.b16 %v969, %v967
      %v1028 = vpack.c.b16 %v970, %v968
      %v1029 = vpack.c.b16 %v973, %v971
      %v1030 = vpack.c.b16 %v974, %v972
      %v1031 = vpack.c.b16 %v977, %v975
      %v1032 = vpack.c.b16 %v978, %v976
      %v1033 = vpack.c.b16 %v981, %v979
      %v1034 = vpack.c.b16 %v982, %v980
      %v1035 = vpack.c.b16 %v985, %v983
      %v1036 = vpack.c.b16 %v986, %v984
      %v1037 = vpack.c.b16 %v989, %v987
      %v1038 = vpack.c.b16 %v990, %v988
      %v1039 = vpack.c.b16 %v993, %v991
      %v1040 = vpack.c.b16 %v994, %v992
      %v1041 = vpack.c.b16 %v997, %v995
      %v1042 = vpack.c.b16 %v998, %v996
      %v1043 = vpack.c.b16 %v1001, %v999
      %v1044 = vpack.c.b16 %v1002, %v1000
      %v1045 = vpack.c.b16 %v1005, %v1003
      %v1046 = vpack.c.b16 %v1006, %v1004
      %v1047 = vpack.c.b16 %v1009, %v1007
      %v1048 = vpack.c.b16 %v1010, %v1008
      %v1049 = vpack.c.b16 %v1013, %v1011
      %v1050 = vpack.c.b16 %v1014, %v1012
      %v1051 = vpack.c.b16 %v1017, %v1015
      %v1052 = vpack.c.b16 %v1018, %v1016
      %v1053 = vpack.c.b16 %v1021, %v1019
      %v1054 = vpack.c.b16 %v1022, %v1020
      %1087 = vmatprep.subr.bf16.mxu0 %v1024
      %1088 = vmatpush1.bf16.msra.mxu0 %v1023
      %1089 = vmatprep.subr.bf16.mxu0 %v1026
      %1090 = vmatpush1.bf16.msra.mxu0 %v1025
      %1091 = vmatprep.subr.bf16.mxu0 %v1028
      %1092 = vmatpush1.bf16.msra.mxu0 %v1027
      %1093 = vmatprep.subr.bf16.mxu0 %v1030
      %1094 = vmatpush1.bf16.msra.mxu0 %v1029
      %1095 = vmatprep.subr.bf16.mxu0 %v1032
      %1096 = vmatpush1.bf16.msra.mxu0 %v1031
      %1097 = vmatprep.subr.bf16.mxu0 %v1034
      %1098 = vmatpush1.bf16.msra.mxu0 %v1033
      %1099 = vmatprep.subr.bf16.mxu0 %v1036
      %1100 = vmatpush1.bf16.msra.mxu0 %v1035
      %1101 = vmatprep.subr.bf16.mxu0 %v1038
      %1102 = vmatpush1.bf16.msra.mxu0 %v1037
      %1103 = vmatprep.subr.bf16.mxu0 %v1040
      %1104 = vmatpush1.bf16.msra.mxu0 %v1039
      %1105 = vmatprep.subr.bf16.mxu0 %v1042
      %1106 = vmatpush1.bf16.msra.mxu0 %v1041
      %1107 = vmatprep.subr.bf16.mxu0 %v1044
      %1108 = vmatpush1.bf16.msra.mxu0 %v1043
      %1109 = vmatprep.subr.bf16.mxu0 %v1046
      %1110 = vmatpush1.bf16.msra.mxu0 %v1045
      %1111 = vmatprep.subr.bf16.mxu0 %v1048
      %1112 = vmatpush1.bf16.msra.mxu0 %v1047
      %1113 = vmatprep.subr.bf16.mxu0 %v1050
      %1114 = vmatpush1.bf16.msra.mxu0 %v1049
      %1115 = vmatprep.subr.bf16.mxu0 %v1052
      %1116 = vmatpush1.bf16.msra.mxu0 %v1051
      %1117 = vmatprep.subr.bf16.mxu0 %v1054
      %1118 = vmatpush1.bf16.msra.mxu0 %v1053
      %1119 = vmatprep.mubr.bf16.mxu0 %v924
      %1120 = vmatmul.mubr.bf16.gmra.mrb[0].mxu0 %v917
      %v1121 = vpop.f32.mrb[0].mxu0
      %v1122 = vadd.f32 0.0, %v1121
      %v1123 = vpop.f32.mrb[0].mxu0
      %v1124 = vadd.f32 0.0, %v1123
      %v1125 = vpop.f32.mrb[0].mxu0
      %v1126 = vpop.f32.mrb[0].mxu0
      %1127 = vdwg.mxu0
      %v1128 = vld [vmem:[%s3] sm:$0xff]
      %v1129 = vld [vmem:[%s3 + $0x8] sm:$0xff]
      %v1130 = vld [vmem:[%s3 + $0x10] sm:$0xff]
      %v1131 = vld [vmem:[%s3 + $0x18] sm:$0xff]
      %v1132 = vld [vmem:[%s3 + $0x20] sm:$0xff]
      %v1133 = vld [vmem:[%s3 + $0x28] sm:$0xff]
      %v1134 = vld [vmem:[%s3 + $0x30] sm:$0xff]
      %v1135 = vld [vmem:[%s3 + $0x38] sm:$0xff]
      %v1136 = vld [vmem:[%s3 + $0x40] sm:$0xff]
      %v1137 = vld [vmem:[%s3 + $0x48] sm:$0xff]
      %v1138 = vld [vmem:[%s3 + $0x50] sm:$0xff]
      %v1139 = vld [vmem:[%s3 + $0x58] sm:$0xff]
      %v1140 = vld [vmem:[%s3 + $0x60] sm:$0xff]
      %v1141 = vld [vmem:[%s3 + $0x68] sm:$0xff]
      %v1142 = vld [vmem:[%s3 + $0x70] sm:$0xff]
      %v1143 = vld [vmem:[%s3 + $0x78] sm:$0xff]
      %v1144 = vld [vmem:[%s3 + $0x80] sm:$0xff]
      %v1145 = vld [vmem:[%s3 + $0x88] sm:$0xff]
      %v1146 = vld [vmem:[%s3 + $0x90] sm:$0xff]
      %v1147 = vld [vmem:[%s3 + $0x98] sm:$0xff]
      %v1148 = vld [vmem:[%s3 + $0xa0] sm:$0xff]
      %v1149 = vld [vmem:[%s3 + $0xa8] sm:$0xff]
      %v1150 = vld [vmem:[%s3 + $0xb0] sm:$0xff]
      %v1151 = vld [vmem:[%s3 + $0xb8] sm:$0xff]
      %v1152 = vld [vmem:[%s3 + $0xc0] sm:$0xff]
      %v1153 = vld [vmem:[%s3 + $0xc8] sm:$0xff]
      %v1154 = vld [vmem:[%s3 + $0xd0] sm:$0xff]
      %v1155 = vld [vmem:[%s3 + $0xd8] sm:$0xff]
      %v1156 = vld [vmem:[%s3 + $0xe0] sm:$0xff]
      %v1157 = vld [vmem:[%s3 + $0xe8] sm:$0xff]
      %v1158 = vld [vmem:[%s3 + $0xf0] sm:$0xff]
      %v1159 = vld [vmem:[%s3 + $0xf8] sm:$0xff]
      %v1160 = vcombine.low %v333, %v340
      %v1162 = vunpack.c.l.s4 1966171168
      %v1163 = vunpack.c.0.s8 %v1162
      %v1164 = vlaneseq
      %v1165 = vshrl.u32 %v1164, 7
      %v1166 = vsub.s32 %v1163, %v1165
      %v1167 = vrot.slane %v1160, %v1166
      %v1168 = vcombine.high %v1167, %v1167
      %v1170 = vunpack.c.l.s4 1966171168
      %v1171 = vunpack.c.0.s8 %v1170
      %v1172 = vlaneseq
      %v1173 = vshrl.u32 %v1172, 7
      %v1174 = vsub.s32 %v1171, %v1173
      %v1175 = vrot.slane %v1167, %v1174
      %v1177 = vunpack.c.l.s4 1966171168
      %v1178 = vunpack.c.0.s8 %v1177
      %v1179 = vlaneseq
      %v1180 = vshrl.u32 %v1179, 7
      %v1181 = vsub.s32 %v1178, %v1180
      %v1182 = vrot.slane %v1168, %v1181
      %v1217 = vunpack.c.l.b16 %v1128
      %v1218 = vunpack.c.h.b16 %v1128
      %v1219 = vunpack.c.l.b16 %v1129
      %v1220 = vunpack.c.h.b16 %v1129
      %v1221 = vunpack.c.l.b16 %v1130
      %v1222 = vunpack.c.h.b16 %v1130
      %v1223 = vunpack.c.l.b16 %v1131
      %v1224 = vunpack.c.h.b16 %v1131
      %v1225 = vunpack.c.l.b16 %v1132
      %v1226 = vunpack.c.h.b16 %v1132
      %v1227 = vunpack.c.l.b16 %v1133
      %v1228 = vunpack.c.h.b16 %v1133
      %v1229 = vunpack.c.l.b16 %v1134
      %v1230 = vunpack.c.h.b16 %v1134
      %v1231 = vunpack.c.l.b16 %v1135
      %v1232 = vunpack.c.h.b16 %v1135
      %v1233 = vunpack.c.l.b16 %v1136
      %v1234 = vunpack.c.h.b16 %v1136
      %v1235 = vunpack.c.l.b16 %v1137
      %v1236 = vunpack.c.h.b16 %v1137
      %v1237 = vunpack.c.l.b16 %v1138
      %v1238 = vunpack.c.h.b16 %v1138
      %v1239 = vunpack.c.l.b16 %v1139
      %v1240 = vunpack.c.h.b16 %v1139
      %v1241 = vunpack.c.l.b16 %v1140
      %v1242 = vunpack.c.h.b16 %v1140
      %v1243 = vunpack.c.l.b16 %v1141
      %v1244 = vunpack.c.h.b16 %v1141
      %v1245 = vunpack.c.l.b16 %v1142
      %v1246 = vunpack.c.h.b16 %v1142
      %v1247 = vunpack.c.l.b16 %v1143
      %v1248 = vunpack.c.h.b16 %v1143
      %v1249 = vunpack.c.l.b16 %v1144
      %v1250 = vunpack.c.h.b16 %v1144
      %v1251 = vunpack.c.l.b16 %v1145
      %v1252 = vunpack.c.h.b16 %v1145
      %v1253 = vunpack.c.l.b16 %v1146
      %v1254 = vunpack.c.h.b16 %v1146
      %v1255 = vunpack.c.l.b16 %v1147
      %v1256 = vunpack.c.h.b16 %v1147
      %v1257 = vunpack.c.l.b16 %v1148
      %v1258 = vunpack.c.h.b16 %v1148
      %v1259 = vunpack.c.l.b16 %v1149
      %v1260 = vunpack.c.h.b16 %v1149
      %v1261 = vunpack.c.l.b16 %v1150
      %v1262 = vunpack.c.h.b16 %v1150
      %v1263 = vunpack.c.l.b16 %v1151
      %v1264 = vunpack.c.h.b16 %v1151
      %v1265 = vunpack.c.l.b16 %v1152
      %v1266 = vunpack.c.h.b16 %v1152
      %v1267 = vunpack.c.l.b16 %v1153
      %v1268 = vunpack.c.h.b16 %v1153
      %v1269 = vunpack.c.l.b16 %v1154
      %v1270 = vunpack.c.h.b16 %v1154
      %v1271 = vunpack.c.l.b16 %v1155
      %v1272 = vunpack.c.h.b16 %v1155
      %v1273 = vunpack.c.l.b16 %v1156
      %v1274 = vunpack.c.h.b16 %v1156
      %v1275 = vunpack.c.l.b16 %v1157
      %v1276 = vunpack.c.h.b16 %v1157
      %v1277 = vunpack.c.l.b16 %v1158
      %v1278 = vunpack.c.h.b16 %v1158
      %v1279 = vunpack.c.l.b16 %v1159
      %v1280 = vunpack.c.h.b16 %v1159
      %v1281 = vpack.c.b16 %v1219, %v1217
      %v1282 = vpack.c.b16 %v1220, %v1218
      %v1283 = vpack.c.b16 %v1223, %v1221
      %v1284 = vpack.c.b16 %v1224, %v1222
      %v1285 = vpack.c.b16 %v1227, %v1225
      %v1286 = vpack.c.b16 %v1228, %v1226
      %v1287 = vpack.c.b16 %v1231, %v1229
      %v1288 = vpack.c.b16 %v1232, %v1230
      %v1289 = vpack.c.b16 %v1235, %v1233
      %v1290 = vpack.c.b16 %v1236, %v1234
      %v1291 = vpack.c.b16 %v1239, %v1237
      %v1292 = vpack.c.b16 %v1240, %v1238
      %v1293 = vpack.c.b16 %v1243, %v1241
      %v1294 = vpack.c.b16 %v1244, %v1242
      %v1295 = vpack.c.b16 %v1247, %v1245
      %v1296 = vpack.c.b16 %v1248, %v1246
      %v1297 = vpack.c.b16 %v1251, %v1249
      %v1298 = vpack.c.b16 %v1252, %v1250
      %v1299 = vpack.c.b16 %v1255, %v1253
      %v1300 = vpack.c.b16 %v1256, %v1254
      %v1301 = vpack.c.b16 %v1259, %v1257
      %v1302 = vpack.c.b16 %v1260, %v1258
      %v1303 = vpack.c.b16 %v1263, %v1261
      %v1304 = vpack.c.b16 %v1264, %v1262
      %v1305 = vpack.c.b16 %v1267, %v1265
      %v1306 = vpack.c.b16 %v1268, %v1266
      %v1307 = vpack.c.b16 %v1271, %v1269
      %v1308 = vpack.c.b16 %v1272, %v1270
      %v1309 = vpack.c.b16 %v1275, %v1273
      %v1310 = vpack.c.b16 %v1276, %v1274
      %v1311 = vpack.c.b16 %v1279, %v1277
      %v1312 = vpack.c.b16 %v1280, %v1278
      %1345 = vmatprep.subr.bf16.mxu0 %v1282
      %1346 = vmatpush1.bf16.msra.mxu0 %v1281
      %1347 = vmatprep.subr.bf16.mxu0 %v1284
      %1348 = vmatpush1.bf16.msra.mxu0 %v1283
      %1349 = vmatprep.subr.bf16.mxu0 %v1286
      %1350 = vmatpush1.bf16.msra.mxu0 %v1285
      %1351 = vmatprep.subr.bf16.mxu0 %v1288
      %1352 = vmatpush1.bf16.msra.mxu0 %v1287
      %1353 = vmatprep.subr.bf16.mxu0 %v1290
      %1354 = vmatpush1.bf16.msra.mxu0 %v1289
      %1355 = vmatprep.subr.bf16.mxu0 %v1292
      %1356 = vmatpush1.bf16.msra.mxu0 %v1291
      %1357 = vmatprep.subr.bf16.mxu0 %v1294
      %1358 = vmatpush1.bf16.msra.mxu0 %v1293
      %1359 = vmatprep.subr.bf16.mxu0 %v1296
      %1360 = vmatpush1.bf16.msra.mxu0 %v1295
      %1361 = vmatprep.subr.bf16.mxu0 %v1298
      %1362 = vmatpush1.bf16.msra.mxu0 %v1297
      %1363 = vmatprep.subr.bf16.mxu0 %v1300
      %1364 = vmatpush1.bf16.msra.mxu0 %v1299
      %1365 = vmatprep.subr.bf16.mxu0 %v1302
      %1366 = vmatpush1.bf16.msra.mxu0 %v1301
      %1367 = vmatprep.subr.bf16.mxu0 %v1304
      %1368 = vmatpush1.bf16.msra.mxu0 %v1303
      %1369 = vmatprep.subr.bf16.mxu0 %v1306
      %1370 = vmatpush1.bf16.msra.mxu0 %v1305
      %1371 = vmatprep.subr.bf16.mxu0 %v1308
      %1372 = vmatpush1.bf16.msra.mxu0 %v1307
      %1373 = vmatprep.subr.bf16.mxu0 %v1310
      %1374 = vmatpush1.bf16.msra.mxu0 %v1309
      %1375 = vmatprep.subr.bf16.mxu0 %v1312
      %1376 = vmatpush1.bf16.msra.mxu0 %v1311
      %1377 = vmatprep.mubr.bf16.mxu0 %v1182
      %1378 = vmatmul.mubr.bf16.gmra.mrb[0].mxu0 %v1175
      %v1379 = vpop.f32.mrb[0].mxu0
      %v1380 = vadd.f32 0.0, %v1379
      %v1381 = vpop.f32.mrb[0].mxu0
      %v1382 = vadd.f32 0.0, %v1381
      %v1383 = vpop.f32.mrb[0].mxu0
      %v1384 = vpop.f32.mrb[0].mxu0
      %1385 = vdwg.mxu0
      %v1386 = vld [vmem:[%s4] sm:$0xf]
      %v1387 = vld [vmem:[%s4 + $0x4] sm:$0xf]
      %v1388 = vld [vmem:[%s4 + $0x8] sm:$0xf]
      %v1389 = vld [vmem:[%s4 + $0xc] sm:$0xf]
      %v1390 = vld [vmem:[%s4 + $0x10] sm:$0xf]
      %v1391 = vld [vmem:[%s4 + $0x14] sm:$0xf]
      %v1392 = vld [vmem:[%s4 + $0x18] sm:$0xf]
      %v1393 = vld [vmem:[%s4 + $0x1c] sm:$0xf]
      %v1394 = vld [vmem:[%s4 + $0x20] sm:$0xf]
      %v1395 = vld [vmem:[%s4 + $0x24] sm:$0xf]
      %v1396 = vld [vmem:[%s4 + $0x28] sm:$0xf]
      %v1397 = vld [vmem:[%s4 + $0x2c] sm:$0xf]
      %v1398 = vld [vmem:[%s4 + $0x30] sm:$0xf]
      %v1399 = vld [vmem:[%s4 + $0x34] sm:$0xf]
      %v1400 = vld [vmem:[%s4 + $0x38] sm:$0xf]
      %v1401 = vld [vmem:[%s4 + $0x3c] sm:$0xf]
      %v1402 = vld [vmem:[%s4 + $0x40] sm:$0xf]
      %v1403 = vld [vmem:[%s4 + $0x44] sm:$0xf]
      %v1404 = vld [vmem:[%s4 + $0x48] sm:$0xf]
      %v1405 = vld [vmem:[%s4 + $0x4c] sm:$0xf]
      %v1406 = vld [vmem:[%s4 + $0x50] sm:$0xf]
      %v1407 = vld [vmem:[%s4 + $0x54] sm:$0xf]
      %v1408 = vld [vmem:[%s4 + $0x58] sm:$0xf]
      %v1409 = vld [vmem:[%s4 + $0x5c] sm:$0xf]
      %v1410 = vld [vmem:[%s4 + $0x60] sm:$0xf]
      %v1411 = vld [vmem:[%s4 + $0x64] sm:$0xf]
      %v1412 = vld [vmem:[%s4 + $0x68] sm:$0xf]
      %v1413 = vld [vmem:[%s4 + $0x6c] sm:$0xf]
      %v1414 = vld [vmem:[%s4 + $0x70] sm:$0xf]
      %v1415 = vld [vmem:[%s4 + $0x74] sm:$0xf]
      %v1416 = vld [vmem:[%s4 + $0x78] sm:$0xf]
      %v1417 = vld [vmem:[%s4 + $0x7c] sm:$0xf]
      %v1418 = vcombine.low %v369, %v378
      %v1420 = vunpack.c.l.s4 1966171168
      %v1421 = vunpack.c.0.s8 %v1420
      %v1422 = vlaneseq
      %v1423 = vshrl.u32 %v1422, 7
      %v1424 = vsub.s32 %v1421, %v1423
      %v1425 = vrot.slane %v1418, %v1424
      %v1426 = vcombine.high %v1425, %v1425
      %v1428 = vunpack.c.l.s4 1966171168
      %v1429 = vunpack.c.0.s8 %v1428
      %v1430 = vlaneseq
      %v1431 = vshrl.u32 %v1430, 7
      %v1432 = vsub.s32 %v1429, %v1431
      %v1433 = vrot.slane %v1425, %v1432
      %v1435 = vunpack.c.l.s4 1966171168
      %v1436 = vunpack.c.0.s8 %v1435
      %v1437 = vlaneseq
      %v1438 = vshrl.u32 %v1437, 7
      %v1439 = vsub.s32 %v1436, %v1438
      %v1440 = vrot.slane %v1426, %v1439
      %v1475 = vunpack.c.l.b16 %v1386
      %v1476 = vunpack.c.l.b16 %v1387
      %v1477 = vunpack.c.l.b16 %v1388
      %v1478 = vunpack.c.l.b16 %v1389
      %v1479 = vunpack.c.l.b16 %v1390
      %v1480 = vunpack.c.l.b16 %v1391
      %v1481 = vunpack.c.l.b16 %v1392
      %v1482 = vunpack.c.l.b16 %v1393
      %v1483 = vunpack.c.l.b16 %v1394
      %v1484 = vunpack.c.l.b16 %v1395
      %v1485 = vunpack.c.l.b16 %v1396
      %v1486 = vunpack.c.l.b16 %v1397
      %v1487 = vunpack.c.l.b16 %v1398
      %v1488 = vunpack.c.l.b16 %v1399
      %v1489 = vunpack.c.l.b16 %v1400
      %v1490 = vunpack.c.l.b16 %v1401
      %v1491 = vunpack.c.l.b16 %v1402
      %v1492 = vunpack.c.l.b16 %v1403
      %v1493 = vunpack.c.l.b16 %v1404
      %v1494 = vunpack.c.l.b16 %v1405
      %v1495 = vunpack.c.l.b16 %v1406
      %v1496 = vunpack.c.l.b16 %v1407
      %v1497 = vunpack.c.l.b16 %v1408
      %v1498 = vunpack.c.l.b16 %v1409
      %v1499 = vunpack.c.l.b16 %v1410
      %v1500 = vunpack.c.l.b16 %v1411
      %v1501 = vunpack.c.l.b16 %v1412
      %v1502 = vunpack.c.l.b16 %v1413
      %v1503 = vunpack.c.l.b16 %v1414
      %v1504 = vunpack.c.l.b16 %v1415
      %v1505 = vunpack.c.l.b16 %v1416
      %v1506 = vunpack.c.l.b16 %v1417
      %v1507 = vpack.c.b16 %v1476, %v1475
      %v1508 = vpack.c.b16 %v1478, %v1477
      %v1509 = vpack.c.b16 %v1480, %v1479
      %v1510 = vpack.c.b16 %v1482, %v1481
      %v1511 = vpack.c.b16 %v1484, %v1483
      %v1512 = vpack.c.b16 %v1486, %v1485
      %v1513 = vpack.c.b16 %v1488, %v1487
      %v1514 = vpack.c.b16 %v1490, %v1489
      %v1515 = vpack.c.b16 %v1492, %v1491
      %v1516 = vpack.c.b16 %v1494, %v1493
      %v1517 = vpack.c.b16 %v1496, %v1495
      %v1518 = vpack.c.b16 %v1498, %v1497
      %v1519 = vpack.c.b16 %v1500, %v1499
      %v1520 = vpack.c.b16 %v1502, %v1501
      %v1521 = vpack.c.b16 %v1504, %v1503
      %v1522 = vpack.c.b16 %v1506, %v1505
      %1539 = vmatprep.subr.bf16.mxu0 0
      %1540 = vmatpush1.bf16.msra.mxu0 %v1507
      %1541 = vmatprep.subr.bf16.mxu0 0
      %1542 = vmatpush1.bf16.msra.mxu0 %v1508
      %1543 = vmatprep.subr.bf16.mxu0 0
      %1544 = vmatpush1.bf16.msra.mxu0 %v1509
      %1545 = vmatprep.subr.bf16.mxu0 0
      %1546 = vmatpush1.bf16.msra.mxu0 %v1510
      %1547 = vmatprep.subr.bf16.mxu0 0
      %1548 = vmatpush1.bf16.msra.mxu0 %v1511
      %1549 = vmatprep.subr.bf16.mxu0 0
      %1550 = vmatpush1.bf16.msra.mxu0 %v1512
      %1551 = vmatprep.subr.bf16.mxu0 0
      %1552 = vmatpush1.bf16.msra.mxu0 %v1513
      %1553 = vmatprep.subr.bf16.mxu0 0
      %1554 = vmatpush1.bf16.msra.mxu0 %v1514
      %1555 = vmatprep.subr.bf16.mxu0 0
      %1556 = vmatpush1.bf16.msra.mxu0 %v1515
      %1557 = vmatprep.subr.bf16.mxu0 0
      %1558 = vmatpush1.bf16.msra.mxu0 %v1516
      %1559 = vmatprep.subr.bf16.mxu0 0
      %1560 = vmatpush1.bf16.msra.mxu0 %v1517
      %1561 = vmatprep.subr.bf16.mxu0 0
      %1562 = vmatpush1.bf16.msra.mxu0 %v1518
      %1563 = vmatprep.subr.bf16.mxu0 0
      %1564 = vmatpush1.bf16.msra.mxu0 %v1519
      %1565 = vmatprep.subr.bf16.mxu0 0
      %1566 = vmatpush1.bf16.msra.mxu0 %v1520
      %1567 = vmatprep.subr.bf16.mxu0 0
      %1568 = vmatpush1.bf16.msra.mxu0 %v1521
      %1569 = vmatprep.subr.bf16.mxu0 0
      %1570 = vmatpush1.bf16.msra.mxu0 %v1522
      %1571 = vmatprep.mubr.bf16.mxu0 %v1440
      %1572 = vmatmul.mubr.bf16.gmra.mrb[0].mxu0 %v1433
      %v1573 = vpop.f32.mrb[0].mxu0
      %v1574 = vadd.f32 0.0, %v1573
      %v1575 = vpop.f32.mrb[0].mxu0
      %v1576 = vpop.f32.mrb[0].mxu0
      %v1577 = vpop.f32.mrb[0].mxu0
      %1578 = vdwg.mxu0
      %v1579 = vld [vmem:[%s5] sm:$0x1]
      %v1581 = vlaneseq
      %v1582 = vshrl.u32 %v1581, 7
      %v1583 = vsub.s32 0, %v1582
      %v1584 = vrot.slane %v1579, %v1583
      %v1586 = vadd.f32 %v823, %v1584
      %v1587 = vadd.f32 %v825, %v1122
      %v1588 = vadd.f32 %v1587, %v1584
      %v1589 = vadd.f32 %v864, %v1380
      %v1590 = vadd.f32 %v1589, %v1584
      %v1591 = vadd.f32 %v866, %v1124
      %v1592 = vadd.f32 %v1591, %v1382
      %v1593 = vadd.f32 %v1592, %v1574
      %v1594 = vadd.f32 %v1593, %v1584
      %v1595 = vmax.f32 %v1586, 0.0
      %v1596 = vmax.f32 %v1588, 0.0
      %v1597 = vmax.f32 %v1590, 0.0
      %v1598 = vmax.f32 %v1594, 0.0
      %v1601 = vcombine.low %v1595, %v1596
      %v1603 = vunpack.c.l.s4 1983009808
      %v1604 = vunpack.c.0.s8 %v1603
      %v1605 = vlaneseq
      %v1606 = vshrl.u32 %v1605, 7
      %v1607 = vsub.s32 %v1604, %v1606
      %v1608 = vrot.slane %v1601, %v1607
      %v1609 = vcombine.high %v1608, %v1608
      %v1612 = vcombine.low %v1597, %v1598
      %v1614 = vunpack.c.l.s4 1983009808
      %v1615 = vunpack.c.0.s8 %v1614
      %v1616 = vlaneseq
      %v1617 = vshrl.u32 %v1616, 7
      %v1618 = vsub.s32 %v1615, %v1617
      %v1619 = vrot.slane %v1612, %v1618
      %v1620 = vcombine.high %v1619, %v1619
      %v1622 = vunpack.c.l.s4 1983009808
      %v1623 = vunpack.c.0.s8 %v1622
      %v1624 = vlaneseq
      %v1625 = vshrl.u32 %v1624, 7
      %v1626 = vsub.s32 %v1623, %v1625
      %v1627 = vrot.slane %v1608, %v1626
      %v1628 = vcombine.high %v1627, %v1627
      %v1630 = vunpack.c.l.s4 1983009808
      %v1631 = vunpack.c.0.s8 %v1630
      %v1632 = vlaneseq
      %v1633 = vshrl.u32 %v1632, 7
      %v1634 = vsub.s32 %v1631, %v1633
      %v1635 = vrot.slane %v1609, %v1634
      %v1636 = vcombine.high %v1635, %v1635
      %v1641 = vpack.c.bf16 %v1627, %v1627
      %v1642 = vpack.c.bf16 %v1628, %v1628
      %v1643 = vpack.c.bf16 %v1635, %v1635
      %v1644 = vpack.c.bf16 %v1636, %v1636
      %v1649 = vcombine.low %v1641, %v1642
      %v1651 = vunpack.c.l.s4 1966171168
      %v1652 = vunpack.c.0.s8 %v1651
      %v1653 = vlaneseq
      %v1654 = vshrl.u32 %v1653, 7
      %v1655 = vsub.s32 %v1652, %v1654
      %v1656 = vrot.slane %v1649, %v1655
      %v1658 = vunpack.c.l.s4 1966171168
      %v1659 = vunpack.c.0.s8 %v1658
      %v1660 = vlaneseq
      %v1661 = vshrl.u32 %v1660, 7
      %v1662 = vsub.s32 %v1659, %v1661
      %v1663 = vrot.slane %v1656, %v1662
      %v1664 = vcombine.low %v1643, %v1644
      %v1666 = vunpack.c.l.s4 1966171168
      %v1667 = vunpack.c.0.s8 %v1666
      %v1668 = vlaneseq
      %v1669 = vshrl.u32 %v1668, 7
      %v1670 = vsub.s32 %v1667, %v1669
      %v1671 = vrot.slane %v1664, %v1670
      %v1673 = vunpack.c.l.s4 1966171168
      %v1674 = vunpack.c.0.s8 %v1673
      %v1675 = vlaneseq
      %v1676 = vshrl.u32 %v1675, 7
      %v1677 = vsub.s32 %v1674, %v1676
      %v1678 = vrot.slane %v1671, %v1677
      %1681 = vst [vmem:[%s249] sm:$0x3] %v1663
      %1682 = vst [vmem:[%s249 + $0x4] sm:$0x3] %v1678
      %v1684 = vunpack.c.l.s4 1983009808
      %v1685 = vunpack.c.0.s8 %v1684
      %v1686 = vlaneseq
      %v1687 = vshrl.u32 %v1686, 7
      %v1688 = vsub.s32 %v1685, %v1687
      %v1689 = vrot.slane %v1619, %v1688
      %v1690 = vcombine.high %v1689, %v1689
      %v1692 = vunpack.c.l.s4 1983009808
      %v1693 = vunpack.c.0.s8 %v1692
      %v1694 = vlaneseq
      %v1695 = vshrl.u32 %v1694, 7
      %v1696 = vsub.s32 %v1693, %v1695
      %v1697 = vrot.slane %v1620, %v1696
      %v1698 = vcombine.high %v1697, %v1697
      %v1703 = vpack.c.bf16 %v1689, %v1689
      %v1704 = vpack.c.bf16 %v1690, %v1690
      %v1705 = vpack.c.bf16 %v1697, %v1697
      %v1706 = vpack.c.bf16 %v1698, %v1698
      %v1711 = vcombine.low %v1703, %v1704
      %v1713 = vunpack.c.l.s4 1966171168
      %v1714 = vunpack.c.0.s8 %v1713
      %v1715 = vlaneseq
      %v1716 = vshrl.u32 %v1715, 7
      %v1717 = vsub.s32 %v1714, %v1716
      %v1718 = vrot.slane %v1711, %v1717
      %v1720 = vunpack.c.l.s4 1966171168
      %v1721 = vunpack.c.0.s8 %v1720
      %v1722 = vlaneseq
      %v1723 = vshrl.u32 %v1722, 7
      %v1724 = vsub.s32 %v1721, %v1723
      %v1725 = vrot.slane %v1718, %v1724
      %v1726 = vcombine.low %v1705, %v1706
      %v1728 = vunpack.c.l.s4 1966171168
      %v1729 = vunpack.c.0.s8 %v1728
      %v1730 = vlaneseq
      %v1731 = vshrl.u32 %v1730, 7
      %v1732 = vsub.s32 %v1729, %v1731
      %v1733 = vrot.slane %v1726, %v1732
      %v1735 = vunpack.c.l.s4 1966171168
      %v1736 = vunpack.c.0.s8 %v1735
      %v1737 = vlaneseq
      %v1738 = vshrl.u32 %v1737, 7
      %v1739 = vsub.s32 %v1736, %v1738
      %v1740 = vrot.slane %v1733, %v1739
      %s1743 = scalar_lea.vmem %s249, 2
      %1744 = vst [vmem:[%s1743] sm:$0x3] %v1725
      %1745 = vst [vmem:[%s1743 + $0x4] sm:$0x3] %v1740
      %p1746 = scmp.lt.s32.totalorder %s17, 1
      %s1747 = scalar_select %p1746, %s17, 1
      %s1748 = smul.addr %s1747, 8
      %s1749 = scalar_lea.vmem %s6, %s1748
      // Predicated region
      $region45: #{autoencoder_forward.9} parent=43 // pred_check
        %p1750 = pneg %p166
      $region46: #{autoencoder_forward.9} parent=43 // pred_check_branch
        %1752 = sbr.rel (%p1750) target = $region48
      $region47: #{autoencoder_forward.9} parent=43 // pred_region
        _
      $region48: #{autoencoder_forward.9} parent=43 // pred_fallthru
        _
    $region44: #{autoencoder_forward.9} parent=5 // pred_fallthru
      _
    %p1753 = scmp.le.s32.totalorder 2, %s12
    // Predicated region
    $region49: #{autoencoder_forward.9} parent=5 // pred_check
      %p1754 = pneg %p1753
    $region50: #{autoencoder_forward.9} parent=5 // pred_check_branch
      %1756 = sbr.rel (%p1754) target = $region52
    $region51: #{autoencoder_forward.9} parent=5 // pred_region
      %s1757 = ssub.s32 %s12, 2
      // Predicated region
      $region53: #{autoencoder_forward.9} parent=51 // pred_check
        %p1758 = pneg %p172
      $region54: #{autoencoder_forward.9} parent=51 // pred_check_branch
        %1760 = sbr.rel (%p1758) target = $region56
      $region55: #{autoencoder_forward.9} parent=51 // pred_region
        %p1761 = scmp.lt.s32.totalorder %s18, 1
        %s1762 = scalar_select %p1761, %s18, 1
        %s1763 = smul.addr %s1762, 8
        %s1764 = scalar_lea.vmem %s6, %s1763
      $region56: #{autoencoder_forward.9} parent=51 // pred_fallthru
        _
    $region52: #{autoencoder_forward.9} parent=5 // pred_fallthru
      _
  $region6: #{autoencoder_forward.9} parent=0 // loop_footer
    %s16 = sadd.s32 1, %s12
  $region7: #{autoencoder_forward.9} parent=0 // loop_footer_branch
    %11 = sbr.rel target = $region3
  $region8: #{autoencoder_forward.9} parent=0 // loop_exit
    _

// kernel: autoencoder_forward.11
$region0: #{autoencoder_forward.11}
  #allocation0 [shape = 'u32[]', space=smem, size = 0x4, offset = 0x4, fixed_abs, tag = 'smem constant byte address 0x4 - core index']
  #allocation1 [shape = 'u32[144,128]{1,0:T(1,128)}', space=vmem, size = 0x12000, scoped, tag = 'internal scratch']
  %s0 = inlined_call_operand.vmem [shape: bf16[2,9,9,64], index: 0, kind: input, shape index: {}]
  %s1 = inlined_call_operand.vmem [shape: bf16[64,512], index: 1, kind: input, shape index: {}]
  %s2 = inlined_call_operand.vmem [shape: bf16[64,256], index: 2, kind: input, shape index: {}]
  %s3 = inlined_call_operand.vmem [shape: bf16[64,256], index: 3, kind: input, shape index: {}]
  %s4 = inlined_call_operand.vmem [shape: bf16[64,128], index: 4, kind: input, shape index: {}]
  %s5 = inlined_call_operand.vmem [shape: f32[1,128], index: 5, kind: input, shape index: {}]
  %s6 = inlined_call_operand.vmem [shape: f32[2,8,2,8,256], index: 6, kind: output, shape index: {}]
  %s7 = sld [smem:[#allocation0]]
  $region57: #{autoencoder_forward.11} parent=0
    _
  %s9 = ssub.s32 1, %s7
  %s10 = scalar_select 0, %s9, %s7
  loop: start=0, step=1, limit=4
  $region2: #{autoencoder_forward.11} parent=0 // loop_pre_header
    _
  $region3: #{autoencoder_forward.11} parent=0 // loop_header
    %s12 = sphi 0, %s16
    %p13 = scmp.ge.s32.totalorder %s12, 4
    %s22 = sphi 0, %s24
    %s25 = sphi 0, %s22
    %s26 = sphi 0, %s25
    %s42 = sphi 0, %s26
    %s46 = sphi 0, %s46
    %s48 = sphi 0, %s46
    %s49 = sphi 0, %s48
    %s63 = sphi 0, %s49
    %s67 = sphi 0, %s67
    %s69 = sphi 0, %s67
    %s70 = sphi 0, %s69
    %s84 = sphi 0, %s70
    %s88 = sphi 0, %s88
    %s90 = sphi 0, %s88
    %s91 = sphi 0, %s90
    %s105 = sphi 0, %s91
    %s109 = sphi 0, %s109
    %s111 = sphi 0, %s109
    %s112 = sphi 0, %s111
    %s126 = sphi 0, %s112
    %s130 = sphi 0, %s130
    %s132 = sphi 0, %s130
    %s133 = sphi 0, %s132
    %s147 = sphi 0, %s133
    %s153 = sphi 0, %s155
    %s156 = sphi 0, %s153
    %s157 = sphi 0, %s156
    %s173 = sphi 0, %s157
  $region4: #{autoencoder_forward.11} parent=0 // loop_header_branch
    %15 = sbr.rel (%p13) target = $region8
  $region5: #{autoencoder_forward.11} parent=0 // loop_body
    %s17 = ssub.s32 %s12, 1
    %s18 = ssub.s32 %s12, 2
    %s19 = sadd.s32 %s12, 1
    %s20 = ssub.s32 %s12, %s19
    %p21 = scmp.eq.s32.totalorder %s20, 0
    %s23 = sadd.s32 %s22, 1
    %s24 = scalar_select %p21, %s22, %s23
    %p27 = pneg %p21
    %p28 = scmp.eq.s32.totalorder %s12, 1
    %p29 = por %p27, %p28
    %p30 = scmp.ne.s32.totalorder %s22, %s25
    %p31 = scmp.eq.s32.totalorder %s12, 0
    %p32 = por %p30, %p31
    %p33 = scmp.ne.s32.totalorder %s22, %s25
    %p34 = scmp.eq.s32.totalorder %s17, 1
    %p35 = por %p33, %p34
    %p36 = scmp.ne.s32.totalorder %s25, %s26
    %p37 = scmp.eq.s32.totalorder %s17, 0
    %p38 = por %p36, %p37
    %p39 = scmp.ne.s32.totalorder %s25, %s26
    %p40 = scmp.eq.s32.totalorder %s18, 1
    %p41 = por %p39, %p40
    %p43 = scmp.ne.s32.totalorder %s26, %s42
    %p44 = scmp.eq.s32.totalorder %s18, 0
    %p45 = por %p43, %p44
    %s47 = sadd.s32 %s46, 1
    %p50 = scmp.eq.s32.totalorder %s12, 1
    %p51 = scmp.ne.s32.totalorder %s46, %s48
    %p52 = scmp.eq.s32.totalorder %s12, 0
    %p53 = por %p51, %p52
    %p54 = scmp.ne.s32.totalorder %s46, %s48
    %p55 = scmp.eq.s32.totalorder %s17, 1
    %p56 = por %p54, %p55
    %p57 = scmp.ne.s32.totalorder %s48, %s49
    %p58 = scmp.eq.s32.totalorder %s17, 0
    %p59 = por %p57, %p58
    %p60 = scmp.ne.s32.totalorder %s48, %s49
    %p61 = scmp.eq.s32.totalorder %s18, 1
    %p62 = por %p60, %p61
    %p64 = scmp.ne.s32.totalorder %s49, %s63
    %p65 = scmp.eq.s32.totalorder %s18, 0
    %p66 = por %p64, %p65
    %s68 = sadd.s32 %s67, 1
    %p71 = scmp.eq.s32.totalorder %s12, 1
    %p72 = scmp.ne.s32.totalorder %s67, %s69
    %p73 = scmp.eq.s32.totalorder %s12, 0
    %p74 = por %p72, %p73
    %p75 = scmp.ne.s32.totalorder %s67, %s69
    %p76 = scmp.eq.s32.totalorder %s17, 1
    %p77 = por %p75, %p76
    %p78 = scmp.ne.s32.totalorder %s69, %s70
    %p79 = scmp.eq.s32.totalorder %s17, 0
    %p80 = por %p78, %p79
    %p81 = scmp.ne.s32.totalorder %s69, %s70
    %p82 = scmp.eq.s32.totalorder %s18, 1
    %p83 = por %p81, %p82
    %p85 = scmp.ne.s32.totalorder %s70, %s84
    %p86 = scmp.eq.s32.totalorder %s18, 0
    %p87 = por %p85, %p86
    %s89 = sadd.s32 %s88, 1
    %p92 = scmp.eq.s32.totalorder %s12, 1
    %p93 = scmp.ne.s32.totalorder %s88, %s90
    %p94 = scmp.eq.s32.totalorder %s12, 0
    %p95 = por %p93, %p94
    %p96 = scmp.ne.s32.totalorder %s88, %s90
    %p97 = scmp.eq.s32.totalorder %s17, 1
    %p98 = por %p96, %p97
    %p99 = scmp.ne.s32.totalorder %s90, %s91
    %p100 = scmp.eq.s32.totalorder %s17, 0
    %p101 = por %p99, %p100
    %p102 = scmp.ne.s32.totalorder %s90, %s91
    %p103 = scmp.eq.s32.totalorder %s18, 1
    %p104 = por %p102, %p103
    %p106 = scmp.ne.s32.totalorder %s91, %s105
    %p107 = scmp.eq.s32.totalorder %s18, 0
    %p108 = por %p106, %p107
    %s110 = sadd.s32 %s109, 1
    %p113 = scmp.eq.s32.totalorder %s12, 1
    %p114 = scmp.ne.s32.totalorder %s109, %s111
    %p115 = scmp.eq.s32.totalorder %s12, 0
    %p116 = por %p114, %p115
    %p117 = scmp.ne.s32.totalorder %s109, %s111
    %p118 = scmp.eq.s32.totalorder %s17, 1
    %p119 = por %p117, %p118
    %p120 = scmp.ne.s32.totalorder %s111, %s112
    %p121 = scmp.eq.s32.totalorder %s17, 0
    %p122 = por %p120, %p121
    %p123 = scmp.ne.s32.totalorder %s111, %s112
    %p124 = scmp.eq.s32.totalorder %s18, 1
    %p125 = por %p123, %p124
    %p127 = scmp.ne.s32.totalorder %s112, %s126
    %p128 = scmp.eq.s32.totalorder %s18, 0
    %p129 = por %p127, %p128
    %s131 = sadd.s32 %s130, 1
    %p134 = scmp.eq.s32.totalorder %s12, 1
    %p135 = scmp.ne.s32.totalorder %s130, %s132
    %p136 = scmp.eq.s32.totalorder %s12, 0
    %p137 = por %p135, %p136
    %p138 = scmp.ne.s32.totalorder %s130, %s132
    %p139 = scmp.eq.s32.totalorder %s17, 1
    %p140 = por %p138, %p139
    %p141 = scmp.ne.s32.totalorder %s132, %s133
    %p142 = scmp.eq.s32.totalorder %s17, 0
    %p143 = por %p141, %p142
    %p144 = scmp.ne.s32.totalorder %s132, %s133
    %p145 = scmp.eq.s32.totalorder %s18, 1
    %p146 = por %p144, %p145
    %p148 = scmp.ne.s32.totalorder %s133, %s147
    %p149 = scmp.eq.s32.totalorder %s18, 0
    %p150 = por %p148, %p149
    %s151 = ssub.s32 %s12, %s19
    %p152 = scmp.eq.s32.totalorder %s151, 0
    %s154 = sadd.s32 %s153, 1
    %s155 = scalar_select %p152, %s153, %s154
    %p158 = pneg %p152
    %p159 = scmp.eq.s32.totalorder %s12, 1
    %p160 = por %p158, %p159
    %p161 = scmp.ne.s32.totalorder %s153, %s156
    %p162 = scmp.eq.s32.totalorder %s12, 0
    %p163 = por %p161, %p162
    %p164 = scmp.ne.s32.totalorder %s153, %s156
    %p165 = scmp.eq.s32.totalorder %s17, 1
    %p166 = por %p164, %p165
    %p167 = scmp.ne.s32.totalorder %s156, %s157
    %p168 = scmp.eq.s32.totalorder %s17, 0
    %p169 = por %p167, %p168
    %p170 = scmp.ne.s32.totalorder %s156, %s157
    %p171 = scmp.eq.s32.totalorder %s18, 1
    %p172 = por %p170, %p171
    %p174 = scmp.ne.s32.totalorder %s157, %s173
    %p175 = scmp.eq.s32.totalorder %s18, 0
    %p176 = por %p174, %p175
    %p177 = scmp.le.s32.totalorder 1, %s12
    %p178 = scmp.lt.s32.totalorder %s12, 3
    %p179 = pnand %p177, %p178
    %p180 = pneg %p179
    // Predicated region
    $region9: #{autoencoder_forward.11} parent=5 // pred_check
      _
    $region10: #{autoencoder_forward.11} parent=5 // pred_check_branch
      %182 = sbr.rel (%p179) target = $region12
    $region11: #{autoencoder_forward.11} parent=5 // pred_region
      %s183 = ssub.s32 %s12, 1
      // Predicated region
      $region13: #{autoencoder_forward.11} parent=11 // pred_check
        %p184 = pneg %p59
      $region14: #{autoencoder_forward.11} parent=11 // pred_check_branch
        %186 = sbr.rel (%p184) target = $region16
      $region15: #{autoencoder_forward.11} parent=11 // pred_region
        _
      $region16: #{autoencoder_forward.11} parent=11 // pred_fallthru
        _
      // Predicated region
      $region17: #{autoencoder_forward.11} parent=11 // pred_check
        %p187 = pneg %p80
      $region18: #{autoencoder_forward.11} parent=11 // pred_check_branch
        %189 = sbr.rel (%p187) target = $region20
      $region19: #{autoencoder_forward.11} parent=11 // pred_region
        _
      $region20: #{autoencoder_forward.11} parent=11 // pred_fallthru
        _
      // Predicated region
      $region21: #{autoencoder_forward.11} parent=11 // pred_check
        %p190 = pneg %p101
      $region22: #{autoencoder_forward.11} parent=11 // pred_check_branch
        %192 = sbr.rel (%p190) target = $region24
      $region23: #{autoencoder_forward.11} parent=11 // pred_region
        _
      $region24: #{autoencoder_forward.11} parent=11 // pred_fallthru
        _
      // Predicated region
      $region25: #{autoencoder_forward.11} parent=11 // pred_check
        %p193 = pneg %p122
      $region26: #{autoencoder_forward.11} parent=11 // pred_check_branch
        %195 = sbr.rel (%p193) target = $region28
      $region27: #{autoencoder_forward.11} parent=11 // pred_region
        _
      $region28: #{autoencoder_forward.11} parent=11 // pred_fallthru
        _
      // Predicated region
      $region29: #{autoencoder_forward.11} parent=11 // pred_check
        %p196 = pneg %p143
      $region30: #{autoencoder_forward.11} parent=11 // pred_check_branch
        %198 = sbr.rel (%p196) target = $region32
      $region31: #{autoencoder_forward.11} parent=11 // pred_region
        _
      $region32: #{autoencoder_forward.11} parent=11 // pred_fallthru
        _
    $region12: #{autoencoder_forward.11} parent=5 // pred_fallthru
      _
    %p199 = scmp.lt.s32.totalorder %s12, 2
    // Predicated region
    $region33: #{autoencoder_forward.11} parent=5 // pred_check
      %p200 = pneg %p199
    $region34: #{autoencoder_forward.11} parent=5 // pred_check_branch
      %202 = sbr.rel (%p200) target = $region36
    $region35: #{autoencoder_forward.11} parent=5 // pred_region
      // Predicated region
      $region37: #{autoencoder_forward.11} parent=35 // pred_check
        %p203 = pneg %p32
      $region38: #{autoencoder_forward.11} parent=35 // pred_check_branch
        %205 = sbr.rel (%p203) target = $region40
      $region39: #{autoencoder_forward.11} parent=35 // pred_region
        %p206 = scmp.lt.s32.totalorder %s12, 1
        %s207 = scalar_select %p206, %s12, 1
        %s208 = smul.addr %s207, 18
        %s209 = smul.addr %s208, 4
        %s210 = scalar_lea.vmem %s0, %s209
      $region40: #{autoencoder_forward.11} parent=35 // pred_fallthru
        _
    $region36: #{autoencoder_forward.11} parent=5 // pred_fallthru
      _
    %p211 = scmp.le.s32.totalorder 1, %s12
    %p212 = scmp.lt.s32.totalorder %s12, 3
    %p213 = pnand %p211, %p212
    %p214 = pneg %p213
    // Predicated region
    $region41: #{autoencoder_forward.11} parent=5 // pred_check
      _
    $region42: #{autoencoder_forward.11} parent=5 // pred_check_branch
      %216 = sbr.rel (%p213) target = $region44
    $region43: #{autoencoder_forward.11} parent=5 // pred_region
      %s217 = ssub.s32 %s12, 1
      %p218 = scmp.lt.s32.totalorder %s17, 1
      %s219 = scalar_select %p218, %s17, 1
      %s220 = smul.addr %s219, 18
      %s221 = smul.addr %s220, 4
      %s222 = scalar_lea.vmem %s0, %s221
      %p223 = pneg %p38
      %p224 = pneg %p35
      %p225 = pneg %p59
      %p226 = pneg %p56
      %p227 = pneg %p80
      %p228 = pneg %p77
      %p229 = pneg %p101
      %p230 = pneg %p98
      %p231 = pneg %p122
      %p232 = pneg %p119
      %p233 = pneg %p143
      %p234 = pneg %p140
      %p235 = pneg %p169
      %p236 = pneg %p166
      %p237 = scmp.lt.s32.totalorder %s17, 1
      %s238 = scalar_select %p237, %s17, 1
      %s239 = smul.addr %s238, 32
      %s240 = smul.addr %s239, 8
      %s241 = scalar_lea.vmem %s6, %s240
      %p242 = scmp.lt.s32.totalorder %s17, 1
      %s243 = scalar_select %p242, %s17, 1
      %s244 = smul.addr %s243, 18
      %s245 = smul.addr %s244, 4
      %s246 = scalar_lea.vmem %s0, %s245
      %p247 = scmp.lt.s32.totalorder %s17, 1
      %s248 = scalar_select %p247, %s17, 1
      %s249 = smul.addr %s248, 32
      %s250 = smul.addr %s249, 8
      %s251 = scalar_lea.vmem %s6, %s250
      %v253 = vld [vmem:[%s246] sm:$0xf]
      %v254 = vld [vmem:[%s246 + $0x8] sm:$0xf]
      %v255 = vld [vmem:[%s246 + $0x10] sm:$0xf]
      %v256 = vld [vmem:[%s246 + $0x18] sm:$0xf]
      %v257 = vld [vmem:[%s246 + $0x20] sm:$0xf]
      %v258 = vld [vmem:[%s246 + $0x28] sm:$0xf]
      %v259 = vld [vmem:[%s246 + $0x30] sm:$0xf]
      %v260 = vld [vmem:[%s246 + $0x38] sm:$0xf]
      %v261 = vld [vmem:[%s246 + $0x4] sm:$0x1]
      %v262 = vld [vmem:[%s246 + $0xc] sm:$0x1]
      %v263 = vld [vmem:[%s246 + $0x14] sm:$0x1]
      %v264 = vld [vmem:[%s246 + $0x1c] sm:$0x1]
      %v265 = vld [vmem:[%s246 + $0x24] sm:$0x1]
      %v266 = vld [vmem:[%s246 + $0x2c] sm:$0x1]
      %v267 = vld [vmem:[%s246 + $0x34] sm:$0x1]
      %v268 = vld [vmem:[%s246 + $0x3c] sm:$0x1]
      %vm269 = vsmask.f32 3328
      %vm270 = vsmask.f32 7440
      %vm271 = vmor %vm269, %vm270
      %v273 = vshrl.u32 %v253, 16
      %v275 = vrot.slane %v273, 4
      %v276 = vshll.u32 %v253, 16
      %v278 = vrot.slane %v276, 5
      %v279 = vor.u32 %v275, %v278
      %v280 = vrot.slane %v279, 4
      %v282 = vshll.u32 %v261, 16
      %v284 = vrot.slane %v282, 5
      %v285 = vsel %vm271, %v280, %v284
      %v287 = vshrl.u32 %v254, 16
      %v289 = vrot.slane %v287, 4
      %v290 = vshll.u32 %v254, 16
      %v292 = vrot.slane %v290, 5
      %v293 = vor.u32 %v289, %v292
      %v294 = vrot.slane %v293, 4
      %v296 = vshll.u32 %v262, 16
      %v298 = vrot.slane %v296, 5
      %v299 = vsel %vm271, %v294, %v298
      %v301 = vshrl.u32 %v255, 16
      %v303 = vrot.slane %v301, 4
      %v304 = vshll.u32 %v255, 16
      %v306 = vrot.slane %v304, 5
      %v307 = vor.u32 %v303, %v306
      %v308 = vrot.slane %v307, 4
      %v310 = vshll.u32 %v263, 16
      %v312 = vrot.slane %v310, 5
      %v313 = vsel %vm271, %v308, %v312
      %v315 = vshrl.u32 %v256, 16
      %v317 = vrot.slane %v315, 4
      %v318 = vshll.u32 %v256, 16
      %v320 = vrot.slane %v318, 5
      %v321 = vor.u32 %v317, %v320
      %v322 = vrot.slane %v321, 4
      %v324 = vshll.u32 %v264, 16
      %v326 = vrot.slane %v324, 5
      %v327 = vsel %vm271, %v322, %v326
      %v329 = vshrl.u32 %v257, 16
      %v331 = vrot.slane %v329, 4
      %v332 = vshll.u32 %v257, 16
      %v334 = vrot.slane %v332, 5
      %v335 = vor.u32 %v331, %v334
      %v336 = vrot.slane %v335, 4
      %v338 = vshll.u32 %v265, 16
      %v340 = vrot.slane %v338, 5
      %v341 = vsel %vm271, %v336, %v340
      %v343 = vshrl.u32 %v258, 16
      %v345 = vrot.slane %v343, 4
      %v346 = vshll.u32 %v258, 16
      %v348 = vrot.slane %v346, 5
      %v349 = vor.u32 %v345, %v348
      %v350 = vrot.slane %v349, 4
      %v352 = vshll.u32 %v266, 16
      %v354 = vrot.slane %v352, 5
      %v355 = vsel %vm271, %v350, %v354
      %v357 = vshrl.u32 %v259, 16
      %v359 = vrot.slane %v357, 4
      %v360 = vshll.u32 %v259, 16
      %v362 = vrot.slane %v360, 5
      %v363 = vor.u32 %v359, %v362
      %v364 = vrot.slane %v363, 4
      %v366 = vshll.u32 %v267, 16
      %v368 = vrot.slane %v366, 5
      %v369 = vsel %vm271, %v364, %v368
      %v371 = vshrl.u32 %v260, 16
      %v373 = vrot.slane %v371, 4
      %v374 = vshll.u32 %v260, 16
      %v376 = vrot.slane %v374, 5
      %v377 = vor.u32 %v373, %v376
      %v378 = vrot.slane %v377, 4
      %v380 = vshll.u32 %v268, 16
      %v382 = vrot.slane %v380, 5
      %v383 = vsel %vm271, %v378, %v382
      %s384 = scalar_lea.vmem %s246, 8
      %v385 = vld [vmem:[%s384] sm:$0xf]
      %v386 = vld [vmem:[%s384 + $0x8] sm:$0xf]
      %v387 = vld [vmem:[%s384 + $0x10] sm:$0xf]
      %v388 = vld [vmem:[%s384 + $0x18] sm:$0xf]
      %v389 = vld [vmem:[%s384 + $0x20] sm:$0xf]
      %v390 = vld [vmem:[%s384 + $0x28] sm:$0xf]
      %v391 = vld [vmem:[%s384 + $0x30] sm:$0xf]
      %v392 = vld [vmem:[%s384 + $0x38] sm:$0xf]
      %v393 = vld [vmem:[%s384 + $0x4] sm:$0x1]
      %v394 = vld [vmem:[%s384 + $0xc] sm:$0x1]
      %v395 = vld [vmem:[%s384 + $0x14] sm:$0x1]
      %v396 = vld [vmem:[%s384 + $0x1c] sm:$0x1]
      %v397 = vld [vmem:[%s384 + $0x24] sm:$0x1]
      %v398 = vld [vmem:[%s384 + $0x2c] sm:$0x1]
      %v399 = vld [vmem:[%s384 + $0x34] sm:$0x1]
      %v400 = vld [vmem:[%s384 + $0x3c] sm:$0x1]
      %v402 = vshrl.u32 %v385, 16
      %v404 = vrot.slane %v402, 4
      %v405 = vshll.u32 %v385, 16
      %v407 = vrot.slane %v405, 5
      %v408 = vor.u32 %v404, %v407
      %v409 = vrot.slane %v408, 4
      %v411 = vshll.u32 %v393, 16
      %v413 = vrot.slane %v411, 5
      %v414 = vsel %vm271, %v409, %v413
      %v416 = vshrl.u32 %v386, 16
      %v418 = vrot.slane %v416, 4
      %v419 = vshll.u32 %v386, 16
      %v421 = vrot.slane %v419, 5
      %v422 = vor.u32 %v418, %v421
      %v423 = vrot.slane %v422, 4
      %v425 = vshll.u32 %v394, 16
      %v427 = vrot.slane %v425, 5
      %v428 = vsel %vm271, %v423, %v427
      %v430 = vshrl.u32 %v387, 16
      %v432 = vrot.slane %v430, 4
      %v433 = vshll.u32 %v387, 16
      %v435 = vrot.slane %v433, 5
      %v436 = vor.u32 %v432, %v435
      %v437 = vrot.slane %v436, 4
      %v439 = vshll.u32 %v395, 16
      %v441 = vrot.slane %v439, 5
      %v442 = vsel %vm271, %v437, %v441
      %v444 = vshrl.u32 %v388, 16
      %v446 = vrot.slane %v444, 4
      %v447 = vshll.u32 %v388, 16
      %v449 = vrot.slane %v447, 5
      %v450 = vor.u32 %v446, %v449
      %v451 = vrot.slane %v450, 4
      %v453 = vshll.u32 %v396, 16
      %v455 = vrot.slane %v453, 5
      %v456 = vsel %vm271, %v451, %v455
      %v458 = vshrl.u32 %v389, 16
      %v460 = vrot.slane %v458, 4
      %v461 = vshll.u32 %v389, 16
      %v463 = vrot.slane %v461, 5
      %v464 = vor.u32 %v460, %v463
      %v465 = vrot.slane %v464, 4
      %v467 = vshll.u32 %v397, 16
      %v469 = vrot.slane %v467, 5
      %v470 = vsel %vm271, %v465, %v469
      %v472 = vshrl.u32 %v390, 16
      %v474 = vrot.slane %v472, 4
      %v475 = vshll.u32 %v390, 16
      %v477 = vrot.slane %v475, 5
      %v478 = vor.u32 %v474, %v477
      %v479 = vrot.slane %v478, 4
      %v481 = vshll.u32 %v398, 16
      %v483 = vrot.slane %v481, 5
      %v484 = vsel %vm271, %v479, %v483
      %v486 = vshrl.u32 %v391, 16
      %v488 = vrot.slane %v486, 4
      %v489 = vshll.u32 %v391, 16
      %v491 = vrot.slane %v489, 5
      %v492 = vor.u32 %v488, %v491
      %v493 = vrot.slane %v492, 4
      %v495 = vshll.u32 %v399, 16
      %v497 = vrot.slane %v495, 5
      %v498 = vsel %vm271, %v493, %v497
      %v500 = vshrl.u32 %v392, 16
      %v502 = vrot.slane %v500, 4
      %v503 = vshll.u32 %v392, 16
      %v505 = vrot.slane %v503, 5
      %v506 = vor.u32 %v502, %v505
      %v507 = vrot.slane %v506, 4
      %v509 = vshll.u32 %v400, 16
      %v511 = vrot.slane %v509, 5
      %v512 = vsel %vm271, %v507, %v511
      %v513 = vld [vmem:[%s1] sm:$0xff]
      %v514 = vld [vmem:[%s1 + $0x8] sm:$0xff]
      %v515 = vld [vmem:[%s1 + $0x10] sm:$0xff]
      %v516 = vld [vmem:[%s1 + $0x18] sm:$0xff]
      %v517 = vld [vmem:[%s1 + $0x20] sm:$0xff]
      %v518 = vld [vmem:[%s1 + $0x28] sm:$0xff]
      %v519 = vld [vmem:[%s1 + $0x30] sm:$0xff]
      %v520 = vld [vmem:[%s1 + $0x38] sm:$0xff]
      %v521 = vld [vmem:[%s1 + $0x40] sm:$0xff]
      %v522 = vld [vmem:[%s1 + $0x48] sm:$0xff]
      %v523 = vld [vmem:[%s1 + $0x50] sm:$0xff]
      %v524 = vld [vmem:[%s1 + $0x58] sm:$0xff]
      %v525 = vld [vmem:[%s1 + $0x60] sm:$0xff]
      %v526 = vld [vmem:[%s1 + $0x68] sm:$0xff]
      %v527 = vld [vmem:[%s1 + $0x70] sm:$0xff]
      %v528 = vld [vmem:[%s1 + $0x78] sm:$0xff]
      %v537 = vunpack.c.l.b16 %v253
      %v538 = vunpack.c.l.b16 %v254
      %v539 = vunpack.c.l.b16 %v255
      %v540 = vunpack.c.l.b16 %v256
      %v541 = vunpack.c.l.b16 %v257
      %v542 = vunpack.c.l.b16 %v258
      %v543 = vunpack.c.l.b16 %v259
      %v544 = vunpack.c.l.b16 %v260
      %v545 = vpack.c.b16 %v538, %v537
      %v546 = vpack.c.b16 %v540, %v539
      %v547 = vpack.c.b16 %v542, %v541
      %v548 = vpack.c.b16 %v544, %v543
      %v565 = vunpack.c.l.b16 %v513
      %v566 = vunpack.c.h.b16 %v513
      %v567 = vunpack.c.l.b16 %v514
      %v568 = vunpack.c.h.b16 %v514
      %v569 = vunpack.c.l.b16 %v515
      %v570 = vunpack.c.h.b16 %v515
      %v571 = vunpack.c.l.b16 %v516
      %v572 = vunpack.c.h.b16 %v516
      %v573 = vunpack.c.l.b16 %v517
      %v574 = vunpack.c.h.b16 %v517
      %v575 = vunpack.c.l.b16 %v518
      %v576 = vunpack.c.h.b16 %v518
      %v577 = vunpack.c.l.b16 %v519
      %v578 = vunpack.c.h.b16 %v519
      %v579 = vunpack.c.l.b16 %v520
      %v580 = vunpack.c.h.b16 %v520
      %v581 = vunpack.c.l.b16 %v521
      %v582 = vunpack.c.h.b16 %v521
      %v583 = vunpack.c.l.b16 %v522
      %v584 = vunpack.c.h.b16 %v522
      %v585 = vunpack.c.l.b16 %v523
      %v586 = vunpack.c.h.b16 %v523
      %v587 = vunpack.c.l.b16 %v524
      %v588 = vunpack.c.h.b16 %v524
      %v589 = vunpack.c.l.b16 %v525
      %v590 = vunpack.c.h.b16 %v525
      %v591 = vunpack.c.l.b16 %v526
      %v592 = vunpack.c.h.b16 %v526
      %v593 = vunpack.c.l.b16 %v527
      %v594 = vunpack.c.h.b16 %v527
      %v595 = vunpack.c.l.b16 %v528
      %v596 = vunpack.c.h.b16 %v528
      %v597 = vpack.c.b16 %v569, %v565
      %v598 = vpack.c.b16 %v570, %v566
      %v599 = vpack.c.b16 %v571, %v567
      %v600 = vpack.c.b16 %v572, %v568
      %v601 = vpack.c.b16 %v577, %v573
      %v602 = vpack.c.b16 %v578, %v574
      %v603 = vpack.c.b16 %v579, %v575
      %v604 = vpack.c.b16 %v580, %v576
      %v605 = vpack.c.b16 %v585, %v581
      %v606 = vpack.c.b16 %v586, %v582
      %v607 = vpack.c.b16 %v587, %v583
      %v608 = vpack.c.b16 %v588, %v584
      %v609 = vpack.c.b16 %v593, %v589
      %v610 = vpack.c.b16 %v594, %v590
      %v611 = vpack.c.b16 %v595, %v591
      %v612 = vpack.c.b16 %v596, %v592
      %vm629 = vcmask 523264
      %v631 = vsel %vm629, %v545, 0
      %v634 = vsel %vm629, %v546, 0
      %v637 = vsel %vm629, %v547, 0
      %v640 = vsel %vm629, %v548, 0
      %642 = vmatprep.subr.bf16.mxu0 %v598
      %643 = vmatpush1.bf16.msra.mxu0 %v597
      %644 = vmatprep.subr.bf16.mxu0 %v602
      %645 = vmatpush1.bf16.msra.mxu0 %v601
      %646 = vmatprep.subr.bf16.mxu0 %v606
      %647 = vmatpush1.bf16.msra.mxu0 %v605
      %648 = vmatprep.subr.bf16.mxu0 %v610
      %649 = vmatpush1.bf16.msra.mxu0 %v609
      %650 = vmatprep.subr.bf16.mxu0 0
      %651 = vmatpush1.bf16.msra.mxu0 0
      %652 = vmatprep.subr.bf16.mxu0 0
      %653 = vmatpush1.bf16.msra.mxu0 0
      %654 = vmatprep.subr.bf16.mxu0 0
      %655 = vmatpush1.bf16.msra.mxu0 0
      %656 = vmatprep.subr.bf16.mxu0 0
      %657 = vmatpush1.bf16.msra.mxu0 0
      %658 = vmatprep.subr.bf16.mxu0 0
      %659 = vmatpush1.bf16.msra.mxu0 0
      %660 = vmatprep.subr.bf16.mxu0 0
      %661 = vmatpush1.bf16.msra.mxu0 0
      %662 = vmatprep.subr.bf16.mxu0 0
      %663 = vmatpush1.bf16.msra.mxu0 0
      %664 = vmatprep.subr.bf16.mxu0 0
      %665 = vmatpush1.bf16.msra.mxu0 0
      %666 = vmatprep.subr.bf16.mxu0 0
      %667 = vmatpush1.bf16.msra.mxu0 0
      %668 = vmatprep.subr.bf16.mxu0 0
      %669 = vmatpush1.bf16.msra.mxu0 0
      %670 = vmatprep.subr.bf16.mxu0 0
      %671 = vmatpush1.bf16.msra.mxu0 0
      %672 = vmatprep.subr.bf16.mxu0 0
      %673 = vmatpush1.bf16.msra.mxu0 0
      %674 = vmatprep.mubr.bf16.mxu0 0
      %675 = vmatmul.mubr.bf16.gmra.mrb[0].mxu0 %v631
      %v676 = vpop.f32.mrb[0].mxu0
      %v677 = vadd.f32 0.0, %v676
      %v678 = vpop.f32.mrb[0].mxu0
      %v679 = vadd.f32 0.0, %v678
      %v680 = vpop.f32.mrb[0].mxu0
      %v681 = vadd.f32 0.0, %v680
      %v682 = vpop.f32.mrb[0].mxu0
      %v683 = vadd.f32 0.0, %v682
      %684 = vmatprep.mubr.bf16.mxu0 0
      %685 = vmatmul.mubr.bf16.gmra.mrb[0].mxu0 %v634
      %v686 = vpop.f32.mrb[0].mxu0
      %v687 = vadd.f32 0.0, %v686
      %v688 = vpop.f32.mrb[0].mxu0
      %v689 = vadd.f32 0.0, %v688
      %v690 = vpop.f32.mrb[0].mxu0
      %v691 = vadd.f32 0.0, %v690
      %v692 = vpop.f32.mrb[0].mxu0
      %v693 = vadd.f32 0.0, %v692
      %694 = vmatprep.mubr.bf16.mxu0 0
      %695 = vmatmul.mubr.bf16.gmra.mrb[0].mxu0 %v637
      %v696 = vpop.f32.mrb[0].mxu0
      %v697 = vadd.f32 0.0, %v696
      %v698 = vpop.f32.mrb[0].mxu0
      %v699 = vadd.f32 0.0, %v698
      %v700 = vpop.f32.mrb[0].mxu0
      %v701 = vadd.f32 0.0, %v700
      %v702 = vpop.f32.mrb[0].mxu0
      %v703 = vadd.f32 0.0, %v702
      %704 = vmatprep.mubr.bf16.mxu0 0
      %705 = vmatmul.mubr.bf16.gmra.mrb[0].mxu0 %v640
      %v706 = vpop.f32.mrb[0].mxu0
      %v707 = vadd.f32 0.0, %v706
      %v708 = vpop.f32.mrb[0].mxu0
      %v709 = vadd.f32 0.0, %v708
      %v710 = vpop.f32.mrb[0].mxu0
      %v711 = vadd.f32 0.0, %v710
      %v712 = vpop.f32.mrb[0].mxu0
      %v713 = vadd.f32 0.0, %v712
      %714 = vdwg.mxu0
      %715 = vmatprep.subr.bf16.mxu0 %v600
      %716 = vmatpush1.bf16.msra.mxu0 %v599
      %717 = vmatprep.subr.bf16.mxu0 %v604
      %718 = vmatpush1.bf16.msra.mxu0 %v603
      %719 = vmatprep.subr.bf16.mxu0 %v608
      %720 = vmatpush1.bf16.msra.mxu0 %v607
      %721 = vmatprep.subr.bf16.mxu0 %v612
      %722 = vmatpush1.bf16.msra.mxu0 %v611
      %723 = vmatprep.subr.bf16.mxu0 0
      %724 = vmatpush1.bf16.msra.mxu0 0
      %725 = vmatprep.subr.bf16.mxu0 0
      %726 = vmatpush1.bf16.msra.mxu0 0
      %727 = vmatprep.subr.bf16.mxu0 0
      %728 = vmatpush1.bf16.msra.mxu0 0
      %729 = vmatprep.subr.bf16.mxu0 0
      %730 = vmatpush1.bf16.msra.mxu0 0
      %731 = vmatprep.subr.bf16.mxu0 0
      %732 = vmatpush1.bf16.msra.mxu0 0
      %733 = vmatprep.subr.bf16.mxu0 0
      %734 = vmatpush1.bf16.msra.mxu0 0
      %735 = vmatprep.subr.bf16.mxu0 0
      %736 = vmatpush1.bf16.msra.mxu0 0
      %737 = vmatprep.subr.bf16.mxu0 0
      %738 = vmatpush1.bf16.msra.mxu0 0
      %739 = vmatprep.subr.bf16.mxu0 0
      %740 = vmatpush1.bf16.msra.mxu0 0
      %741 = vmatprep.subr.bf16.mxu0 0
      %742 = vmatpush1.bf16.msra.mxu0 0
      %743 = vmatprep.subr.bf16.mxu0 0
      %744 = vmatpush1.bf16.msra.mxu0 0
      %745 = vmatprep.subr.bf16.mxu0 0
      %746 = vmatpush1.bf16.msra.mxu0 0
      %747 = vmatprep.mubr.bf16.mxu0 0
      %748 = vmatmul.mubr.bf16.gmra.mrb[0].mxu0 %v631
      %v749 = vpop.f32.mrb[0].mxu0
      %v750 = vadd.f32 0.0, %v749
      %v751 = vpop.f32.mrb[0].mxu0
      %v752 = vadd.f32 0.0, %v751
      %v753 = vpop.f32.mrb[0].mxu0
      %v754 = vadd.f32 0.0, %v753
      %v755 = vpop.f32.mrb[0].mxu0
      %v756 = vadd.f32 0.0, %v755
      %757 = vmatprep.mubr.bf16.mxu0 0
      %758 = vmatmul.mubr.bf16.gmra.mrb[0].mxu0 %v634
      %v759 = vpop.f32.mrb[0].mxu0
      %v760 = vadd.f32 0.0, %v759
      %v761 = vpop.f32.mrb[0].mxu0
      %v762 = vadd.f32 0.0, %v761
      %v763 = vpop.f32.mrb[0].mxu0
      %v764 = vadd.f32 0.0, %v763
      %v765 = vpop.f32.mrb[0].mxu0
      %v766 = vadd.f32 0.0, %v765
      %767 = vmatprep.mubr.bf16.mxu0 0
      %768 = vmatmul.mubr.bf16.gmra.mrb[0].mxu0 %v637
      %v769 = vpop.f32.mrb[0].mxu0
      %v770 = vadd.f32 0.0, %v769
      %v771 = vpop.f32.mrb[0].mxu0
      %v772 = vadd.f32 0.0, %v771
      %v773 = vpop.f32.mrb[0].mxu0
      %v774 = vadd.f32 0.0, %v773
      %v775 = vpop.f32.mrb[0].mxu0
      %v776 = vadd.f32 0.0, %v775
      %777 = vmatprep.mubr.bf16.mxu0 0
      %778 = vmatmul.mubr.bf16.gmra.mrb[0].mxu0 %v640
      %v779 = vpop.f32.mrb[0].mxu0
      %v780 = vadd.f32 0.0, %v779
      %v781 = vpop.f32.mrb[0].mxu0
      %v782 = vadd.f32 0.0, %v781
      %v783 = vpop.f32.mrb[0].mxu0
      %v784 = vadd.f32 0.0, %v783
      %v785 = vpop.f32.mrb[0].mxu0
      %v786 = vadd.f32 0.0, %v785
      %787 = vdwg.mxu0
      %v788 = vld [vmem:[%s2] sm:$0xff]
      %v789 = vld [vmem:[%s2 + $0x8] sm:$0xff]
      %v790 = vld [vmem:[%s2 + $0x10] sm:$0xff]
      %v791 = vld [vmem:[%s2 + $0x18] sm:$0xff]
      %v792 = vld [vmem:[%s2 + $0x20] sm:$0xff]
      %v793 = vld [vmem:[%s2 + $0x28] sm:$0xff]
      %v794 = vld [vmem:[%s2 + $0x30] sm:$0xff]
      %v795 = vld [vmem:[%s2 + $0x38] sm:$0xff]
      %v796 = vunpack.c.l.b16 %v285
      %v797 = vunpack.c.l.b16 %v299
      %v798 = vunpack.c.l.b16 %v313
      %v799 = vunpack.c.l.b16 %v327
      %v800 = vunpack.c.l.b16 %v341
      %v801 = vunpack.c.l.b16 %v355
      %v802 = vunpack.c.l.b16 %v369
      %v803 = vunpack.c.l.b16 %v383
      %v804 = vpack.c.b16 %v797, %v796
      %v805 = vpack.c.b16 %v799, %v798
      %v806 = vpack.c.b16 %v801, %v800
      %v807 = vpack.c.b16 %v803, %v802
      %v816 = vunpack.c.l.b16 %v788
      %v817 = vunpack.c.h.b16 %v788
      %v818 = vunpack.c.l.b16 %v789
      %v819 = vunpack.c.h.b16 %v789
      %v820 = vunpack.c.l.b16 %v790
      %v821 = vunpack.c.h.b16 %v790
      %v822 = vunpack.c.l.b16 %v791
      %v823 = vunpack.c.h.b16 %v791
      %v824 = vunpack.c.l.b16 %v792
      %v825 = vunpack.c.h.b16 %v792
      %v826 = vunpack.c.l.b16 %v793
      %v827 = vunpack.c.h.b16 %v793
      %v828 = vunpack.c.l.b16 %v794
      %v829 = vunpack.c.h.b16 %v794
      %v830 = vunpack.c.l.b16 %v795
      %v831 = vunpack.c.h.b16 %v795
      %v832 = vpack.c.b16 %v818, %v816
      %v833 = vpack.c.b16 %v819, %v817
      %v834 = vpack.c.b16 %v822, %v820
      %v835 = vpack.c.b16 %v823, %v821
      %v836 = vpack.c.b16 %v826, %v824
      %v837 = vpack.c.b16 %v827, %v825
      %v838 = vpack.c.b16 %v830, %v828
      %v839 = vpack.c.b16 %v831, %v829
      %v849 = vsel %vm629, %v804, 0
      %v852 = vsel %vm629, %v805, 0
      %v855 = vsel %vm629, %v806, 0
      %v858 = vsel %vm629, %v807, 0
      %860 = vmatprep.subr.bf16.mxu0 %v833
      %861 = vmatpush1.bf16.msra.mxu0 %v832
      %862 = vmatprep.subr.bf16.mxu0 %v835
      %863 = vmatpush1.bf16.msra.mxu0 %v834
      %864 = vmatprep.subr.bf16.mxu0 %v837
      %865 = vmatpush1.bf16.msra.mxu0 %v836
      %866 = vmatprep.subr.bf16.mxu0 %v839
      %867 = vmatpush1.bf16.msra.mxu0 %v838
      %868 = vmatprep.subr.bf16.mxu0 0
      %869 = vmatpush1.bf16.msra.mxu0 0
      %870 = vmatprep.subr.bf16.mxu0 0
      %871 = vmatpush1.bf16.msra.mxu0 0
      %872 = vmatprep.subr.bf16.mxu0 0
      %873 = vmatpush1.bf16.msra.mxu0 0
      %874 = vmatprep.subr.bf16.mxu0 0
      %875 = vmatpush1.bf16.msra.mxu0 0
      %876 = vmatprep.subr.bf16.mxu0 0
      %877 = vmatpush1.bf16.msra.mxu0 0
      %878 = vmatprep.subr.bf16.mxu0 0
      %879 = vmatpush1.bf16.msra.mxu0 0
      %880 = vmatprep.subr.bf16.mxu0 0
      %881 = vmatpush1.bf16.msra.mxu0 0
      %882 = vmatprep.subr.bf16.mxu0 0
      %883 = vmatpush1.bf16.msra.mxu0 0
      %884 = vmatprep.subr.bf16.mxu0 0
      %885 = vmatpush1.bf16.msra.mxu0 0
      %886 = vmatprep.subr.bf16.mxu0 0
      %887 = vmatpush1.bf16.msra.mxu0 0
      %888 = vmatprep.subr.bf16.mxu0 0
      %889 = vmatpush1.bf16.msra.mxu0 0
      %890 = vmatprep.subr.bf16.mxu0 0
      %891 = vmatpush1.bf16.msra.mxu0 0
      %892 = vmatprep.mubr.bf16.mxu0 0
      %893 = vmatmul.mubr.bf16.gmra.mrb[0].mxu0 %v849
      %v894 = vpop.f32.mrb[0].mxu0
      %v895 = vadd.f32 0.0, %v894
      %v896 = vpop.f32.mrb[0].mxu0
      %v897 = vadd.f32 0.0, %v896
      %v898 = vpop.f32.mrb[0].mxu0
      %v899 = vadd.f32 0.0, %v898
      %v900 = vpop.f32.mrb[0].mxu0
      %v901 = vadd.f32 0.0, %v900
      %902 = vmatprep.mubr.bf16.mxu0 0
      %903 = vmatmul.mubr.bf16.gmra.mrb[0].mxu0 %v852
      %v904 = vpop.f32.mrb[0].mxu0
      %v905 = vadd.f32 0.0, %v904
      %v906 = vpop.f32.mrb[0].mxu0
      %v907 = vadd.f32 0.0, %v906
      %v908 = vpop.f32.mrb[0].mxu0
      %v909 = vadd.f32 0.0, %v908
      %v910 = vpop.f32.mrb[0].mxu0
      %v911 = vadd.f32 0.0, %v910
      %912 = vmatprep.mubr.bf16.mxu0 0
      %913 = vmatmul.mubr.bf16.gmra.mrb[0].mxu0 %v855
      %v914 = vpop.f32.mrb[0].mxu0
      %v915 = vadd.f32 0.0, %v914
      %v916 = vpop.f32.mrb[0].mxu0
      %v917 = vadd.f32 0.0, %v916
      %v918 = vpop.f32.mrb[0].mxu0
      %v919 = vadd.f32 0.0, %v918
      %v920 = vpop.f32.mrb[0].mxu0
      %v921 = vadd.f32 0.0, %v920
      %922 = vmatprep.mubr.bf16.mxu0 0
      %923 = vmatmul.mubr.bf16.gmra.mrb[0].mxu0 %v858
      %v924 = vpop.f32.mrb[0].mxu0
      %v925 = vadd.f32 0.0, %v924
      %v926 = vpop.f32.mrb[0].mxu0
      %v927 = vadd.f32 0.0, %v926
      %v928 = vpop.f32.mrb[0].mxu0
      %v929 = vadd.f32 0.0, %v928
      %v930 = vpop.f32.mrb[0].mxu0
      %v931 = vadd.f32 0.0, %v930
      %932 = vdwg.mxu0
      %v933 = vld [vmem:[%s3] sm:$0xff]
      %v934 = vld [vmem:[%s3 + $0x8] sm:$0xff]
      %v935 = vld [vmem:[%s3 + $0x10] sm:$0xff]
      %v936 = vld [vmem:[%s3 + $0x18] sm:$0xff]
      %v937 = vld [vmem:[%s3 + $0x20] sm:$0xff]
      %v938 = vld [vmem:[%s3 + $0x28] sm:$0xff]
      %v939 = vld [vmem:[%s3 + $0x30] sm:$0xff]
      %v940 = vld [vmem:[%s3 + $0x38] sm:$0xff]
      %v949 = vunpack.c.l.b16 %v385
      %v950 = vunpack.c.l.b16 %v386
      %v951 = vunpack.c.l.b16 %v387
      %v952 = vunpack.c.l.b16 %v388
      %v953 = vunpack.c.l.b16 %v389
      %v954 = vunpack.c.l.b16 %v390
      %v955 = vunpack.c.l.b16 %v391
      %v956 = vunpack.c.l.b16 %v392
      %v957 = vpack.c.b16 %v950, %v949
      %v958 = vpack.c.b16 %v952, %v951
      %v959 = vpack.c.b16 %v954, %v953
      %v960 = vpack.c.b16 %v956, %v955
      %v969 = vunpack.c.l.b16 %v933
      %v970 = vunpack.c.h.b16 %v933
      %v971 = vunpack.c.l.b16 %v934
      %v972 = vunpack.c.h.b16 %v934
      %v973 = vunpack.c.l.b16 %v935
      %v974 = vunpack.c.h.b16 %v935
      %v975 = vunpack.c.l.b16 %v936
      %v976 = vunpack.c.h.b16 %v936
      %v977 = vunpack.c.l.b16 %v937
      %v978 = vunpack.c.h.b16 %v937
      %v979 = vunpack.c.l.b16 %v938
      %v980 = vunpack.c.h.b16 %v938
      %v981 = vunpack.c.l.b16 %v939
      %v982 = vunpack.c.h.b16 %v939
      %v983 = vunpack.c.l.b16 %v940
      %v984 = vunpack.c.h.b16 %v940
      %v985 = vpack.c.b16 %v971, %v969
      %v986 = vpack.c.b16 %v972, %v970
      %v987 = vpack.c.b16 %v975, %v973
      %v988 = vpack.c.b16 %v976, %v974
      %v989 = vpack.c.b16 %v979, %v977
      %v990 = vpack.c.b16 %v980, %v978
      %v991 = vpack.c.b16 %v983, %v981
      %v992 = vpack.c.b16 %v984, %v982
      %v1002 = vsel %vm629, %v957, 0
      %v1005 = vsel %vm629, %v958, 0
      %v1008 = vsel %vm629, %v959, 0
      %v1011 = vsel %vm629, %v960, 0
      %1013 = vmatprep.subr.bf16.mxu0 %v986
      %1014 = vmatpush1.bf16.msra.mxu0 %v985
      %1015 = vmatprep.subr.bf16.mxu0 %v988
      %1016 = vmatpush1.bf16.msra.mxu0 %v987
      %1017 = vmatprep.subr.bf16.mxu0 %v990
      %1018 = vmatpush1.bf16.msra.mxu0 %v989
      %1019 = vmatprep.subr.bf16.mxu0 %v992
      %1020 = vmatpush1.bf16.msra.mxu0 %v991
      %1021 = vmatprep.subr.bf16.mxu0 0
      %1022 = vmatpush1.bf16.msra.mxu0 0
      %1023 = vmatprep.subr.bf16.mxu0 0
      %1024 = vmatpush1.bf16.msra.mxu0 0
      %1025 = vmatprep.subr.bf16.mxu0 0
      %1026 = vmatpush1.bf16.msra.mxu0 0
      %1027 = vmatprep.subr.bf16.mxu0 0
      %1028 = vmatpush1.bf16.msra.mxu0 0
      %1029 = vmatprep.subr.bf16.mxu0 0
      %1030 = vmatpush1.bf16.msra.mxu0 0
      %1031 = vmatprep.subr.bf16.mxu0 0
      %1032 = vmatpush1.bf16.msra.mxu0 0
      %1033 = vmatprep.subr.bf16.mxu0 0
      %1034 = vmatpush1.bf16.msra.mxu0 0
      %1035 = vmatprep.subr.bf16.mxu0 0
      %1036 = vmatpush1.bf16.msra.mxu0 0
      %1037 = vmatprep.subr.bf16.mxu0 0
      %1038 = vmatpush1.bf16.msra.mxu0 0
      %1039 = vmatprep.subr.bf16.mxu0 0
      %1040 = vmatpush1.bf16.msra.mxu0 0
      %1041 = vmatprep.subr.bf16.mxu0 0
      %1042 = vmatpush1.bf16.msra.mxu0 0
      %1043 = vmatprep.subr.bf16.mxu0 0
      %1044 = vmatpush1.bf16.msra.mxu0 0
      %1045 = vmatprep.mubr.bf16.mxu0 0
      %1046 = vmatmul.mubr.bf16.gmra.mrb[0].mxu0 %v1002
      %v1047 = vpop.f32.mrb[0].mxu0
      %v1048 = vadd.f32 0.0, %v1047
      %v1049 = vpop.f32.mrb[0].mxu0
      %v1050 = vadd.f32 0.0, %v1049
      %v1051 = vpop.f32.mrb[0].mxu0
      %v1052 = vadd.f32 0.0, %v1051
      %v1053 = vpop.f32.mrb[0].mxu0
      %v1054 = vadd.f32 0.0, %v1053
      %1055 = vmatprep.mubr.bf16.mxu0 0
      %1056 = vmatmul.mubr.bf16.gmra.mrb[0].mxu0 %v1005
      %v1057 = vpop.f32.mrb[0].mxu0
      %v1058 = vadd.f32 0.0, %v1057
      %v1059 = vpop.f32.mrb[0].mxu0
      %v1060 = vadd.f32 0.0, %v1059
      %v1061 = vpop.f32.mrb[0].mxu0
      %v1062 = vadd.f32 0.0, %v1061
      %v1063 = vpop.f32.mrb[0].mxu0
      %v1064 = vadd.f32 0.0, %v1063
      %1065 = vmatprep.mubr.bf16.mxu0 0
      %1066 = vmatmul.mubr.bf16.gmra.mrb[0].mxu0 %v1008
      %v1067 = vpop.f32.mrb[0].mxu0
      %v1068 = vadd.f32 0.0, %v1067
      %v1069 = vpop.f32.mrb[0].mxu0
      %v1070 = vadd.f32 0.0, %v1069
      %v1071 = vpop.f32.mrb[0].mxu0
      %v1072 = vadd.f32 0.0, %v1071
      %v1073 = vpop.f32.mrb[0].mxu0
      %v1074 = vadd.f32 0.0, %v1073
      %1075 = vmatprep.mubr.bf16.mxu0 0
      %1076 = vmatmul.mubr.bf16.gmra.mrb[0].mxu0 %v1011
      %v1077 = vpop.f32.mrb[0].mxu0
      %v1078 = vadd.f32 0.0, %v1077
      %v1079 = vpop.f32.mrb[0].mxu0
      %v1080 = vadd.f32 0.0, %v1079
      %v1081 = vpop.f32.mrb[0].mxu0
      %v1082 = vadd.f32 0.0, %v1081
      %v1083 = vpop.f32.mrb[0].mxu0
      %v1084 = vadd.f32 0.0, %v1083
      %1085 = vdwg.mxu0
      %v1086 = vld [vmem:[%s4] sm:$0xf]
      %v1087 = vld [vmem:[%s4 + $0x4] sm:$0xf]
      %v1088 = vld [vmem:[%s4 + $0x8] sm:$0xf]
      %v1089 = vld [vmem:[%s4 + $0xc] sm:$0xf]
      %v1090 = vld [vmem:[%s4 + $0x10] sm:$0xf]
      %v1091 = vld [vmem:[%s4 + $0x14] sm:$0xf]
      %v1092 = vld [vmem:[%s4 + $0x18] sm:$0xf]
      %v1093 = vld [vmem:[%s4 + $0x1c] sm:$0xf]
      %v1094 = vunpack.c.l.b16 %v414
      %v1095 = vunpack.c.l.b16 %v428
      %v1096 = vunpack.c.l.b16 %v442
      %v1097 = vunpack.c.l.b16 %v456
      %v1098 = vunpack.c.l.b16 %v470
      %v1099 = vunpack.c.l.b16 %v484
      %v1100 = vunpack.c.l.b16 %v498
      %v1101 = vunpack.c.l.b16 %v512
      %v1102 = vpack.c.b16 %v1095, %v1094
      %v1103 = vpack.c.b16 %v1097, %v1096
      %v1104 = vpack.c.b16 %v1099, %v1098
      %v1105 = vpack.c.b16 %v1101, %v1100
      %v1114 = vunpack.c.l.b16 %v1086
      %v1115 = vunpack.c.l.b16 %v1087
      %v1116 = vunpack.c.l.b16 %v1088
      %v1117 = vunpack.c.l.b16 %v1089
      %v1118 = vunpack.c.l.b16 %v1090
      %v1119 = vunpack.c.l.b16 %v1091
      %v1120 = vunpack.c.l.b16 %v1092
      %v1121 = vunpack.c.l.b16 %v1093
      %v1122 = vpack.c.b16 %v1115, %v1114
      %v1123 = vpack.c.b16 %v1117, %v1116
      %v1124 = vpack.c.b16 %v1119, %v1118
      %v1125 = vpack.c.b16 %v1121, %v1120
      %v1131 = vsel %vm629, %v1102, 0
      %v1134 = vsel %vm629, %v1103, 0
      %v1137 = vsel %vm629, %v1104, 0
      %v1140 = vsel %vm629, %v1105, 0
      %1142 = vmatprep.subr.bf16.mxu0 0
      %1143 = vmatpush1.bf16.msra.mxu0 %v1122
      %1144 = vmatprep.subr.bf16.mxu0 0
      %1145 = vmatpush1.bf16.msra.mxu0 %v1123
      %1146 = vmatprep.subr.bf16.mxu0 0
      %1147 = vmatpush1.bf16.msra.mxu0 %v1124
      %1148 = vmatprep.subr.bf16.mxu0 0
      %1149 = vmatpush1.bf16.msra.mxu0 %v1125
      %1150 = vmatprep.subr.bf16.mxu0 0
      %1151 = vmatpush1.bf16.msra.mxu0 0
      %1152 = vmatprep.subr.bf16.mxu0 0
      %1153 = vmatpush1.bf16.msra.mxu0 0
      %1154 = vmatprep.subr.bf16.mxu0 0
      %1155 = vmatpush1.bf16.msra.mxu0 0
      %1156 = vmatprep.subr.bf16.mxu0 0
      %1157 = vmatpush1.bf16.msra.mxu0 0
      %1158 = vmatprep.subr.bf16.mxu0 0
      %1159 = vmatpush1.bf16.msra.mxu0 0
      %1160 = vmatprep.subr.bf16.mxu0 0
      %1161 = vmatpush1.bf16.msra.mxu0 0
      %1162 = vmatprep.subr.bf16.mxu0 0
      %1163 = vmatpush1.bf16.msra.mxu0 0
      %1164 = vmatprep.subr.bf16.mxu0 0
      %1165 = vmatpush1.bf16.msra.mxu0 0
      %1166 = vmatprep.subr.bf16.mxu0 0
      %1167 = vmatpush1.bf16.msra.mxu0 0
      %1168 = vmatprep.subr.bf16.mxu0 0
      %1169 = vmatpush1.bf16.msra.mxu0 0
      %1170 = vmatprep.subr.bf16.mxu0 0
      %1171 = vmatpush1.bf16.msra.mxu0 0
      %1172 = vmatprep.subr.bf16.mxu0 0
      %1173 = vmatpush1.bf16.msra.mxu0 0
      %1174 = vmatprep.mubr.bf16.mxu0 0
      %1175 = vmatmul.mubr.bf16.gmra.mrb[0].mxu0 %v1131
      %v1176 = vpop.f32.mrb[0].mxu0
      %v1177 = vadd.f32 0.0, %v1176
      %v1178 = vpop.f32.mrb[0].mxu0
      %v1179 = vpop.f32.mrb[0].mxu0
      %v1180 = vadd.f32 0.0, %v1179
      %v1181 = vpop.f32.mrb[0].mxu0
      %1182 = vmatprep.mubr.bf16.mxu0 0
      %1183 = vmatmul.mubr.bf16.gmra.mrb[0].mxu0 %v1134
      %v1184 = vpop.f32.mrb[0].mxu0
      %v1185 = vadd.f32 0.0, %v1184
      %v1186 = vpop.f32.mrb[0].mxu0
      %v1187 = vpop.f32.mrb[0].mxu0
      %v1188 = vadd.f32 0.0, %v1187
      %v1189 = vpop.f32.mrb[0].mxu0
      %1190 = vmatprep.mubr.bf16.mxu0 0
      %1191 = vmatmul.mubr.bf16.gmra.mrb[0].mxu0 %v1137
      %v1192 = vpop.f32.mrb[0].mxu0
      %v1193 = vadd.f32 0.0, %v1192
      %v1194 = vpop.f32.mrb[0].mxu0
      %v1195 = vpop.f32.mrb[0].mxu0
      %v1196 = vadd.f32 0.0, %v1195
      %v1197 = vpop.f32.mrb[0].mxu0
      %1198 = vmatprep.mubr.bf16.mxu0 0
      %1199 = vmatmul.mubr.bf16.gmra.mrb[0].mxu0 %v1140
      %v1200 = vpop.f32.mrb[0].mxu0
      %v1201 = vadd.f32 0.0, %v1200
      %v1202 = vpop.f32.mrb[0].mxu0
      %v1203 = vpop.f32.mrb[0].mxu0
      %v1204 = vadd.f32 0.0, %v1203
      %v1205 = vpop.f32.mrb[0].mxu0
      %1206 = vdwg.mxu0
      %v1207 = vld [vmem:[%s5] sm:$0x1]
      %v1209 = vlaneseq
      %v1210 = vshrl.u32 %v1209, 7
      %v1211 = vsub.s32 0, %v1210
      %v1212 = vrot.slane %v1207, %v1211
      %v1214 = vadd.f32 %v677, %v1212
      %v1215 = vadd.f32 %v681, %v1212
      %v1216 = vadd.f32 %v687, %v1212
      %v1217 = vadd.f32 %v691, %v1212
      %v1218 = vadd.f32 %v697, %v1212
      %v1219 = vadd.f32 %v701, %v1212
      %v1220 = vadd.f32 %v707, %v1212
      %v1221 = vadd.f32 %v711, %v1212
      %v1222 = vadd.f32 %v679, %v895
      %v1223 = vadd.f32 %v683, %v899
      %v1224 = vadd.f32 %v689, %v905
      %v1225 = vadd.f32 %v693, %v909
      %v1226 = vadd.f32 %v699, %v915
      %v1227 = vadd.f32 %v703, %v919
      %v1228 = vadd.f32 %v709, %v925
      %v1229 = vadd.f32 %v713, %v929
      %v1230 = vadd.f32 %v1222, %v1212
      %v1231 = vadd.f32 %v1223, %v1212
      %v1232 = vadd.f32 %v1224, %v1212
      %v1233 = vadd.f32 %v1225, %v1212
      %v1234 = vadd.f32 %v1226, %v1212
      %v1235 = vadd.f32 %v1227, %v1212
      %v1236 = vadd.f32 %v1228, %v1212
      %v1237 = vadd.f32 %v1229, %v1212
      %v1238 = vadd.f32 %v750, %v1048
      %v1239 = vadd.f32 %v754, %v1052
      %v1240 = vadd.f32 %v760, %v1058
      %v1241 = vadd.f32 %v764, %v1062
      %v1242 = vadd.f32 %v770, %v1068
      %v1243 = vadd.f32 %v774, %v1072
      %v1244 = vadd.f32 %v780, %v1078
      %v1245 = vadd.f32 %v784, %v1082
      %v1246 = vadd.f32 %v1238, %v1212
      %v1247 = vadd.f32 %v1239, %v1212
      %v1248 = vadd.f32 %v1240, %v1212
      %v1249 = vadd.f32 %v1241, %v1212
      %v1250 = vadd.f32 %v1242, %v1212
      %v1251 = vadd.f32 %v1243, %v1212
      %v1252 = vadd.f32 %v1244, %v1212
      %v1253 = vadd.f32 %v1245, %v1212
      %v1254 = vadd.f32 %v752, %v897
      %v1255 = vadd.f32 %v756, %v901
      %v1256 = vadd.f32 %v762, %v907
      %v1257 = vadd.f32 %v766, %v911
      %v1258 = vadd.f32 %v772, %v917
      %v1259 = vadd.f32 %v776, %v921
      %v1260 = vadd.f32 %v782, %v927
      %v1261 = vadd.f32 %v786, %v931
      %v1262 = vadd.f32 %v1254, %v1050
      %v1263 = vadd.f32 %v1255, %v1054
      %v1264 = vadd.f32 %v1256, %v1060
      %v1265 = vadd.f32 %v1257, %v1064
      %v1266 = vadd.f32 %v1258, %v1070
      %v1267 = vadd.f32 %v1259, %v1074
      %v1268 = vadd.f32 %v1260, %v1080
      %v1269 = vadd.f32 %v1261, %v1084
      %v1270 = vadd.f32 %v1262, %v1177
      %v1271 = vadd.f32 %v1263, %v1180
      %v1272 = vadd.f32 %v1264, %v1185
      %v1273 = vadd.f32 %v1265, %v1188
      %v1274 = vadd.f32 %v1266, %v1193
      %v1275 = vadd.f32 %v1267, %v1196
      %v1276 = vadd.f32 %v1268, %v1201
      %v1277 = vadd.f32 %v1269, %v1204
      %v1278 = vadd.f32 %v1270, %v1212
      %v1279 = vadd.f32 %v1271, %v1212
      %v1280 = vadd.f32 %v1272, %v1212
      %v1281 = vadd.f32 %v1273, %v1212
      %v1282 = vadd.f32 %v1274, %v1212
      %v1283 = vadd.f32 %v1275, %v1212
      %v1284 = vadd.f32 %v1276, %v1212
      %v1285 = vadd.f32 %v1277, %v1212
      %1286 = vst [vmem:[%s251] sm:$0xff] %v1214
      %1287 = vst [vmem:[%s251 + $0x8] sm:$0xff] %v1230
      %1288 = vst [vmem:[%s251 + $0x20] sm:$0xff] %v1215
      %1289 = vst [vmem:[%s251 + $0x28] sm:$0xff] %v1231
      %1290 = vst [vmem:[%s251 + $0x40] sm:$0xff] %v1216
      %1291 = vst [vmem:[%s251 + $0x48] sm:$0xff] %v1232
      %1292 = vst [vmem:[%s251 + $0x60] sm:$0xff] %v1217
      %1293 = vst [vmem:[%s251 + $0x68] sm:$0xff] %v1233
      %1294 = vst [vmem:[%s251 + $0x80] sm:$0xff] %v1218
      %1295 = vst [vmem:[%s251 + $0x88] sm:$0xff] %v1234
      %1296 = vst [vmem:[%s251 + $0xa0] sm:$0xff] %v1219
      %1297 = vst [vmem:[%s251 + $0xa8] sm:$0xff] %v1235
      %1298 = vst [vmem:[%s251 + $0xc0] sm:$0xff] %v1220
      %1299 = vst [vmem:[%s251 + $0xc8] sm:$0xff] %v1236
      %1300 = vst [vmem:[%s251 + $0xe0] sm:$0xff] %v1221
      %1301 = vst [vmem:[%s251 + $0xe8] sm:$0xff] %v1237
      %s1302 = scalar_lea.vmem %s251, 16
      %1303 = vst [vmem:[%s1302] sm:$0xff] %v1246
      %1304 = vst [vmem:[%s1302 + $0x8] sm:$0xff] %v1278
      %1305 = vst [vmem:[%s1302 + $0x20] sm:$0xff] %v1247
      %1306 = vst [vmem:[%s1302 + $0x28] sm:$0xff] %v1279
      %1307 = vst [vmem:[%s1302 + $0x40] sm:$0xff] %v1248
      %1308 = vst [vmem:[%s1302 + $0x48] sm:$0xff] %v1280
      %1309 = vst [vmem:[%s1302 + $0x60] sm:$0xff] %v1249
      %1310 = vst [vmem:[%s1302 + $0x68] sm:$0xff] %v1281
      %1311 = vst [vmem:[%s1302 + $0x80] sm:$0xff] %v1250
      %1312 = vst [vmem:[%s1302 + $0x88] sm:$0xff] %v1282
      %1313 = vst [vmem:[%s1302 + $0xa0] sm:$0xff] %v1251
      %1314 = vst [vmem:[%s1302 + $0xa8] sm:$0xff] %v1283
      %1315 = vst [vmem:[%s1302 + $0xc0] sm:$0xff] %v1252
      %1316 = vst [vmem:[%s1302 + $0xc8] sm:$0xff] %v1284
      %1317 = vst [vmem:[%s1302 + $0xe0] sm:$0xff] %v1253
      %1318 = vst [vmem:[%s1302 + $0xe8] sm:$0xff] %v1285
      %p1319 = scmp.lt.s32.totalorder %s17, 1
      %s1320 = scalar_select %p1319, %s17, 1
      %s1321 = smul.addr %s1320, 32
      %s1322 = smul.addr %s1321, 8
      %s1323 = scalar_lea.vmem %s6, %s1322
      // Predicated region
      $region45: #{autoencoder_forward.11} parent=43 // pred_check
        %p1324 = pneg %p166
      $region46: #{autoencoder_forward.11} parent=43 // pred_check_branch
        %1326 = sbr.rel (%p1324) target = $region48
      $region47: #{autoencoder_forward.11} parent=43 // pred_region
        _
      $region48: #{autoencoder_forward.11} parent=43 // pred_fallthru
        _
    $region44: #{autoencoder_forward.11} parent=5 // pred_fallthru
      _
    %p1327 = scmp.le.s32.totalorder 2, %s12
    // Predicated region
    $region49: #{autoencoder_forward.11} parent=5 // pred_check
      %p1328 = pneg %p1327
    $region50: #{autoencoder_forward.11} parent=5 // pred_check_branch
      %1330 = sbr.rel (%p1328) target = $region52
    $region51: #{autoencoder_forward.11} parent=5 // pred_region
      %s1331 = ssub.s32 %s12, 2
      // Predicated region
      $region53: #{autoencoder_forward.11} parent=51 // pred_check
        %p1332 = pneg %p172
      $region54: #{autoencoder_forward.11} parent=51 // pred_check_branch
        %1334 = sbr.rel (%p1332) target = $region56
      $region55: #{autoencoder_forward.11} parent=51 // pred_region
        %p1335 = scmp.lt.s32.totalorder %s18, 1
        %s1336 = scalar_select %p1335, %s18, 1
        %s1337 = smul.addr %s1336, 32
        %s1338 = smul.addr %s1337, 8
        %s1339 = scalar_lea.vmem %s6, %s1338
      $region56: #{autoencoder_forward.11} parent=51 // pred_fallthru
        _
    $region52: #{autoencoder_forward.11} parent=5 // pred_fallthru
      _
  $region6: #{autoencoder_forward.11} parent=0 // loop_footer
    %s16 = sadd.s32 1, %s12
  $region7: #{autoencoder_forward.11} parent=0 // loop_footer_branch
    %11 = sbr.rel target = $region3
  $region8: #{autoencoder_forward.11} parent=0 // loop_exit
    _

</llo_original>
